<compile_context>
chip_gen: v7x
topology: tpu7x:2x2x1
jax: 0.10.0
libtpu: 0.0.40
codegen_flags: <defaults>
</compile_context>

<pallas_src>
import functools

import numpy as np

import jax
import jax.numpy as jnp
from jax.experimental import pallas as pl
from jax.experimental.pallas import tpu as pltpu


PW = 256    # planar activation width (14*16 = 7*32 = 224 used lanes, padded)
LIN = 128   # lane width of the packed input / output slabs


def _round_up(x, m):
    return (x + m - 1) // m * m


# ----------------------------------------------------------------------------
# Fused kernel: the whole 6-layer forward for one batch tile of `bt` images.
# Planar layout: rows = (spatial-row, batch-in-tile), cols = width x channels
# zero-padded to 256 lanes.  Stride-2 convs / deconvs are phase-decomposed so
# every layer is a handful of full-width 2-D matmuls.
# ----------------------------------------------------------------------------
def _fused_ae_kernel(xr_ref, cm1_ref, b1_ref, cm2_ref, b2_ref,
                     w3_ref, b3_ref, w4_ref, b4_ref,
                     bw5_ref, b5_ref, w6_ref, b6_ref,
                     out_ref,
                     h1e, h1o, h2, h4, h5e, h5o, *, bt):
    B = bt
    R = 7 * B
    f32 = jnp.float32
    bf16 = jnp.bfloat16

    def mm(a, w):
        return jnp.dot(a, w, preferred_element_type=f32)

    # Zero ONLY the halo rows that must read as zeros.  Every data row (incl.
    # its padded lanes) is fully overwritten below before it is read.
    zrow = jnp.zeros((B, PW), bf16)
    h1o[0:B, :] = zrow          # top halo for encoder-2 (input row "-1")
    h4[R:R + B, :] = zrow       # bottom halo for decoder-2 (input row "7")
    h5e[R:R + B, :] = zrow      # bottom halo for decoder-3 (input row "7")

    # -- encoder 1: Conv2d(1->16, k3, s2, p1) + ReLU -------------------------
    # The 3 kernel-row taps are concatenated along K in xr -> 1 matmul/phase.
    h1e[0:R, :] = jnp.maximum(mm(xr_ref[0], cm1_ref[...]) + b1_ref[...],
                              0.0).astype(bf16)
    h1o[B:B + R, :] = jnp.maximum(mm(xr_ref[1], cm1_ref[...]) + b1_ref[...],
                                  0.0).astype(bf16)

    # -- encoder 2: Conv2d(16->32, k3, s2, p1) + ReLU ------------------------
    acc = (mm(h1o[0:R, :], cm2_ref[0])          # kernel row 0 -> odd row j-1
           + mm(h1e[0:R, :], cm2_ref[1])        # kernel row 1 -> even row j
           + mm(h1o[B:B + R, :], cm2_ref[2]))   # kernel row 2 -> odd row j
    h2[0:R, :] = jnp.maximum(acc + b2_ref[...], 0.0).astype(bf16)

    # -- encoder 3: Conv2d(32->64, k7, valid) == FC (no activation) ----------
    acc3 = mm(h2[0:B, :], w3_ref[0])
    for i in range(1, 7):                        # accumulate form (MRB on v7x)
        acc3 += mm(h2[i * B:(i + 1) * B, :], w3_ref[i])
    h3 = (acc3 + b3_ref[...]).astype(bf16)       # (bt, 64) latent

    # -- decoder 1: ConvTranspose2d(64->32, k7) on 1x1 == FC + ReLU ----------
    for i in range(7):
        acc = mm(h3, w4_ref[i])
        h4[i * B:(i + 1) * B, :] = jnp.maximum(acc + b4_ref[...],
                                               0.0).astype(bf16)

    # -- decoder 2: ConvTranspose2d(32->16, k3, s2, p1, op1) + ReLU ----------
    # Sub-pixel decomposition: even output rows use kernel-row 1 only,
    # odd rows use kernel-row 2 (same input row) + kernel-row 0 (next row).
    h5e[0:R, :] = jnp.maximum(mm(h4[0:R, :], bw5_ref[1]) + b5_ref[...],
                              0.0).astype(bf16)
    acc = mm(h4[0:R, :], bw5_ref[2]) + mm(h4[B:B + R, :], bw5_ref[0])
    h5o[0:R, :] = jnp.maximum(acc + b5_ref[...], 0.0).astype(bf16)

    # -- decoder 3: ConvTranspose2d(16->1, k3, s2, p1, op1) + Sigmoid --------
    # The 4 output-row phases (row mod 4) live in 32-lane groups of one
    # 128-lane slab -> lane-dense matmuls + one unmasked output store.
    acc = (mm(h5e[0:R, :], w6_ref[0])
           + mm(h5o[0:R, :], w6_ref[1])
           + mm(h5e[B:B + R, :], w6_ref[2]))
    out_ref[...] = jax.nn.sigmoid(acc + b6_ref[...])


def _const_spec(arr):
    nd = arr.ndim
    return pl.BlockSpec(arr.shape, lambda i, _nd=nd: (0,) * _nd)


def autoencoder_forward(prepared, x, *, block_batch=256):
    """x: (B, 1, 28, 28) float32 (NCHW) -> (B, 1, 28, 28) float32."""
    B = x.shape[0]
    # Batch tile: multiple of 16 so every bf16 planar slice is tile-aligned.
    # 256 keeps the e3/d1 matmuls at a full MXU pass while the whole working
    # set (~13 MiB) fits the default scoped VMEM on v5e/v6e/v7x.  On v6e you
    # can raise block_batch (and vmem_limit_bytes) for more amortization; on
    # v7x keep it <= ~512 for the 64 MiB VMEM.
    bt = _round_up(max(16, min(block_batch, _round_up(B, 16))), 16)
    T = -(-B // bt)
    R = 7 * bt

    xr = _build_input_rows(x, bt, T)                      # (2, T*R, 128) bf16

    ins = (xr, prepared["cm1"], prepared["b1"], prepared["cm2"], prepared["b2"],
           prepared["w3r"], prepared["b3"], prepared["w4r"], prepared["b4"],
           prepared["bw5"], prepared["b5"], prepared["w6p"], prepared["b6p"])

    in_specs = [pl.BlockSpec((2, R, LIN), lambda i: (0, i, 0))]
    in_specs += [_const_spec(a) for a in ins[1:]]         # weights: fetch once

    out = pl.pallas_call(
        functools.partial(_fused_ae_kernel, bt=bt),
        out_shape=jax.ShapeDtypeStruct((T * R, LIN), jnp.float32),
        grid=(T,),
        in_specs=in_specs,
        out_specs=pl.BlockSpec((R, LIN), lambda i: (i, 0)),
        scratch_shapes=[
            pltpu.VMEM((7 * bt, PW), jnp.bfloat16),   # h1e
            pltpu.VMEM((8 * bt, PW), jnp.bfloat16),   # h1o (+ top halo row)
            pltpu.VMEM((7 * bt, PW), jnp.bfloat16),   # h2
            pltpu.VMEM((8 * bt, PW), jnp.bfloat16),   # h4  (+ bottom halo row)
            pltpu.VMEM((8 * bt, PW), jnp.bfloat16),   # h5e (+ bottom halo row)
            pltpu.VMEM((7 * bt, PW), jnp.bfloat16),   # h5o
        ],
        compiler_params=pltpu.CompilerParams(
            dimension_semantics=("parallel",)),       # megacore split on v7x
    )(*ins)

    # out[(t*7 + q)*bt + b_local, 32c + w] == y[t*bt + b_local, 4q + c, w]
    y = out.reshape(T, 7, bt, 4, 32)[..., :28]
    y = y.transpose(0, 2, 1, 3, 4).reshape(T * bt, 28, 28)
    return y[:B, None, :, :]


# ----------------------------------------------------------------------------
# Host-side input packing (runs inside jit, tiny relative to the conv work)
# ----------------------------------------------------------------------------
def _build_input_rows(x, bt, T, compute_dtype=jnp.bfloat16):
    """x: (B,1,28,28) -> (2, T*7*bt, 128) bf16.

    Row layout: (tile, h1-output-row m, batch-in-tile).  Lane layout: the 3
    encoder-1 kernel-row taps at lane offsets 32*di (zero padded to 128)."""
    B = x.shape[0]
    Bp = T * bt
    x2 = x[:, 0, :, :].astype(jnp.float32)                     # (B, 28, 28)
    if Bp > B:
        x2 = jnp.concatenate(
            [x2, jnp.zeros((Bp - B, 28, 28), jnp.float32)], axis=0)
    m = jnp.arange(7)
    di = jnp.arange(3)
    rows_e = 4 * m[:, None] - 1 + di[None, :]     # even h1 rows: input 4m-1+di
    rows_o = 4 * m[:, None] + 1 + di[None, :]     # odd  h1 rows: input 4m+1+di
    idx = jnp.stack([rows_e, rows_o], axis=0)                  # (2, 7, 3)
    g = x2[:, jnp.clip(idx, 0, 27), :]                         # (Bp, 2, 7, 3, 28)
    valid = (idx >= 0) & (idx <= 27)
    g = jnp.where(valid[None, :, :, :, None], g, 0.0)
    g = jnp.pad(g, ((0, 0),) * 4 + ((0, 4),))                  # tap -> 32 lanes
    g = g.reshape(Bp, 2, 7, 96)
    g = jnp.pad(g, ((0, 0), (0, 0), (0, 0), (0, LIN - 96)))    # -> 128 lanes
    g = g.reshape(T, bt, 2, 7, LIN).transpose(2, 0, 3, 1, 4)   # (2,T,7,bt,128)
    return g.reshape(2, T * 7 * bt, LIN).astype(compute_dtype)


# ----------------------------------------------------------------------------
# Host-side weight preparation (runs once, plain numpy)
# ----------------------------------------------------------------------------
def prepare_params(params, compute_dtype=jnp.bfloat16):
    """Reshape PyTorch-layout weights into block-structured planar matmul weights."""
    p = {k: np.asarray(v, np.float32) for k, v in params.items()}
    W1, b1 = p["e1_w"], p["e1_b"]   # (16,1,3,3)
    W2, b2 = p["e2_w"], p["e2_b"]   # (32,16,3,3)
    W3, b3 = p["e3_w"], p["e3_b"]   # (64,32,7,7)
    W4, b4 = p["d1_w"], p["d1_b"]   # (64,32,7,7)  ConvT: (Cin,Cout,kh,kw)
    W5, b5 = p["d2_w"], p["d2_b"]   # (32,16,3,3)
    W6, b6 = p["d3_w"], p["d3_b"]   # (16,1,3,3)

    # e1 fused over kernel rows: (128 -> 14*16); input tap di lives at lanes
    # [32*di : 32*di+28].  h1[:, j] <- x[:, 2j-1+dj].
    cm1 = np.zeros((LIN, PW), np.float32)
    for di in range(3):
        for j in range(14):
            for dj in range(3):
                w_in = 2 * j - 1 + dj
                if 0 <= w_in < 28:
                    cm1[32 * di + w_in, j * 16:(j + 1) * 16] += W1[:, 0, di, dj]

    # e2: (14*16 -> 7*32) per kernel row.
    cm2 = np.zeros((3, PW, PW), np.float32)
    for di in range(3):
        for j in range(7):
            for dj in range(3):
                w_in = 2 * j - 1 + dj
                if 0 <= w_in < 14:
                    cm2[di, w_in * 16:(w_in + 1) * 16, j * 32:(j + 1) * 32] += \
                        W2[:, :, di, dj].T
    # e3: FC per kernel row i: (7*32 -> 64).
    w3r = np.zeros((7, PW, 64), np.float32)
    for i in range(7):
        for j in range(7):
            w3r[i, j * 32:(j + 1) * 32, :] = W3[:, :, i, j].T
    # d1: FC per output row i: (64 -> 7*32).
    w4r = np.zeros((7, 64, PW), np.float32)
    for i in range(7):
        for j in range(7):
            w4r[i, :, j * 32:(j + 1) * 32] = W4[:, :, i, j]
    # d2: (7*32 -> 14*16) per kernel row kr; output col = 2n + kc - 1.
    bw5 = np.zeros((3, PW, PW), np.float32)
    for kr in range(3):
        for n in range(7):
            for kc in range(3):
                w_out = 2 * n + kc - 1
                if 0 <= w_out < 14:
                    bw5[kr, n * 32:(n + 1) * 32, w_out * 16:(w_out + 1) * 16] += \
                        W5[:, :, kr, kc]
    # d3: per kernel row kr, (14*16 -> 28) ...
    cm6 = np.zeros((3, PW, 28), np.float32)
    for kr in range(3):
        for n in range(14):
            for kc in range(3):
                w_out = 2 * n + kc - 1
                if 0 <= w_out < 28:
                    cm6[kr, n * 16:(n + 1) * 16, w_out] += W6[:, 0, kr, kc]
    # ... then packed lane-dense: output-row phase c occupies lanes 32c:32c+28.
    #   source 0 = h5e (unshifted): phase 0 uses kr=1, phase 1 uses kr=2
    #   source 1 = h5o            : phase 1 kr=0, phase 2 kr=1, phase 3 kr=2
    #   source 2 = h5e shifted +1 : phase 3 uses kr=0
    w6p = np.zeros((3, PW, LIN), np.float32)
    w6p[0, :, 0:28] = cm6[1]
    w6p[0, :, 32:60] = cm6[2]
    w6p[1, :, 32:60] = cm6[0]
    w6p[1, :, 64:92] = cm6[1]
    w6p[1, :, 96:124] = cm6[2]
    w6p[2, :, 96:124] = cm6[0]

    def tile_bias(b, reps):
        row = np.zeros((1, PW), np.float32)
        row[0, :reps * b.shape[0]] = np.tile(b, reps)
        return row

    b6p = np.zeros((1, LIN), np.float32)
    for c in range(4):
        b6p[0, 32 * c:32 * c + 28] = b6[0]

    return {
        "cm1": jnp.asarray(cm1, compute_dtype),
        "cm2": jnp.asarray(cm2, compute_dtype),
        "w3r": jnp.asarray(w3r, compute_dtype),
        "w4r": jnp.asarray(w4r, compute_dtype),
        "bw5": jnp.asarray(bw5, compute_dtype),
        "w6p": jnp.asarray(w6p, compute_dtype),
        "b1": jnp.asarray(tile_bias(b1, 14), jnp.float32),
        "b2": jnp.asarray(tile_bias(b2, 7), jnp.float32),
        "b3": jnp.asarray(b3.reshape(1, 64), jnp.float32),
        "b4": jnp.asarray(tile_bias(b4, 7), jnp.float32),
        "b5": jnp.asarray(tile_bias(b5, 14), jnp.float32),
        "b6p": jnp.asarray(b6p, jnp.float32),
    }


# ----------------------------------------------------------------------------
# Parameters (PyTorch layouts) + pure-XLA reference for a numerical self-check
# ----------------------------------------------------------------------------
def init_params(key):
    def w_init(k, shape, fan_in):
        bound = 1.0 / jnp.sqrt(fan_in)
        return jax.random.uniform(k, shape, jnp.float32, -bound, bound)

    keys = jax.random.split(key, 12)
    return {
        "e1_w": w_init(keys[0], (16, 1, 3, 3), 1 * 9),
        "e1_b": w_init(keys[1], (16,), 1 * 9),
        "e2_w": w_init(keys[2], (32, 16, 3, 3), 16 * 9),
        "e2_b": w_init(keys[3], (32,), 16 * 9),
        "e3_w": w_init(keys[4], (64, 32, 7, 7), 32 * 49),
        "e3_b": w_init(keys[5], (64,), 32 * 49),
        "d1_w": w_init(keys[6], (64, 32, 7, 7), 64 * 49),
        "d1_b": w_init(keys[7], (32,), 64 * 49),
        "d2_w": w_init(keys[8], (32, 16, 3, 3), 32 * 9),
        "d2_b": w_init(keys[9], (16,), 32 * 9),
        "d3_w": w_init(keys[10], (16, 1, 3, 3), 16 * 9),
        "d3_b": w_init(keys[11], (1,), 16 * 9),
    }


def reference_forward(params, x):
    dn = ("NCHW", "OIHW", "NCHW")
    hp = jax.lax.Precision.HIGHEST

    def conv(h, w, b, stride, pad):
        y = jax.lax.conv_general_dilated(
            h, w, (stride, stride), [(pad, pad), (pad, pad)],
            dimension_numbers=dn, precision=hp)
        return y + b.reshape(1, -1, 1, 1)

    def deconv(h, w, b, stride, pad, out_pad):
        k = w.shape[2]
        w_eq = jnp.transpose(w[:, :, ::-1, ::-1], (1, 0, 2, 3))
        lo, hi = k - 1 - pad, k - 1 - pad + out_pad
        y = jax.lax.conv_general_dilated(
            h, w_eq, (1, 1), [(lo, hi), (lo, hi)],
            lhs_dilation=(stride, stride), dimension_numbers=dn, precision=hp)
        return y + b.reshape(1, -1, 1, 1)

    h = jax.nn.relu(conv(x, params["e1_w"], params["e1_b"], 2, 1))
    h = jax.nn.relu(conv(h, params["e2_w"], params["e2_b"], 2, 1))
    h = conv(h, params["e3_w"], params["e3_b"], 1, 0)
    h = jax.nn.relu(deconv(h, params["d1_w"], params["d1_b"], 1, 0, 0))
    h = jax.nn.relu(deconv(h, params["d2_w"], params["d2_b"], 2, 1, 1))
    return jax.nn.sigmoid(deconv(h, params["d3_w"], params["d3_b"], 2, 1, 1))


if __name__ == "__main__":
    key = jax.random.PRNGKey(0)
    pkey, xkey = jax.random.split(key)
    params = init_params(pkey)
    prepared = prepare_params(params)

    # MNIST-style input: the 7x7 valid conv / 7x7 deconv pin H = W = 28.
    # Small batch, tiled into two grid steps to exercise the batch pipeline
    # (production sizes would use the default block_batch=256).
    x = jax.random.uniform(xkey, (32, 1, 28, 28), jnp.float32)

    fwd = jax.jit(functools.partial(autoencoder_forward, block_batch=16))
    out = jax.block_until_ready(fwd(prepared, x))

    assert out.shape == (32, 1, 28, 28), out.shape
    assert bool(jnp.all(jnp.isfinite(out)))
    assert bool(jnp.all((out >= 0.0) & (out <= 1.0)))   # sigmoid range

    ref = jax.block_until_ready(jax.jit(reference_forward)(params, x))
    max_err = float(jnp.max(jnp.abs(out - ref)))
    assert max_err < 5e-2, max_err                      # bf16-MXU tolerance

    print("KERNEL_OK")
</pallas_src>

<mosaic_0001>
module attributes {stable_mosaic.version = 11 : i64} {
  func.func @_fused_ae_kernel(%arg0: i32, %arg1: memref<2x112x128xbf16, #tpu.memory_space<vmem>>, %arg2: memref<128x256xbf16, #tpu.memory_space<vmem>>, %arg3: memref<1x256xf32, #tpu.memory_space<vmem>>, %arg4: memref<3x256x256xbf16, #tpu.memory_space<vmem>>, %arg5: memref<1x256xf32, #tpu.memory_space<vmem>>, %arg6: memref<7x256x64xbf16, #tpu.memory_space<vmem>>, %arg7: memref<1x64xf32, #tpu.memory_space<vmem>>, %arg8: memref<7x64x256xbf16, #tpu.memory_space<vmem>>, %arg9: memref<1x256xf32, #tpu.memory_space<vmem>>, %arg10: memref<3x256x256xbf16, #tpu.memory_space<vmem>>, %arg11: memref<1x256xf32, #tpu.memory_space<vmem>>, %arg12: memref<3x256x128xbf16, #tpu.memory_space<vmem>>, %arg13: memref<1x128xf32, #tpu.memory_space<vmem>>, %arg14: memref<112x128xf32, #tpu.memory_space<vmem>>, %arg15: memref<112x256xbf16, #tpu.memory_space<vmem>>, %arg16: memref<128x256xbf16, #tpu.memory_space<vmem>>, %arg17: memref<112x256xbf16, #tpu.memory_space<vmem>>, %arg18: memref<128x256xbf16, #tpu.memory_space<vmem>>, %arg19: memref<128x256xbf16, #tpu.memory_space<vmem>>, %arg20: memref<112x256xbf16, #tpu.memory_space<vmem>>) attributes {dimension_semantics = [#tpu.dimension_semantics<parallel>], iteration_bounds = array<i64: 2>, scalar_prefetch = 0 : i64, scratch_operands = 6 : i64, tpu.core_type = #tpu.core_type<tc>, window_params = [{transform_indices = @transform_0, window_bounds = array<i64: 2, 112, 128>}, {pipeline_mode = #tpu.pipeline_mode<synchronous>, transform_indices = @transform_1, window_bounds = array<i64: 128, 256>}, {pipeline_mode = #tpu.pipeline_mode<synchronous>, transform_indices = @transform_2, window_bounds = array<i64: 1, 256>}, {pipeline_mode = #tpu.pipeline_mode<synchronous>, transform_indices = @transform_3, window_bounds = array<i64: 3, 256, 256>}, {pipeline_mode = #tpu.pipeline_mode<synchronous>, transform_indices = @transform_4, window_bounds = array<i64: 1, 256>}, {pipeline_mode = #tpu.pipeline_mode<synchronous>, transform_indices = @transform_5, window_bounds = array<i64: 7, 256, 64>}, {pipeline_mode = #tpu.pipeline_mode<synchronous>, transform_indices = @transform_6, window_bounds = array<i64: 1, 64>}, {pipeline_mode = #tpu.pipeline_mode<synchronous>, transform_indices = @transform_7, window_bounds = array<i64: 7, 64, 256>}, {pipeline_mode = #tpu.pipeline_mode<synchronous>, transform_indices = @transform_8, window_bounds = array<i64: 1, 256>}, {pipeline_mode = #tpu.pipeline_mode<synchronous>, transform_indices = @transform_9, window_bounds = array<i64: 3, 256, 256>}, {pipeline_mode = #tpu.pipeline_mode<synchronous>, transform_indices = @transform_10, window_bounds = array<i64: 1, 256>}, {pipeline_mode = #tpu.pipeline_mode<synchronous>, transform_indices = @transform_11, window_bounds = array<i64: 3, 256, 128>}, {pipeline_mode = #tpu.pipeline_mode<synchronous>, transform_indices = @transform_12, window_bounds = array<i64: 1, 128>}, {transform_indices = @transform_13, window_bounds = array<i64: 112, 128>}]} {
    %cst = arith.constant 0.000000e+00 : bf16
    %0 = vector.broadcast %cst : bf16 to vector<16x256xbf16>
    %c0 = arith.constant 0 : index
    %c0_0 = arith.constant 0 : index
    %1 = vector.load %arg16[%c0, %c0_0] : memref<128x256xbf16, #tpu.memory_space<vmem>>, vector<16x256xbf16>
    tpu.vector_store %arg16[%c0, %c0_0], %0 {strides = array<i32>} : memref<128x256xbf16, #tpu.memory_space<vmem>>, vector<16x256xbf16>,
    %c112 = arith.constant 112 : index
    %c0_1 = arith.constant 0 : index
    %2 = vector.load %arg18[%c112, %c0_1] : memref<128x256xbf16, #tpu.memory_space<vmem>>, vector<16x256xbf16>
    tpu.vector_store %arg18[%c112, %c0_1], %0 {strides = array<i32>} : memref<128x256xbf16, #tpu.memory_space<vmem>>, vector<16x256xbf16>,
    %c112_2 = arith.constant 112 : index
    %c0_3 = arith.constant 0 : index
    %3 = vector.load %arg19[%c112_2, %c0_3] : memref<128x256xbf16, #tpu.memory_space<vmem>>, vector<16x256xbf16>
    tpu.vector_store %arg19[%c112_2, %c0_3], %0 {strides = array<i32>} : memref<128x256xbf16, #tpu.memory_space<vmem>>, vector<16x256xbf16>,
    %c0_4 = arith.constant 0 : index
    %c0_5 = arith.constant 0 : index
    %c0_6 = arith.constant 0 : index
    %4 = vector.load %arg1[%c0_4, %c0_5, %c0_6] : memref<2x112x128xbf16, #tpu.memory_space<vmem>>, vector<1x112x128xbf16>
    %5 = vector.shape_cast %4 : vector<1x112x128xbf16> to vector<112x128xbf16>
    %c0_7 = arith.constant 0 : index
    %c0_8 = arith.constant 0 : index
    %6 = vector.load %arg2[%c0_7, %c0_8] : memref<128x256xbf16, #tpu.memory_space<vmem>>, vector<128x256xbf16>
    %cst_9 = arith.constant dense<0.000000e+00> : vector<112x256xf32>
    %7 = tpu.matmul %5, %6, %cst_9 {dimension_numbers = #tpu.dot_dimension_numbers<[1], [0], [0], [1], [0, 0, 1, 1], [], []>} : vector<112x128xbf16>, vector<128x256xbf16>, vector<112x256xf32> -> vector<112x256xf32>
    %c0_10 = arith.constant 0 : index
    %c0_11 = arith.constant 0 : index
    %8 = vector.load %arg3[%c0_10, %c0_11] : memref<1x256xf32, #tpu.memory_space<vmem>>, vector<1x256xf32>
    %9 = vector.broadcast %8 : vector<1x256xf32> to vector<112x256xf32>
    %10 = arith.addf %7, %9 : vector<112x256xf32>
    %cst_12 = arith.constant 0.000000e+00 : f32
    %11 = vector.broadcast %cst_12 : f32 to vector<112x256xf32>
    %12 = arith.maximumf %10, %11 : vector<112x256xf32>
    %13 = arith.truncf %12 : vector<112x256xf32> to vector<112x256xbf16>
    %c0_13 = arith.constant 0 : index
    %c0_14 = arith.constant 0 : index
    %14 = vector.load %arg15[%c0_13, %c0_14] : memref<112x256xbf16, #tpu.memory_space<vmem>>, vector<112x256xbf16>
    tpu.vector_store %arg15[%c0_13, %c0_14], %13 {strides = array<i32>} : memref<112x256xbf16, #tpu.memory_space<vmem>>, vector<112x256xbf16>,
    %c1 = arith.constant 1 : index
    %c0_15 = arith.constant 0 : index
    %c0_16 = arith.constant 0 : index
    %15 = vector.load %arg1[%c1, %c0_15, %c0_16] : memref<2x112x128xbf16, #tpu.memory_space<vmem>>, vector<1x112x128xbf16>
    %16 = vector.shape_cast %15 : vector<1x112x128xbf16> to vector<112x128xbf16>
    %c0_17 = arith.constant 0 : index
    %c0_18 = arith.constant 0 : index
    %17 = vector.load %arg2[%c0_17, %c0_18] : memref<128x256xbf16, #tpu.memory_space<vmem>>, vector<128x256xbf16>
    %cst_19 = arith.constant dense<0.000000e+00> : vector<112x256xf32>
    %18 = tpu.matmul %16, %17, %cst_19 {dimension_numbers = #tpu.dot_dimension_numbers<[1], [0], [0], [1], [0, 0, 1, 1], [], []>} : vector<112x128xbf16>, vector<128x256xbf16>, vector<112x256xf32> -> vector<112x256xf32>
    %c0_20 = arith.constant 0 : index
    %c0_21 = arith.constant 0 : index
    %19 = vector.load %arg3[%c0_20, %c0_21] : memref<1x256xf32, #tpu.memory_space<vmem>>, vector<1x256xf32>
    %20 = vector.broadcast %19 : vector<1x256xf32> to vector<112x256xf32>
    %21 = arith.addf %18, %20 : vector<112x256xf32>
    %cst_22 = arith.constant 0.000000e+00 : f32
    %22 = vector.broadcast %cst_22 : f32 to vector<112x256xf32>
    %23 = arith.maximumf %21, %22 : vector<112x256xf32>
    %24 = arith.truncf %23 : vector<112x256xf32> to vector<112x256xbf16>
    %c16 = arith.constant 16 : index
    %c0_23 = arith.constant 0 : index
    %25 = vector.load %arg16[%c16, %c0_23] : memref<128x256xbf16, #tpu.memory_space<vmem>>, vector<112x256xbf16>
    tpu.vector_store %arg16[%c16, %c0_23], %24 {strides = array<i32>} : memref<128x256xbf16, #tpu.memory_space<vmem>>, vector<112x256xbf16>,
    %c0_24 = arith.constant 0 : index
    %c0_25 = arith.constant 0 : index
    %26 = vector.load %arg16[%c0_24, %c0_25] : memref<128x256xbf16, #tpu.memory_space<vmem>>, vector<112x256xbf16>
    %c0_26 = arith.constant 0 : index
    %c0_27 = arith.constant 0 : index
    %c0_28 = arith.constant 0 : index
    %27 = vector.load %arg4[%c0_26, %c0_27, %c0_28] : memref<3x256x256xbf16, #tpu.memory_space<vmem>>, vector<1x256x256xbf16>
    %28 = vector.shape_cast %27 : vector<1x256x256xbf16> to vector<256x256xbf16>
    %cst_29 = arith.constant dense<0.000000e+00> : vector<112x256xf32>
    %29 = tpu.matmul %26, %28, %cst_29 {dimension_numbers = #tpu.dot_dimension_numbers<[1], [0], [0], [1], [0, 0, 1, 1], [], []>} : vector<112x256xbf16>, vector<256x256xbf16>, vector<112x256xf32> -> vector<112x256xf32>
    %c0_30 = arith.constant 0 : index
    %c0_31 = arith.constant 0 : index
    %30 = vector.load %arg15[%c0_30, %c0_31] : memref<112x256xbf16, #tpu.memory_space<vmem>>, vector<112x256xbf16>
    %c1_32 = arith.constant 1 : index
    %c0_33 = arith.constant 0 : index
    %c0_34 = arith.constant 0 : index
    %31 = vector.load %arg4[%c1_32, %c0_33, %c0_34] : memref<3x256x256xbf16, #tpu.memory_space<vmem>>, vector<1x256x256xbf16>
    %32 = vector.shape_cast %31 : vector<1x256x256xbf16> to vector<256x256xbf16>
    %cst_35 = arith.constant dense<0.000000e+00> : vector<112x256xf32>
    %33 = tpu.matmul %30, %32, %cst_35 {dimension_numbers = #tpu.dot_dimension_numbers<[1], [0], [0], [1], [0, 0, 1, 1], [], []>} : vector<112x256xbf16>, vector<256x256xbf16>, vector<112x256xf32> -> vector<112x256xf32>
    %34 = arith.addf %29, %33 : vector<112x256xf32>
    %c16_36 = arith.constant 16 : index
    %c0_37 = arith.constant 0 : index
    %35 = vector.load %arg16[%c16_36, %c0_37] : memref<128x256xbf16, #tpu.memory_space<vmem>>, vector<112x256xbf16>
    %c2 = arith.constant 2 : index
    %c0_38 = arith.constant 0 : index
    %c0_39 = arith.constant 0 : index
    %36 = vector.load %arg4[%c2, %c0_38, %c0_39] : memref<3x256x256xbf16, #tpu.memory_space<vmem>>, vector<1x256x256xbf16>
    %37 = vector.shape_cast %36 : vector<1x256x256xbf16> to vector<256x256xbf16>
    %cst_40 = arith.constant dense<0.000000e+00> : vector<112x256xf32>
    %38 = tpu.matmul %35, %37, %cst_40 {dimension_numbers = #tpu.dot_dimension_numbers<[1], [0], [0], [1], [0, 0, 1, 1], [], []>} : vector<112x256xbf16>, vector<256x256xbf16>, vector<112x256xf32> -> vector<112x256xf32>
    %39 = arith.addf %34, %38 : vector<112x256xf32>
    %c0_41 = arith.constant 0 : index
    %c0_42 = arith.constant 0 : index
    %40 = vector.load %arg5[%c0_41, %c0_42] : memref<1x256xf32, #tpu.memory_space<vmem>>, vector<1x256xf32>
    %41 = vector.broadcast %40 : vector<1x256xf32> to vector<112x256xf32>
    %42 = arith.addf %39, %41 : vector<112x256xf32>
    %cst_43 = arith.constant 0.000000e+00 : f32
    %43 = vector.broadcast %cst_43 : f32 to vector<112x256xf32>
    %44 = arith.maximumf %42, %43 : vector<112x256xf32>
    %45 = arith.truncf %44 : vector<112x256xf32> to vector<112x256xbf16>
    %c0_44 = arith.constant 0 : index
    %c0_45 = arith.constant 0 : index
    %46 = vector.load %arg17[%c0_44, %c0_45] : memref<112x256xbf16, #tpu.memory_space<vmem>>, vector<112x256xbf16>
    tpu.vector_store %arg17[%c0_44, %c0_45], %45 {strides = array<i32>} : memref<112x256xbf16, #tpu.memory_space<vmem>>, vector<112x256xbf16>,
    %c0_46 = arith.constant 0 : index
    %c0_47 = arith.constant 0 : index
    %47 = vector.load %arg17[%c0_46, %c0_47] : memref<112x256xbf16, #tpu.memory_space<vmem>>, vector<16x256xbf16>
    %c0_48 = arith.constant 0 : index
    %c0_49 = arith.constant 0 : index
    %c0_50 = arith.constant 0 : index
    %48 = vector.load %arg6[%c0_48, %c0_49, %c0_50] : memref<7x256x64xbf16, #tpu.memory_space<vmem>>, vector<1x256x64xbf16>
    %49 = vector.shape_cast %48 : vector<1x256x64xbf16> to vector<256x64xbf16>
    %cst_51 = arith.constant dense<0.000000e+00> : vector<16x64xf32>
    %50 = tpu.matmul %47, %49, %cst_51 {dimension_numbers = #tpu.dot_dimension_numbers<[1], [0], [0], [1], [0, 0, 1, 1], [], []>} : vector<16x256xbf16>, vector<256x64xbf16>, vector<16x64xf32> -> vector<16x64xf32>
    %c16_52 = arith.constant 16 : index
    %c0_53 = arith.constant 0 : index
    %51 = vector.load %arg17[%c16_52, %c0_53] : memref<112x256xbf16, #tpu.memory_space<vmem>>, vector<16x256xbf16>
    %c1_54 = arith.constant 1 : index
    %c0_55 = arith.constant 0 : index
    %c0_56 = arith.constant 0 : index
    %52 = vector.load %arg6[%c1_54, %c0_55, %c0_56] : memref<7x256x64xbf16, #tpu.memory_space<vmem>>, vector<1x256x64xbf16>
    %53 = vector.shape_cast %52 : vector<1x256x64xbf16> to vector<256x64xbf16>
    %cst_57 = arith.constant dense<0.000000e+00> : vector<16x64xf32>
    %54 = tpu.matmul %51, %53, %cst_57 {dimension_numbers = #tpu.dot_dimension_numbers<[1], [0], [0], [1], [0, 0, 1, 1], [], []>} : vector<16x256xbf16>, vector<256x64xbf16>, vector<16x64xf32> -> vector<16x64xf32>
    %55 = arith.addf %50, %54 : vector<16x64xf32>
    %c32 = arith.constant 32 : index
    %c0_58 = arith.constant 0 : index
    %56 = vector.load %arg17[%c32, %c0_58] : memref<112x256xbf16, #tpu.memory_space<vmem>>, vector<16x256xbf16>
    %c2_59 = arith.constant 2 : index
    %c0_60 = arith.constant 0 : index
    %c0_61 = arith.constant 0 : index
    %57 = vector.load %arg6[%c2_59, %c0_60, %c0_61] : memref<7x256x64xbf16, #tpu.memory_space<vmem>>, vector<1x256x64xbf16>
    %58 = vector.shape_cast %57 : vector<1x256x64xbf16> to vector<256x64xbf16>
    %cst_62 = arith.constant dense<0.000000e+00> : vector<16x64xf32>
    %59 = tpu.matmul %56, %58, %cst_62 {dimension_numbers = #tpu.dot_dimension_numbers<[1], [0], [0], [1], [0, 0, 1, 1], [], []>} : vector<16x256xbf16>, vector<256x64xbf16>, vector<16x64xf32> -> vector<16x64xf32>
    %60 = arith.addf %55, %59 : vector<16x64xf32>
    %c48 = arith.constant 48 : index
    %c0_63 = arith.constant 0 : index
    %61 = vector.load %arg17[%c48, %c0_63] : memref<112x256xbf16, #tpu.memory_space<vmem>>, vector<16x256xbf16>
    %c3 = arith.constant 3 : index
    %c0_64 = arith.constant 0 : index
    %c0_65 = arith.constant 0 : index
    %62 = vector.load %arg6[%c3, %c0_64, %c0_65] : memref<7x256x64xbf16, #tpu.memory_space<vmem>>, vector<1x256x64xbf16>
    %63 = vector.shape_cast %62 : vector<1x256x64xbf16> to vector<256x64xbf16>
    %cst_66 = arith.constant dense<0.000000e+00> : vector<16x64xf32>
    %64 = tpu.matmul %61, %63, %cst_66 {dimension_numbers = #tpu.dot_dimension_numbers<[1], [0], [0], [1], [0, 0, 1, 1], [], []>} : vector<16x256xbf16>, vector<256x64xbf16>, vector<16x64xf32> -> vector<16x64xf32>
    %65 = arith.addf %60, %64 : vector<16x64xf32>
    %c64 = arith.constant 64 : index
    %c0_67 = arith.constant 0 : index
    %66 = vector.load %arg17[%c64, %c0_67] : memref<112x256xbf16, #tpu.memory_space<vmem>>, vector<16x256xbf16>
    %c4 = arith.constant 4 : index
    %c0_68 = arith.constant 0 : index
    %c0_69 = arith.constant 0 : index
    %67 = vector.load %arg6[%c4, %c0_68, %c0_69] : memref<7x256x64xbf16, #tpu.memory_space<vmem>>, vector<1x256x64xbf16>
    %68 = vector.shape_cast %67 : vector<1x256x64xbf16> to vector<256x64xbf16>
    %cst_70 = arith.constant dense<0.000000e+00> : vector<16x64xf32>
    %69 = tpu.matmul %66, %68, %cst_70 {dimension_numbers = #tpu.dot_dimension_numbers<[1], [0], [0], [1], [0, 0, 1, 1], [], []>} : vector<16x256xbf16>, vector<256x64xbf16>, vector<16x64xf32> -> vector<16x64xf32>
    %70 = arith.addf %65, %69 : vector<16x64xf32>
    %c80 = arith.constant 80 : index
    %c0_71 = arith.constant 0 : index
    %71 = vector.load %arg17[%c80, %c0_71] : memref<112x256xbf16, #tpu.memory_space<vmem>>, vector<16x256xbf16>
    %c5 = arith.constant 5 : index
    %c0_72 = arith.constant 0 : index
    %c0_73 = arith.constant 0 : index
    %72 = vector.load %arg6[%c5, %c0_72, %c0_73] : memref<7x256x64xbf16, #tpu.memory_space<vmem>>, vector<1x256x64xbf16>
    %73 = vector.shape_cast %72 : vector<1x256x64xbf16> to vector<256x64xbf16>
    %cst_74 = arith.constant dense<0.000000e+00> : vector<16x64xf32>
    %74 = tpu.matmul %71, %73, %cst_74 {dimension_numbers = #tpu.dot_dimension_numbers<[1], [0], [0], [1], [0, 0, 1, 1], [], []>} : vector<16x256xbf16>, vector<256x64xbf16>, vector<16x64xf32> -> vector<16x64xf32>
    %75 = arith.addf %70, %74 : vector<16x64xf32>
    %c96 = arith.constant 96 : index
    %c0_75 = arith.constant 0 : index
    %76 = vector.load %arg17[%c96, %c0_75] : memref<112x256xbf16, #tpu.memory_space<vmem>>, vector<16x256xbf16>
    %c6 = arith.constant 6 : index
    %c0_76 = arith.constant 0 : index
    %c0_77 = arith.constant 0 : index
    %77 = vector.load %arg6[%c6, %c0_76, %c0_77] : memref<7x256x64xbf16, #tpu.memory_space<vmem>>, vector<1x256x64xbf16>
    %78 = vector.shape_cast %77 : vector<1x256x64xbf16> to vector<256x64xbf16>
    %cst_78 = arith.constant dense<0.000000e+00> : vector<16x64xf32>
    %79 = tpu.matmul %76, %78, %cst_78 {dimension_numbers = #tpu.dot_dimension_numbers<[1], [0], [0], [1], [0, 0, 1, 1], [], []>} : vector<16x256xbf16>, vector<256x64xbf16>, vector<16x64xf32> -> vector<16x64xf32>
    %80 = arith.addf %75, %79 : vector<16x64xf32>
    %c0_79 = arith.constant 0 : index
    %c0_80 = arith.constant 0 : index
    %81 = vector.load %arg7[%c0_79, %c0_80] : memref<1x64xf32, #tpu.memory_space<vmem>>, vector<1x64xf32>
    %82 = vector.broadcast %81 : vector<1x64xf32> to vector<16x64xf32>
    %83 = arith.addf %80, %82 : vector<16x64xf32>
    %84 = arith.truncf %83 : vector<16x64xf32> to vector<16x64xbf16>
    %c0_81 = arith.constant 0 : index
    %c0_82 = arith.constant 0 : index
    %c0_83 = arith.constant 0 : index
    %85 = vector.load %arg8[%c0_81, %c0_82, %c0_83] : memref<7x64x256xbf16, #tpu.memory_space<vmem>>, vector<1x64x256xbf16>
    %86 = vector.shape_cast %85 : vector<1x64x256xbf16> to vector<64x256xbf16>
    %cst_84 = arith.constant dense<0.000000e+00> : vector<16x256xf32>
    %87 = tpu.matmul %84, %86, %cst_84 {dimension_numbers = #tpu.dot_dimension_numbers<[1], [0], [0], [1], [0, 0, 1, 1], [], []>} : vector<16x64xbf16>, vector<64x256xbf16>, vector<16x256xf32> -> vector<16x256xf32>
    %c0_85 = arith.constant 0 : index
    %c0_86 = arith.constant 0 : index
    %88 = vector.load %arg9[%c0_85, %c0_86] : memref<1x256xf32, #tpu.memory_space<vmem>>, vector<1x256xf32>
    %89 = vector.broadcast %88 : vector<1x256xf32> to vector<16x256xf32>
    %90 = arith.addf %87, %89 : vector<16x256xf32>
    %cst_87 = arith.constant 0.000000e+00 : f32
    %91 = vector.broadcast %cst_87 : f32 to vector<16x256xf32>
    %92 = arith.maximumf %90, %91 : vector<16x256xf32>
    %93 = arith.truncf %92 : vector<16x256xf32> to vector<16x256xbf16>
    %c0_88 = arith.constant 0 : index
    %c0_89 = arith.constant 0 : index
    %94 = vector.load %arg18[%c0_88, %c0_89] : memref<128x256xbf16, #tpu.memory_space<vmem>>, vector<16x256xbf16>
    tpu.vector_store %arg18[%c0_88, %c0_89], %93 {strides = array<i32>} : memref<128x256xbf16, #tpu.memory_space<vmem>>, vector<16x256xbf16>,
    %c1_90 = arith.constant 1 : index
    %c0_91 = arith.constant 0 : index
    %c0_92 = arith.constant 0 : index
    %95 = vector.load %arg8[%c1_90, %c0_91, %c0_92] : memref<7x64x256xbf16, #tpu.memory_space<vmem>>, vector<1x64x256xbf16>
    %96 = vector.shape_cast %95 : vector<1x64x256xbf16> to vector<64x256xbf16>
    %cst_93 = arith.constant dense<0.000000e+00> : vector<16x256xf32>
    %97 = tpu.matmul %84, %96, %cst_93 {dimension_numbers = #tpu.dot_dimension_numbers<[1], [0], [0], [1], [0, 0, 1, 1], [], []>} : vector<16x64xbf16>, vector<64x256xbf16>, vector<16x256xf32> -> vector<16x256xf32>
    %c0_94 = arith.constant 0 : index
    %c0_95 = arith.constant 0 : index
    %98 = vector.load %arg9[%c0_94, %c0_95] : memref<1x256xf32, #tpu.memory_space<vmem>>, vector<1x256xf32>
    %99 = vector.broadcast %98 : vector<1x256xf32> to vector<16x256xf32>
    %100 = arith.addf %97, %99 : vector<16x256xf32>
    %cst_96 = arith.constant 0.000000e+00 : f32
    %101 = vector.broadcast %cst_96 : f32 to vector<16x256xf32>
    %102 = arith.maximumf %100, %101 : vector<16x256xf32>
    %103 = arith.truncf %102 : vector<16x256xf32> to vector<16x256xbf16>
    %c16_97 = arith.constant 16 : index
    %c0_98 = arith.constant 0 : index
    %104 = vector.load %arg18[%c16_97, %c0_98] : memref<128x256xbf16, #tpu.memory_space<vmem>>, vector<16x256xbf16>
    tpu.vector_store %arg18[%c16_97, %c0_98], %103 {strides = array<i32>} : memref<128x256xbf16, #tpu.memory_space<vmem>>, vector<16x256xbf16>,
    %c2_99 = arith.constant 2 : index
    %c0_100 = arith.constant 0 : index
    %c0_101 = arith.constant 0 : index
    %105 = vector.load %arg8[%c2_99, %c0_100, %c0_101] : memref<7x64x256xbf16, #tpu.memory_space<vmem>>, vector<1x64x256xbf16>
    %106 = vector.shape_cast %105 : vector<1x64x256xbf16> to vector<64x256xbf16>
    %cst_102 = arith.constant dense<0.000000e+00> : vector<16x256xf32>
    %107 = tpu.matmul %84, %106, %cst_102 {dimension_numbers = #tpu.dot_dimension_numbers<[1], [0], [0], [1], [0, 0, 1, 1], [], []>} : vector<16x64xbf16>, vector<64x256xbf16>, vector<16x256xf32> -> vector<16x256xf32>
    %c0_103 = arith.constant 0 : index
    %c0_104 = arith.constant 0 : index
    %108 = vector.load %arg9[%c0_103, %c0_104] : memref<1x256xf32, #tpu.memory_space<vmem>>, vector<1x256xf32>
    %109 = vector.broadcast %108 : vector<1x256xf32> to vector<16x256xf32>
    %110 = arith.addf %107, %109 : vector<16x256xf32>
    %cst_105 = arith.constant 0.000000e+00 : f32
    %111 = vector.broadcast %cst_105 : f32 to vector<16x256xf32>
    %112 = arith.maximumf %110, %111 : vector<16x256xf32>
    %113 = arith.truncf %112 : vector<16x256xf32> to vector<16x256xbf16>
    %c32_106 = arith.constant 32 : index
    %c0_107 = arith.constant 0 : index
    %114 = vector.load %arg18[%c32_106, %c0_107] : memref<128x256xbf16, #tpu.memory_space<vmem>>, vector<16x256xbf16>
    tpu.vector_store %arg18[%c32_106, %c0_107], %113 {strides = array<i32>} : memref<128x256xbf16, #tpu.memory_space<vmem>>, vector<16x256xbf16>,
    %c3_108 = arith.constant 3 : index
    %c0_109 = arith.constant 0 : index
    %c0_110 = arith.constant 0 : index
    %115 = vector.load %arg8[%c3_108, %c0_109, %c0_110] : memref<7x64x256xbf16, #tpu.memory_space<vmem>>, vector<1x64x256xbf16>
    %116 = vector.shape_cast %115 : vector<1x64x256xbf16> to vector<64x256xbf16>
    %cst_111 = arith.constant dense<0.000000e+00> : vector<16x256xf32>
    %117 = tpu.matmul %84, %116, %cst_111 {dimension_numbers = #tpu.dot_dimension_numbers<[1], [0], [0], [1], [0, 0, 1, 1], [], []>} : vector<16x64xbf16>, vector<64x256xbf16>, vector<16x256xf32> -> vector<16x256xf32>
    %c0_112 = arith.constant 0 : index
    %c0_113 = arith.constant 0 : index
    %118 = vector.load %arg9[%c0_112, %c0_113] : memref<1x256xf32, #tpu.memory_space<vmem>>, vector<1x256xf32>
    %119 = vector.broadcast %118 : vector<1x256xf32> to vector<16x256xf32>
    %120 = arith.addf %117, %119 : vector<16x256xf32>
    %cst_114 = arith.constant 0.000000e+00 : f32
    %121 = vector.broadcast %cst_114 : f32 to vector<16x256xf32>
    %122 = arith.maximumf %120, %121 : vector<16x256xf32>
    %123 = arith.truncf %122 : vector<16x256xf32> to vector<16x256xbf16>
    %c48_115 = arith.constant 48 : index
    %c0_116 = arith.constant 0 : index
    %124 = vector.load %arg18[%c48_115, %c0_116] : memref<128x256xbf16, #tpu.memory_space<vmem>>, vector<16x256xbf16>
    tpu.vector_store %arg18[%c48_115, %c0_116], %123 {strides = array<i32>} : memref<128x256xbf16, #tpu.memory_space<vmem>>, vector<16x256xbf16>,
    %c4_117 = arith.constant 4 : index
    %c0_118 = arith.constant 0 : index
    %c0_119 = arith.constant 0 : index
    %125 = vector.load %arg8[%c4_117, %c0_118, %c0_119] : memref<7x64x256xbf16, #tpu.memory_space<vmem>>, vector<1x64x256xbf16>
    %126 = vector.shape_cast %125 : vector<1x64x256xbf16> to vector<64x256xbf16>
    %cst_120 = arith.constant dense<0.000000e+00> : vector<16x256xf32>
    %127 = tpu.matmul %84, %126, %cst_120 {dimension_numbers = #tpu.dot_dimension_numbers<[1], [0], [0], [1], [0, 0, 1, 1], [], []>} : vector<16x64xbf16>, vector<64x256xbf16>, vector<16x256xf32> -> vector<16x256xf32>
    %c0_121 = arith.constant 0 : index
    %c0_122 = arith.constant 0 : index
    %128 = vector.load %arg9[%c0_121, %c0_122] : memref<1x256xf32, #tpu.memory_space<vmem>>, vector<1x256xf32>
    %129 = vector.broadcast %128 : vector<1x256xf32> to vector<16x256xf32>
    %130 = arith.addf %127, %129 : vector<16x256xf32>
    %cst_123 = arith.constant 0.000000e+00 : f32
    %131 = vector.broadcast %cst_123 : f32 to vector<16x256xf32>
    %132 = arith.maximumf %130, %131 : vector<16x256xf32>
    %133 = arith.truncf %132 : vector<16x256xf32> to vector<16x256xbf16>
    %c64_124 = arith.constant 64 : index
    %c0_125 = arith.constant 0 : index
    %134 = vector.load %arg18[%c64_124, %c0_125] : memref<128x256xbf16, #tpu.memory_space<vmem>>, vector<16x256xbf16>
    tpu.vector_store %arg18[%c64_124, %c0_125], %133 {strides = array<i32>} : memref<128x256xbf16, #tpu.memory_space<vmem>>, vector<16x256xbf16>,
    %c5_126 = arith.constant 5 : index
    %c0_127 = arith.constant 0 : index
    %c0_128 = arith.constant 0 : index
    %135 = vector.load %arg8[%c5_126, %c0_127, %c0_128] : memref<7x64x256xbf16, #tpu.memory_space<vmem>>, vector<1x64x256xbf16>
    %136 = vector.shape_cast %135 : vector<1x64x256xbf16> to vector<64x256xbf16>
    %cst_129 = arith.constant dense<0.000000e+00> : vector<16x256xf32>
    %137 = tpu.matmul %84, %136, %cst_129 {dimension_numbers = #tpu.dot_dimension_numbers<[1], [0], [0], [1], [0, 0, 1, 1], [], []>} : vector<16x64xbf16>, vector<64x256xbf16>, vector<16x256xf32> -> vector<16x256xf32>
    %c0_130 = arith.constant 0 : index
    %c0_131 = arith.constant 0 : index
    %138 = vector.load %arg9[%c0_130, %c0_131] : memref<1x256xf32, #tpu.memory_space<vmem>>, vector<1x256xf32>
    %139 = vector.broadcast %138 : vector<1x256xf32> to vector<16x256xf32>
    %140 = arith.addf %137, %139 : vector<16x256xf32>
    %cst_132 = arith.constant 0.000000e+00 : f32
    %141 = vector.broadcast %cst_132 : f32 to vector<16x256xf32>
    %142 = arith.maximumf %140, %141 : vector<16x256xf32>
    %143 = arith.truncf %142 : vector<16x256xf32> to vector<16x256xbf16>
    %c80_133 = arith.constant 80 : index
    %c0_134 = arith.constant 0 : index
    %144 = vector.load %arg18[%c80_133, %c0_134] : memref<128x256xbf16, #tpu.memory_space<vmem>>, vector<16x256xbf16>
    tpu.vector_store %arg18[%c80_133, %c0_134], %143 {strides = array<i32>} : memref<128x256xbf16, #tpu.memory_space<vmem>>, vector<16x256xbf16>,
    %c6_135 = arith.constant 6 : index
    %c0_136 = arith.constant 0 : index
    %c0_137 = arith.constant 0 : index
    %145 = vector.load %arg8[%c6_135, %c0_136, %c0_137] : memref<7x64x256xbf16, #tpu.memory_space<vmem>>, vector<1x64x256xbf16>
    %146 = vector.shape_cast %145 : vector<1x64x256xbf16> to vector<64x256xbf16>
    %cst_138 = arith.constant dense<0.000000e+00> : vector<16x256xf32>
    %147 = tpu.matmul %84, %146, %cst_138 {dimension_numbers = #tpu.dot_dimension_numbers<[1], [0], [0], [1], [0, 0, 1, 1], [], []>} : vector<16x64xbf16>, vector<64x256xbf16>, vector<16x256xf32> -> vector<16x256xf32>
    %c0_139 = arith.constant 0 : index
    %c0_140 = arith.constant 0 : index
    %148 = vector.load %arg9[%c0_139, %c0_140] : memref<1x256xf32, #tpu.memory_space<vmem>>, vector<1x256xf32>
    %149 = vector.broadcast %148 : vector<1x256xf32> to vector<16x256xf32>
    %150 = arith.addf %147, %149 : vector<16x256xf32>
    %cst_141 = arith.constant 0.000000e+00 : f32
    %151 = vector.broadcast %cst_141 : f32 to vector<16x256xf32>
    %152 = arith.maximumf %150, %151 : vector<16x256xf32>
    %153 = arith.truncf %152 : vector<16x256xf32> to vector<16x256xbf16>
    %c96_142 = arith.constant 96 : index
    %c0_143 = arith.constant 0 : index
    %154 = vector.load %arg18[%c96_142, %c0_143] : memref<128x256xbf16, #tpu.memory_space<vmem>>, vector<16x256xbf16>
    tpu.vector_store %arg18[%c96_142, %c0_143], %153 {strides = array<i32>} : memref<128x256xbf16, #tpu.memory_space<vmem>>, vector<16x256xbf16>,
    %c0_144 = arith.constant 0 : index
    %c0_145 = arith.constant 0 : index
    %155 = vector.load %arg18[%c0_144, %c0_145] : memref<128x256xbf16, #tpu.memory_space<vmem>>, vector<112x256xbf16>
    %c1_146 = arith.constant 1 : index
    %c0_147 = arith.constant 0 : index
    %c0_148 = arith.constant 0 : index
    %156 = vector.load %arg10[%c1_146, %c0_147, %c0_148] : memref<3x256x256xbf16, #tpu.memory_space<vmem>>, vector<1x256x256xbf16>
    %157 = vector.shape_cast %156 : vector<1x256x256xbf16> to vector<256x256xbf16>
    %cst_149 = arith.constant dense<0.000000e+00> : vector<112x256xf32>
    %158 = tpu.matmul %155, %157, %cst_149 {dimension_numbers = #tpu.dot_dimension_numbers<[1], [0], [0], [1], [0, 0, 1, 1], [], []>} : vector<112x256xbf16>, vector<256x256xbf16>, vector<112x256xf32> -> vector<112x256xf32>
    %c0_150 = arith.constant 0 : index
    %c0_151 = arith.constant 0 : index
    %159 = vector.load %arg11[%c0_150, %c0_151] : memref<1x256xf32, #tpu.memory_space<vmem>>, vector<1x256xf32>
    %160 = vector.broadcast %159 : vector<1x256xf32> to vector<112x256xf32>
    %161 = arith.addf %158, %160 : vector<112x256xf32>
    %cst_152 = arith.constant 0.000000e+00 : f32
    %162 = vector.broadcast %cst_152 : f32 to vector<112x256xf32>
    %163 = arith.maximumf %161, %162 : vector<112x256xf32>
    %164 = arith.truncf %163 : vector<112x256xf32> to vector<112x256xbf16>
    %c0_153 = arith.constant 0 : index
    %c0_154 = arith.constant 0 : index
    %165 = vector.load %arg19[%c0_153, %c0_154] : memref<128x256xbf16, #tpu.memory_space<vmem>>, vector<112x256xbf16>
    tpu.vector_store %arg19[%c0_153, %c0_154], %164 {strides = array<i32>} : memref<128x256xbf16, #tpu.memory_space<vmem>>, vector<112x256xbf16>,
    %c0_155 = arith.constant 0 : index
    %c0_156 = arith.constant 0 : index
    %166 = vector.load %arg18[%c0_155, %c0_156] : memref<128x256xbf16, #tpu.memory_space<vmem>>, vector<112x256xbf16>
    %c2_157 = arith.constant 2 : index
    %c0_158 = arith.constant 0 : index
    %c0_159 = arith.constant 0 : index
    %167 = vector.load %arg10[%c2_157, %c0_158, %c0_159] : memref<3x256x256xbf16, #tpu.memory_space<vmem>>, vector<1x256x256xbf16>
    %168 = vector.shape_cast %167 : vector<1x256x256xbf16> to vector<256x256xbf16>
    %cst_160 = arith.constant dense<0.000000e+00> : vector<112x256xf32>
    %169 = tpu.matmul %166, %168, %cst_160 {dimension_numbers = #tpu.dot_dimension_numbers<[1], [0], [0], [1], [0, 0, 1, 1], [], []>} : vector<112x256xbf16>, vector<256x256xbf16>, vector<112x256xf32> -> vector<112x256xf32>
    %c16_161 = arith.constant 16 : index
    %c0_162 = arith.constant 0 : index
    %170 = vector.load %arg18[%c16_161, %c0_162] : memref<128x256xbf16, #tpu.memory_space<vmem>>, vector<112x256xbf16>
    %c0_163 = arith.constant 0 : index
    %c0_164 = arith.constant 0 : index
    %c0_165 = arith.constant 0 : index
    %171 = vector.load %arg10[%c0_163, %c0_164, %c0_165] : memref<3x256x256xbf16, #tpu.memory_space<vmem>>, vector<1x256x256xbf16>
    %172 = vector.shape_cast %171 : vector<1x256x256xbf16> to vector<256x256xbf16>
    %cst_166 = arith.constant dense<0.000000e+00> : vector<112x256xf32>
    %173 = tpu.matmul %170, %172, %cst_166 {dimension_numbers = #tpu.dot_dimension_numbers<[1], [0], [0], [1], [0, 0, 1, 1], [], []>} : vector<112x256xbf16>, vector<256x256xbf16>, vector<112x256xf32> -> vector<112x256xf32>
    %174 = arith.addf %169, %173 : vector<112x256xf32>
    %c0_167 = arith.constant 0 : index
    %c0_168 = arith.constant 0 : index
    %175 = vector.load %arg11[%c0_167, %c0_168] : memref<1x256xf32, #tpu.memory_space<vmem>>, vector<1x256xf32>
    %176 = vector.broadcast %175 : vector<1x256xf32> to vector<112x256xf32>
    %177 = arith.addf %174, %176 : vector<112x256xf32>
    %cst_169 = arith.constant 0.000000e+00 : f32
    %178 = vector.broadcast %cst_169 : f32 to vector<112x256xf32>
    %179 = arith.maximumf %177, %178 : vector<112x256xf32>
    %180 = arith.truncf %179 : vector<112x256xf32> to vector<112x256xbf16>
    %c0_170 = arith.constant 0 : index
    %c0_171 = arith.constant 0 : index
    %181 = vector.load %arg20[%c0_170, %c0_171] : memref<112x256xbf16, #tpu.memory_space<vmem>>, vector<112x256xbf16>
    tpu.vector_store %arg20[%c0_170, %c0_171], %180 {strides = array<i32>} : memref<112x256xbf16, #tpu.memory_space<vmem>>, vector<112x256xbf16>,
    %c0_172 = arith.constant 0 : index
    %c0_173 = arith.constant 0 : index
    %182 = vector.load %arg19[%c0_172, %c0_173] : memref<128x256xbf16, #tpu.memory_space<vmem>>, vector<112x256xbf16>
    %c0_174 = arith.constant 0 : index
    %c0_175 = arith.constant 0 : index
    %c0_176 = arith.constant 0 : index
    %183 = vector.load %arg12[%c0_174, %c0_175, %c0_176] : memref<3x256x128xbf16, #tpu.memory_space<vmem>>, vector<1x256x128xbf16>
    %184 = vector.shape_cast %183 : vector<1x256x128xbf16> to vector<256x128xbf16>
    %cst_177 = arith.constant dense<0.000000e+00> : vector<112x128xf32>
    %185 = tpu.matmul %182, %184, %cst_177 {dimension_numbers = #tpu.dot_dimension_numbers<[1], [0], [0], [1], [0, 0, 1, 1], [], []>} : vector<112x256xbf16>, vector<256x128xbf16>, vector<112x128xf32> -> vector<112x128xf32>
    %c0_178 = arith.constant 0 : index
    %c0_179 = arith.constant 0 : index
    %186 = vector.load %arg20[%c0_178, %c0_179] : memref<112x256xbf16, #tpu.memory_space<vmem>>, vector<112x256xbf16>
    %c1_180 = arith.constant 1 : index
    %c0_181 = arith.constant 0 : index
    %c0_182 = arith.constant 0 : index
    %187 = vector.load %arg12[%c1_180, %c0_181, %c0_182] : memref<3x256x128xbf16, #tpu.memory_space<vmem>>, vector<1x256x128xbf16>
    %188 = vector.shape_cast %187 : vector<1x256x128xbf16> to vector<256x128xbf16>
    %cst_183 = arith.constant dense<0.000000e+00> : vector<112x128xf32>
    %189 = tpu.matmul %186, %188, %cst_183 {dimension_numbers = #tpu.dot_dimension_numbers<[1], [0], [0], [1], [0, 0, 1, 1], [], []>} : vector<112x256xbf16>, vector<256x128xbf16>, vector<112x128xf32> -> vector<112x128xf32>
    %190 = arith.addf %185, %189 : vector<112x128xf32>
    %c16_184 = arith.constant 16 : index
    %c0_185 = arith.constant 0 : index
    %191 = vector.load %arg19[%c16_184, %c0_185] : memref<128x256xbf16, #tpu.memory_space<vmem>>, vector<112x256xbf16>
    %c2_186 = arith.constant 2 : index
    %c0_187 = arith.constant 0 : index
    %c0_188 = arith.constant 0 : index
    %192 = vector.load %arg12[%c2_186, %c0_187, %c0_188] : memref<3x256x128xbf16, #tpu.memory_space<vmem>>, vector<1x256x128xbf16>
    %193 = vector.shape_cast %192 : vector<1x256x128xbf16> to vector<256x128xbf16>
    %cst_189 = arith.constant dense<0.000000e+00> : vector<112x128xf32>
    %194 = tpu.matmul %191, %193, %cst_189 {dimension_numbers = #tpu.dot_dimension_numbers<[1], [0], [0], [1], [0, 0, 1, 1], [], []>} : vector<112x256xbf16>, vector<256x128xbf16>, vector<112x128xf32> -> vector<112x128xf32>
    %195 = arith.addf %190, %194 : vector<112x128xf32>
    %c0_190 = arith.constant 0 : index
    %c0_191 = arith.constant 0 : index
    %196 = vector.load %arg13[%c0_190, %c0_191] : memref<1x128xf32, #tpu.memory_space<vmem>>, vector<1x128xf32>
    %197 = vector.broadcast %196 : vector<1x128xf32> to vector<112x128xf32>
    %198 = arith.addf %195, %197 : vector<112x128xf32>
    %199 = arith.negf %198 : vector<112x128xf32>
    %200 = math.exp %199 : vector<112x128xf32>
    %cst_192 = arith.constant 1.000000e+00 : f32
    %201 = vector.broadcast %cst_192 : f32 to vector<112x128xf32>
    %202 = arith.addf %201, %200 : vector<112x128xf32>
    %203 = arith.divf %201, %202 : vector<112x128xf32>
    %c0_193 = arith.constant 0 : index
    %c0_194 = arith.constant 0 : index
    %204 = vector.load %arg14[%c0_193, %c0_194] : memref<112x128xf32, #tpu.memory_space<vmem>>, vector<112x128xf32>
    tpu.vector_store %arg14[%c0_193, %c0_194], %203 {strides = array<i32>} : memref<112x128xf32, #tpu.memory_space<vmem>>, vector<112x128xf32>,
    return
  }
  func.func @transform_0(%arg0: i32) -> (i32, i32, i32) {
    %c0_i32 = arith.constant 0 : i32
    %c0_i32_0 = arith.constant 0 : i32
    %c0_i32_1 = arith.constant 0 : i32
    return %c0_i32, %arg0, %c0_i32_0 : i32, i32, i32
  }
  func.func @transform_1(%arg0: i32) -> (i32, i32) {
    %c0_i32 = arith.constant 0 : i32
    %c0_i32_0 = arith.constant 0 : i32
    %c0_i32_1 = arith.constant 0 : i32
    return %c0_i32, %c0_i32_0 : i32, i32
  }
  func.func @transform_2(%arg0: i32) -> (i32, i32) {
    %c0_i32 = arith.constant 0 : i32
    %c0_i32_0 = arith.constant 0 : i32
    %c0_i32_1 = arith.constant 0 : i32
    return %c0_i32, %c0_i32_0 : i32, i32
  }
  func.func @transform_3(%arg0: i32) -> (i32, i32, i32) {
    %c0_i32 = arith.constant 0 : i32
    %c0_i32_0 = arith.constant 0 : i32
    %c0_i32_1 = arith.constant 0 : i32
    %c0_i32_2 = arith.constant 0 : i32
    return %c0_i32, %c0_i32_0, %c0_i32_1 : i32, i32, i32
  }
  func.func @transform_4(%arg0: i32) -> (i32, i32) {
    %c0_i32 = arith.constant 0 : i32
    %c0_i32_0 = arith.constant 0 : i32
    %c0_i32_1 = arith.constant 0 : i32
    return %c0_i32, %c0_i32_0 : i32, i32
  }
  func.func @transform_5(%arg0: i32) -> (i32, i32, i32) {
    %c0_i32 = arith.constant 0 : i32
    %c0_i32_0 = arith.constant 0 : i32
    %c0_i32_1 = arith.constant 0 : i32
    %c0_i32_2 = arith.constant 0 : i32
    return %c0_i32, %c0_i32_0, %c0_i32_1 : i32, i32, i32
  }
  func.func @transform_6(%arg0: i32) -> (i32, i32) {
    %c0_i32 = arith.constant 0 : i32
    %c0_i32_0 = arith.constant 0 : i32
    %c0_i32_1 = arith.constant 0 : i32
    return %c0_i32, %c0_i32_0 : i32, i32
  }
  func.func @transform_7(%arg0: i32) -> (i32, i32, i32) {
    %c0_i32 = arith.constant 0 : i32
    %c0_i32_0 = arith.constant 0 : i32
    %c0_i32_1 = arith.constant 0 : i32
    %c0_i32_2 = arith.constant 0 : i32
    return %c0_i32, %c0_i32_0, %c0_i32_1 : i32, i32, i32
  }
  func.func @transform_8(%arg0: i32) -> (i32, i32) {
    %c0_i32 = arith.constant 0 : i32
    %c0_i32_0 = arith.constant 0 : i32
    %c0_i32_1 = arith.constant 0 : i32
    return %c0_i32, %c0_i32_0 : i32, i32
  }
  func.func @transform_9(%arg0: i32) -> (i32, i32, i32) {
    %c0_i32 = arith.constant 0 : i32
    %c0_i32_0 = arith.constant 0 : i32
    %c0_i32_1 = arith.constant 0 : i32
    %c0_i32_2 = arith.constant 0 : i32
    return %c0_i32, %c0_i32_0, %c0_i32_1 : i32, i32, i32
  }
  func.func @transform_10(%arg0: i32) -> (i32, i32) {
    %c0_i32 = arith.constant 0 : i32
    %c0_i32_0 = arith.constant 0 : i32
    %c0_i32_1 = arith.constant 0 : i32
    return %c0_i32, %c0_i32_0 : i32, i32
  }
  func.func @transform_11(%arg0: i32) -> (i32, i32, i32) {
    %c0_i32 = arith.constant 0 : i32
    %c0_i32_0 = arith.constant 0 : i32
    %c0_i32_1 = arith.constant 0 : i32
    %c0_i32_2 = arith.constant 0 : i32
    return %c0_i32, %c0_i32_0, %c0_i32_1 : i32, i32, i32
  }
  func.func @transform_12(%arg0: i32) -> (i32, i32) {
    %c0_i32 = arith.constant 0 : i32
    %c0_i32_0 = arith.constant 0 : i32
    %c0_i32_1 = arith.constant 0 : i32
    return %c0_i32, %c0_i32_0 : i32, i32
  }
  func.func @transform_13(%arg0: i32) -> (i32, i32) {
    %c0_i32 = arith.constant 0 : i32
    %c0_i32_0 = arith.constant 0 : i32
    return %arg0, %c0_i32 : i32, i32
  }
}

</mosaic_0001>

<llo_original>
// kernel: autoencoder_forward.1
$region0: #{autoencoder_forward.1}
  #allocation0 [shape = 'u32[]', space=smem, size = 0x4, offset = 0x4, fixed_abs, tag = 'smem constant byte address 0x4 - core index']
  #allocation1 [shape = 'u32[144,128]{1,0:T(1,128)}', space=vmem, size = 0x12000, scoped, tag = 'internal scratch']
  #allocation2 [shape = 'bf16[112,256]{1,0:T(16,128)(2,1)}', space=vmem, size = 0xe000, scoped, tag = 'scratch operand']
  #allocation3 [shape = 'bf16[128,256]{1,0:T(16,128)(2,1)}', space=vmem, size = 0x10000, scoped, tag = 'scratch operand']
  #allocation4 [shape = 'bf16[112,256]{1,0:T(16,128)(2,1)}', space=vmem, size = 0xe000, scoped, tag = 'scratch operand']
  #allocation5 [shape = 'bf16[128,256]{1,0:T(16,128)(2,1)}', space=vmem, size = 0x10000, scoped, tag = 'scratch operand']
  #allocation6 [shape = 'bf16[128,256]{1,0:T(16,128)(2,1)}', space=vmem, size = 0x10000, scoped, tag = 'scratch operand']
  #allocation7 [shape = 'bf16[112,256]{1,0:T(16,128)(2,1)}', space=vmem, size = 0xe000, scoped, tag = 'scratch operand']
  %s0 = inlined_call_operand.vmem [shape: bf16[2,224,128], index: 0, kind: input, shape index: {}]
  %s1 = inlined_call_operand.vmem [shape: bf16[128,256], index: 1, kind: input, shape index: {}]
  %s2 = inlined_call_operand.vmem [shape: f32[1,256], index: 2, kind: input, shape index: {}]
  %s3 = inlined_call_operand.vmem [shape: bf16[3,256,256], index: 3, kind: input, shape index: {}]
  %s4 = inlined_call_operand.vmem [shape: f32[1,256], index: 4, kind: input, shape index: {}]
  %s5 = inlined_call_operand.vmem [shape: bf16[7,256,64], index: 5, kind: input, shape index: {}]
  %s6 = inlined_call_operand.vmem [shape: f32[1,64], index: 6, kind: input, shape index: {}]
  %s7 = inlined_call_operand.vmem [shape: bf16[7,64,256], index: 7, kind: input, shape index: {}]
  %s8 = inlined_call_operand.vmem [shape: f32[1,256], index: 8, kind: input, shape index: {}]
  %s9 = inlined_call_operand.vmem [shape: bf16[3,256,256], index: 9, kind: input, shape index: {}]
  %s10 = inlined_call_operand.vmem [shape: f32[1,256], index: 10, kind: input, shape index: {}]
  %s11 = inlined_call_operand.vmem [shape: bf16[3,256,128], index: 11, kind: input, shape index: {}]
  %s12 = inlined_call_operand.vmem [shape: f32[1,128], index: 12, kind: input, shape index: {}]
  %s13 = inlined_call_operand.vmem [shape: f32[224,128], index: 13, kind: output, shape index: {}]
  %s14 = sld [smem:[#allocation0]]
  $region126: #{autoencoder_forward.1} parent=0
    _
  %s16 = ssub.s32 1, %s14
  %s17 = scalar_select 0, %s16, %s14
  $region1: #{autoencoder_forward.1} parent=0
    #allocation8 [shape = 'u8[114688]{0}', space=vmem, size = 0x1c000, scoped, tag = 'input window, operand 0']
    loop: start=0, step=1, limit=4
    $region2: #{autoencoder_forward.1} parent=1 // loop_pre_header
      _
    $region3: #{autoencoder_forward.1} parent=1 // loop_header
      %s19 = sphi 0, %s23
      %p20 = scmp.ge.s32.totalorder %s19, 4
      %s29 = sphi 0, %s31
      %s32 = sphi 0, %s29
      %s33 = sphi 0, %s32
      %s49 = sphi 0, %s33
      %s53 = sphi 0, %s53
      %s55 = sphi 0, %s53
      %s56 = sphi 0, %s55
      %s70 = sphi 0, %s56
      %s74 = sphi 0, %s74
      %s76 = sphi 0, %s74
      %s77 = sphi 0, %s76
      %s91 = sphi 0, %s77
      %s95 = sphi 0, %s95
      %s97 = sphi 0, %s95
      %s98 = sphi 0, %s97
      %s112 = sphi 0, %s98
      %s116 = sphi 0, %s116
      %s118 = sphi 0, %s116
      %s119 = sphi 0, %s118
      %s133 = sphi 0, %s119
      %s137 = sphi 0, %s137
      %s139 = sphi 0, %s137
      %s140 = sphi 0, %s139
      %s154 = sphi 0, %s140
      %s158 = sphi 0, %s158
      %s160 = sphi 0, %s158
      %s161 = sphi 0, %s160
      %s175 = sphi 0, %s161
      %s179 = sphi 0, %s179
      %s181 = sphi 0, %s179
      %s182 = sphi 0, %s181
      %s196 = sphi 0, %s182
      %s200 = sphi 0, %s200
      %s202 = sphi 0, %s200
      %s203 = sphi 0, %s202
      %s217 = sphi 0, %s203
      %s221 = sphi 0, %s221
      %s223 = sphi 0, %s221
      %s224 = sphi 0, %s223
      %s238 = sphi 0, %s224
      %s242 = sphi 0, %s242
      %s244 = sphi 0, %s242
      %s245 = sphi 0, %s244
      %s259 = sphi 0, %s245
      %s263 = sphi 0, %s263
      %s265 = sphi 0, %s263
      %s266 = sphi 0, %s265
      %s280 = sphi 0, %s266
      %s284 = sphi 0, %s284
      %s286 = sphi 0, %s284
      %s287 = sphi 0, %s286
      %s301 = sphi 0, %s287
      %s307 = sphi 0, %s309
      %s310 = sphi 0, %s307
      %s311 = sphi 0, %s310
      %s327 = sphi 0, %s311
    $region4: #{autoencoder_forward.1} parent=1 // loop_header_branch
      %22 = sbr.rel (%p20) target = $region8
    $region5: #{autoencoder_forward.1} parent=1 // loop_body
      %s24 = ssub.s32 %s19, 1
      %s25 = ssub.s32 %s19, 2
      %s26 = sadd.s32 %s19, 1
      %s27 = ssub.s32 %s19, %s26
      %p28 = scmp.eq.s32.totalorder %s27, 0
      %s30 = sadd.s32 %s29, 1
      %s31 = scalar_select %p28, %s29, %s30
      %p34 = pneg %p28
      %p35 = scmp.eq.s32.totalorder %s19, 1
      %p36 = por %p34, %p35
      %p37 = scmp.ne.s32.totalorder %s29, %s32
      %p38 = scmp.eq.s32.totalorder %s19, 0
      %p39 = por %p37, %p38
      %p40 = scmp.ne.s32.totalorder %s29, %s32
      %p41 = scmp.eq.s32.totalorder %s24, 1
      %p42 = por %p40, %p41
      %p43 = scmp.ne.s32.totalorder %s32, %s33
      %p44 = scmp.eq.s32.totalorder %s24, 0
      %p45 = por %p43, %p44
      %p46 = scmp.ne.s32.totalorder %s32, %s33
      %p47 = scmp.eq.s32.totalorder %s25, 1
      %p48 = por %p46, %p47
      %p50 = scmp.ne.s32.totalorder %s33, %s49
      %p51 = scmp.eq.s32.totalorder %s25, 0
      %p52 = por %p50, %p51
      %s54 = sadd.s32 %s53, 1
      %p57 = scmp.eq.s32.totalorder %s19, 1
      %p58 = scmp.ne.s32.totalorder %s53, %s55
      %p59 = scmp.eq.s32.totalorder %s19, 0
      %p60 = por %p58, %p59
      %p61 = scmp.ne.s32.totalorder %s53, %s55
      %p62 = scmp.eq.s32.totalorder %s24, 1
      %p63 = por %p61, %p62
      %p64 = scmp.ne.s32.totalorder %s55, %s56
      %p65 = scmp.eq.s32.totalorder %s24, 0
      %p66 = por %p64, %p65
      %p67 = scmp.ne.s32.totalorder %s55, %s56
      %p68 = scmp.eq.s32.totalorder %s25, 1
      %p69 = por %p67, %p68
      %p71 = scmp.ne.s32.totalorder %s56, %s70
      %p72 = scmp.eq.s32.totalorder %s25, 0
      %p73 = por %p71, %p72
      %s75 = sadd.s32 %s74, 1
      %p78 = scmp.eq.s32.totalorder %s19, 1
      %p79 = scmp.ne.s32.totalorder %s74, %s76
      %p80 = scmp.eq.s32.totalorder %s19, 0
      %p81 = por %p79, %p80
      %p82 = scmp.ne.s32.totalorder %s74, %s76
      %p83 = scmp.eq.s32.totalorder %s24, 1
      %p84 = por %p82, %p83
      %p85 = scmp.ne.s32.totalorder %s76, %s77
      %p86 = scmp.eq.s32.totalorder %s24, 0
      %p87 = por %p85, %p86
      %p88 = scmp.ne.s32.totalorder %s76, %s77
      %p89 = scmp.eq.s32.totalorder %s25, 1
      %p90 = por %p88, %p89
      %p92 = scmp.ne.s32.totalorder %s77, %s91
      %p93 = scmp.eq.s32.totalorder %s25, 0
      %p94 = por %p92, %p93
      %s96 = sadd.s32 %s95, 1
      %p99 = scmp.eq.s32.totalorder %s19, 1
      %p100 = scmp.ne.s32.totalorder %s95, %s97
      %p101 = scmp.eq.s32.totalorder %s19, 0
      %p102 = por %p100, %p101
      %p103 = scmp.ne.s32.totalorder %s95, %s97
      %p104 = scmp.eq.s32.totalorder %s24, 1
      %p105 = por %p103, %p104
      %p106 = scmp.ne.s32.totalorder %s97, %s98
      %p107 = scmp.eq.s32.totalorder %s24, 0
      %p108 = por %p106, %p107
      %p109 = scmp.ne.s32.totalorder %s97, %s98
      %p110 = scmp.eq.s32.totalorder %s25, 1
      %p111 = por %p109, %p110
      %p113 = scmp.ne.s32.totalorder %s98, %s112
      %p114 = scmp.eq.s32.totalorder %s25, 0
      %p115 = por %p113, %p114
      %s117 = sadd.s32 %s116, 1
      %p120 = scmp.eq.s32.totalorder %s19, 1
      %p121 = scmp.ne.s32.totalorder %s116, %s118
      %p122 = scmp.eq.s32.totalorder %s19, 0
      %p123 = por %p121, %p122
      %p124 = scmp.ne.s32.totalorder %s116, %s118
      %p125 = scmp.eq.s32.totalorder %s24, 1
      %p126 = por %p124, %p125
      %p127 = scmp.ne.s32.totalorder %s118, %s119
      %p128 = scmp.eq.s32.totalorder %s24, 0
      %p129 = por %p127, %p128
      %p130 = scmp.ne.s32.totalorder %s118, %s119
      %p131 = scmp.eq.s32.totalorder %s25, 1
      %p132 = por %p130, %p131
      %p134 = scmp.ne.s32.totalorder %s119, %s133
      %p135 = scmp.eq.s32.totalorder %s25, 0
      %p136 = por %p134, %p135
      %s138 = sadd.s32 %s137, 1
      %p141 = scmp.eq.s32.totalorder %s19, 1
      %p142 = scmp.ne.s32.totalorder %s137, %s139
      %p143 = scmp.eq.s32.totalorder %s19, 0
      %p144 = por %p142, %p143
      %p145 = scmp.ne.s32.totalorder %s137, %s139
      %p146 = scmp.eq.s32.totalorder %s24, 1
      %p147 = por %p145, %p146
      %p148 = scmp.ne.s32.totalorder %s139, %s140
      %p149 = scmp.eq.s32.totalorder %s24, 0
      %p150 = por %p148, %p149
      %p151 = scmp.ne.s32.totalorder %s139, %s140
      %p152 = scmp.eq.s32.totalorder %s25, 1
      %p153 = por %p151, %p152
      %p155 = scmp.ne.s32.totalorder %s140, %s154
      %p156 = scmp.eq.s32.totalorder %s25, 0
      %p157 = por %p155, %p156
      %s159 = sadd.s32 %s158, 1
      %p162 = scmp.eq.s32.totalorder %s19, 1
      %p163 = scmp.ne.s32.totalorder %s158, %s160
      %p164 = scmp.eq.s32.totalorder %s19, 0
      %p165 = por %p163, %p164
      %p166 = scmp.ne.s32.totalorder %s158, %s160
      %p167 = scmp.eq.s32.totalorder %s24, 1
      %p168 = por %p166, %p167
      %p169 = scmp.ne.s32.totalorder %s160, %s161
      %p170 = scmp.eq.s32.totalorder %s24, 0
      %p171 = por %p169, %p170
      %p172 = scmp.ne.s32.totalorder %s160, %s161
      %p173 = scmp.eq.s32.totalorder %s25, 1
      %p174 = por %p172, %p173
      %p176 = scmp.ne.s32.totalorder %s161, %s175
      %p177 = scmp.eq.s32.totalorder %s25, 0
      %p178 = por %p176, %p177
      %s180 = sadd.s32 %s179, 1
      %p183 = scmp.eq.s32.totalorder %s19, 1
      %p184 = scmp.ne.s32.totalorder %s179, %s181
      %p185 = scmp.eq.s32.totalorder %s19, 0
      %p186 = por %p184, %p185
      %p187 = scmp.ne.s32.totalorder %s179, %s181
      %p188 = scmp.eq.s32.totalorder %s24, 1
      %p189 = por %p187, %p188
      %p190 = scmp.ne.s32.totalorder %s181, %s182
      %p191 = scmp.eq.s32.totalorder %s24, 0
      %p192 = por %p190, %p191
      %p193 = scmp.ne.s32.totalorder %s181, %s182
      %p194 = scmp.eq.s32.totalorder %s25, 1
      %p195 = por %p193, %p194
      %p197 = scmp.ne.s32.totalorder %s182, %s196
      %p198 = scmp.eq.s32.totalorder %s25, 0
      %p199 = por %p197, %p198
      %s201 = sadd.s32 %s200, 1
      %p204 = scmp.eq.s32.totalorder %s19, 1
      %p205 = scmp.ne.s32.totalorder %s200, %s202
      %p206 = scmp.eq.s32.totalorder %s19, 0
      %p207 = por %p205, %p206
      %p208 = scmp.ne.s32.totalorder %s200, %s202
      %p209 = scmp.eq.s32.totalorder %s24, 1
      %p210 = por %p208, %p209
      %p211 = scmp.ne.s32.totalorder %s202, %s203
      %p212 = scmp.eq.s32.totalorder %s24, 0
      %p213 = por %p211, %p212
      %p214 = scmp.ne.s32.totalorder %s202, %s203
      %p215 = scmp.eq.s32.totalorder %s25, 1
      %p216 = por %p214, %p215
      %p218 = scmp.ne.s32.totalorder %s203, %s217
      %p219 = scmp.eq.s32.totalorder %s25, 0
      %p220 = por %p218, %p219
      %s222 = sadd.s32 %s221, 1
      %p225 = scmp.eq.s32.totalorder %s19, 1
      %p226 = scmp.ne.s32.totalorder %s221, %s223
      %p227 = scmp.eq.s32.totalorder %s19, 0
      %p228 = por %p226, %p227
      %p229 = scmp.ne.s32.totalorder %s221, %s223
      %p230 = scmp.eq.s32.totalorder %s24, 1
      %p231 = por %p229, %p230
      %p232 = scmp.ne.s32.totalorder %s223, %s224
      %p233 = scmp.eq.s32.totalorder %s24, 0
      %p234 = por %p232, %p233
      %p235 = scmp.ne.s32.totalorder %s223, %s224
      %p236 = scmp.eq.s32.totalorder %s25, 1
      %p237 = por %p235, %p236
      %p239 = scmp.ne.s32.totalorder %s224, %s238
      %p240 = scmp.eq.s32.totalorder %s25, 0
      %p241 = por %p239, %p240
      %s243 = sadd.s32 %s242, 1
      %p246 = scmp.eq.s32.totalorder %s19, 1
      %p247 = scmp.ne.s32.totalorder %s242, %s244
      %p248 = scmp.eq.s32.totalorder %s19, 0
      %p249 = por %p247, %p248
      %p250 = scmp.ne.s32.totalorder %s242, %s244
      %p251 = scmp.eq.s32.totalorder %s24, 1
      %p252 = por %p250, %p251
      %p253 = scmp.ne.s32.totalorder %s244, %s245
      %p254 = scmp.eq.s32.totalorder %s24, 0
      %p255 = por %p253, %p254
      %p256 = scmp.ne.s32.totalorder %s244, %s245
      %p257 = scmp.eq.s32.totalorder %s25, 1
      %p258 = por %p256, %p257
      %p260 = scmp.ne.s32.totalorder %s245, %s259
      %p261 = scmp.eq.s32.totalorder %s25, 0
      %p262 = por %p260, %p261
      %s264 = sadd.s32 %s263, 1
      %p267 = scmp.eq.s32.totalorder %s19, 1
      %p268 = scmp.ne.s32.totalorder %s263, %s265
      %p269 = scmp.eq.s32.totalorder %s19, 0
      %p270 = por %p268, %p269
      %p271 = scmp.ne.s32.totalorder %s263, %s265
      %p272 = scmp.eq.s32.totalorder %s24, 1
      %p273 = por %p271, %p272
      %p274 = scmp.ne.s32.totalorder %s265, %s266
      %p275 = scmp.eq.s32.totalorder %s24, 0
      %p276 = por %p274, %p275
      %p277 = scmp.ne.s32.totalorder %s265, %s266
      %p278 = scmp.eq.s32.totalorder %s25, 1
      %p279 = por %p277, %p278
      %p281 = scmp.ne.s32.totalorder %s266, %s280
      %p282 = scmp.eq.s32.totalorder %s25, 0
      %p283 = por %p281, %p282
      %s285 = sadd.s32 %s284, 1
      %p288 = scmp.eq.s32.totalorder %s19, 1
      %p289 = scmp.ne.s32.totalorder %s284, %s286
      %p290 = scmp.eq.s32.totalorder %s19, 0
      %p291 = por %p289, %p290
      %p292 = scmp.ne.s32.totalorder %s284, %s286
      %p293 = scmp.eq.s32.totalorder %s24, 1
      %p294 = por %p292, %p293
      %p295 = scmp.ne.s32.totalorder %s286, %s287
      %p296 = scmp.eq.s32.totalorder %s24, 0
      %p297 = por %p295, %p296
      %p298 = scmp.ne.s32.totalorder %s286, %s287
      %p299 = scmp.eq.s32.totalorder %s25, 1
      %p300 = por %p298, %p299
      %p302 = scmp.ne.s32.totalorder %s287, %s301
      %p303 = scmp.eq.s32.totalorder %s25, 0
      %p304 = por %p302, %p303
      %s305 = ssub.s32 %s19, %s26
      %p306 = scmp.eq.s32.totalorder %s305, 0
      %s308 = sadd.s32 %s307, 1
      %s309 = scalar_select %p306, %s307, %s308
      %p312 = pneg %p306
      %p313 = scmp.eq.s32.totalorder %s19, 1
      %p314 = por %p312, %p313
      %p315 = scmp.ne.s32.totalorder %s307, %s310
      %p316 = scmp.eq.s32.totalorder %s19, 0
      %p317 = por %p315, %p316
      %p318 = scmp.ne.s32.totalorder %s307, %s310
      %p319 = scmp.eq.s32.totalorder %s24, 1
      %p320 = por %p318, %p319
      %p321 = scmp.ne.s32.totalorder %s310, %s311
      %p322 = scmp.eq.s32.totalorder %s24, 0
      %p323 = por %p321, %p322
      %p324 = scmp.ne.s32.totalorder %s310, %s311
      %p325 = scmp.eq.s32.totalorder %s25, 1
      %p326 = por %p324, %p325
      %p328 = scmp.ne.s32.totalorder %s311, %s327
      %p329 = scmp.eq.s32.totalorder %s25, 0
      %p330 = por %p328, %p329
      %p331 = scmp.le.s32.totalorder 1, %s19
      %p332 = scmp.lt.s32.totalorder %s19, 3
      %p333 = pnand %p331, %p332
      %p334 = pneg %p333
      // Predicated region
      $region9: #{autoencoder_forward.1} parent=5 // pred_check
        _
      $region10: #{autoencoder_forward.1} parent=5 // pred_check_branch
        %336 = sbr.rel (%p333) target = $region12
      $region11: #{autoencoder_forward.1} parent=5 // pred_region
        %s337 = ssub.s32 %s19, 1
        // Predicated region
        $region13: #{autoencoder_forward.1} parent=11 // pred_check
          %p338 = pneg %p66
        $region14: #{autoencoder_forward.1} parent=11 // pred_check_branch
          %340 = sbr.rel (%p338) target = $region16
        $region15: #{autoencoder_forward.1} parent=11 // pred_region
          _
        $region16: #{autoencoder_forward.1} parent=11 // pred_fallthru
          _
        // Predicated region
        $region17: #{autoencoder_forward.1} parent=11 // pred_check
          %p341 = pneg %p87
        $region18: #{autoencoder_forward.1} parent=11 // pred_check_branch
          %343 = sbr.rel (%p341) target = $region20
        $region19: #{autoencoder_forward.1} parent=11 // pred_region
          _
        $region20: #{autoencoder_forward.1} parent=11 // pred_fallthru
          _
        // Predicated region
        $region21: #{autoencoder_forward.1} parent=11 // pred_check
          %p344 = pneg %p108
        $region22: #{autoencoder_forward.1} parent=11 // pred_check_branch
          %346 = sbr.rel (%p344) target = $region24
        $region23: #{autoencoder_forward.1} parent=11 // pred_region
          _
        $region24: #{autoencoder_forward.1} parent=11 // pred_fallthru
          _
        // Predicated region
        $region25: #{autoencoder_forward.1} parent=11 // pred_check
          %p347 = pneg %p129
        $region26: #{autoencoder_forward.1} parent=11 // pred_check_branch
          %349 = sbr.rel (%p347) target = $region28
        $region27: #{autoencoder_forward.1} parent=11 // pred_region
          _
        $region28: #{autoencoder_forward.1} parent=11 // pred_fallthru
          _
        // Predicated region
        $region29: #{autoencoder_forward.1} parent=11 // pred_check
          %p350 = pneg %p150
        $region30: #{autoencoder_forward.1} parent=11 // pred_check_branch
          %352 = sbr.rel (%p350) target = $region32
        $region31: #{autoencoder_forward.1} parent=11 // pred_region
          _
        $region32: #{autoencoder_forward.1} parent=11 // pred_fallthru
          _
        // Predicated region
        $region33: #{autoencoder_forward.1} parent=11 // pred_check
          %p353 = pneg %p171
        $region34: #{autoencoder_forward.1} parent=11 // pred_check_branch
          %355 = sbr.rel (%p353) target = $region36
        $region35: #{autoencoder_forward.1} parent=11 // pred_region
          _
        $region36: #{autoencoder_forward.1} parent=11 // pred_fallthru
          _
        // Predicated region
        $region37: #{autoencoder_forward.1} parent=11 // pred_check
          %p356 = pneg %p192
        $region38: #{autoencoder_forward.1} parent=11 // pred_check_branch
          %358 = sbr.rel (%p356) target = $region40
        $region39: #{autoencoder_forward.1} parent=11 // pred_region
          _
        $region40: #{autoencoder_forward.1} parent=11 // pred_fallthru
          _
        // Predicated region
        $region41: #{autoencoder_forward.1} parent=11 // pred_check
          %p359 = pneg %p213
        $region42: #{autoencoder_forward.1} parent=11 // pred_check_branch
          %361 = sbr.rel (%p359) target = $region44
        $region43: #{autoencoder_forward.1} parent=11 // pred_region
          _
        $region44: #{autoencoder_forward.1} parent=11 // pred_fallthru
          _
        // Predicated region
        $region45: #{autoencoder_forward.1} parent=11 // pred_check
          %p362 = pneg %p234
        $region46: #{autoencoder_forward.1} parent=11 // pred_check_branch
          %364 = sbr.rel (%p362) target = $region48
        $region47: #{autoencoder_forward.1} parent=11 // pred_region
          _
        $region48: #{autoencoder_forward.1} parent=11 // pred_fallthru
          _
        // Predicated region
        $region49: #{autoencoder_forward.1} parent=11 // pred_check
          %p365 = pneg %p255
        $region50: #{autoencoder_forward.1} parent=11 // pred_check_branch
          %367 = sbr.rel (%p365) target = $region52
        $region51: #{autoencoder_forward.1} parent=11 // pred_region
          _
        $region52: #{autoencoder_forward.1} parent=11 // pred_fallthru
          _
        // Predicated region
        $region53: #{autoencoder_forward.1} parent=11 // pred_check
          %p368 = pneg %p276
        $region54: #{autoencoder_forward.1} parent=11 // pred_check_branch
          %370 = sbr.rel (%p368) target = $region56
        $region55: #{autoencoder_forward.1} parent=11 // pred_region
          _
        $region56: #{autoencoder_forward.1} parent=11 // pred_fallthru
          _
        // Predicated region
        $region57: #{autoencoder_forward.1} parent=11 // pred_check
          %p371 = pneg %p297
        $region58: #{autoencoder_forward.1} parent=11 // pred_check_branch
          %373 = sbr.rel (%p371) target = $region60
        $region59: #{autoencoder_forward.1} parent=11 // pred_region
          _
        $region60: #{autoencoder_forward.1} parent=11 // pred_fallthru
          _
      $region12: #{autoencoder_forward.1} parent=5 // pred_fallthru
        _
      %p374 = scmp.lt.s32.totalorder %s19, 2
      // Predicated region
      $region61: #{autoencoder_forward.1} parent=5 // pred_check
        %p375 = pneg %p374
      $region62: #{autoencoder_forward.1} parent=5 // pred_check_branch
        %377 = sbr.rel (%p375) target = $region64
      $region63: #{autoencoder_forward.1} parent=5 // pred_region
        // Predicated region
        $region65: #{autoencoder_forward.1} parent=63 // pred_check
          %p378 = pneg %p39
        $region66: #{autoencoder_forward.1} parent=63 // pred_check_branch
          %380 = sbr.rel (%p378) target = $region68
        $region67: #{autoencoder_forward.1} parent=63 // pred_region
          %s381 = sand.u32 %s29, 1
          %s382 = sand.u32 %s29, 1
          %s383 = smul.addr %s382, 112
          %s384 = scalar_lea.vmem [#allocation8], %s383
          %s385 = smul.u32 14, %s19
          %s386 = smul.addr %s385, 4
          %s387 = scalar_lea.vmem %s0, %s386
          // Predicated region
          $region69: #{autoencoder_forward.1} parent=67 // pred_check
            _
          $region70: #{autoencoder_forward.1} parent=67 // pred_check_branch
            %389 = sbr.rel (0) target = $region72
          $region71: #{autoencoder_forward.1} parent=67 // pred_region
            // Predicated region
            $region73: #{autoencoder_forward.1} parent=71 // pred_check
              _
            $region74: #{autoencoder_forward.1} parent=71 // pred_check_branch
              %391 = sbr.rel target = $region76
            $region75: #{autoencoder_forward.1} parent=71 // pred_region
              // Predicated region
              $region88: #{autoencoder_forward.1} parent=75 // pred_check
                _
              $region89: #{autoencoder_forward.1} parent=75 // pred_check_branch
                %460 = sbr.rel (0) target = $region91
              $region90: #{autoencoder_forward.1} parent=75 // pred_region
                loop: start=0, step=1, limit=1
                $region92: #{autoencoder_forward.1} parent=90 // loop_pre_header
                  _
                $region93: #{autoencoder_forward.1} parent=90 // loop_header
                  %s462 = sphi 0, %s466
                  %p463 = scmp.ge.s32.totalorder %s462, 1
                  %s467 = sphi %s387, %s387
                  %s468 = sphi %s384, %s384
                $region94: #{autoencoder_forward.1} parent=90 // loop_header_branch
                  %465 = sbr.rel (%p463) target = $region98
                $region95: #{autoencoder_forward.1} parent=90 // loop_body
                  _
                $region96: #{autoencoder_forward.1} parent=90 // loop_footer
                  %s466 = sadd.s32 1, %s462
                $region97: #{autoencoder_forward.1} parent=90 // loop_footer_branch
                  %461 = sbr.rel target = $region93
                $region98: #{autoencoder_forward.1} parent=90 // loop_exit
                  _
                loop: start=0, step=1, limit=1
                $region99: #{autoencoder_forward.1} parent=90 // loop_pre_header
                  _
                $region100: #{autoencoder_forward.1} parent=90 // loop_header
                  %s471 = sphi 0, %s475
                  %p472 = scmp.ge.s32.totalorder %s471, 1
                  %s476 = sphi %s387, %s387
                  %s477 = sphi %s384, %s384
                $region101: #{autoencoder_forward.1} parent=90 // loop_header_branch
                  %474 = sbr.rel (%p472) target = $region105
                $region102: #{autoencoder_forward.1} parent=90 // loop_body
                  %v478 = vld [vmem:[%s476] sm:$0xf]
                  %479 = vst [vmem:[%s477] sm:$0xf] %v478
                  %v480 = vld [vmem:[%s476 + $0x4] sm:$0xf]
                  %481 = vst [vmem:[%s477 + $0x4] sm:$0xf] %v480
                  %v482 = vld [vmem:[%s476 + $0x8] sm:$0xf]
                  %483 = vst [vmem:[%s477 + $0x8] sm:$0xf] %v482
                  %v484 = vld [vmem:[%s476 + $0xc] sm:$0xf]
                  %485 = vst [vmem:[%s477 + $0xc] sm:$0xf] %v484
                  %v486 = vld [vmem:[%s476 + $0x10] sm:$0xf]
                  %487 = vst [vmem:[%s477 + $0x10] sm:$0xf] %v486
                  %v488 = vld [vmem:[%s476 + $0x14] sm:$0xf]
                  %489 = vst [vmem:[%s477 + $0x14] sm:$0xf] %v488
                  %v490 = vld [vmem:[%s476 + $0x18] sm:$0xf]
                  %491 = vst [vmem:[%s477 + $0x18] sm:$0xf] %v490
                  %v492 = vld [vmem:[%s476 + $0x1c] sm:$0xf]
                  %493 = vst [vmem:[%s477 + $0x1c] sm:$0xf] %v492
                  %v494 = vld [vmem:[%s476 + $0x20] sm:$0xf]
                  %495 = vst [vmem:[%s477 + $0x20] sm:$0xf] %v494
                  %v496 = vld [vmem:[%s476 + $0x24] sm:$0xf]
                  %497 = vst [vmem:[%s477 + $0x24] sm:$0xf] %v496
                  %v498 = vld [vmem:[%s476 + $0x28] sm:$0xf]
                  %499 = vst [vmem:[%s477 + $0x28] sm:$0xf] %v498
                  %v500 = vld [vmem:[%s476 + $0x2c] sm:$0xf]
                  %501 = vst [vmem:[%s477 + $0x2c] sm:$0xf] %v500
                  %v502 = vld [vmem:[%s476 + $0x30] sm:$0xf]
                  %503 = vst [vmem:[%s477 + $0x30] sm:$0xf] %v502
                  %v504 = vld [vmem:[%s476 + $0x34] sm:$0xf]
                  %505 = vst [vmem:[%s477 + $0x34] sm:$0xf] %v504
                  %v506 = vld [vmem:[%s476 + $0x70] sm:$0xf]
                  %507 = vst [vmem:[%s477 + $0x38] sm:$0xf] %v506
                  %v508 = vld [vmem:[%s476 + $0x74] sm:$0xf]
                  %509 = vst [vmem:[%s477 + $0x3c] sm:$0xf] %v508
                  %v510 = vld [vmem:[%s476 + $0x78] sm:$0xf]
                  %511 = vst [vmem:[%s477 + $0x40] sm:$0xf] %v510
                  %v512 = vld [vmem:[%s476 + $0x7c] sm:$0xf]
                  %513 = vst [vmem:[%s477 + $0x44] sm:$0xf] %v512
                  %v514 = vld [vmem:[%s476 + $0x80] sm:$0xf]
                  %515 = vst [vmem:[%s477 + $0x48] sm:$0xf] %v514
                  %v516 = vld [vmem:[%s476 + $0x84] sm:$0xf]
                  %517 = vst [vmem:[%s477 + $0x4c] sm:$0xf] %v516
                  %v518 = vld [vmem:[%s476 + $0x88] sm:$0xf]
                  %519 = vst [vmem:[%s477 + $0x50] sm:$0xf] %v518
                  %v520 = vld [vmem:[%s476 + $0x8c] sm:$0xf]
                  %521 = vst [vmem:[%s477 + $0x54] sm:$0xf] %v520
                  %v522 = vld [vmem:[%s476 + $0x90] sm:$0xf]
                  %523 = vst [vmem:[%s477 + $0x58] sm:$0xf] %v522
                  %v524 = vld [vmem:[%s476 + $0x94] sm:$0xf]
                  %525 = vst [vmem:[%s477 + $0x5c] sm:$0xf] %v524
                  %v526 = vld [vmem:[%s476 + $0x98] sm:$0xf]
                  %527 = vst [vmem:[%s477 + $0x60] sm:$0xf] %v526
                  %v528 = vld [vmem:[%s476 + $0x9c] sm:$0xf]
                  %529 = vst [vmem:[%s477 + $0x64] sm:$0xf] %v528
                  %v530 = vld [vmem:[%s476 + $0xa0] sm:$0xf]
                  %531 = vst [vmem:[%s477 + $0x68] sm:$0xf] %v530
                  %v532 = vld [vmem:[%s476 + $0xa4] sm:$0xf]
                  %533 = vst [vmem:[%s477 + $0x6c] sm:$0xf] %v532
                $region103: #{autoencoder_forward.1} parent=90 // loop_footer
                  %s475 = sadd.s32 1, %s471
                $region104: #{autoencoder_forward.1} parent=90 // loop_footer_branch
                  %470 = sbr.rel target = $region100
                $region105: #{autoencoder_forward.1} parent=90 // loop_exit
                  _
              $region91: #{autoencoder_forward.1} parent=75 // pred_fallthru
                _
            $region76: #{autoencoder_forward.1} parent=71 // pred_fallthru
              _
            // Predicated region
            $region77: #{autoencoder_forward.1} parent=71 // pred_check
              _
            $region78: #{autoencoder_forward.1} parent=71 // pred_check_branch
              %393 = sbr.rel (0) target = $region80
            $region79: #{autoencoder_forward.1} parent=71 // pred_region
              loop: start=0, step=1, limit=1
              $region81: #{autoencoder_forward.1} parent=79 // loop_pre_header
                _
              $region82: #{autoencoder_forward.1} parent=79 // loop_header
                %s396 = sphi 0, %s400
                %p397 = scmp.ge.s32.totalorder %s396, 1
                %s401 = sphi %s387, %s387
                %s402 = sphi %s384, %s384
              $region83: #{autoencoder_forward.1} parent=79 // loop_header_branch
                %399 = sbr.rel (%p397) target = $region87
              $region84: #{autoencoder_forward.1} parent=79 // loop_body
                %v403 = vld [vmem:[%s401] sm:$0xf]
                %404 = vst [vmem:[%s402] sm:$0xf] %v403
                %v405 = vld [vmem:[%s401 + $0x4] sm:$0xf]
                %406 = vst [vmem:[%s402 + $0x4] sm:$0xf] %v405
                %v407 = vld [vmem:[%s401 + $0x8] sm:$0xf]
                %408 = vst [vmem:[%s402 + $0x8] sm:$0xf] %v407
                %v409 = vld [vmem:[%s401 + $0xc] sm:$0xf]
                %410 = vst [vmem:[%s402 + $0xc] sm:$0xf] %v409
                %v411 = vld [vmem:[%s401 + $0x10] sm:$0xf]
                %412 = vst [vmem:[%s402 + $0x10] sm:$0xf] %v411
                %v413 = vld [vmem:[%s401 + $0x14] sm:$0xf]
                %414 = vst [vmem:[%s402 + $0x14] sm:$0xf] %v413
                %v415 = vld [vmem:[%s401 + $0x18] sm:$0xf]
                %416 = vst [vmem:[%s402 + $0x18] sm:$0xf] %v415
                %v417 = vld [vmem:[%s401 + $0x1c] sm:$0xf]
                %418 = vst [vmem:[%s402 + $0x1c] sm:$0xf] %v417
                %v419 = vld [vmem:[%s401 + $0x20] sm:$0xf]
                %420 = vst [vmem:[%s402 + $0x20] sm:$0xf] %v419
                %v421 = vld [vmem:[%s401 + $0x24] sm:$0xf]
                %422 = vst [vmem:[%s402 + $0x24] sm:$0xf] %v421
                %v423 = vld [vmem:[%s401 + $0x28] sm:$0xf]
                %424 = vst [vmem:[%s402 + $0x28] sm:$0xf] %v423
                %v425 = vld [vmem:[%s401 + $0x2c] sm:$0xf]
                %426 = vst [vmem:[%s402 + $0x2c] sm:$0xf] %v425
                %v427 = vld [vmem:[%s401 + $0x30] sm:$0xf]
                %428 = vst [vmem:[%s402 + $0x30] sm:$0xf] %v427
                %v429 = vld [vmem:[%s401 + $0x34] sm:$0xf]
                %430 = vst [vmem:[%s402 + $0x34] sm:$0xf] %v429
                %v431 = vld [vmem:[%s401 + $0x70] sm:$0xf]
                %432 = vst [vmem:[%s402 + $0x38] sm:$0xf] %v431
                %v433 = vld [vmem:[%s401 + $0x74] sm:$0xf]
                %434 = vst [vmem:[%s402 + $0x3c] sm:$0xf] %v433
                %v435 = vld [vmem:[%s401 + $0x78] sm:$0xf]
                %436 = vst [vmem:[%s402 + $0x40] sm:$0xf] %v435
                %v437 = vld [vmem:[%s401 + $0x7c] sm:$0xf]
                %438 = vst [vmem:[%s402 + $0x44] sm:$0xf] %v437
                %v439 = vld [vmem:[%s401 + $0x80] sm:$0xf]
                %440 = vst [vmem:[%s402 + $0x48] sm:$0xf] %v439
                %v441 = vld [vmem:[%s401 + $0x84] sm:$0xf]
                %442 = vst [vmem:[%s402 + $0x4c] sm:$0xf] %v441
                %v443 = vld [vmem:[%s401 + $0x88] sm:$0xf]
                %444 = vst [vmem:[%s402 + $0x50] sm:$0xf] %v443
                %v445 = vld [vmem:[%s401 + $0x8c] sm:$0xf]
                %446 = vst [vmem:[%s402 + $0x54] sm:$0xf] %v445
                %v447 = vld [vmem:[%s401 + $0x90] sm:$0xf]
                %448 = vst [vmem:[%s402 + $0x58] sm:$0xf] %v447
                %v449 = vld [vmem:[%s401 + $0x94] sm:$0xf]
                %450 = vst [vmem:[%s402 + $0x5c] sm:$0xf] %v449
                %v451 = vld [vmem:[%s401 + $0x98] sm:$0xf]
                %452 = vst [vmem:[%s402 + $0x60] sm:$0xf] %v451
                %v453 = vld [vmem:[%s401 + $0x9c] sm:$0xf]
                %454 = vst [vmem:[%s402 + $0x64] sm:$0xf] %v453
                %v455 = vld [vmem:[%s401 + $0xa0] sm:$0xf]
                %456 = vst [vmem:[%s402 + $0x68] sm:$0xf] %v455
                %v457 = vld [vmem:[%s401 + $0xa4] sm:$0xf]
                %458 = vst [vmem:[%s402 + $0x6c] sm:$0xf] %v457
              $region85: #{autoencoder_forward.1} parent=79 // loop_footer
                %s400 = sadd.s32 1, %s396
              $region86: #{autoencoder_forward.1} parent=79 // loop_footer_branch
                %395 = sbr.rel target = $region82
              $region87: #{autoencoder_forward.1} parent=79 // loop_exit
                _
            $region80: #{autoencoder_forward.1} parent=71 // pred_fallthru
              _
          $region72: #{autoencoder_forward.1} parent=67 // pred_fallthru
            _
          %534 = vnop
        $region68: #{autoencoder_forward.1} parent=63 // pred_fallthru
          _
      $region64: #{autoencoder_forward.1} parent=5 // pred_fallthru
        _
      %p535 = scmp.le.s32.totalorder 1, %s19
      %p536 = scmp.lt.s32.totalorder %s19, 3
      %p537 = pnand %p535, %p536
      %p538 = pneg %p537
      // Predicated region
      $region106: #{autoencoder_forward.1} parent=5 // pred_check
        _
      $region107: #{autoencoder_forward.1} parent=5 // pred_check_branch
        %540 = sbr.rel (%p537) target = $region109
      $region108: #{autoencoder_forward.1} parent=5 // pred_region
        %s541 = ssub.s32 %s19, 1
        %s542 = sand.u32 %s32, 1
        %s543 = sand.u32 %s32, 1
        %s544 = smul.addr %s543, 112
        %s545 = scalar_lea.vmem [#allocation8], %s544
        // Predicated region
        $region110: #{autoencoder_forward.1} parent=108 // pred_check
          %p546 = pneg %p45
        $region111: #{autoencoder_forward.1} parent=108 // pred_check_branch
          %548 = sbr.rel (%p546) target = $region113
        $region112: #{autoencoder_forward.1} parent=108 // pred_region
          _
        $region113: #{autoencoder_forward.1} parent=108 // pred_fallthru
          _
        %s549 = sand.u32 %s32, 1
        %s550 = sand.u32 %s32, 1
        %s551 = smul.addr %s550, 112
        %s552 = scalar_lea.vmem [#allocation8], %s551
        %p553 = pneg %p45
        %p554 = pneg %p42
        %p555 = pneg %p66
        %p556 = pneg %p63
        %p557 = pneg %p87
        %p558 = pneg %p84
        %p559 = pneg %p108
        %p560 = pneg %p105
        %p561 = pneg %p129
        %p562 = pneg %p126
        %p563 = pneg %p150
        %p564 = pneg %p147
        %p565 = pneg %p171
        %p566 = pneg %p168
        %p567 = pneg %p192
        %p568 = pneg %p189
        %p569 = pneg %p213
        %p570 = pneg %p210
        %p571 = pneg %p234
        %p572 = pneg %p231
        %p573 = pneg %p255
        %p574 = pneg %p252
        %p575 = pneg %p276
        %p576 = pneg %p273
        %p577 = pneg %p297
        %p578 = pneg %p294
        %p579 = pneg %p323
        %p580 = pneg %p320
        %s581 = smul.u32 14, %s24
        %p582 = scmp.lt.s32.totalorder %s581, 27
        %s583 = scalar_select %p582, %s581, 27
        %s584 = smul.addr %s583, 8
        %s585 = scalar_lea.vmem %s13, %s584
        %s586 = smul.u32 14, %s24
        %s587 = smul.u32 14, %s24
        %p588 = scmp.lt.s32.totalorder %s587, 27
        %s589 = scalar_select %p588, %s587, 27
        %s590 = smul.addr %s589, 8
        %s591 = scalar_lea.vmem %s13, %s590
        %s592 = smul.u32 14, %s24
        %594 = vst [vmem:[#allocation3] sm:$0xff] 0
        %595 = vst [vmem:[#allocation3 + $0x8] sm:$0xff] 0
        %596 = vst [vmem:[#allocation5 + $0x70] sm:$0xff] 0
        %597 = vst [vmem:[#allocation5 + $0x78] sm:$0xff] 0
        %598 = vst [vmem:[#allocation6 + $0x70] sm:$0xff] 0
        %599 = vst [vmem:[#allocation6 + $0x78] sm:$0xff] 0
        %v600 = vld [vmem:[%s545] sm:$0xf]
        %v601 = vld [vmem:[%s545 + $0x4] sm:$0xf]
        %v602 = vld [vmem:[%s545 + $0x8] sm:$0xf]
        %v603 = vld [vmem:[%s545 + $0xc] sm:$0xf]
        %v604 = vld [vmem:[%s545 + $0x10] sm:$0xf]
        %v605 = vld [vmem:[%s545 + $0x14] sm:$0xf]
        %v606 = vld [vmem:[%s545 + $0x18] sm:$0xf]
        %v607 = vld [vmem:[%s545 + $0x1c] sm:$0xf]
        %v608 = vld [vmem:[%s545 + $0x20] sm:$0xf]
        %v609 = vld [vmem:[%s545 + $0x24] sm:$0xf]
        %v610 = vld [vmem:[%s545 + $0x28] sm:$0xf]
        %v611 = vld [vmem:[%s545 + $0x2c] sm:$0xf]
        %v612 = vld [vmem:[%s545 + $0x30] sm:$0xf]
        %v613 = vld [vmem:[%s545 + $0x34] sm:$0xf]
        %v614 = vld [vmem:[%s1] sm:$0xff]
        %v615 = vld [vmem:[%s1 + $0x8] sm:$0xff]
        %v616 = vld [vmem:[%s1 + $0x10] sm:$0xff]
        %v617 = vld [vmem:[%s1 + $0x18] sm:$0xff]
        %v618 = vld [vmem:[%s1 + $0x20] sm:$0xff]
        %v619 = vld [vmem:[%s1 + $0x28] sm:$0xff]
        %v620 = vld [vmem:[%s1 + $0x30] sm:$0xff]
        %v621 = vld [vmem:[%s1 + $0x38] sm:$0xff]
        %v622 = vld [vmem:[%s1 + $0x40] sm:$0xff]
        %v623 = vld [vmem:[%s1 + $0x48] sm:$0xff]
        %v624 = vld [vmem:[%s1 + $0x50] sm:$0xff]
        %v625 = vld [vmem:[%s1 + $0x58] sm:$0xff]
        %v626 = vld [vmem:[%s1 + $0x60] sm:$0xff]
        %v627 = vld [vmem:[%s1 + $0x68] sm:$0xff]
        %v628 = vld [vmem:[%s1 + $0x70] sm:$0xff]
        %v629 = vld [vmem:[%s1 + $0x78] sm:$0xff]
        %v630 = vld [vmem:[%s2] sm:$0x3]
        %v632 = vlaneseq
        %v633 = vshrl.u32 %v632, 7
        %v634 = vsub.s32 0, %v633
        %v635 = vrot.slane %v630, %v634
        %v636 = vlaneseq
        %v637 = vshrl.u32 %v636, 7
        %v638 = vsub.s32 1, %v637
        %v639 = vrot.slane %v630, %v638
        %v656 = vunpack.c.l.b16 %v600
        %v657 = vunpack.c.l.b16 %v601
        %v658 = vunpack.c.l.b16 %v602
        %v659 = vunpack.c.l.b16 %v603
        %v660 = vunpack.c.l.b16 %v604
        %v661 = vunpack.c.l.b16 %v605
        %v662 = vunpack.c.l.b16 %v606
        %v663 = vunpack.c.l.b16 %v607
        %v664 = vunpack.c.l.b16 %v608
        %v665 = vunpack.c.l.b16 %v609
        %v666 = vunpack.c.l.b16 %v610
        %v667 = vunpack.c.l.b16 %v611
        %v668 = vunpack.c.l.b16 %v612
        %v669 = vunpack.c.l.b16 %v613
        %v670 = vpack.c.b16 %v657, %v656
        %v671 = vpack.c.b16 %v659, %v658
        %v672 = vpack.c.b16 %v661, %v660
        %v673 = vpack.c.b16 %v663, %v662
        %v674 = vpack.c.b16 %v665, %v664
        %v675 = vpack.c.b16 %v667, %v666
        %v676 = vpack.c.b16 %v669, %v668
        %v700 = vunpack.c.l.b16 %v614
        %v701 = vunpack.c.h.b16 %v614
        %v702 = vunpack.c.l.b16 %v615
        %v703 = vunpack.c.h.b16 %v615
        %v704 = vunpack.c.l.b16 %v616
        %v705 = vunpack.c.h.b16 %v616
        %v706 = vunpack.c.l.b16 %v617
        %v707 = vunpack.c.h.b16 %v617
        %v708 = vunpack.c.l.b16 %v618
        %v709 = vunpack.c.h.b16 %v618
        %v710 = vunpack.c.l.b16 %v619
        %v711 = vunpack.c.h.b16 %v619
        %v712 = vunpack.c.l.b16 %v620
        %v713 = vunpack.c.h.b16 %v620
        %v714 = vunpack.c.l.b16 %v621
        %v715 = vunpack.c.h.b16 %v621
        %v716 = vunpack.c.l.b16 %v622
        %v717 = vunpack.c.h.b16 %v622
        %v718 = vunpack.c.l.b16 %v623
        %v719 = vunpack.c.h.b16 %v623
        %v720 = vunpack.c.l.b16 %v624
        %v721 = vunpack.c.h.b16 %v624
        %v722 = vunpack.c.l.b16 %v625
        %v723 = vunpack.c.h.b16 %v625
        %v724 = vunpack.c.l.b16 %v626
        %v725 = vunpack.c.h.b16 %v626
        %v726 = vunpack.c.l.b16 %v627
        %v727 = vunpack.c.h.b16 %v627
        %v728 = vunpack.c.l.b16 %v628
        %v729 = vunpack.c.h.b16 %v628
        %v730 = vunpack.c.l.b16 %v629
        %v731 = vunpack.c.h.b16 %v629
        %v732 = vpack.c.b16 %v702, %v700
        %v733 = vpack.c.b16 %v703, %v701
        %v734 = vpack.c.b16 %v706, %v704
        %v735 = vpack.c.b16 %v707, %v705
        %v736 = vpack.c.b16 %v710, %v708
        %v737 = vpack.c.b16 %v711, %v709
        %v738 = vpack.c.b16 %v714, %v712
        %v739 = vpack.c.b16 %v715, %v713
        %v740 = vpack.c.b16 %v718, %v716
        %v741 = vpack.c.b16 %v719, %v717
        %v742 = vpack.c.b16 %v722, %v720
        %v743 = vpack.c.b16 %v723, %v721
        %v744 = vpack.c.b16 %v726, %v724
        %v745 = vpack.c.b16 %v727, %v725
        %v746 = vpack.c.b16 %v730, %v728
        %v747 = vpack.c.b16 %v731, %v729
        %764 = vmatprep.subr.bf16.mxu0 %v733
        %765 = vmatpush1.bf16.msra.mxu0 %v732
        %766 = vmatprep.subr.bf16.mxu0 %v735
        %767 = vmatpush1.bf16.msra.mxu0 %v734
        %768 = vmatprep.subr.bf16.mxu0 %v737
        %769 = vmatpush1.bf16.msra.mxu0 %v736
        %770 = vmatprep.subr.bf16.mxu0 %v739
        %771 = vmatpush1.bf16.msra.mxu0 %v738
        %772 = vmatprep.subr.bf16.mxu0 %v741
        %773 = vmatpush1.bf16.msra.mxu0 %v740
        %774 = vmatprep.subr.bf16.mxu0 %v743
        %775 = vmatpush1.bf16.msra.mxu0 %v742
        %776 = vmatprep.subr.bf16.mxu0 %v745
        %777 = vmatpush1.bf16.msra.mxu0 %v744
        %778 = vmatprep.subr.bf16.mxu0 %v747
        %779 = vmatpush1.bf16.msra.mxu0 %v746
        %780 = vmatprep.subr.bf16.mxu0 0
        %781 = vmatpush1.bf16.msra.mxu0 0
        %782 = vmatprep.subr.bf16.mxu0 0
        %783 = vmatpush1.bf16.msra.mxu0 0
        %784 = vmatprep.subr.bf16.mxu0 0
        %785 = vmatpush1.bf16.msra.mxu0 0
        %786 = vmatprep.subr.bf16.mxu0 0
        %787 = vmatpush1.bf16.msra.mxu0 0
        %788 = vmatprep.subr.bf16.mxu0 0
        %789 = vmatpush1.bf16.msra.mxu0 0
        %790 = vmatprep.subr.bf16.mxu0 0
        %791 = vmatpush1.bf16.msra.mxu0 0
        %792 = vmatprep.subr.bf16.mxu0 0
        %793 = vmatpush1.bf16.msra.mxu0 0
        %794 = vmatprep.subr.bf16.mxu0 0
        %795 = vmatpush1.bf16.msra.mxu0 0
        %796 = vmatprep.mubr.bf16.mxu0 0
        %797 = vmatmul.mubr.bf16.gmra.mrb[0].mxu0 %v670
        %v798 = vpop.f32.mrb[0].mxu0
        %v799 = vadd.f32 %v635, %v798
        %v800 = vpop.f32.mrb[0].mxu0
        %v801 = vadd.f32 %v639, %v800
        %v802 = vpop.f32.mrb[0].mxu0
        %v803 = vadd.f32 %v635, %v802
        %v804 = vpop.f32.mrb[0].mxu0
        %v805 = vadd.f32 %v639, %v804
        %806 = vmatprep.mubr.bf16.mxu0 0
        %807 = vmatmul.mubr.bf16.gmra.mrb[0].mxu0 %v671
        %v808 = vpop.f32.mrb[0].mxu0
        %v809 = vadd.f32 %v635, %v808
        %v810 = vpop.f32.mrb[0].mxu0
        %v811 = vadd.f32 %v639, %v810
        %v812 = vpop.f32.mrb[0].mxu0
        %v813 = vadd.f32 %v635, %v812
        %v814 = vpop.f32.mrb[0].mxu0
        %v815 = vadd.f32 %v639, %v814
        %816 = vmatprep.mubr.bf16.mxu0 0
        %817 = vmatmul.mubr.bf16.gmra.mrb[0].mxu0 %v672
        %v818 = vpop.f32.mrb[0].mxu0
        %v819 = vadd.f32 %v635, %v818
        %v820 = vpop.f32.mrb[0].mxu0
        %v821 = vadd.f32 %v639, %v820
        %v822 = vpop.f32.mrb[0].mxu0
        %v823 = vadd.f32 %v635, %v822
        %v824 = vpop.f32.mrb[0].mxu0
        %v825 = vadd.f32 %v639, %v824
        %826 = vmatprep.mubr.bf16.mxu0 0
        %827 = vmatmul.mubr.bf16.gmra.mrb[0].mxu0 %v673
        %v828 = vpop.f32.mrb[0].mxu0
        %v829 = vadd.f32 %v635, %v828
        %v830 = vpop.f32.mrb[0].mxu0
        %v831 = vadd.f32 %v639, %v830
        %v832 = vpop.f32.mrb[0].mxu0
        %v833 = vadd.f32 %v635, %v832
        %v834 = vpop.f32.mrb[0].mxu0
        %v835 = vadd.f32 %v639, %v834
        %836 = vmatprep.mubr.bf16.mxu0 0
        %837 = vmatmul.mubr.bf16.gmra.mrb[0].mxu0 %v674
        %v838 = vpop.f32.mrb[0].mxu0
        %v839 = vadd.f32 %v635, %v838
        %v840 = vpop.f32.mrb[0].mxu0
        %v841 = vadd.f32 %v639, %v840
        %v842 = vpop.f32.mrb[0].mxu0
        %v843 = vadd.f32 %v635, %v842
        %v844 = vpop.f32.mrb[0].mxu0
        %v845 = vadd.f32 %v639, %v844
        %846 = vmatprep.mubr.bf16.mxu0 0
        %847 = vmatmul.mubr.bf16.gmra.mrb[0].mxu0 %v675
        %v848 = vpop.f32.mrb[0].mxu0
        %v849 = vadd.f32 %v635, %v848
        %v850 = vpop.f32.mrb[0].mxu0
        %v851 = vadd.f32 %v639, %v850
        %v852 = vpop.f32.mrb[0].mxu0
        %v853 = vadd.f32 %v635, %v852
        %v854 = vpop.f32.mrb[0].mxu0
        %v855 = vadd.f32 %v639, %v854
        %856 = vmatprep.mubr.bf16.mxu0 0
        %857 = vmatmul.mubr.bf16.gmra.mrb[0].mxu0 %v676
        %v858 = vpop.f32.mrb[0].mxu0
        %v859 = vadd.f32 %v635, %v858
        %v860 = vpop.f32.mrb[0].mxu0
        %v861 = vadd.f32 %v639, %v860
        %v862 = vpop.f32.mrb[0].mxu0
        %v863 = vadd.f32 %v635, %v862
        %v864 = vpop.f32.mrb[0].mxu0
        %v865 = vadd.f32 %v639, %v864
        %866 = vdwg.mxu0
        %v867 = vmax.f32 %v799, 0.0
        %v868 = vmax.f32 %v801, 0.0
        %v869 = vmax.f32 %v803, 0.0
        %v870 = vmax.f32 %v805, 0.0
        %v871 = vmax.f32 %v809, 0.0
        %v872 = vmax.f32 %v811, 0.0
        %v873 = vmax.f32 %v813, 0.0
        %v874 = vmax.f32 %v815, 0.0
        %v875 = vmax.f32 %v819, 0.0
        %v876 = vmax.f32 %v821, 0.0
        %v877 = vmax.f32 %v823, 0.0
        %v878 = vmax.f32 %v825, 0.0
        %v879 = vmax.f32 %v829, 0.0
        %v880 = vmax.f32 %v831, 0.0
        %v881 = vmax.f32 %v833, 0.0
        %v882 = vmax.f32 %v835, 0.0
        %v883 = vmax.f32 %v839, 0.0
        %v884 = vmax.f32 %v841, 0.0
        %v885 = vmax.f32 %v843, 0.0
        %v886 = vmax.f32 %v845, 0.0
        %v887 = vmax.f32 %v849, 0.0
        %v888 = vmax.f32 %v851, 0.0
        %v889 = vmax.f32 %v853, 0.0
        %v890 = vmax.f32 %v855, 0.0
        %v891 = vmax.f32 %v859, 0.0
        %v892 = vmax.f32 %v861, 0.0
        %v893 = vmax.f32 %v863, 0.0
        %v894 = vmax.f32 %v865, 0.0
        %v895 = vpack.c.bf16 %v869, %v867
        %v896 = vpack.c.bf16 %v870, %v868
        %v897 = vpack.c.bf16 %v873, %v871
        %v898 = vpack.c.bf16 %v874, %v872
        %v899 = vpack.c.bf16 %v877, %v875
        %v900 = vpack.c.bf16 %v878, %v876
        %v901 = vpack.c.bf16 %v881, %v879
        %v902 = vpack.c.bf16 %v882, %v880
        %v903 = vpack.c.bf16 %v885, %v883
        %v904 = vpack.c.bf16 %v886, %v884
        %v905 = vpack.c.bf16 %v889, %v887
        %v906 = vpack.c.bf16 %v890, %v888
        %v907 = vpack.c.bf16 %v893, %v891
        %v908 = vpack.c.bf16 %v894, %v892
        %909 = vst [vmem:[#allocation2] sm:$0xff] %v895
        %910 = vst [vmem:[#allocation2 + $0x8] sm:$0xff] %v896
        %911 = vst [vmem:[#allocation2 + $0x10] sm:$0xff] %v897
        %912 = vst [vmem:[#allocation2 + $0x18] sm:$0xff] %v898
        %913 = vst [vmem:[#allocation2 + $0x20] sm:$0xff] %v899
        %914 = vst [vmem:[#allocation2 + $0x28] sm:$0xff] %v900
        %915 = vst [vmem:[#allocation2 + $0x30] sm:$0xff] %v901
        %916 = vst [vmem:[#allocation2 + $0x38] sm:$0xff] %v902
        %917 = vst [vmem:[#allocation2 + $0x40] sm:$0xff] %v903
        %918 = vst [vmem:[#allocation2 + $0x48] sm:$0xff] %v904
        %919 = vst [vmem:[#allocation2 + $0x50] sm:$0xff] %v905
        %920 = vst [vmem:[#allocation2 + $0x58] sm:$0xff] %v906
        %921 = vst [vmem:[#allocation2 + $0x60] sm:$0xff] %v907
        %922 = vst [vmem:[#allocation2 + $0x68] sm:$0xff] %v908
        %s923 = scalar_lea.vmem %s545, 56 [#allocation8]
        %v924 = vld [vmem:[%s923] sm:$0xf]
        %v925 = vld [vmem:[%s923 + $0x4] sm:$0xf]
        %v926 = vld [vmem:[%s923 + $0x8] sm:$0xf]
        %v927 = vld [vmem:[%s923 + $0xc] sm:$0xf]
        %v928 = vld [vmem:[%s923 + $0x10] sm:$0xf]
        %v929 = vld [vmem:[%s923 + $0x14] sm:$0xf]
        %v930 = vld [vmem:[%s923 + $0x18] sm:$0xf]
        %v931 = vld [vmem:[%s923 + $0x1c] sm:$0xf]
        %v932 = vld [vmem:[%s923 + $0x20] sm:$0xf]
        %v933 = vld [vmem:[%s923 + $0x24] sm:$0xf]
        %v934 = vld [vmem:[%s923 + $0x28] sm:$0xf]
        %v935 = vld [vmem:[%s923 + $0x2c] sm:$0xf]
        %v936 = vld [vmem:[%s923 + $0x30] sm:$0xf]
        %v937 = vld [vmem:[%s923 + $0x34] sm:$0xf]
        %v938 = vld [vmem:[%s1] sm:$0xff]
        %v939 = vld [vmem:[%s1 + $0x8] sm:$0xff]
        %v940 = vld [vmem:[%s1 + $0x10] sm:$0xff]
        %v941 = vld [vmem:[%s1 + $0x18] sm:$0xff]
        %v942 = vld [vmem:[%s1 + $0x20] sm:$0xff]
        %v943 = vld [vmem:[%s1 + $0x28] sm:$0xff]
        %v944 = vld [vmem:[%s1 + $0x30] sm:$0xff]
        %v945 = vld [vmem:[%s1 + $0x38] sm:$0xff]
        %v946 = vld [vmem:[%s1 + $0x40] sm:$0xff]
        %v947 = vld [vmem:[%s1 + $0x48] sm:$0xff]
        %v948 = vld [vmem:[%s1 + $0x50] sm:$0xff]
        %v949 = vld [vmem:[%s1 + $0x58] sm:$0xff]
        %v950 = vld [vmem:[%s1 + $0x60] sm:$0xff]
        %v951 = vld [vmem:[%s1 + $0x68] sm:$0xff]
        %v952 = vld [vmem:[%s1 + $0x70] sm:$0xff]
        %v953 = vld [vmem:[%s1 + $0x78] sm:$0xff]
        %v954 = vld [vmem:[%s2] sm:$0x3]
        %v956 = vlaneseq
        %v957 = vshrl.u32 %v956, 7
        %v958 = vsub.s32 0, %v957
        %v959 = vrot.slane %v954, %v958
        %v960 = vlaneseq
        %v961 = vshrl.u32 %v960, 7
        %v962 = vsub.s32 1, %v961
        %v963 = vrot.slane %v954, %v962
        %v980 = vunpack.c.l.b16 %v924
        %v981 = vunpack.c.l.b16 %v925
        %v982 = vunpack.c.l.b16 %v926
        %v983 = vunpack.c.l.b16 %v927
        %v984 = vunpack.c.l.b16 %v928
        %v985 = vunpack.c.l.b16 %v929
        %v986 = vunpack.c.l.b16 %v930
        %v987 = vunpack.c.l.b16 %v931
        %v988 = vunpack.c.l.b16 %v932
        %v989 = vunpack.c.l.b16 %v933
        %v990 = vunpack.c.l.b16 %v934
        %v991 = vunpack.c.l.b16 %v935
        %v992 = vunpack.c.l.b16 %v936
        %v993 = vunpack.c.l.b16 %v937
        %v994 = vpack.c.b16 %v981, %v980
        %v995 = vpack.c.b16 %v983, %v982
        %v996 = vpack.c.b16 %v985, %v984
        %v997 = vpack.c.b16 %v987, %v986
        %v998 = vpack.c.b16 %v989, %v988
        %v999 = vpack.c.b16 %v991, %v990
        %v1000 = vpack.c.b16 %v993, %v992
        %v1024 = vunpack.c.l.b16 %v938
        %v1025 = vunpack.c.h.b16 %v938
        %v1026 = vunpack.c.l.b16 %v939
        %v1027 = vunpack.c.h.b16 %v939
        %v1028 = vunpack.c.l.b16 %v940
        %v1029 = vunpack.c.h.b16 %v940
        %v1030 = vunpack.c.l.b16 %v941
        %v1031 = vunpack.c.h.b16 %v941
        %v1032 = vunpack.c.l.b16 %v942
        %v1033 = vunpack.c.h.b16 %v942
        %v1034 = vunpack.c.l.b16 %v943
        %v1035 = vunpack.c.h.b16 %v943
        %v1036 = vunpack.c.l.b16 %v944
        %v1037 = vunpack.c.h.b16 %v944
        %v1038 = vunpack.c.l.b16 %v945
        %v1039 = vunpack.c.h.b16 %v945
        %v1040 = vunpack.c.l.b16 %v946
        %v1041 = vunpack.c.h.b16 %v946
        %v1042 = vunpack.c.l.b16 %v947
        %v1043 = vunpack.c.h.b16 %v947
        %v1044 = vunpack.c.l.b16 %v948
        %v1045 = vunpack.c.h.b16 %v948
        %v1046 = vunpack.c.l.b16 %v949
        %v1047 = vunpack.c.h.b16 %v949
        %v1048 = vunpack.c.l.b16 %v950
        %v1049 = vunpack.c.h.b16 %v950
        %v1050 = vunpack.c.l.b16 %v951
        %v1051 = vunpack.c.h.b16 %v951
        %v1052 = vunpack.c.l.b16 %v952
        %v1053 = vunpack.c.h.b16 %v952
        %v1054 = vunpack.c.l.b16 %v953
        %v1055 = vunpack.c.h.b16 %v953
        %v1056 = vpack.c.b16 %v1026, %v1024
        %v1057 = vpack.c.b16 %v1027, %v1025
        %v1058 = vpack.c.b16 %v1030, %v1028
        %v1059 = vpack.c.b16 %v1031, %v1029
        %v1060 = vpack.c.b16 %v1034, %v1032
        %v1061 = vpack.c.b16 %v1035, %v1033
        %v1062 = vpack.c.b16 %v1038, %v1036
        %v1063 = vpack.c.b16 %v1039, %v1037
        %v1064 = vpack.c.b16 %v1042, %v1040
        %v1065 = vpack.c.b16 %v1043, %v1041
        %v1066 = vpack.c.b16 %v1046, %v1044
        %v1067 = vpack.c.b16 %v1047, %v1045
        %v1068 = vpack.c.b16 %v1050, %v1048
        %v1069 = vpack.c.b16 %v1051, %v1049
        %v1070 = vpack.c.b16 %v1054, %v1052
        %v1071 = vpack.c.b16 %v1055, %v1053
        %1088 = vmatprep.subr.bf16.mxu0 %v1057
        %1089 = vmatpush1.bf16.msra.mxu0 %v1056
        %1090 = vmatprep.subr.bf16.mxu0 %v1059
        %1091 = vmatpush1.bf16.msra.mxu0 %v1058
        %1092 = vmatprep.subr.bf16.mxu0 %v1061
        %1093 = vmatpush1.bf16.msra.mxu0 %v1060
        %1094 = vmatprep.subr.bf16.mxu0 %v1063
        %1095 = vmatpush1.bf16.msra.mxu0 %v1062
        %1096 = vmatprep.subr.bf16.mxu0 %v1065
        %1097 = vmatpush1.bf16.msra.mxu0 %v1064
        %1098 = vmatprep.subr.bf16.mxu0 %v1067
        %1099 = vmatpush1.bf16.msra.mxu0 %v1066
        %1100 = vmatprep.subr.bf16.mxu0 %v1069
        %1101 = vmatpush1.bf16.msra.mxu0 %v1068
        %1102 = vmatprep.subr.bf16.mxu0 %v1071
        %1103 = vmatpush1.bf16.msra.mxu0 %v1070
        %1104 = vmatprep.subr.bf16.mxu0 0
        %1105 = vmatpush1.bf16.msra.mxu0 0
        %1106 = vmatprep.subr.bf16.mxu0 0
        %1107 = vmatpush1.bf16.msra.mxu0 0
        %1108 = vmatprep.subr.bf16.mxu0 0
        %1109 = vmatpush1.bf16.msra.mxu0 0
        %1110 = vmatprep.subr.bf16.mxu0 0
        %1111 = vmatpush1.bf16.msra.mxu0 0
        %1112 = vmatprep.subr.bf16.mxu0 0
        %1113 = vmatpush1.bf16.msra.mxu0 0
        %1114 = vmatprep.subr.bf16.mxu0 0
        %1115 = vmatpush1.bf16.msra.mxu0 0
        %1116 = vmatprep.subr.bf16.mxu0 0
        %1117 = vmatpush1.bf16.msra.mxu0 0
        %1118 = vmatprep.subr.bf16.mxu0 0
        %1119 = vmatpush1.bf16.msra.mxu0 0
        %1120 = vmatprep.mubr.bf16.mxu0 0
        %1121 = vmatmul.mubr.bf16.gmra.mrb[0].mxu0 %v994
        %v1122 = vpop.f32.mrb[0].mxu0
        %v1123 = vadd.f32 %v959, %v1122
        %v1124 = vpop.f32.mrb[0].mxu0
        %v1125 = vadd.f32 %v963, %v1124
        %v1126 = vpop.f32.mrb[0].mxu0
        %v1127 = vadd.f32 %v959, %v1126
        %v1128 = vpop.f32.mrb[0].mxu0
        %v1129 = vadd.f32 %v963, %v1128
        %1130 = vmatprep.mubr.bf16.mxu0 0
        %1131 = vmatmul.mubr.bf16.gmra.mrb[0].mxu0 %v995
        %v1132 = vpop.f32.mrb[0].mxu0
        %v1133 = vadd.f32 %v959, %v1132
        %v1134 = vpop.f32.mrb[0].mxu0
        %v1135 = vadd.f32 %v963, %v1134
        %v1136 = vpop.f32.mrb[0].mxu0
        %v1137 = vadd.f32 %v959, %v1136
        %v1138 = vpop.f32.mrb[0].mxu0
        %v1139 = vadd.f32 %v963, %v1138
        %1140 = vmatprep.mubr.bf16.mxu0 0
        %1141 = vmatmul.mubr.bf16.gmra.mrb[0].mxu0 %v996
        %v1142 = vpop.f32.mrb[0].mxu0
        %v1143 = vadd.f32 %v959, %v1142
        %v1144 = vpop.f32.mrb[0].mxu0
        %v1145 = vadd.f32 %v963, %v1144
        %v1146 = vpop.f32.mrb[0].mxu0
        %v1147 = vadd.f32 %v959, %v1146
        %v1148 = vpop.f32.mrb[0].mxu0
        %v1149 = vadd.f32 %v963, %v1148
        %1150 = vmatprep.mubr.bf16.mxu0 0
        %1151 = vmatmul.mubr.bf16.gmra.mrb[0].mxu0 %v997
        %v1152 = vpop.f32.mrb[0].mxu0
        %v1153 = vadd.f32 %v959, %v1152
        %v1154 = vpop.f32.mrb[0].mxu0
        %v1155 = vadd.f32 %v963, %v1154
        %v1156 = vpop.f32.mrb[0].mxu0
        %v1157 = vadd.f32 %v959, %v1156
        %v1158 = vpop.f32.mrb[0].mxu0
        %v1159 = vadd.f32 %v963, %v1158
        %1160 = vmatprep.mubr.bf16.mxu0 0
        %1161 = vmatmul.mubr.bf16.gmra.mrb[0].mxu0 %v998
        %v1162 = vpop.f32.mrb[0].mxu0
        %v1163 = vadd.f32 %v959, %v1162
        %v1164 = vpop.f32.mrb[0].mxu0
        %v1165 = vadd.f32 %v963, %v1164
        %v1166 = vpop.f32.mrb[0].mxu0
        %v1167 = vadd.f32 %v959, %v1166
        %v1168 = vpop.f32.mrb[0].mxu0
        %v1169 = vadd.f32 %v963, %v1168
        %1170 = vmatprep.mubr.bf16.mxu0 0
        %1171 = vmatmul.mubr.bf16.gmra.mrb[0].mxu0 %v999
        %v1172 = vpop.f32.mrb[0].mxu0
        %v1173 = vadd.f32 %v959, %v1172
        %v1174 = vpop.f32.mrb[0].mxu0
        %v1175 = vadd.f32 %v963, %v1174
        %v1176 = vpop.f32.mrb[0].mxu0
        %v1177 = vadd.f32 %v959, %v1176
        %v1178 = vpop.f32.mrb[0].mxu0
        %v1179 = vadd.f32 %v963, %v1178
        %1180 = vmatprep.mubr.bf16.mxu0 0
        %1181 = vmatmul.mubr.bf16.gmra.mrb[0].mxu0 %v1000
        %v1182 = vpop.f32.mrb[0].mxu0
        %v1183 = vadd.f32 %v959, %v1182
        %v1184 = vpop.f32.mrb[0].mxu0
        %v1185 = vadd.f32 %v963, %v1184
        %v1186 = vpop.f32.mrb[0].mxu0
        %v1187 = vadd.f32 %v959, %v1186
        %v1188 = vpop.f32.mrb[0].mxu0
        %v1189 = vadd.f32 %v963, %v1188
        %1190 = vdwg.mxu0
        %v1191 = vmax.f32 %v1123, 0.0
        %v1192 = vmax.f32 %v1125, 0.0
        %v1193 = vmax.f32 %v1127, 0.0
        %v1194 = vmax.f32 %v1129, 0.0
        %v1195 = vmax.f32 %v1133, 0.0
        %v1196 = vmax.f32 %v1135, 0.0
        %v1197 = vmax.f32 %v1137, 0.0
        %v1198 = vmax.f32 %v1139, 0.0
        %v1199 = vmax.f32 %v1143, 0.0
        %v1200 = vmax.f32 %v1145, 0.0
        %v1201 = vmax.f32 %v1147, 0.0
        %v1202 = vmax.f32 %v1149, 0.0
        %v1203 = vmax.f32 %v1153, 0.0
        %v1204 = vmax.f32 %v1155, 0.0
        %v1205 = vmax.f32 %v1157, 0.0
        %v1206 = vmax.f32 %v1159, 0.0
        %v1207 = vmax.f32 %v1163, 0.0
        %v1208 = vmax.f32 %v1165, 0.0
        %v1209 = vmax.f32 %v1167, 0.0
        %v1210 = vmax.f32 %v1169, 0.0
        %v1211 = vmax.f32 %v1173, 0.0
        %v1212 = vmax.f32 %v1175, 0.0
        %v1213 = vmax.f32 %v1177, 0.0
        %v1214 = vmax.f32 %v1179, 0.0
        %v1215 = vmax.f32 %v1183, 0.0
        %v1216 = vmax.f32 %v1185, 0.0
        %v1217 = vmax.f32 %v1187, 0.0
        %v1218 = vmax.f32 %v1189, 0.0
        %v1219 = vpack.c.bf16 %v1193, %v1191
        %v1220 = vpack.c.bf16 %v1194, %v1192
        %v1221 = vpack.c.bf16 %v1197, %v1195
        %v1222 = vpack.c.bf16 %v1198, %v1196
        %v1223 = vpack.c.bf16 %v1201, %v1199
        %v1224 = vpack.c.bf16 %v1202, %v1200
        %v1225 = vpack.c.bf16 %v1205, %v1203
        %v1226 = vpack.c.bf16 %v1206, %v1204
        %v1227 = vpack.c.bf16 %v1209, %v1207
        %v1228 = vpack.c.bf16 %v1210, %v1208
        %v1229 = vpack.c.bf16 %v1213, %v1211
        %v1230 = vpack.c.bf16 %v1214, %v1212
        %v1231 = vpack.c.bf16 %v1217, %v1215
        %v1232 = vpack.c.bf16 %v1218, %v1216
        %1233 = vst [vmem:[#allocation3 + $0x10] sm:$0xff] %v1219
        %1234 = vst [vmem:[#allocation3 + $0x18] sm:$0xff] %v1220
        %1235 = vst [vmem:[#allocation3 + $0x20] sm:$0xff] %v1221
        %1236 = vst [vmem:[#allocation3 + $0x28] sm:$0xff] %v1222
        %1237 = vst [vmem:[#allocation3 + $0x30] sm:$0xff] %v1223
        %1238 = vst [vmem:[#allocation3 + $0x38] sm:$0xff] %v1224
        %1239 = vst [vmem:[#allocation3 + $0x40] sm:$0xff] %v1225
        %1240 = vst [vmem:[#allocation3 + $0x48] sm:$0xff] %v1226
        %1241 = vst [vmem:[#allocation3 + $0x50] sm:$0xff] %v1227
        %1242 = vst [vmem:[#allocation3 + $0x58] sm:$0xff] %v1228
        %1243 = vst [vmem:[#allocation3 + $0x60] sm:$0xff] %v1229
        %1244 = vst [vmem:[#allocation3 + $0x68] sm:$0xff] %v1230
        %1245 = vst [vmem:[#allocation3 + $0x70] sm:$0xff] %v1231
        %1246 = vst [vmem:[#allocation3 + $0x78] sm:$0xff] %v1232
        %v1247 = vld [vmem:[#allocation3] sm:$0xff]
        %v1248 = vld [vmem:[#allocation3 + $0x8] sm:$0xff]
        %v1249 = vld [vmem:[#allocation3 + $0x10] sm:$0xff]
        %v1250 = vld [vmem:[#allocation3 + $0x18] sm:$0xff]
        %v1251 = vld [vmem:[#allocation3 + $0x20] sm:$0xff]
        %v1252 = vld [vmem:[#allocation3 + $0x28] sm:$0xff]
        %v1253 = vld [vmem:[#allocation3 + $0x30] sm:$0xff]
        %v1254 = vld [vmem:[#allocation3 + $0x38] sm:$0xff]
        %v1255 = vld [vmem:[#allocation3 + $0x40] sm:$0xff]
        %v1256 = vld [vmem:[#allocation3 + $0x48] sm:$0xff]
        %v1257 = vld [vmem:[#allocation3 + $0x50] sm:$0xff]
        %v1258 = vld [vmem:[#allocation3 + $0x58] sm:$0xff]
        %v1259 = vld [vmem:[#allocation3 + $0x60] sm:$0xff]
        %v1260 = vld [vmem:[#allocation3 + $0x68] sm:$0xff]
        %v1261 = vld [vmem:[%s3] sm:$0xff]
        %v1262 = vld [vmem:[%s3 + $0x8] sm:$0xff]
        %v1263 = vld [vmem:[%s3 + $0x10] sm:$0xff]
        %v1264 = vld [vmem:[%s3 + $0x18] sm:$0xff]
        %v1265 = vld [vmem:[%s3 + $0x20] sm:$0xff]
        %v1266 = vld [vmem:[%s3 + $0x28] sm:$0xff]
        %v1267 = vld [vmem:[%s3 + $0x30] sm:$0xff]
        %v1268 = vld [vmem:[%s3 + $0x38] sm:$0xff]
        %v1269 = vld [vmem:[%s3 + $0x40] sm:$0xff]
        %v1270 = vld [vmem:[%s3 + $0x48] sm:$0xff]
        %v1271 = vld [vmem:[%s3 + $0x50] sm:$0xff]
        %v1272 = vld [vmem:[%s3 + $0x58] sm:$0xff]
        %v1273 = vld [vmem:[%s3 + $0x60] sm:$0xff]
        %v1274 = vld [vmem:[%s3 + $0x68] sm:$0xff]
        %v1275 = vld [vmem:[%s3 + $0x70] sm:$0xff]
        %v1276 = vld [vmem:[%s3 + $0x78] sm:$0xff]
        %v1277 = vld [vmem:[%s3 + $0x80] sm:$0xff]
        %v1278 = vld [vmem:[%s3 + $0x88] sm:$0xff]
        %v1279 = vld [vmem:[%s3 + $0x90] sm:$0xff]
        %v1280 = vld [vmem:[%s3 + $0x98] sm:$0xff]
        %v1281 = vld [vmem:[%s3 + $0xa0] sm:$0xff]
        %v1282 = vld [vmem:[%s3 + $0xa8] sm:$0xff]
        %v1283 = vld [vmem:[%s3 + $0xb0] sm:$0xff]
        %v1284 = vld [vmem:[%s3 + $0xb8] sm:$0xff]
        %v1285 = vld [vmem:[%s3 + $0xc0] sm:$0xff]
        %v1286 = vld [vmem:[%s3 + $0xc8] sm:$0xff]
        %v1287 = vld [vmem:[%s3 + $0xd0] sm:$0xff]
        %v1288 = vld [vmem:[%s3 + $0xd8] sm:$0xff]
        %v1289 = vld [vmem:[%s3 + $0xe0] sm:$0xff]
        %v1290 = vld [vmem:[%s3 + $0xe8] sm:$0xff]
        %v1291 = vld [vmem:[%s3 + $0xf0] sm:$0xff]
        %v1292 = vld [vmem:[%s3 + $0xf8] sm:$0xff]
        %v1293 = vld [vmem:[#allocation2] sm:$0xff]
        %v1294 = vld [vmem:[#allocation2 + $0x8] sm:$0xff]
        %v1295 = vld [vmem:[#allocation2 + $0x10] sm:$0xff]
        %v1296 = vld [vmem:[#allocation2 + $0x18] sm:$0xff]
        %v1297 = vld [vmem:[#allocation2 + $0x20] sm:$0xff]
        %v1298 = vld [vmem:[#allocation2 + $0x28] sm:$0xff]
        %v1299 = vld [vmem:[#allocation2 + $0x30] sm:$0xff]
        %v1300 = vld [vmem:[#allocation2 + $0x38] sm:$0xff]
        %v1301 = vld [vmem:[#allocation2 + $0x40] sm:$0xff]
        %v1302 = vld [vmem:[#allocation2 + $0x48] sm:$0xff]
        %v1303 = vld [vmem:[#allocation2 + $0x50] sm:$0xff]
        %v1304 = vld [vmem:[#allocation2 + $0x58] sm:$0xff]
        %v1305 = vld [vmem:[#allocation2 + $0x60] sm:$0xff]
        %v1306 = vld [vmem:[#allocation2 + $0x68] sm:$0xff]
        %s1307 = scalar_lea.vmem %s3, 256
        %v1308 = vld [vmem:[%s1307] sm:$0xff]
        %v1309 = vld [vmem:[%s1307 + $0x8] sm:$0xff]
        %v1310 = vld [vmem:[%s1307 + $0x10] sm:$0xff]
        %v1311 = vld [vmem:[%s1307 + $0x18] sm:$0xff]
        %v1312 = vld [vmem:[%s1307 + $0x20] sm:$0xff]
        %v1313 = vld [vmem:[%s1307 + $0x28] sm:$0xff]
        %v1314 = vld [vmem:[%s1307 + $0x30] sm:$0xff]
        %v1315 = vld [vmem:[%s1307 + $0x38] sm:$0xff]
        %v1316 = vld [vmem:[%s1307 + $0x40] sm:$0xff]
        %v1317 = vld [vmem:[%s1307 + $0x48] sm:$0xff]
        %v1318 = vld [vmem:[%s1307 + $0x50] sm:$0xff]
        %v1319 = vld [vmem:[%s1307 + $0x58] sm:$0xff]
        %v1320 = vld [vmem:[%s1307 + $0x60] sm:$0xff]
        %v1321 = vld [vmem:[%s1307 + $0x68] sm:$0xff]
        %v1322 = vld [vmem:[%s1307 + $0x70] sm:$0xff]
        %v1323 = vld [vmem:[%s1307 + $0x78] sm:$0xff]
        %v1324 = vld [vmem:[%s1307 + $0x80] sm:$0xff]
        %v1325 = vld [vmem:[%s1307 + $0x88] sm:$0xff]
        %v1326 = vld [vmem:[%s1307 + $0x90] sm:$0xff]
        %v1327 = vld [vmem:[%s1307 + $0x98] sm:$0xff]
        %v1328 = vld [vmem:[%s1307 + $0xa0] sm:$0xff]
        %v1329 = vld [vmem:[%s1307 + $0xa8] sm:$0xff]
        %v1330 = vld [vmem:[%s1307 + $0xb0] sm:$0xff]
        %v1331 = vld [vmem:[%s1307 + $0xb8] sm:$0xff]
        %v1332 = vld [vmem:[%s1307 + $0xc0] sm:$0xff]
        %v1333 = vld [vmem:[%s1307 + $0xc8] sm:$0xff]
        %v1334 = vld [vmem:[%s1307 + $0xd0] sm:$0xff]
        %v1335 = vld [vmem:[%s1307 + $0xd8] sm:$0xff]
        %v1336 = vld [vmem:[%s1307 + $0xe0] sm:$0xff]
        %v1337 = vld [vmem:[%s1307 + $0xe8] sm:$0xff]
        %v1338 = vld [vmem:[%s1307 + $0xf0] sm:$0xff]
        %v1339 = vld [vmem:[%s1307 + $0xf8] sm:$0xff]
        %v1372 = vunpack.c.l.b16 %v1308
        %v1373 = vunpack.c.h.b16 %v1308
        %v1374 = vunpack.c.l.b16 %v1309
        %v1375 = vunpack.c.h.b16 %v1309
        %v1376 = vunpack.c.l.b16 %v1310
        %v1377 = vunpack.c.h.b16 %v1310
        %v1378 = vunpack.c.l.b16 %v1311
        %v1379 = vunpack.c.h.b16 %v1311
        %v1380 = vunpack.c.l.b16 %v1312
        %v1381 = vunpack.c.h.b16 %v1312
        %v1382 = vunpack.c.l.b16 %v1313
        %v1383 = vunpack.c.h.b16 %v1313
        %v1384 = vunpack.c.l.b16 %v1314
        %v1385 = vunpack.c.h.b16 %v1314
        %v1386 = vunpack.c.l.b16 %v1315
        %v1387 = vunpack.c.h.b16 %v1315
        %v1388 = vunpack.c.l.b16 %v1316
        %v1389 = vunpack.c.h.b16 %v1316
        %v1390 = vunpack.c.l.b16 %v1317
        %v1391 = vunpack.c.h.b16 %v1317
        %v1392 = vunpack.c.l.b16 %v1318
        %v1393 = vunpack.c.h.b16 %v1318
        %v1394 = vunpack.c.l.b16 %v1319
        %v1395 = vunpack.c.h.b16 %v1319
        %v1396 = vunpack.c.l.b16 %v1320
        %v1397 = vunpack.c.h.b16 %v1320
        %v1398 = vunpack.c.l.b16 %v1321
        %v1399 = vunpack.c.h.b16 %v1321
        %v1400 = vunpack.c.l.b16 %v1322
        %v1401 = vunpack.c.h.b16 %v1322
        %v1402 = vunpack.c.l.b16 %v1323
        %v1403 = vunpack.c.h.b16 %v1323
        %v1404 = vunpack.c.l.b16 %v1324
        %v1405 = vunpack.c.h.b16 %v1324
        %v1406 = vunpack.c.l.b16 %v1325
        %v1407 = vunpack.c.h.b16 %v1325
        %v1408 = vunpack.c.l.b16 %v1326
        %v1409 = vunpack.c.h.b16 %v1326
        %v1410 = vunpack.c.l.b16 %v1327
        %v1411 = vunpack.c.h.b16 %v1327
        %v1412 = vunpack.c.l.b16 %v1328
        %v1413 = vunpack.c.h.b16 %v1328
        %v1414 = vunpack.c.l.b16 %v1329
        %v1415 = vunpack.c.h.b16 %v1329
        %v1416 = vunpack.c.l.b16 %v1330
        %v1417 = vunpack.c.h.b16 %v1330
        %v1418 = vunpack.c.l.b16 %v1331
        %v1419 = vunpack.c.h.b16 %v1331
        %v1420 = vunpack.c.l.b16 %v1332
        %v1421 = vunpack.c.h.b16 %v1332
        %v1422 = vunpack.c.l.b16 %v1333
        %v1423 = vunpack.c.h.b16 %v1333
        %v1424 = vunpack.c.l.b16 %v1334
        %v1425 = vunpack.c.h.b16 %v1334
        %v1426 = vunpack.c.l.b16 %v1335
        %v1427 = vunpack.c.h.b16 %v1335
        %v1428 = vunpack.c.l.b16 %v1336
        %v1429 = vunpack.c.h.b16 %v1336
        %v1430 = vunpack.c.l.b16 %v1337
        %v1431 = vunpack.c.h.b16 %v1337
        %v1432 = vunpack.c.l.b16 %v1338
        %v1433 = vunpack.c.h.b16 %v1338
        %v1434 = vunpack.c.l.b16 %v1339
        %v1435 = vunpack.c.h.b16 %v1339
        %v1436 = vpack.c.b16 %v1374, %v1372
        %v1437 = vpack.c.b16 %v1375, %v1373
        %v1438 = vpack.c.b16 %v1378, %v1376
        %v1439 = vpack.c.b16 %v1379, %v1377
        %v1440 = vpack.c.b16 %v1382, %v1380
        %v1441 = vpack.c.b16 %v1383, %v1381
        %v1442 = vpack.c.b16 %v1386, %v1384
        %v1443 = vpack.c.b16 %v1387, %v1385
        %v1444 = vpack.c.b16 %v1390, %v1388
        %v1445 = vpack.c.b16 %v1391, %v1389
        %v1446 = vpack.c.b16 %v1394, %v1392
        %v1447 = vpack.c.b16 %v1395, %v1393
        %v1448 = vpack.c.b16 %v1398, %v1396
        %v1449 = vpack.c.b16 %v1399, %v1397
        %v1450 = vpack.c.b16 %v1402, %v1400
        %v1451 = vpack.c.b16 %v1403, %v1401
        %v1452 = vpack.c.b16 %v1406, %v1404
        %v1453 = vpack.c.b16 %v1407, %v1405
        %v1454 = vpack.c.b16 %v1410, %v1408
        %v1455 = vpack.c.b16 %v1411, %v1409
        %v1456 = vpack.c.b16 %v1414, %v1412
        %v1457 = vpack.c.b16 %v1415, %v1413
        %v1458 = vpack.c.b16 %v1418, %v1416
        %v1459 = vpack.c.b16 %v1419, %v1417
        %v1460 = vpack.c.b16 %v1422, %v1420
        %v1461 = vpack.c.b16 %v1423, %v1421
        %v1462 = vpack.c.b16 %v1426, %v1424
        %v1463 = vpack.c.b16 %v1427, %v1425
        %v1464 = vpack.c.b16 %v1430, %v1428
        %v1465 = vpack.c.b16 %v1431, %v1429
        %v1466 = vpack.c.b16 %v1434, %v1432
        %v1467 = vpack.c.b16 %v1435, %v1433
        %1500 = vmatprep.subr.bf16.mxu0 %v1437
        %1501 = vmatpush1.bf16.msra.mxu0 %v1436
        %1502 = vmatprep.subr.bf16.mxu0 %v1439
        %1503 = vmatpush1.bf16.msra.mxu0 %v1438
        %1504 = vmatprep.subr.bf16.mxu0 %v1441
        %1505 = vmatpush1.bf16.msra.mxu0 %v1440
        %1506 = vmatprep.subr.bf16.mxu0 %v1443
        %1507 = vmatpush1.bf16.msra.mxu0 %v1442
        %1508 = vmatprep.subr.bf16.mxu0 %v1445
        %1509 = vmatpush1.bf16.msra.mxu0 %v1444
        %1510 = vmatprep.subr.bf16.mxu0 %v1447
        %1511 = vmatpush1.bf16.msra.mxu0 %v1446
        %1512 = vmatprep.subr.bf16.mxu0 %v1449
        %1513 = vmatpush1.bf16.msra.mxu0 %v1448
        %1514 = vmatprep.subr.bf16.mxu0 %v1451
        %1515 = vmatpush1.bf16.msra.mxu0 %v1450
        %1516 = vmatprep.subr.bf16.mxu0 %v1453
        %1517 = vmatpush1.bf16.msra.mxu0 %v1452
        %1518 = vmatprep.subr.bf16.mxu0 %v1455
        %1519 = vmatpush1.bf16.msra.mxu0 %v1454
        %1520 = vmatprep.subr.bf16.mxu0 %v1457
        %1521 = vmatpush1.bf16.msra.mxu0 %v1456
        %1522 = vmatprep.subr.bf16.mxu0 %v1459
        %1523 = vmatpush1.bf16.msra.mxu0 %v1458
        %1524 = vmatprep.subr.bf16.mxu0 %v1461
        %1525 = vmatpush1.bf16.msra.mxu0 %v1460
        %1526 = vmatprep.subr.bf16.mxu0 %v1463
        %1527 = vmatpush1.bf16.msra.mxu0 %v1462
        %1528 = vmatprep.subr.bf16.mxu0 %v1465
        %1529 = vmatpush1.bf16.msra.mxu0 %v1464
        %1530 = vmatprep.subr.bf16.mxu0 %v1467
        %1531 = vmatpush1.bf16.msra.mxu0 %v1466
        %1532 = vmatprep.mubr.bf16.mxu0 %v1294
        %1533 = vmatmul.mubr.bf16.gmra.mrb[0].mxu0 %v1293
        %v1534 = vpop.f32.mrb[0].mxu0
        %v1535 = vadd.f32 0.0, %v1534
        %v1536 = vpop.f32.mrb[0].mxu0
        %v1537 = vadd.f32 0.0, %v1536
        %v1538 = vpop.f32.mrb[0].mxu0
        %v1539 = vadd.f32 0.0, %v1538
        %v1540 = vpop.f32.mrb[0].mxu0
        %v1541 = vadd.f32 0.0, %v1540
        %1542 = vmatprep.mubr.bf16.mxu0 %v1296
        %1543 = vmatmul.mubr.bf16.gmra.mrb[0].mxu0 %v1295
        %v1544 = vpop.f32.mrb[0].mxu0
        %v1545 = vadd.f32 0.0, %v1544
        %v1546 = vpop.f32.mrb[0].mxu0
        %v1547 = vadd.f32 0.0, %v1546
        %v1548 = vpop.f32.mrb[0].mxu0
        %v1549 = vadd.f32 0.0, %v1548
        %v1550 = vpop.f32.mrb[0].mxu0
        %v1551 = vadd.f32 0.0, %v1550
        %1552 = vmatprep.mubr.bf16.mxu0 %v1298
        %1553 = vmatmul.mubr.bf16.gmra.mrb[0].mxu0 %v1297
        %v1554 = vpop.f32.mrb[0].mxu0
        %v1555 = vadd.f32 0.0, %v1554
        %v1556 = vpop.f32.mrb[0].mxu0
        %v1557 = vadd.f32 0.0, %v1556
        %v1558 = vpop.f32.mrb[0].mxu0
        %v1559 = vadd.f32 0.0, %v1558
        %v1560 = vpop.f32.mrb[0].mxu0
        %v1561 = vadd.f32 0.0, %v1560
        %1562 = vmatprep.mubr.bf16.mxu0 %v1300
        %1563 = vmatmul.mubr.bf16.gmra.mrb[0].mxu0 %v1299
        %v1564 = vpop.f32.mrb[0].mxu0
        %v1565 = vadd.f32 0.0, %v1564
        %v1566 = vpop.f32.mrb[0].mxu0
        %v1567 = vadd.f32 0.0, %v1566
        %v1568 = vpop.f32.mrb[0].mxu0
        %v1569 = vadd.f32 0.0, %v1568
        %v1570 = vpop.f32.mrb[0].mxu0
        %v1571 = vadd.f32 0.0, %v1570
        %1572 = vmatprep.mubr.bf16.mxu0 %v1302
        %1573 = vmatmul.mubr.bf16.gmra.mrb[0].mxu0 %v1301
        %v1574 = vpop.f32.mrb[0].mxu0
        %v1575 = vadd.f32 0.0, %v1574
        %v1576 = vpop.f32.mrb[0].mxu0
        %v1577 = vadd.f32 0.0, %v1576
        %v1578 = vpop.f32.mrb[0].mxu0
        %v1579 = vadd.f32 0.0, %v1578
        %v1580 = vpop.f32.mrb[0].mxu0
        %v1581 = vadd.f32 0.0, %v1580
        %1582 = vmatprep.mubr.bf16.mxu0 %v1304
        %1583 = vmatmul.mubr.bf16.gmra.mrb[0].mxu0 %v1303
        %v1584 = vpop.f32.mrb[0].mxu0
        %v1585 = vadd.f32 0.0, %v1584
        %v1586 = vpop.f32.mrb[0].mxu0
        %v1587 = vadd.f32 0.0, %v1586
        %v1588 = vpop.f32.mrb[0].mxu0
        %v1589 = vadd.f32 0.0, %v1588
        %v1590 = vpop.f32.mrb[0].mxu0
        %v1591 = vadd.f32 0.0, %v1590
        %1592 = vmatprep.mubr.bf16.mxu0 %v1306
        %1593 = vmatmul.mubr.bf16.gmra.mrb[0].mxu0 %v1305
        %v1594 = vpop.f32.mrb[0].mxu0
        %v1595 = vadd.f32 0.0, %v1594
        %v1596 = vpop.f32.mrb[0].mxu0
        %v1597 = vadd.f32 0.0, %v1596
        %v1598 = vpop.f32.mrb[0].mxu0
        %v1599 = vadd.f32 0.0, %v1598
        %v1600 = vpop.f32.mrb[0].mxu0
        %v1601 = vadd.f32 0.0, %v1600
        %1602 = vdwg.mxu0
        %v1635 = vunpack.c.l.b16 %v1261
        %v1636 = vunpack.c.h.b16 %v1261
        %v1637 = vunpack.c.l.b16 %v1262
        %v1638 = vunpack.c.h.b16 %v1262
        %v1639 = vunpack.c.l.b16 %v1263
        %v1640 = vunpack.c.h.b16 %v1263
        %v1641 = vunpack.c.l.b16 %v1264
        %v1642 = vunpack.c.h.b16 %v1264
        %v1643 = vunpack.c.l.b16 %v1265
        %v1644 = vunpack.c.h.b16 %v1265
        %v1645 = vunpack.c.l.b16 %v1266
        %v1646 = vunpack.c.h.b16 %v1266
        %v1647 = vunpack.c.l.b16 %v1267
        %v1648 = vunpack.c.h.b16 %v1267
        %v1649 = vunpack.c.l.b16 %v1268
        %v1650 = vunpack.c.h.b16 %v1268
        %v1651 = vunpack.c.l.b16 %v1269
        %v1652 = vunpack.c.h.b16 %v1269
        %v1653 = vunpack.c.l.b16 %v1270
        %v1654 = vunpack.c.h.b16 %v1270
        %v1655 = vunpack.c.l.b16 %v1271
        %v1656 = vunpack.c.h.b16 %v1271
        %v1657 = vunpack.c.l.b16 %v1272
        %v1658 = vunpack.c.h.b16 %v1272
        %v1659 = vunpack.c.l.b16 %v1273
        %v1660 = vunpack.c.h.b16 %v1273
        %v1661 = vunpack.c.l.b16 %v1274
        %v1662 = vunpack.c.h.b16 %v1274
        %v1663 = vunpack.c.l.b16 %v1275
        %v1664 = vunpack.c.h.b16 %v1275
        %v1665 = vunpack.c.l.b16 %v1276
        %v1666 = vunpack.c.h.b16 %v1276
        %v1667 = vunpack.c.l.b16 %v1277
        %v1668 = vunpack.c.h.b16 %v1277
        %v1669 = vunpack.c.l.b16 %v1278
        %v1670 = vunpack.c.h.b16 %v1278
        %v1671 = vunpack.c.l.b16 %v1279
        %v1672 = vunpack.c.h.b16 %v1279
        %v1673 = vunpack.c.l.b16 %v1280
        %v1674 = vunpack.c.h.b16 %v1280
        %v1675 = vunpack.c.l.b16 %v1281
        %v1676 = vunpack.c.h.b16 %v1281
        %v1677 = vunpack.c.l.b16 %v1282
        %v1678 = vunpack.c.h.b16 %v1282
        %v1679 = vunpack.c.l.b16 %v1283
        %v1680 = vunpack.c.h.b16 %v1283
        %v1681 = vunpack.c.l.b16 %v1284
        %v1682 = vunpack.c.h.b16 %v1284
        %v1683 = vunpack.c.l.b16 %v1285
        %v1684 = vunpack.c.h.b16 %v1285
        %v1685 = vunpack.c.l.b16 %v1286
        %v1686 = vunpack.c.h.b16 %v1286
        %v1687 = vunpack.c.l.b16 %v1287
        %v1688 = vunpack.c.h.b16 %v1287
        %v1689 = vunpack.c.l.b16 %v1288
        %v1690 = vunpack.c.h.b16 %v1288
        %v1691 = vunpack.c.l.b16 %v1289
        %v1692 = vunpack.c.h.b16 %v1289
        %v1693 = vunpack.c.l.b16 %v1290
        %v1694 = vunpack.c.h.b16 %v1290
        %v1695 = vunpack.c.l.b16 %v1291
        %v1696 = vunpack.c.h.b16 %v1291
        %v1697 = vunpack.c.l.b16 %v1292
        %v1698 = vunpack.c.h.b16 %v1292
        %v1699 = vpack.c.b16 %v1637, %v1635
        %v1700 = vpack.c.b16 %v1638, %v1636
        %v1701 = vpack.c.b16 %v1641, %v1639
        %v1702 = vpack.c.b16 %v1642, %v1640
        %v1703 = vpack.c.b16 %v1645, %v1643
        %v1704 = vpack.c.b16 %v1646, %v1644
        %v1705 = vpack.c.b16 %v1649, %v1647
        %v1706 = vpack.c.b16 %v1650, %v1648
        %v1707 = vpack.c.b16 %v1653, %v1651
        %v1708 = vpack.c.b16 %v1654, %v1652
        %v1709 = vpack.c.b16 %v1657, %v1655
        %v1710 = vpack.c.b16 %v1658, %v1656
        %v1711 = vpack.c.b16 %v1661, %v1659
        %v1712 = vpack.c.b16 %v1662, %v1660
        %v1713 = vpack.c.b16 %v1665, %v1663
        %v1714 = vpack.c.b16 %v1666, %v1664
        %v1715 = vpack.c.b16 %v1669, %v1667
        %v1716 = vpack.c.b16 %v1670, %v1668
        %v1717 = vpack.c.b16 %v1673, %v1671
        %v1718 = vpack.c.b16 %v1674, %v1672
        %v1719 = vpack.c.b16 %v1677, %v1675
        %v1720 = vpack.c.b16 %v1678, %v1676
        %v1721 = vpack.c.b16 %v1681, %v1679
        %v1722 = vpack.c.b16 %v1682, %v1680
        %v1723 = vpack.c.b16 %v1685, %v1683
        %v1724 = vpack.c.b16 %v1686, %v1684
        %v1725 = vpack.c.b16 %v1689, %v1687
        %v1726 = vpack.c.b16 %v1690, %v1688
        %v1727 = vpack.c.b16 %v1693, %v1691
        %v1728 = vpack.c.b16 %v1694, %v1692
        %v1729 = vpack.c.b16 %v1697, %v1695
        %v1730 = vpack.c.b16 %v1698, %v1696
        %1763 = vmatprep.subr.bf16.mxu0 %v1700
        %1764 = vmatpush1.bf16.msra.mxu0 %v1699
        %1765 = vmatprep.subr.bf16.mxu0 %v1702
        %1766 = vmatpush1.bf16.msra.mxu0 %v1701
        %1767 = vmatprep.subr.bf16.mxu0 %v1704
        %1768 = vmatpush1.bf16.msra.mxu0 %v1703
        %1769 = vmatprep.subr.bf16.mxu0 %v1706
        %1770 = vmatpush1.bf16.msra.mxu0 %v1705
        %1771 = vmatprep.subr.bf16.mxu0 %v1708
        %1772 = vmatpush1.bf16.msra.mxu0 %v1707
        %1773 = vmatprep.subr.bf16.mxu0 %v1710
        %1774 = vmatpush1.bf16.msra.mxu0 %v1709
        %1775 = vmatprep.subr.bf16.mxu0 %v1712
        %1776 = vmatpush1.bf16.msra.mxu0 %v1711
        %1777 = vmatprep.subr.bf16.mxu0 %v1714
        %1778 = vmatpush1.bf16.msra.mxu0 %v1713
        %1779 = vmatprep.subr.bf16.mxu0 %v1716
        %1780 = vmatpush1.bf16.msra.mxu0 %v1715
        %1781 = vmatprep.subr.bf16.mxu0 %v1718
        %1782 = vmatpush1.bf16.msra.mxu0 %v1717
        %1783 = vmatprep.subr.bf16.mxu0 %v1720
        %1784 = vmatpush1.bf16.msra.mxu0 %v1719
        %1785 = vmatprep.subr.bf16.mxu0 %v1722
        %1786 = vmatpush1.bf16.msra.mxu0 %v1721
        %1787 = vmatprep.subr.bf16.mxu0 %v1724
        %1788 = vmatpush1.bf16.msra.mxu0 %v1723
        %1789 = vmatprep.subr.bf16.mxu0 %v1726
        %1790 = vmatpush1.bf16.msra.mxu0 %v1725
        %1791 = vmatprep.subr.bf16.mxu0 %v1728
        %1792 = vmatpush1.bf16.msra.mxu0 %v1727
        %1793 = vmatprep.subr.bf16.mxu0 %v1730
        %1794 = vmatpush1.bf16.msra.mxu0 %v1729
        %1795 = vmatprep.mubr.bf16.mxu0 %v1248
        %1796 = vmatmul.mubr.bf16.gmra.mrb[0].mxu0 %v1247
        %v1797 = vpop.f32.mrb[0].mxu0
        %v1798 = vadd.f32 %v1535, %v1797
        %v1799 = vpop.f32.mrb[0].mxu0
        %v1800 = vadd.f32 %v1537, %v1799
        %v1801 = vpop.f32.mrb[0].mxu0
        %v1802 = vadd.f32 %v1539, %v1801
        %v1803 = vpop.f32.mrb[0].mxu0
        %v1804 = vadd.f32 %v1541, %v1803
        %1805 = vmatprep.mubr.bf16.mxu0 %v1250
        %1806 = vmatmul.mubr.bf16.gmra.mrb[0].mxu0 %v1249
        %v1807 = vpop.f32.mrb[0].mxu0
        %v1808 = vadd.f32 %v1545, %v1807
        %v1809 = vpop.f32.mrb[0].mxu0
        %v1810 = vadd.f32 %v1547, %v1809
        %v1811 = vpop.f32.mrb[0].mxu0
        %v1812 = vadd.f32 %v1549, %v1811
        %v1813 = vpop.f32.mrb[0].mxu0
        %v1814 = vadd.f32 %v1551, %v1813
        %1815 = vmatprep.mubr.bf16.mxu0 %v1252
        %1816 = vmatmul.mubr.bf16.gmra.mrb[0].mxu0 %v1251
        %v1817 = vpop.f32.mrb[0].mxu0
        %v1818 = vadd.f32 %v1555, %v1817
        %v1819 = vpop.f32.mrb[0].mxu0
        %v1820 = vadd.f32 %v1557, %v1819
        %v1821 = vpop.f32.mrb[0].mxu0
        %v1822 = vadd.f32 %v1559, %v1821
        %v1823 = vpop.f32.mrb[0].mxu0
        %v1824 = vadd.f32 %v1561, %v1823
        %1825 = vmatprep.mubr.bf16.mxu0 %v1254
        %1826 = vmatmul.mubr.bf16.gmra.mrb[0].mxu0 %v1253
        %v1827 = vpop.f32.mrb[0].mxu0
        %v1828 = vadd.f32 %v1565, %v1827
        %v1829 = vpop.f32.mrb[0].mxu0
        %v1830 = vadd.f32 %v1567, %v1829
        %v1831 = vpop.f32.mrb[0].mxu0
        %v1832 = vadd.f32 %v1569, %v1831
        %v1833 = vpop.f32.mrb[0].mxu0
        %v1834 = vadd.f32 %v1571, %v1833
        %1835 = vmatprep.mubr.bf16.mxu0 %v1256
        %1836 = vmatmul.mubr.bf16.gmra.mrb[0].mxu0 %v1255
        %v1837 = vpop.f32.mrb[0].mxu0
        %v1838 = vadd.f32 %v1575, %v1837
        %v1839 = vpop.f32.mrb[0].mxu0
        %v1840 = vadd.f32 %v1577, %v1839
        %v1841 = vpop.f32.mrb[0].mxu0
        %v1842 = vadd.f32 %v1579, %v1841
        %v1843 = vpop.f32.mrb[0].mxu0
        %v1844 = vadd.f32 %v1581, %v1843
        %1845 = vmatprep.mubr.bf16.mxu0 %v1258
        %1846 = vmatmul.mubr.bf16.gmra.mrb[0].mxu0 %v1257
        %v1847 = vpop.f32.mrb[0].mxu0
        %v1848 = vadd.f32 %v1585, %v1847
        %v1849 = vpop.f32.mrb[0].mxu0
        %v1850 = vadd.f32 %v1587, %v1849
        %v1851 = vpop.f32.mrb[0].mxu0
        %v1852 = vadd.f32 %v1589, %v1851
        %v1853 = vpop.f32.mrb[0].mxu0
        %v1854 = vadd.f32 %v1591, %v1853
        %1855 = vmatprep.mubr.bf16.mxu0 %v1260
        %1856 = vmatmul.mubr.bf16.gmra.mrb[0].mxu0 %v1259
        %v1857 = vpop.f32.mrb[0].mxu0
        %v1858 = vadd.f32 %v1595, %v1857
        %v1859 = vpop.f32.mrb[0].mxu0
        %v1860 = vadd.f32 %v1597, %v1859
        %v1861 = vpop.f32.mrb[0].mxu0
        %v1862 = vadd.f32 %v1599, %v1861
        %v1863 = vpop.f32.mrb[0].mxu0
        %v1864 = vadd.f32 %v1601, %v1863
        %1865 = vdwg.mxu0
        %v1866 = vld [vmem:[#allocation3 + $0x10] sm:$0xff]
        %v1867 = vld [vmem:[#allocation3 + $0x18] sm:$0xff]
        %v1868 = vld [vmem:[#allocation3 + $0x20] sm:$0xff]
        %v1869 = vld [vmem:[#allocation3 + $0x28] sm:$0xff]
        %v1870 = vld [vmem:[#allocation3 + $0x30] sm:$0xff]
        %v1871 = vld [vmem:[#allocation3 + $0x38] sm:$0xff]
        %v1872 = vld [vmem:[#allocation3 + $0x40] sm:$0xff]
        %v1873 = vld [vmem:[#allocation3 + $0x48] sm:$0xff]
        %v1874 = vld [vmem:[#allocation3 + $0x50] sm:$0xff]
        %v1875 = vld [vmem:[#allocation3 + $0x58] sm:$0xff]
        %v1876 = vld [vmem:[#allocation3 + $0x60] sm:$0xff]
        %v1877 = vld [vmem:[#allocation3 + $0x68] sm:$0xff]
        %v1878 = vld [vmem:[#allocation3 + $0x70] sm:$0xff]
        %v1879 = vld [vmem:[#allocation3 + $0x78] sm:$0xff]
        %s1880 = scalar_lea.vmem %s3, 512
        %v1881 = vld [vmem:[%s1880] sm:$0xff]
        %v1882 = vld [vmem:[%s1880 + $0x8] sm:$0xff]
        %v1883 = vld [vmem:[%s1880 + $0x10] sm:$0xff]
        %v1884 = vld [vmem:[%s1880 + $0x18] sm:$0xff]
        %v1885 = vld [vmem:[%s1880 + $0x20] sm:$0xff]
        %v1886 = vld [vmem:[%s1880 + $0x28] sm:$0xff]
        %v1887 = vld [vmem:[%s1880 + $0x30] sm:$0xff]
        %v1888 = vld [vmem:[%s1880 + $0x38] sm:$0xff]
        %v1889 = vld [vmem:[%s1880 + $0x40] sm:$0xff]
        %v1890 = vld [vmem:[%s1880 + $0x48] sm:$0xff]
        %v1891 = vld [vmem:[%s1880 + $0x50] sm:$0xff]
        %v1892 = vld [vmem:[%s1880 + $0x58] sm:$0xff]
        %v1893 = vld [vmem:[%s1880 + $0x60] sm:$0xff]
        %v1894 = vld [vmem:[%s1880 + $0x68] sm:$0xff]
        %v1895 = vld [vmem:[%s1880 + $0x70] sm:$0xff]
        %v1896 = vld [vmem:[%s1880 + $0x78] sm:$0xff]
        %v1897 = vld [vmem:[%s1880 + $0x80] sm:$0xff]
        %v1898 = vld [vmem:[%s1880 + $0x88] sm:$0xff]
        %v1899 = vld [vmem:[%s1880 + $0x90] sm:$0xff]
        %v1900 = vld [vmem:[%s1880 + $0x98] sm:$0xff]
        %v1901 = vld [vmem:[%s1880 + $0xa0] sm:$0xff]
        %v1902 = vld [vmem:[%s1880 + $0xa8] sm:$0xff]
        %v1903 = vld [vmem:[%s1880 + $0xb0] sm:$0xff]
        %v1904 = vld [vmem:[%s1880 + $0xb8] sm:$0xff]
        %v1905 = vld [vmem:[%s1880 + $0xc0] sm:$0xff]
        %v1906 = vld [vmem:[%s1880 + $0xc8] sm:$0xff]
        %v1907 = vld [vmem:[%s1880 + $0xd0] sm:$0xff]
        %v1908 = vld [vmem:[%s1880 + $0xd8] sm:$0xff]
        %v1909 = vld [vmem:[%s1880 + $0xe0] sm:$0xff]
        %v1910 = vld [vmem:[%s1880 + $0xe8] sm:$0xff]
        %v1911 = vld [vmem:[%s1880 + $0xf0] sm:$0xff]
        %v1912 = vld [vmem:[%s1880 + $0xf8] sm:$0xff]
        %v1945 = vunpack.c.l.b16 %v1881
        %v1946 = vunpack.c.h.b16 %v1881
        %v1947 = vunpack.c.l.b16 %v1882
        %v1948 = vunpack.c.h.b16 %v1882
        %v1949 = vunpack.c.l.b16 %v1883
        %v1950 = vunpack.c.h.b16 %v1883
        %v1951 = vunpack.c.l.b16 %v1884
        %v1952 = vunpack.c.h.b16 %v1884
        %v1953 = vunpack.c.l.b16 %v1885
        %v1954 = vunpack.c.h.b16 %v1885
        %v1955 = vunpack.c.l.b16 %v1886
        %v1956 = vunpack.c.h.b16 %v1886
        %v1957 = vunpack.c.l.b16 %v1887
        %v1958 = vunpack.c.h.b16 %v1887
        %v1959 = vunpack.c.l.b16 %v1888
        %v1960 = vunpack.c.h.b16 %v1888
        %v1961 = vunpack.c.l.b16 %v1889
        %v1962 = vunpack.c.h.b16 %v1889
        %v1963 = vunpack.c.l.b16 %v1890
        %v1964 = vunpack.c.h.b16 %v1890
        %v1965 = vunpack.c.l.b16 %v1891
        %v1966 = vunpack.c.h.b16 %v1891
        %v1967 = vunpack.c.l.b16 %v1892
        %v1968 = vunpack.c.h.b16 %v1892
        %v1969 = vunpack.c.l.b16 %v1893
        %v1970 = vunpack.c.h.b16 %v1893
        %v1971 = vunpack.c.l.b16 %v1894
        %v1972 = vunpack.c.h.b16 %v1894
        %v1973 = vunpack.c.l.b16 %v1895
        %v1974 = vunpack.c.h.b16 %v1895
        %v1975 = vunpack.c.l.b16 %v1896
        %v1976 = vunpack.c.h.b16 %v1896
        %v1977 = vunpack.c.l.b16 %v1897
        %v1978 = vunpack.c.h.b16 %v1897
        %v1979 = vunpack.c.l.b16 %v1898
        %v1980 = vunpack.c.h.b16 %v1898
        %v1981 = vunpack.c.l.b16 %v1899
        %v1982 = vunpack.c.h.b16 %v1899
        %v1983 = vunpack.c.l.b16 %v1900
        %v1984 = vunpack.c.h.b16 %v1900
        %v1985 = vunpack.c.l.b16 %v1901
        %v1986 = vunpack.c.h.b16 %v1901
        %v1987 = vunpack.c.l.b16 %v1902
        %v1988 = vunpack.c.h.b16 %v1902
        %v1989 = vunpack.c.l.b16 %v1903
        %v1990 = vunpack.c.h.b16 %v1903
        %v1991 = vunpack.c.l.b16 %v1904
        %v1992 = vunpack.c.h.b16 %v1904
        %v1993 = vunpack.c.l.b16 %v1905
        %v1994 = vunpack.c.h.b16 %v1905
        %v1995 = vunpack.c.l.b16 %v1906
        %v1996 = vunpack.c.h.b16 %v1906
        %v1997 = vunpack.c.l.b16 %v1907
        %v1998 = vunpack.c.h.b16 %v1907
        %v1999 = vunpack.c.l.b16 %v1908
        %v2000 = vunpack.c.h.b16 %v1908
        %v2001 = vunpack.c.l.b16 %v1909
        %v2002 = vunpack.c.h.b16 %v1909
        %v2003 = vunpack.c.l.b16 %v1910
        %v2004 = vunpack.c.h.b16 %v1910
        %v2005 = vunpack.c.l.b16 %v1911
        %v2006 = vunpack.c.h.b16 %v1911
        %v2007 = vunpack.c.l.b16 %v1912
        %v2008 = vunpack.c.h.b16 %v1912
        %v2009 = vpack.c.b16 %v1947, %v1945
        %v2010 = vpack.c.b16 %v1948, %v1946
        %v2011 = vpack.c.b16 %v1951, %v1949
        %v2012 = vpack.c.b16 %v1952, %v1950
        %v2013 = vpack.c.b16 %v1955, %v1953
        %v2014 = vpack.c.b16 %v1956, %v1954
        %v2015 = vpack.c.b16 %v1959, %v1957
        %v2016 = vpack.c.b16 %v1960, %v1958
        %v2017 = vpack.c.b16 %v1963, %v1961
        %v2018 = vpack.c.b16 %v1964, %v1962
        %v2019 = vpack.c.b16 %v1967, %v1965
        %v2020 = vpack.c.b16 %v1968, %v1966
        %v2021 = vpack.c.b16 %v1971, %v1969
        %v2022 = vpack.c.b16 %v1972, %v1970
        %v2023 = vpack.c.b16 %v1975, %v1973
        %v2024 = vpack.c.b16 %v1976, %v1974
        %v2025 = vpack.c.b16 %v1979, %v1977
        %v2026 = vpack.c.b16 %v1980, %v1978
        %v2027 = vpack.c.b16 %v1983, %v1981
        %v2028 = vpack.c.b16 %v1984, %v1982
        %v2029 = vpack.c.b16 %v1987, %v1985
        %v2030 = vpack.c.b16 %v1988, %v1986
        %v2031 = vpack.c.b16 %v1991, %v1989
        %v2032 = vpack.c.b16 %v1992, %v1990
        %v2033 = vpack.c.b16 %v1995, %v1993
        %v2034 = vpack.c.b16 %v1996, %v1994
        %v2035 = vpack.c.b16 %v1999, %v1997
        %v2036 = vpack.c.b16 %v2000, %v1998
        %v2037 = vpack.c.b16 %v2003, %v2001
        %v2038 = vpack.c.b16 %v2004, %v2002
        %v2039 = vpack.c.b16 %v2007, %v2005
        %v2040 = vpack.c.b16 %v2008, %v2006
        %2073 = vmatprep.subr.bf16.mxu0 %v2010
        %2074 = vmatpush1.bf16.msra.mxu0 %v2009
        %2075 = vmatprep.subr.bf16.mxu0 %v2012
        %2076 = vmatpush1.bf16.msra.mxu0 %v2011
        %2077 = vmatprep.subr.bf16.mxu0 %v2014
        %2078 = vmatpush1.bf16.msra.mxu0 %v2013
        %2079 = vmatprep.subr.bf16.mxu0 %v2016
        %2080 = vmatpush1.bf16.msra.mxu0 %v2015
        %2081 = vmatprep.subr.bf16.mxu0 %v2018
        %2082 = vmatpush1.bf16.msra.mxu0 %v2017
        %2083 = vmatprep.subr.bf16.mxu0 %v2020
        %2084 = vmatpush1.bf16.msra.mxu0 %v2019
        %2085 = vmatprep.subr.bf16.mxu0 %v2022
        %2086 = vmatpush1.bf16.msra.mxu0 %v2021
        %2087 = vmatprep.subr.bf16.mxu0 %v2024
        %2088 = vmatpush1.bf16.msra.mxu0 %v2023
        %2089 = vmatprep.subr.bf16.mxu0 %v2026
        %2090 = vmatpush1.bf16.msra.mxu0 %v2025
        %2091 = vmatprep.subr.bf16.mxu0 %v2028
        %2092 = vmatpush1.bf16.msra.mxu0 %v2027
        %2093 = vmatprep.subr.bf16.mxu0 %v2030
        %2094 = vmatpush1.bf16.msra.mxu0 %v2029
        %2095 = vmatprep.subr.bf16.mxu0 %v2032
        %2096 = vmatpush1.bf16.msra.mxu0 %v2031
        %2097 = vmatprep.subr.bf16.mxu0 %v2034
        %2098 = vmatpush1.bf16.msra.mxu0 %v2033
        %2099 = vmatprep.subr.bf16.mxu0 %v2036
        %2100 = vmatpush1.bf16.msra.mxu0 %v2035
        %2101 = vmatprep.subr.bf16.mxu0 %v2038
        %2102 = vmatpush1.bf16.msra.mxu0 %v2037
        %2103 = vmatprep.subr.bf16.mxu0 %v2040
        %2104 = vmatpush1.bf16.msra.mxu0 %v2039
        %2105 = vmatprep.mubr.bf16.mxu0 %v1867
        %2106 = vmatmul.mubr.bf16.gmra.mrb[0].mxu0 %v1866
        %v2107 = vpop.f32.mrb[0].mxu0
        %v2108 = vadd.f32 0.0, %v2107
        %v2109 = vpop.f32.mrb[0].mxu0
        %v2110 = vadd.f32 0.0, %v2109
        %v2111 = vpop.f32.mrb[0].mxu0
        %v2112 = vadd.f32 0.0, %v2111
        %v2113 = vpop.f32.mrb[0].mxu0
        %v2114 = vadd.f32 0.0, %v2113
        %2115 = vmatprep.mubr.bf16.mxu0 %v1869
        %2116 = vmatmul.mubr.bf16.gmra.mrb[0].mxu0 %v1868
        %v2117 = vpop.f32.mrb[0].mxu0
        %v2118 = vadd.f32 0.0, %v2117
        %v2119 = vpop.f32.mrb[0].mxu0
        %v2120 = vadd.f32 0.0, %v2119
        %v2121 = vpop.f32.mrb[0].mxu0
        %v2122 = vadd.f32 0.0, %v2121
        %v2123 = vpop.f32.mrb[0].mxu0
        %v2124 = vadd.f32 0.0, %v2123
        %2125 = vmatprep.mubr.bf16.mxu0 %v1871
        %2126 = vmatmul.mubr.bf16.gmra.mrb[0].mxu0 %v1870
        %v2127 = vpop.f32.mrb[0].mxu0
        %v2128 = vadd.f32 0.0, %v2127
        %v2129 = vpop.f32.mrb[0].mxu0
        %v2130 = vadd.f32 0.0, %v2129
        %v2131 = vpop.f32.mrb[0].mxu0
        %v2132 = vadd.f32 0.0, %v2131
        %v2133 = vpop.f32.mrb[0].mxu0
        %v2134 = vadd.f32 0.0, %v2133
        %2135 = vmatprep.mubr.bf16.mxu0 %v1873
        %2136 = vmatmul.mubr.bf16.gmra.mrb[0].mxu0 %v1872
        %v2137 = vpop.f32.mrb[0].mxu0
        %v2138 = vadd.f32 0.0, %v2137
        %v2139 = vpop.f32.mrb[0].mxu0
        %v2140 = vadd.f32 0.0, %v2139
        %v2141 = vpop.f32.mrb[0].mxu0
        %v2142 = vadd.f32 0.0, %v2141
        %v2143 = vpop.f32.mrb[0].mxu0
        %v2144 = vadd.f32 0.0, %v2143
        %2145 = vmatprep.mubr.bf16.mxu0 %v1875
        %2146 = vmatmul.mubr.bf16.gmra.mrb[0].mxu0 %v1874
        %v2147 = vpop.f32.mrb[0].mxu0
        %v2148 = vadd.f32 0.0, %v2147
        %v2149 = vpop.f32.mrb[0].mxu0
        %v2150 = vadd.f32 0.0, %v2149
        %v2151 = vpop.f32.mrb[0].mxu0
        %v2152 = vadd.f32 0.0, %v2151
        %v2153 = vpop.f32.mrb[0].mxu0
        %v2154 = vadd.f32 0.0, %v2153
        %2155 = vmatprep.mubr.bf16.mxu0 %v1877
        %2156 = vmatmul.mubr.bf16.gmra.mrb[0].mxu0 %v1876
        %v2157 = vpop.f32.mrb[0].mxu0
        %v2158 = vadd.f32 0.0, %v2157
        %v2159 = vpop.f32.mrb[0].mxu0
        %v2160 = vadd.f32 0.0, %v2159
        %v2161 = vpop.f32.mrb[0].mxu0
        %v2162 = vadd.f32 0.0, %v2161
        %v2163 = vpop.f32.mrb[0].mxu0
        %v2164 = vadd.f32 0.0, %v2163
        %2165 = vmatprep.mubr.bf16.mxu0 %v1879
        %2166 = vmatmul.mubr.bf16.gmra.mrb[0].mxu0 %v1878
        %v2167 = vpop.f32.mrb[0].mxu0
        %v2168 = vadd.f32 0.0, %v2167
        %v2169 = vpop.f32.mrb[0].mxu0
        %v2170 = vadd.f32 0.0, %v2169
        %v2171 = vpop.f32.mrb[0].mxu0
        %v2172 = vadd.f32 0.0, %v2171
        %v2173 = vpop.f32.mrb[0].mxu0
        %v2174 = vadd.f32 0.0, %v2173
        %2175 = vdwg.mxu0
        %v2176 = vadd.f32 %v1798, %v2108
        %v2177 = vadd.f32 %v1800, %v2110
        %v2178 = vadd.f32 %v1802, %v2112
        %v2179 = vadd.f32 %v1804, %v2114
        %v2180 = vadd.f32 %v1808, %v2118
        %v2181 = vadd.f32 %v1810, %v2120
        %v2182 = vadd.f32 %v1812, %v2122
        %v2183 = vadd.f32 %v1814, %v2124
        %v2184 = vadd.f32 %v1818, %v2128
        %v2185 = vadd.f32 %v1820, %v2130
        %v2186 = vadd.f32 %v1822, %v2132
        %v2187 = vadd.f32 %v1824, %v2134
        %v2188 = vadd.f32 %v1828, %v2138
        %v2189 = vadd.f32 %v1830, %v2140
        %v2190 = vadd.f32 %v1832, %v2142
        %v2191 = vadd.f32 %v1834, %v2144
        %v2192 = vadd.f32 %v1838, %v2148
        %v2193 = vadd.f32 %v1840, %v2150
        %v2194 = vadd.f32 %v1842, %v2152
        %v2195 = vadd.f32 %v1844, %v2154
        %v2196 = vadd.f32 %v1848, %v2158
        %v2197 = vadd.f32 %v1850, %v2160
        %v2198 = vadd.f32 %v1852, %v2162
        %v2199 = vadd.f32 %v1854, %v2164
        %v2200 = vadd.f32 %v1858, %v2168
        %v2201 = vadd.f32 %v1860, %v2170
        %v2202 = vadd.f32 %v1862, %v2172
        %v2203 = vadd.f32 %v1864, %v2174
        %v2204 = vld [vmem:[%s4] sm:$0x3]
        %v2206 = vlaneseq
        %v2207 = vshrl.u32 %v2206, 7
        %v2208 = vsub.s32 0, %v2207
        %v2209 = vrot.slane %v2204, %v2208
        %v2210 = vlaneseq
        %v2211 = vshrl.u32 %v2210, 7
        %v2212 = vsub.s32 1, %v2211
        %v2213 = vrot.slane %v2204, %v2212
        %v2216 = vadd.f32 %v2176, %v2209
        %v2217 = vadd.f32 %v2177, %v2213
        %v2218 = vadd.f32 %v2178, %v2209
        %v2219 = vadd.f32 %v2179, %v2213
        %v2220 = vadd.f32 %v2180, %v2209
        %v2221 = vadd.f32 %v2181, %v2213
        %v2222 = vadd.f32 %v2182, %v2209
        %v2223 = vadd.f32 %v2183, %v2213
        %v2224 = vadd.f32 %v2184, %v2209
        %v2225 = vadd.f32 %v2185, %v2213
        %v2226 = vadd.f32 %v2186, %v2209
        %v2227 = vadd.f32 %v2187, %v2213
        %v2228 = vadd.f32 %v2188, %v2209
        %v2229 = vadd.f32 %v2189, %v2213
        %v2230 = vadd.f32 %v2190, %v2209
        %v2231 = vadd.f32 %v2191, %v2213
        %v2232 = vadd.f32 %v2192, %v2209
        %v2233 = vadd.f32 %v2193, %v2213
        %v2234 = vadd.f32 %v2194, %v2209
        %v2235 = vadd.f32 %v2195, %v2213
        %v2236 = vadd.f32 %v2196, %v2209
        %v2237 = vadd.f32 %v2197, %v2213
        %v2238 = vadd.f32 %v2198, %v2209
        %v2239 = vadd.f32 %v2199, %v2213
        %v2240 = vadd.f32 %v2200, %v2209
        %v2241 = vadd.f32 %v2201, %v2213
        %v2242 = vadd.f32 %v2202, %v2209
        %v2243 = vadd.f32 %v2203, %v2213
        %v2244 = vmax.f32 %v2216, 0.0
        %v2245 = vmax.f32 %v2217, 0.0
        %v2246 = vmax.f32 %v2218, 0.0
        %v2247 = vmax.f32 %v2219, 0.0
        %v2248 = vmax.f32 %v2220, 0.0
        %v2249 = vmax.f32 %v2221, 0.0
        %v2250 = vmax.f32 %v2222, 0.0
        %v2251 = vmax.f32 %v2223, 0.0
        %v2252 = vmax.f32 %v2224, 0.0
        %v2253 = vmax.f32 %v2225, 0.0
        %v2254 = vmax.f32 %v2226, 0.0
        %v2255 = vmax.f32 %v2227, 0.0
        %v2256 = vmax.f32 %v2228, 0.0
        %v2257 = vmax.f32 %v2229, 0.0
        %v2258 = vmax.f32 %v2230, 0.0
        %v2259 = vmax.f32 %v2231, 0.0
        %v2260 = vmax.f32 %v2232, 0.0
        %v2261 = vmax.f32 %v2233, 0.0
        %v2262 = vmax.f32 %v2234, 0.0
        %v2263 = vmax.f32 %v2235, 0.0
        %v2264 = vmax.f32 %v2236, 0.0
        %v2265 = vmax.f32 %v2237, 0.0
        %v2266 = vmax.f32 %v2238, 0.0
        %v2267 = vmax.f32 %v2239, 0.0
        %v2268 = vmax.f32 %v2240, 0.0
        %v2269 = vmax.f32 %v2241, 0.0
        %v2270 = vmax.f32 %v2242, 0.0
        %v2271 = vmax.f32 %v2243, 0.0
        %v2272 = vpack.c.bf16 %v2246, %v2244
        %v2273 = vpack.c.bf16 %v2247, %v2245
        %v2274 = vpack.c.bf16 %v2250, %v2248
        %v2275 = vpack.c.bf16 %v2251, %v2249
        %v2276 = vpack.c.bf16 %v2254, %v2252
        %v2277 = vpack.c.bf16 %v2255, %v2253
        %v2278 = vpack.c.bf16 %v2258, %v2256
        %v2279 = vpack.c.bf16 %v2259, %v2257
        %v2280 = vpack.c.bf16 %v2262, %v2260
        %v2281 = vpack.c.bf16 %v2263, %v2261
        %v2282 = vpack.c.bf16 %v2266, %v2264
        %v2283 = vpack.c.bf16 %v2267, %v2265
        %v2284 = vpack.c.bf16 %v2270, %v2268
        %v2285 = vpack.c.bf16 %v2271, %v2269
        %2286 = vst [vmem:[#allocation4] sm:$0xff] %v2272
        %2287 = vst [vmem:[#allocation4 + $0x8] sm:$0xff] %v2273
        %2288 = vst [vmem:[#allocation4 + $0x10] sm:$0xff] %v2274
        %2289 = vst [vmem:[#allocation4 + $0x18] sm:$0xff] %v2275
        %2290 = vst [vmem:[#allocation4 + $0x20] sm:$0xff] %v2276
        %2291 = vst [vmem:[#allocation4 + $0x28] sm:$0xff] %v2277
        %2292 = vst [vmem:[#allocation4 + $0x30] sm:$0xff] %v2278
        %2293 = vst [vmem:[#allocation4 + $0x38] sm:$0xff] %v2279
        %2294 = vst [vmem:[#allocation4 + $0x40] sm:$0xff] %v2280
        %2295 = vst [vmem:[#allocation4 + $0x48] sm:$0xff] %v2281
        %2296 = vst [vmem:[#allocation4 + $0x50] sm:$0xff] %v2282
        %2297 = vst [vmem:[#allocation4 + $0x58] sm:$0xff] %v2283
        %2298 = vst [vmem:[#allocation4 + $0x60] sm:$0xff] %v2284
        %2299 = vst [vmem:[#allocation4 + $0x68] sm:$0xff] %v2285
        %v2300 = vld [vmem:[#allocation4] sm:$0xff]
        %v2301 = vld [vmem:[#allocation4 + $0x8] sm:$0xff]
        %v2302 = vld [vmem:[%s5] sm:$0xf]
        %v2303 = vld [vmem:[%s5 + $0x4] sm:$0xf]
        %v2304 = vld [vmem:[%s5 + $0x8] sm:$0xf]
        %v2305 = vld [vmem:[%s5 + $0xc] sm:$0xf]
        %v2306 = vld [vmem:[%s5 + $0x10] sm:$0xf]
        %v2307 = vld [vmem:[%s5 + $0x14] sm:$0xf]
        %v2308 = vld [vmem:[%s5 + $0x18] sm:$0xf]
        %v2309 = vld [vmem:[%s5 + $0x1c] sm:$0xf]
        %v2310 = vld [vmem:[%s5 + $0x20] sm:$0xf]
        %v2311 = vld [vmem:[%s5 + $0x24] sm:$0xf]
        %v2312 = vld [vmem:[%s5 + $0x28] sm:$0xf]
        %v2313 = vld [vmem:[%s5 + $0x2c] sm:$0xf]
        %v2314 = vld [vmem:[%s5 + $0x30] sm:$0xf]
        %v2315 = vld [vmem:[%s5 + $0x34] sm:$0xf]
        %v2316 = vld [vmem:[%s5 + $0x38] sm:$0xf]
        %v2317 = vld [vmem:[%s5 + $0x3c] sm:$0xf]
        %v2318 = vld [vmem:[%s5 + $0x40] sm:$0xf]
        %v2319 = vld [vmem:[%s5 + $0x44] sm:$0xf]
        %v2320 = vld [vmem:[%s5 + $0x48] sm:$0xf]
        %v2321 = vld [vmem:[%s5 + $0x4c] sm:$0xf]
        %v2322 = vld [vmem:[%s5 + $0x50] sm:$0xf]
        %v2323 = vld [vmem:[%s5 + $0x54] sm:$0xf]
        %v2324 = vld [vmem:[%s5 + $0x58] sm:$0xf]
        %v2325 = vld [vmem:[%s5 + $0x5c] sm:$0xf]
        %v2326 = vld [vmem:[%s5 + $0x60] sm:$0xf]
        %v2327 = vld [vmem:[%s5 + $0x64] sm:$0xf]
        %v2328 = vld [vmem:[%s5 + $0x68] sm:$0xf]
        %v2329 = vld [vmem:[%s5 + $0x6c] sm:$0xf]
        %v2330 = vld [vmem:[%s5 + $0x70] sm:$0xf]
        %v2331 = vld [vmem:[%s5 + $0x74] sm:$0xf]
        %v2332 = vld [vmem:[%s5 + $0x78] sm:$0xf]
        %v2333 = vld [vmem:[%s5 + $0x7c] sm:$0xf]
        %v2334 = vld [vmem:[#allocation4 + $0x10] sm:$0xff]
        %v2335 = vld [vmem:[#allocation4 + $0x18] sm:$0xff]
        %s2336 = scalar_lea.vmem %s5, 128
        %v2337 = vld [vmem:[%s2336] sm:$0xf]
        %v2338 = vld [vmem:[%s2336 + $0x4] sm:$0xf]
        %v2339 = vld [vmem:[%s2336 + $0x8] sm:$0xf]
        %v2340 = vld [vmem:[%s2336 + $0xc] sm:$0xf]
        %v2341 = vld [vmem:[%s2336 + $0x10] sm:$0xf]
        %v2342 = vld [vmem:[%s2336 + $0x14] sm:$0xf]
        %v2343 = vld [vmem:[%s2336 + $0x18] sm:$0xf]
        %v2344 = vld [vmem:[%s2336 + $0x1c] sm:$0xf]
        %v2345 = vld [vmem:[%s2336 + $0x20] sm:$0xf]
        %v2346 = vld [vmem:[%s2336 + $0x24] sm:$0xf]
        %v2347 = vld [vmem:[%s2336 + $0x28] sm:$0xf]
        %v2348 = vld [vmem:[%s2336 + $0x2c] sm:$0xf]
        %v2349 = vld [vmem:[%s2336 + $0x30] sm:$0xf]
        %v2350 = vld [vmem:[%s2336 + $0x34] sm:$0xf]
        %v2351 = vld [vmem:[%s2336 + $0x38] sm:$0xf]
        %v2352 = vld [vmem:[%s2336 + $0x3c] sm:$0xf]
        %v2353 = vld [vmem:[%s2336 + $0x40] sm:$0xf]
        %v2354 = vld [vmem:[%s2336 + $0x44] sm:$0xf]
        %v2355 = vld [vmem:[%s2336 + $0x48] sm:$0xf]
        %v2356 = vld [vmem:[%s2336 + $0x4c] sm:$0xf]
        %v2357 = vld [vmem:[%s2336 + $0x50] sm:$0xf]
        %v2358 = vld [vmem:[%s2336 + $0x54] sm:$0xf]
        %v2359 = vld [vmem:[%s2336 + $0x58] sm:$0xf]
        %v2360 = vld [vmem:[%s2336 + $0x5c] sm:$0xf]
        %v2361 = vld [vmem:[%s2336 + $0x60] sm:$0xf]
        %v2362 = vld [vmem:[%s2336 + $0x64] sm:$0xf]
        %v2363 = vld [vmem:[%s2336 + $0x68] sm:$0xf]
        %v2364 = vld [vmem:[%s2336 + $0x6c] sm:$0xf]
        %v2365 = vld [vmem:[%s2336 + $0x70] sm:$0xf]
        %v2366 = vld [vmem:[%s2336 + $0x74] sm:$0xf]
        %v2367 = vld [vmem:[%s2336 + $0x78] sm:$0xf]
        %v2368 = vld [vmem:[%s2336 + $0x7c] sm:$0xf]
        %v2401 = vunpack.c.l.b16 %v2337
        %v2402 = vunpack.c.l.b16 %v2338
        %v2403 = vunpack.c.l.b16 %v2339
        %v2404 = vunpack.c.l.b16 %v2340
        %v2405 = vunpack.c.l.b16 %v2341
        %v2406 = vunpack.c.l.b16 %v2342
        %v2407 = vunpack.c.l.b16 %v2343
        %v2408 = vunpack.c.l.b16 %v2344
        %v2409 = vunpack.c.l.b16 %v2345
        %v2410 = vunpack.c.l.b16 %v2346
        %v2411 = vunpack.c.l.b16 %v2347
        %v2412 = vunpack.c.l.b16 %v2348
        %v2413 = vunpack.c.l.b16 %v2349
        %v2414 = vunpack.c.l.b16 %v2350
        %v2415 = vunpack.c.l.b16 %v2351
        %v2416 = vunpack.c.l.b16 %v2352
        %v2417 = vunpack.c.l.b16 %v2353
        %v2418 = vunpack.c.l.b16 %v2354
        %v2419 = vunpack.c.l.b16 %v2355
        %v2420 = vunpack.c.l.b16 %v2356
        %v2421 = vunpack.c.l.b16 %v2357
        %v2422 = vunpack.c.l.b16 %v2358
        %v2423 = vunpack.c.l.b16 %v2359
        %v2424 = vunpack.c.l.b16 %v2360
        %v2425 = vunpack.c.l.b16 %v2361
        %v2426 = vunpack.c.l.b16 %v2362
        %v2427 = vunpack.c.l.b16 %v2363
        %v2428 = vunpack.c.l.b16 %v2364
        %v2429 = vunpack.c.l.b16 %v2365
        %v2430 = vunpack.c.l.b16 %v2366
        %v2431 = vunpack.c.l.b16 %v2367
        %v2432 = vunpack.c.l.b16 %v2368
        %v2433 = vpack.c.b16 %v2402, %v2401
        %v2434 = vpack.c.b16 %v2404, %v2403
        %v2435 = vpack.c.b16 %v2406, %v2405
        %v2436 = vpack.c.b16 %v2408, %v2407
        %v2437 = vpack.c.b16 %v2410, %v2409
        %v2438 = vpack.c.b16 %v2412, %v2411
        %v2439 = vpack.c.b16 %v2414, %v2413
        %v2440 = vpack.c.b16 %v2416, %v2415
        %v2441 = vpack.c.b16 %v2418, %v2417
        %v2442 = vpack.c.b16 %v2420, %v2419
        %v2443 = vpack.c.b16 %v2422, %v2421
        %v2444 = vpack.c.b16 %v2424, %v2423
        %v2445 = vpack.c.b16 %v2426, %v2425
        %v2446 = vpack.c.b16 %v2428, %v2427
        %v2447 = vpack.c.b16 %v2430, %v2429
        %v2448 = vpack.c.b16 %v2432, %v2431
        %2465 = vmatprep.subr.bf16.mxu0 0
        %2466 = vmatpush1.bf16.msra.mxu0 %v2433
        %2467 = vmatprep.subr.bf16.mxu0 0
        %2468 = vmatpush1.bf16.msra.mxu0 %v2434
        %2469 = vmatprep.subr.bf16.mxu0 0
        %2470 = vmatpush1.bf16.msra.mxu0 %v2435
        %2471 = vmatprep.subr.bf16.mxu0 0
        %2472 = vmatpush1.bf16.msra.mxu0 %v2436
        %2473 = vmatprep.subr.bf16.mxu0 0
        %2474 = vmatpush1.bf16.msra.mxu0 %v2437
        %2475 = vmatprep.subr.bf16.mxu0 0
        %2476 = vmatpush1.bf16.msra.mxu0 %v2438
        %2477 = vmatprep.subr.bf16.mxu0 0
        %2478 = vmatpush1.bf16.msra.mxu0 %v2439
        %2479 = vmatprep.subr.bf16.mxu0 0
        %2480 = vmatpush1.bf16.msra.mxu0 %v2440
        %2481 = vmatprep.subr.bf16.mxu0 0
        %2482 = vmatpush1.bf16.msra.mxu0 %v2441
        %2483 = vmatprep.subr.bf16.mxu0 0
        %2484 = vmatpush1.bf16.msra.mxu0 %v2442
        %2485 = vmatprep.subr.bf16.mxu0 0
        %2486 = vmatpush1.bf16.msra.mxu0 %v2443
        %2487 = vmatprep.subr.bf16.mxu0 0
        %2488 = vmatpush1.bf16.msra.mxu0 %v2444
        %2489 = vmatprep.subr.bf16.mxu0 0
        %2490 = vmatpush1.bf16.msra.mxu0 %v2445
        %2491 = vmatprep.subr.bf16.mxu0 0
        %2492 = vmatpush1.bf16.msra.mxu0 %v2446
        %2493 = vmatprep.subr.bf16.mxu0 0
        %2494 = vmatpush1.bf16.msra.mxu0 %v2447
        %2495 = vmatprep.subr.bf16.mxu0 0
        %2496 = vmatpush1.bf16.msra.mxu0 %v2448
        %2497 = vmatprep.mubr.bf16.mxu0 %v2335
        %2498 = vmatmul.mubr.bf16.gmra.mrb[0].mxu0 %v2334
        %v2499 = vpop.f32.mrb[0].mxu0
        %v2500 = vadd.f32 0.0, %v2499
        %v2501 = vpop.f32.mrb[0].mxu0
        %v2502 = vpop.f32.mrb[0].mxu0
        %v2503 = vadd.f32 0.0, %v2502
        %v2504 = vpop.f32.mrb[0].mxu0
        %2505 = vdwg.mxu0
        %v2538 = vunpack.c.l.b16 %v2302
        %v2539 = vunpack.c.l.b16 %v2303
        %v2540 = vunpack.c.l.b16 %v2304
        %v2541 = vunpack.c.l.b16 %v2305
        %v2542 = vunpack.c.l.b16 %v2306
        %v2543 = vunpack.c.l.b16 %v2307
        %v2544 = vunpack.c.l.b16 %v2308
        %v2545 = vunpack.c.l.b16 %v2309
        %v2546 = vunpack.c.l.b16 %v2310
        %v2547 = vunpack.c.l.b16 %v2311
        %v2548 = vunpack.c.l.b16 %v2312
        %v2549 = vunpack.c.l.b16 %v2313
        %v2550 = vunpack.c.l.b16 %v2314
        %v2551 = vunpack.c.l.b16 %v2315
        %v2552 = vunpack.c.l.b16 %v2316
        %v2553 = vunpack.c.l.b16 %v2317
        %v2554 = vunpack.c.l.b16 %v2318
        %v2555 = vunpack.c.l.b16 %v2319
        %v2556 = vunpack.c.l.b16 %v2320
        %v2557 = vunpack.c.l.b16 %v2321
        %v2558 = vunpack.c.l.b16 %v2322
        %v2559 = vunpack.c.l.b16 %v2323
        %v2560 = vunpack.c.l.b16 %v2324
        %v2561 = vunpack.c.l.b16 %v2325
        %v2562 = vunpack.c.l.b16 %v2326
        %v2563 = vunpack.c.l.b16 %v2327
        %v2564 = vunpack.c.l.b16 %v2328
        %v2565 = vunpack.c.l.b16 %v2329
        %v2566 = vunpack.c.l.b16 %v2330
        %v2567 = vunpack.c.l.b16 %v2331
        %v2568 = vunpack.c.l.b16 %v2332
        %v2569 = vunpack.c.l.b16 %v2333
        %v2570 = vpack.c.b16 %v2539, %v2538
        %v2571 = vpack.c.b16 %v2541, %v2540
        %v2572 = vpack.c.b16 %v2543, %v2542
        %v2573 = vpack.c.b16 %v2545, %v2544
        %v2574 = vpack.c.b16 %v2547, %v2546
        %v2575 = vpack.c.b16 %v2549, %v2548
        %v2576 = vpack.c.b16 %v2551, %v2550
        %v2577 = vpack.c.b16 %v2553, %v2552
        %v2578 = vpack.c.b16 %v2555, %v2554
        %v2579 = vpack.c.b16 %v2557, %v2556
        %v2580 = vpack.c.b16 %v2559, %v2558
        %v2581 = vpack.c.b16 %v2561, %v2560
        %v2582 = vpack.c.b16 %v2563, %v2562
        %v2583 = vpack.c.b16 %v2565, %v2564
        %v2584 = vpack.c.b16 %v2567, %v2566
        %v2585 = vpack.c.b16 %v2569, %v2568
        %2602 = vmatprep.subr.bf16.mxu0 0
        %2603 = vmatpush1.bf16.msra.mxu0 %v2570
        %2604 = vmatprep.subr.bf16.mxu0 0
        %2605 = vmatpush1.bf16.msra.mxu0 %v2571
        %2606 = vmatprep.subr.bf16.mxu0 0
        %2607 = vmatpush1.bf16.msra.mxu0 %v2572
        %2608 = vmatprep.subr.bf16.mxu0 0
        %2609 = vmatpush1.bf16.msra.mxu0 %v2573
        %2610 = vmatprep.subr.bf16.mxu0 0
        %2611 = vmatpush1.bf16.msra.mxu0 %v2574
        %2612 = vmatprep.subr.bf16.mxu0 0
        %2613 = vmatpush1.bf16.msra.mxu0 %v2575
        %2614 = vmatprep.subr.bf16.mxu0 0
        %2615 = vmatpush1.bf16.msra.mxu0 %v2576
        %2616 = vmatprep.subr.bf16.mxu0 0
        %2617 = vmatpush1.bf16.msra.mxu0 %v2577
        %2618 = vmatprep.subr.bf16.mxu0 0
        %2619 = vmatpush1.bf16.msra.mxu0 %v2578
        %2620 = vmatprep.subr.bf16.mxu0 0
        %2621 = vmatpush1.bf16.msra.mxu0 %v2579
        %2622 = vmatprep.subr.bf16.mxu0 0
        %2623 = vmatpush1.bf16.msra.mxu0 %v2580
        %2624 = vmatprep.subr.bf16.mxu0 0
        %2625 = vmatpush1.bf16.msra.mxu0 %v2581
        %2626 = vmatprep.subr.bf16.mxu0 0
        %2627 = vmatpush1.bf16.msra.mxu0 %v2582
        %2628 = vmatprep.subr.bf16.mxu0 0
        %2629 = vmatpush1.bf16.msra.mxu0 %v2583
        %2630 = vmatprep.subr.bf16.mxu0 0
        %2631 = vmatpush1.bf16.msra.mxu0 %v2584
        %2632 = vmatprep.subr.bf16.mxu0 0
        %2633 = vmatpush1.bf16.msra.mxu0 %v2585
        %2634 = vmatprep.mubr.bf16.mxu0 %v2301
        %2635 = vmatmul.mubr.bf16.gmra.mrb[0].mxu0 %v2300
        %v2636 = vpop.f32.mrb[0].mxu0
        %v2637 = vadd.f32 %v2500, %v2636
        %v2638 = vpop.f32.mrb[0].mxu0
        %v2639 = vpop.f32.mrb[0].mxu0
        %v2640 = vadd.f32 %v2503, %v2639
        %v2641 = vpop.f32.mrb[0].mxu0
        %2642 = vdwg.mxu0
        %v2643 = vld [vmem:[#allocation4 + $0x20] sm:$0xff]
        %v2644 = vld [vmem:[#allocation4 + $0x28] sm:$0xff]
        %s2645 = scalar_lea.vmem %s5, 256
        %v2646 = vld [vmem:[%s2645] sm:$0xf]
        %v2647 = vld [vmem:[%s2645 + $0x4] sm:$0xf]
        %v2648 = vld [vmem:[%s2645 + $0x8] sm:$0xf]
        %v2649 = vld [vmem:[%s2645 + $0xc] sm:$0xf]
        %v2650 = vld [vmem:[%s2645 + $0x10] sm:$0xf]
        %v2651 = vld [vmem:[%s2645 + $0x14] sm:$0xf]
        %v2652 = vld [vmem:[%s2645 + $0x18] sm:$0xf]
        %v2653 = vld [vmem:[%s2645 + $0x1c] sm:$0xf]
        %v2654 = vld [vmem:[%s2645 + $0x20] sm:$0xf]
        %v2655 = vld [vmem:[%s2645 + $0x24] sm:$0xf]
        %v2656 = vld [vmem:[%s2645 + $0x28] sm:$0xf]
        %v2657 = vld [vmem:[%s2645 + $0x2c] sm:$0xf]
        %v2658 = vld [vmem:[%s2645 + $0x30] sm:$0xf]
        %v2659 = vld [vmem:[%s2645 + $0x34] sm:$0xf]
        %v2660 = vld [vmem:[%s2645 + $0x38] sm:$0xf]
        %v2661 = vld [vmem:[%s2645 + $0x3c] sm:$0xf]
        %v2662 = vld [vmem:[%s2645 + $0x40] sm:$0xf]
        %v2663 = vld [vmem:[%s2645 + $0x44] sm:$0xf]
        %v2664 = vld [vmem:[%s2645 + $0x48] sm:$0xf]
        %v2665 = vld [vmem:[%s2645 + $0x4c] sm:$0xf]
        %v2666 = vld [vmem:[%s2645 + $0x50] sm:$0xf]
        %v2667 = vld [vmem:[%s2645 + $0x54] sm:$0xf]
        %v2668 = vld [vmem:[%s2645 + $0x58] sm:$0xf]
        %v2669 = vld [vmem:[%s2645 + $0x5c] sm:$0xf]
        %v2670 = vld [vmem:[%s2645 + $0x60] sm:$0xf]
        %v2671 = vld [vmem:[%s2645 + $0x64] sm:$0xf]
        %v2672 = vld [vmem:[%s2645 + $0x68] sm:$0xf]
        %v2673 = vld [vmem:[%s2645 + $0x6c] sm:$0xf]
        %v2674 = vld [vmem:[%s2645 + $0x70] sm:$0xf]
        %v2675 = vld [vmem:[%s2645 + $0x74] sm:$0xf]
        %v2676 = vld [vmem:[%s2645 + $0x78] sm:$0xf]
        %v2677 = vld [vmem:[%s2645 + $0x7c] sm:$0xf]
        %v2710 = vunpack.c.l.b16 %v2646
        %v2711 = vunpack.c.l.b16 %v2647
        %v2712 = vunpack.c.l.b16 %v2648
        %v2713 = vunpack.c.l.b16 %v2649
        %v2714 = vunpack.c.l.b16 %v2650
        %v2715 = vunpack.c.l.b16 %v2651
        %v2716 = vunpack.c.l.b16 %v2652
        %v2717 = vunpack.c.l.b16 %v2653
        %v2718 = vunpack.c.l.b16 %v2654
        %v2719 = vunpack.c.l.b16 %v2655
        %v2720 = vunpack.c.l.b16 %v2656
        %v2721 = vunpack.c.l.b16 %v2657
        %v2722 = vunpack.c.l.b16 %v2658
        %v2723 = vunpack.c.l.b16 %v2659
        %v2724 = vunpack.c.l.b16 %v2660
        %v2725 = vunpack.c.l.b16 %v2661
        %v2726 = vunpack.c.l.b16 %v2662
        %v2727 = vunpack.c.l.b16 %v2663
        %v2728 = vunpack.c.l.b16 %v2664
        %v2729 = vunpack.c.l.b16 %v2665
        %v2730 = vunpack.c.l.b16 %v2666
        %v2731 = vunpack.c.l.b16 %v2667
        %v2732 = vunpack.c.l.b16 %v2668
        %v2733 = vunpack.c.l.b16 %v2669
        %v2734 = vunpack.c.l.b16 %v2670
        %v2735 = vunpack.c.l.b16 %v2671
        %v2736 = vunpack.c.l.b16 %v2672
        %v2737 = vunpack.c.l.b16 %v2673
        %v2738 = vunpack.c.l.b16 %v2674
        %v2739 = vunpack.c.l.b16 %v2675
        %v2740 = vunpack.c.l.b16 %v2676
        %v2741 = vunpack.c.l.b16 %v2677
        %v2742 = vpack.c.b16 %v2711, %v2710
        %v2743 = vpack.c.b16 %v2713, %v2712
        %v2744 = vpack.c.b16 %v2715, %v2714
        %v2745 = vpack.c.b16 %v2717, %v2716
        %v2746 = vpack.c.b16 %v2719, %v2718
        %v2747 = vpack.c.b16 %v2721, %v2720
        %v2748 = vpack.c.b16 %v2723, %v2722
        %v2749 = vpack.c.b16 %v2725, %v2724
        %v2750 = vpack.c.b16 %v2727, %v2726
        %v2751 = vpack.c.b16 %v2729, %v2728
        %v2752 = vpack.c.b16 %v2731, %v2730
        %v2753 = vpack.c.b16 %v2733, %v2732
        %v2754 = vpack.c.b16 %v2735, %v2734
        %v2755 = vpack.c.b16 %v2737, %v2736
        %v2756 = vpack.c.b16 %v2739, %v2738
        %v2757 = vpack.c.b16 %v2741, %v2740
        %2774 = vmatprep.subr.bf16.mxu0 0
        %2775 = vmatpush1.bf16.msra.mxu0 %v2742
        %2776 = vmatprep.subr.bf16.mxu0 0
        %2777 = vmatpush1.bf16.msra.mxu0 %v2743
        %2778 = vmatprep.subr.bf16.mxu0 0
        %2779 = vmatpush1.bf16.msra.mxu0 %v2744
        %2780 = vmatprep.subr.bf16.mxu0 0
        %2781 = vmatpush1.bf16.msra.mxu0 %v2745
        %2782 = vmatprep.subr.bf16.mxu0 0
        %2783 = vmatpush1.bf16.msra.mxu0 %v2746
        %2784 = vmatprep.subr.bf16.mxu0 0
        %2785 = vmatpush1.bf16.msra.mxu0 %v2747
        %2786 = vmatprep.subr.bf16.mxu0 0
        %2787 = vmatpush1.bf16.msra.mxu0 %v2748
        %2788 = vmatprep.subr.bf16.mxu0 0
        %2789 = vmatpush1.bf16.msra.mxu0 %v2749
        %2790 = vmatprep.subr.bf16.mxu0 0
        %2791 = vmatpush1.bf16.msra.mxu0 %v2750
        %2792 = vmatprep.subr.bf16.mxu0 0
        %2793 = vmatpush1.bf16.msra.mxu0 %v2751
        %2794 = vmatprep.subr.bf16.mxu0 0
        %2795 = vmatpush1.bf16.msra.mxu0 %v2752
        %2796 = vmatprep.subr.bf16.mxu0 0
        %2797 = vmatpush1.bf16.msra.mxu0 %v2753
        %2798 = vmatprep.subr.bf16.mxu0 0
        %2799 = vmatpush1.bf16.msra.mxu0 %v2754
        %2800 = vmatprep.subr.bf16.mxu0 0
        %2801 = vmatpush1.bf16.msra.mxu0 %v2755
        %2802 = vmatprep.subr.bf16.mxu0 0
        %2803 = vmatpush1.bf16.msra.mxu0 %v2756
        %2804 = vmatprep.subr.bf16.mxu0 0
        %2805 = vmatpush1.bf16.msra.mxu0 %v2757
        %2806 = vmatprep.mubr.bf16.mxu0 %v2644
        %2807 = vmatmul.mubr.bf16.gmra.mrb[0].mxu0 %v2643
        %v2808 = vpop.f32.mrb[0].mxu0
        %v2809 = vadd.f32 0.0, %v2808
        %v2810 = vpop.f32.mrb[0].mxu0
        %v2811 = vpop.f32.mrb[0].mxu0
        %v2812 = vadd.f32 0.0, %v2811
        %v2813 = vpop.f32.mrb[0].mxu0
        %2814 = vdwg.mxu0
        %v2815 = vadd.f32 %v2637, %v2809
        %v2816 = vadd.f32 %v2640, %v2812
        %v2817 = vld [vmem:[#allocation4 + $0x30] sm:$0xff]
        %v2818 = vld [vmem:[#allocation4 + $0x38] sm:$0xff]
        %s2819 = scalar_lea.vmem %s5, 384
        %v2820 = vld [vmem:[%s2819] sm:$0xf]
        %v2821 = vld [vmem:[%s2819 + $0x4] sm:$0xf]
        %v2822 = vld [vmem:[%s2819 + $0x8] sm:$0xf]
        %v2823 = vld [vmem:[%s2819 + $0xc] sm:$0xf]
        %v2824 = vld [vmem:[%s2819 + $0x10] sm:$0xf]
        %v2825 = vld [vmem:[%s2819 + $0x14] sm:$0xf]
        %v2826 = vld [vmem:[%s2819 + $0x18] sm:$0xf]
        %v2827 = vld [vmem:[%s2819 + $0x1c] sm:$0xf]
        %v2828 = vld [vmem:[%s2819 + $0x20] sm:$0xf]
        %v2829 = vld [vmem:[%s2819 + $0x24] sm:$0xf]
        %v2830 = vld [vmem:[%s2819 + $0x28] sm:$0xf]
        %v2831 = vld [vmem:[%s2819 + $0x2c] sm:$0xf]
        %v2832 = vld [vmem:[%s2819 + $0x30] sm:$0xf]
        %v2833 = vld [vmem:[%s2819 + $0x34] sm:$0xf]
        %v2834 = vld [vmem:[%s2819 + $0x38] sm:$0xf]
        %v2835 = vld [vmem:[%s2819 + $0x3c] sm:$0xf]
        %v2836 = vld [vmem:[%s2819 + $0x40] sm:$0xf]
        %v2837 = vld [vmem:[%s2819 + $0x44] sm:$0xf]
        %v2838 = vld [vmem:[%s2819 + $0x48] sm:$0xf]
        %v2839 = vld [vmem:[%s2819 + $0x4c] sm:$0xf]
        %v2840 = vld [vmem:[%s2819 + $0x50] sm:$0xf]
        %v2841 = vld [vmem:[%s2819 + $0x54] sm:$0xf]
        %v2842 = vld [vmem:[%s2819 + $0x58] sm:$0xf]
        %v2843 = vld [vmem:[%s2819 + $0x5c] sm:$0xf]
        %v2844 = vld [vmem:[%s2819 + $0x60] sm:$0xf]
        %v2845 = vld [vmem:[%s2819 + $0x64] sm:$0xf]
        %v2846 = vld [vmem:[%s2819 + $0x68] sm:$0xf]
        %v2847 = vld [vmem:[%s2819 + $0x6c] sm:$0xf]
        %v2848 = vld [vmem:[%s2819 + $0x70] sm:$0xf]
        %v2849 = vld [vmem:[%s2819 + $0x74] sm:$0xf]
        %v2850 = vld [vmem:[%s2819 + $0x78] sm:$0xf]
        %v2851 = vld [vmem:[%s2819 + $0x7c] sm:$0xf]
        %v2884 = vunpack.c.l.b16 %v2820
        %v2885 = vunpack.c.l.b16 %v2821
        %v2886 = vunpack.c.l.b16 %v2822
        %v2887 = vunpack.c.l.b16 %v2823
        %v2888 = vunpack.c.l.b16 %v2824
        %v2889 = vunpack.c.l.b16 %v2825
        %v2890 = vunpack.c.l.b16 %v2826
        %v2891 = vunpack.c.l.b16 %v2827
        %v2892 = vunpack.c.l.b16 %v2828
        %v2893 = vunpack.c.l.b16 %v2829
        %v2894 = vunpack.c.l.b16 %v2830
        %v2895 = vunpack.c.l.b16 %v2831
        %v2896 = vunpack.c.l.b16 %v2832
        %v2897 = vunpack.c.l.b16 %v2833
        %v2898 = vunpack.c.l.b16 %v2834
        %v2899 = vunpack.c.l.b16 %v2835
        %v2900 = vunpack.c.l.b16 %v2836
        %v2901 = vunpack.c.l.b16 %v2837
        %v2902 = vunpack.c.l.b16 %v2838
        %v2903 = vunpack.c.l.b16 %v2839
        %v2904 = vunpack.c.l.b16 %v2840
        %v2905 = vunpack.c.l.b16 %v2841
        %v2906 = vunpack.c.l.b16 %v2842
        %v2907 = vunpack.c.l.b16 %v2843
        %v2908 = vunpack.c.l.b16 %v2844
        %v2909 = vunpack.c.l.b16 %v2845
        %v2910 = vunpack.c.l.b16 %v2846
        %v2911 = vunpack.c.l.b16 %v2847
        %v2912 = vunpack.c.l.b16 %v2848
        %v2913 = vunpack.c.l.b16 %v2849
        %v2914 = vunpack.c.l.b16 %v2850
        %v2915 = vunpack.c.l.b16 %v2851
        %v2916 = vpack.c.b16 %v2885, %v2884
        %v2917 = vpack.c.b16 %v2887, %v2886
        %v2918 = vpack.c.b16 %v2889, %v2888
        %v2919 = vpack.c.b16 %v2891, %v2890
        %v2920 = vpack.c.b16 %v2893, %v2892
        %v2921 = vpack.c.b16 %v2895, %v2894
        %v2922 = vpack.c.b16 %v2897, %v2896
        %v2923 = vpack.c.b16 %v2899, %v2898
        %v2924 = vpack.c.b16 %v2901, %v2900
        %v2925 = vpack.c.b16 %v2903, %v2902
        %v2926 = vpack.c.b16 %v2905, %v2904
        %v2927 = vpack.c.b16 %v2907, %v2906
        %v2928 = vpack.c.b16 %v2909, %v2908
        %v2929 = vpack.c.b16 %v2911, %v2910
        %v2930 = vpack.c.b16 %v2913, %v2912
        %v2931 = vpack.c.b16 %v2915, %v2914
        %2948 = vmatprep.subr.bf16.mxu0 0
        %2949 = vmatpush1.bf16.msra.mxu0 %v2916
        %2950 = vmatprep.subr.bf16.mxu0 0
        %2951 = vmatpush1.bf16.msra.mxu0 %v2917
        %2952 = vmatprep.subr.bf16.mxu0 0
        %2953 = vmatpush1.bf16.msra.mxu0 %v2918
        %2954 = vmatprep.subr.bf16.mxu0 0
        %2955 = vmatpush1.bf16.msra.mxu0 %v2919
        %2956 = vmatprep.subr.bf16.mxu0 0
        %2957 = vmatpush1.bf16.msra.mxu0 %v2920
        %2958 = vmatprep.subr.bf16.mxu0 0
        %2959 = vmatpush1.bf16.msra.mxu0 %v2921
        %2960 = vmatprep.subr.bf16.mxu0 0
        %2961 = vmatpush1.bf16.msra.mxu0 %v2922
        %2962 = vmatprep.subr.bf16.mxu0 0
        %2963 = vmatpush1.bf16.msra.mxu0 %v2923
        %2964 = vmatprep.subr.bf16.mxu0 0
        %2965 = vmatpush1.bf16.msra.mxu0 %v2924
        %2966 = vmatprep.subr.bf16.mxu0 0
        %2967 = vmatpush1.bf16.msra.mxu0 %v2925
        %2968 = vmatprep.subr.bf16.mxu0 0
        %2969 = vmatpush1.bf16.msra.mxu0 %v2926
        %2970 = vmatprep.subr.bf16.mxu0 0
        %2971 = vmatpush1.bf16.msra.mxu0 %v2927
        %2972 = vmatprep.subr.bf16.mxu0 0
        %2973 = vmatpush1.bf16.msra.mxu0 %v2928
        %2974 = vmatprep.subr.bf16.mxu0 0
        %2975 = vmatpush1.bf16.msra.mxu0 %v2929
        %2976 = vmatprep.subr.bf16.mxu0 0
        %2977 = vmatpush1.bf16.msra.mxu0 %v2930
        %2978 = vmatprep.subr.bf16.mxu0 0
        %2979 = vmatpush1.bf16.msra.mxu0 %v2931
        %2980 = vmatprep.mubr.bf16.mxu0 %v2818
        %2981 = vmatmul.mubr.bf16.gmra.mrb[0].mxu0 %v2817
        %v2982 = vpop.f32.mrb[0].mxu0
        %v2983 = vadd.f32 0.0, %v2982
        %v2984 = vpop.f32.mrb[0].mxu0
        %v2985 = vpop.f32.mrb[0].mxu0
        %v2986 = vadd.f32 0.0, %v2985
        %v2987 = vpop.f32.mrb[0].mxu0
        %2988 = vdwg.mxu0
        %v2989 = vadd.f32 %v2815, %v2983
        %v2990 = vadd.f32 %v2816, %v2986
        %v2991 = vld [vmem:[#allocation4 + $0x40] sm:$0xff]
        %v2992 = vld [vmem:[#allocation4 + $0x48] sm:$0xff]
        %s2993 = scalar_lea.vmem %s5, 512
        %v2994 = vld [vmem:[%s2993] sm:$0xf]
        %v2995 = vld [vmem:[%s2993 + $0x4] sm:$0xf]
        %v2996 = vld [vmem:[%s2993 + $0x8] sm:$0xf]
        %v2997 = vld [vmem:[%s2993 + $0xc] sm:$0xf]
        %v2998 = vld [vmem:[%s2993 + $0x10] sm:$0xf]
        %v2999 = vld [vmem:[%s2993 + $0x14] sm:$0xf]
        %v3000 = vld [vmem:[%s2993 + $0x18] sm:$0xf]
        %v3001 = vld [vmem:[%s2993 + $0x1c] sm:$0xf]
        %v3002 = vld [vmem:[%s2993 + $0x20] sm:$0xf]
        %v3003 = vld [vmem:[%s2993 + $0x24] sm:$0xf]
        %v3004 = vld [vmem:[%s2993 + $0x28] sm:$0xf]
        %v3005 = vld [vmem:[%s2993 + $0x2c] sm:$0xf]
        %v3006 = vld [vmem:[%s2993 + $0x30] sm:$0xf]
        %v3007 = vld [vmem:[%s2993 + $0x34] sm:$0xf]
        %v3008 = vld [vmem:[%s2993 + $0x38] sm:$0xf]
        %v3009 = vld [vmem:[%s2993 + $0x3c] sm:$0xf]
        %v3010 = vld [vmem:[%s2993 + $0x40] sm:$0xf]
        %v3011 = vld [vmem:[%s2993 + $0x44] sm:$0xf]
        %v3012 = vld [vmem:[%s2993 + $0x48] sm:$0xf]
        %v3013 = vld [vmem:[%s2993 + $0x4c] sm:$0xf]
        %v3014 = vld [vmem:[%s2993 + $0x50] sm:$0xf]
        %v3015 = vld [vmem:[%s2993 + $0x54] sm:$0xf]
        %v3016 = vld [vmem:[%s2993 + $0x58] sm:$0xf]
        %v3017 = vld [vmem:[%s2993 + $0x5c] sm:$0xf]
        %v3018 = vld [vmem:[%s2993 + $0x60] sm:$0xf]
        %v3019 = vld [vmem:[%s2993 + $0x64] sm:$0xf]
        %v3020 = vld [vmem:[%s2993 + $0x68] sm:$0xf]
        %v3021 = vld [vmem:[%s2993 + $0x6c] sm:$0xf]
        %v3022 = vld [vmem:[%s2993 + $0x70] sm:$0xf]
        %v3023 = vld [vmem:[%s2993 + $0x74] sm:$0xf]
        %v3024 = vld [vmem:[%s2993 + $0x78] sm:$0xf]
        %v3025 = vld [vmem:[%s2993 + $0x7c] sm:$0xf]
        %v3058 = vunpack.c.l.b16 %v2994
        %v3059 = vunpack.c.l.b16 %v2995
        %v3060 = vunpack.c.l.b16 %v2996
        %v3061 = vunpack.c.l.b16 %v2997
        %v3062 = vunpack.c.l.b16 %v2998
        %v3063 = vunpack.c.l.b16 %v2999
        %v3064 = vunpack.c.l.b16 %v3000
        %v3065 = vunpack.c.l.b16 %v3001
        %v3066 = vunpack.c.l.b16 %v3002
        %v3067 = vunpack.c.l.b16 %v3003
        %v3068 = vunpack.c.l.b16 %v3004
        %v3069 = vunpack.c.l.b16 %v3005
        %v3070 = vunpack.c.l.b16 %v3006
        %v3071 = vunpack.c.l.b16 %v3007
        %v3072 = vunpack.c.l.b16 %v3008
        %v3073 = vunpack.c.l.b16 %v3009
        %v3074 = vunpack.c.l.b16 %v3010
        %v3075 = vunpack.c.l.b16 %v3011
        %v3076 = vunpack.c.l.b16 %v3012
        %v3077 = vunpack.c.l.b16 %v3013
        %v3078 = vunpack.c.l.b16 %v3014
        %v3079 = vunpack.c.l.b16 %v3015
        %v3080 = vunpack.c.l.b16 %v3016
        %v3081 = vunpack.c.l.b16 %v3017
        %v3082 = vunpack.c.l.b16 %v3018
        %v3083 = vunpack.c.l.b16 %v3019
        %v3084 = vunpack.c.l.b16 %v3020
        %v3085 = vunpack.c.l.b16 %v3021
        %v3086 = vunpack.c.l.b16 %v3022
        %v3087 = vunpack.c.l.b16 %v3023
        %v3088 = vunpack.c.l.b16 %v3024
        %v3089 = vunpack.c.l.b16 %v3025
        %v3090 = vpack.c.b16 %v3059, %v3058
        %v3091 = vpack.c.b16 %v3061, %v3060
        %v3092 = vpack.c.b16 %v3063, %v3062
        %v3093 = vpack.c.b16 %v3065, %v3064
        %v3094 = vpack.c.b16 %v3067, %v3066
        %v3095 = vpack.c.b16 %v3069, %v3068
        %v3096 = vpack.c.b16 %v3071, %v3070
        %v3097 = vpack.c.b16 %v3073, %v3072
        %v3098 = vpack.c.b16 %v3075, %v3074
        %v3099 = vpack.c.b16 %v3077, %v3076
        %v3100 = vpack.c.b16 %v3079, %v3078
        %v3101 = vpack.c.b16 %v3081, %v3080
        %v3102 = vpack.c.b16 %v3083, %v3082
        %v3103 = vpack.c.b16 %v3085, %v3084
        %v3104 = vpack.c.b16 %v3087, %v3086
        %v3105 = vpack.c.b16 %v3089, %v3088
        %3122 = vmatprep.subr.bf16.mxu0 0
        %3123 = vmatpush1.bf16.msra.mxu0 %v3090
        %3124 = vmatprep.subr.bf16.mxu0 0
        %3125 = vmatpush1.bf16.msra.mxu0 %v3091
        %3126 = vmatprep.subr.bf16.mxu0 0
        %3127 = vmatpush1.bf16.msra.mxu0 %v3092
        %3128 = vmatprep.subr.bf16.mxu0 0
        %3129 = vmatpush1.bf16.msra.mxu0 %v3093
        %3130 = vmatprep.subr.bf16.mxu0 0
        %3131 = vmatpush1.bf16.msra.mxu0 %v3094
        %3132 = vmatprep.subr.bf16.mxu0 0
        %3133 = vmatpush1.bf16.msra.mxu0 %v3095
        %3134 = vmatprep.subr.bf16.mxu0 0
        %3135 = vmatpush1.bf16.msra.mxu0 %v3096
        %3136 = vmatprep.subr.bf16.mxu0 0
        %3137 = vmatpush1.bf16.msra.mxu0 %v3097
        %3138 = vmatprep.subr.bf16.mxu0 0
        %3139 = vmatpush1.bf16.msra.mxu0 %v3098
        %3140 = vmatprep.subr.bf16.mxu0 0
        %3141 = vmatpush1.bf16.msra.mxu0 %v3099
        %3142 = vmatprep.subr.bf16.mxu0 0
        %3143 = vmatpush1.bf16.msra.mxu0 %v3100
        %3144 = vmatprep.subr.bf16.mxu0 0
        %3145 = vmatpush1.bf16.msra.mxu0 %v3101
        %3146 = vmatprep.subr.bf16.mxu0 0
        %3147 = vmatpush1.bf16.msra.mxu0 %v3102
        %3148 = vmatprep.subr.bf16.mxu0 0
        %3149 = vmatpush1.bf16.msra.mxu0 %v3103
        %3150 = vmatprep.subr.bf16.mxu0 0
        %3151 = vmatpush1.bf16.msra.mxu0 %v3104
        %3152 = vmatprep.subr.bf16.mxu0 0
        %3153 = vmatpush1.bf16.msra.mxu0 %v3105
        %3154 = vmatprep.mubr.bf16.mxu0 %v2992
        %3155 = vmatmul.mubr.bf16.gmra.mrb[0].mxu0 %v2991
        %v3156 = vpop.f32.mrb[0].mxu0
        %v3157 = vadd.f32 0.0, %v3156
        %v3158 = vpop.f32.mrb[0].mxu0
        %v3159 = vpop.f32.mrb[0].mxu0
        %v3160 = vadd.f32 0.0, %v3159
        %v3161 = vpop.f32.mrb[0].mxu0
        %3162 = vdwg.mxu0
        %v3163 = vadd.f32 %v2989, %v3157
        %v3164 = vadd.f32 %v2990, %v3160
        %v3165 = vld [vmem:[#allocation4 + $0x50] sm:$0xff]
        %v3166 = vld [vmem:[#allocation4 + $0x58] sm:$0xff]
        %s3167 = scalar_lea.vmem %s5, 640
        %v3168 = vld [vmem:[%s3167] sm:$0xf]
        %v3169 = vld [vmem:[%s3167 + $0x4] sm:$0xf]
        %v3170 = vld [vmem:[%s3167 + $0x8] sm:$0xf]
        %v3171 = vld [vmem:[%s3167 + $0xc] sm:$0xf]
        %v3172 = vld [vmem:[%s3167 + $0x10] sm:$0xf]
        %v3173 = vld [vmem:[%s3167 + $0x14] sm:$0xf]
        %v3174 = vld [vmem:[%s3167 + $0x18] sm:$0xf]
        %v3175 = vld [vmem:[%s3167 + $0x1c] sm:$0xf]
        %v3176 = vld [vmem:[%s3167 + $0x20] sm:$0xf]
        %v3177 = vld [vmem:[%s3167 + $0x24] sm:$0xf]
        %v3178 = vld [vmem:[%s3167 + $0x28] sm:$0xf]
        %v3179 = vld [vmem:[%s3167 + $0x2c] sm:$0xf]
        %v3180 = vld [vmem:[%s3167 + $0x30] sm:$0xf]
        %v3181 = vld [vmem:[%s3167 + $0x34] sm:$0xf]
        %v3182 = vld [vmem:[%s3167 + $0x38] sm:$0xf]
        %v3183 = vld [vmem:[%s3167 + $0x3c] sm:$0xf]
        %v3184 = vld [vmem:[%s3167 + $0x40] sm:$0xf]
        %v3185 = vld [vmem:[%s3167 + $0x44] sm:$0xf]
        %v3186 = vld [vmem:[%s3167 + $0x48] sm:$0xf]
        %v3187 = vld [vmem:[%s3167 + $0x4c] sm:$0xf]
        %v3188 = vld [vmem:[%s3167 + $0x50] sm:$0xf]
        %v3189 = vld [vmem:[%s3167 + $0x54] sm:$0xf]
        %v3190 = vld [vmem:[%s3167 + $0x58] sm:$0xf]
        %v3191 = vld [vmem:[%s3167 + $0x5c] sm:$0xf]
        %v3192 = vld [vmem:[%s3167 + $0x60] sm:$0xf]
        %v3193 = vld [vmem:[%s3167 + $0x64] sm:$0xf]
        %v3194 = vld [vmem:[%s3167 + $0x68] sm:$0xf]
        %v3195 = vld [vmem:[%s3167 + $0x6c] sm:$0xf]
        %v3196 = vld [vmem:[%s3167 + $0x70] sm:$0xf]
        %v3197 = vld [vmem:[%s3167 + $0x74] sm:$0xf]
        %v3198 = vld [vmem:[%s3167 + $0x78] sm:$0xf]
        %v3199 = vld [vmem:[%s3167 + $0x7c] sm:$0xf]
        %v3232 = vunpack.c.l.b16 %v3168
        %v3233 = vunpack.c.l.b16 %v3169
        %v3234 = vunpack.c.l.b16 %v3170
        %v3235 = vunpack.c.l.b16 %v3171
        %v3236 = vunpack.c.l.b16 %v3172
        %v3237 = vunpack.c.l.b16 %v3173
        %v3238 = vunpack.c.l.b16 %v3174
        %v3239 = vunpack.c.l.b16 %v3175
        %v3240 = vunpack.c.l.b16 %v3176
        %v3241 = vunpack.c.l.b16 %v3177
        %v3242 = vunpack.c.l.b16 %v3178
        %v3243 = vunpack.c.l.b16 %v3179
        %v3244 = vunpack.c.l.b16 %v3180
        %v3245 = vunpack.c.l.b16 %v3181
        %v3246 = vunpack.c.l.b16 %v3182
        %v3247 = vunpack.c.l.b16 %v3183
        %v3248 = vunpack.c.l.b16 %v3184
        %v3249 = vunpack.c.l.b16 %v3185
        %v3250 = vunpack.c.l.b16 %v3186
        %v3251 = vunpack.c.l.b16 %v3187
        %v3252 = vunpack.c.l.b16 %v3188
        %v3253 = vunpack.c.l.b16 %v3189
        %v3254 = vunpack.c.l.b16 %v3190
        %v3255 = vunpack.c.l.b16 %v3191
        %v3256 = vunpack.c.l.b16 %v3192
        %v3257 = vunpack.c.l.b16 %v3193
        %v3258 = vunpack.c.l.b16 %v3194
        %v3259 = vunpack.c.l.b16 %v3195
        %v3260 = vunpack.c.l.b16 %v3196
        %v3261 = vunpack.c.l.b16 %v3197
        %v3262 = vunpack.c.l.b16 %v3198
        %v3263 = vunpack.c.l.b16 %v3199
        %v3264 = vpack.c.b16 %v3233, %v3232
        %v3265 = vpack.c.b16 %v3235, %v3234
        %v3266 = vpack.c.b16 %v3237, %v3236
        %v3267 = vpack.c.b16 %v3239, %v3238
        %v3268 = vpack.c.b16 %v3241, %v3240
        %v3269 = vpack.c.b16 %v3243, %v3242
        %v3270 = vpack.c.b16 %v3245, %v3244
        %v3271 = vpack.c.b16 %v3247, %v3246
        %v3272 = vpack.c.b16 %v3249, %v3248
        %v3273 = vpack.c.b16 %v3251, %v3250
        %v3274 = vpack.c.b16 %v3253, %v3252
        %v3275 = vpack.c.b16 %v3255, %v3254
        %v3276 = vpack.c.b16 %v3257, %v3256
        %v3277 = vpack.c.b16 %v3259, %v3258
        %v3278 = vpack.c.b16 %v3261, %v3260
        %v3279 = vpack.c.b16 %v3263, %v3262
        %3296 = vmatprep.subr.bf16.mxu0 0
        %3297 = vmatpush1.bf16.msra.mxu0 %v3264
        %3298 = vmatprep.subr.bf16.mxu0 0
        %3299 = vmatpush1.bf16.msra.mxu0 %v3265
        %3300 = vmatprep.subr.bf16.mxu0 0
        %3301 = vmatpush1.bf16.msra.mxu0 %v3266
        %3302 = vmatprep.subr.bf16.mxu0 0
        %3303 = vmatpush1.bf16.msra.mxu0 %v3267
        %3304 = vmatprep.subr.bf16.mxu0 0
        %3305 = vmatpush1.bf16.msra.mxu0 %v3268
        %3306 = vmatprep.subr.bf16.mxu0 0
        %3307 = vmatpush1.bf16.msra.mxu0 %v3269
        %3308 = vmatprep.subr.bf16.mxu0 0
        %3309 = vmatpush1.bf16.msra.mxu0 %v3270
        %3310 = vmatprep.subr.bf16.mxu0 0
        %3311 = vmatpush1.bf16.msra.mxu0 %v3271
        %3312 = vmatprep.subr.bf16.mxu0 0
        %3313 = vmatpush1.bf16.msra.mxu0 %v3272
        %3314 = vmatprep.subr.bf16.mxu0 0
        %3315 = vmatpush1.bf16.msra.mxu0 %v3273
        %3316 = vmatprep.subr.bf16.mxu0 0
        %3317 = vmatpush1.bf16.msra.mxu0 %v3274
        %3318 = vmatprep.subr.bf16.mxu0 0
        %3319 = vmatpush1.bf16.msra.mxu0 %v3275
        %3320 = vmatprep.subr.bf16.mxu0 0
        %3321 = vmatpush1.bf16.msra.mxu0 %v3276
        %3322 = vmatprep.subr.bf16.mxu0 0
        %3323 = vmatpush1.bf16.msra.mxu0 %v3277
        %3324 = vmatprep.subr.bf16.mxu0 0
        %3325 = vmatpush1.bf16.msra.mxu0 %v3278
        %3326 = vmatprep.subr.bf16.mxu0 0
        %3327 = vmatpush1.bf16.msra.mxu0 %v3279
        %3328 = vmatprep.mubr.bf16.mxu0 %v3166
        %3329 = vmatmul.mubr.bf16.gmra.mrb[0].mxu0 %v3165
        %v3330 = vpop.f32.mrb[0].mxu0
        %v3331 = vadd.f32 0.0, %v3330
        %v3332 = vpop.f32.mrb[0].mxu0
        %v3333 = vpop.f32.mrb[0].mxu0
        %v3334 = vadd.f32 0.0, %v3333
        %v3335 = vpop.f32.mrb[0].mxu0
        %3336 = vdwg.mxu0
        %v3337 = vadd.f32 %v3163, %v3331
        %v3338 = vadd.f32 %v3164, %v3334
        %v3339 = vld [vmem:[#allocation4 + $0x60] sm:$0xff]
        %v3340 = vld [vmem:[#allocation4 + $0x68] sm:$0xff]
        %s3341 = scalar_lea.vmem %s5, 768
        %v3342 = vld [vmem:[%s3341] sm:$0xf]
        %v3343 = vld [vmem:[%s3341 + $0x4] sm:$0xf]
        %v3344 = vld [vmem:[%s3341 + $0x8] sm:$0xf]
        %v3345 = vld [vmem:[%s3341 + $0xc] sm:$0xf]
        %v3346 = vld [vmem:[%s3341 + $0x10] sm:$0xf]
        %v3347 = vld [vmem:[%s3341 + $0x14] sm:$0xf]
        %v3348 = vld [vmem:[%s3341 + $0x18] sm:$0xf]
        %v3349 = vld [vmem:[%s3341 + $0x1c] sm:$0xf]
        %v3350 = vld [vmem:[%s3341 + $0x20] sm:$0xf]
        %v3351 = vld [vmem:[%s3341 + $0x24] sm:$0xf]
        %v3352 = vld [vmem:[%s3341 + $0x28] sm:$0xf]
        %v3353 = vld [vmem:[%s3341 + $0x2c] sm:$0xf]
        %v3354 = vld [vmem:[%s3341 + $0x30] sm:$0xf]
        %v3355 = vld [vmem:[%s3341 + $0x34] sm:$0xf]
        %v3356 = vld [vmem:[%s3341 + $0x38] sm:$0xf]
        %v3357 = vld [vmem:[%s3341 + $0x3c] sm:$0xf]
        %v3358 = vld [vmem:[%s3341 + $0x40] sm:$0xf]
        %v3359 = vld [vmem:[%s3341 + $0x44] sm:$0xf]
        %v3360 = vld [vmem:[%s3341 + $0x48] sm:$0xf]
        %v3361 = vld [vmem:[%s3341 + $0x4c] sm:$0xf]
        %v3362 = vld [vmem:[%s3341 + $0x50] sm:$0xf]
        %v3363 = vld [vmem:[%s3341 + $0x54] sm:$0xf]
        %v3364 = vld [vmem:[%s3341 + $0x58] sm:$0xf]
        %v3365 = vld [vmem:[%s3341 + $0x5c] sm:$0xf]
        %v3366 = vld [vmem:[%s3341 + $0x60] sm:$0xf]
        %v3367 = vld [vmem:[%s3341 + $0x64] sm:$0xf]
        %v3368 = vld [vmem:[%s3341 + $0x68] sm:$0xf]
        %v3369 = vld [vmem:[%s3341 + $0x6c] sm:$0xf]
        %v3370 = vld [vmem:[%s3341 + $0x70] sm:$0xf]
        %v3371 = vld [vmem:[%s3341 + $0x74] sm:$0xf]
        %v3372 = vld [vmem:[%s3341 + $0x78] sm:$0xf]
        %v3373 = vld [vmem:[%s3341 + $0x7c] sm:$0xf]
        %v3406 = vunpack.c.l.b16 %v3342
        %v3407 = vunpack.c.l.b16 %v3343
        %v3408 = vunpack.c.l.b16 %v3344
        %v3409 = vunpack.c.l.b16 %v3345
        %v3410 = vunpack.c.l.b16 %v3346
        %v3411 = vunpack.c.l.b16 %v3347
        %v3412 = vunpack.c.l.b16 %v3348
        %v3413 = vunpack.c.l.b16 %v3349
        %v3414 = vunpack.c.l.b16 %v3350
        %v3415 = vunpack.c.l.b16 %v3351
        %v3416 = vunpack.c.l.b16 %v3352
        %v3417 = vunpack.c.l.b16 %v3353
        %v3418 = vunpack.c.l.b16 %v3354
        %v3419 = vunpack.c.l.b16 %v3355
        %v3420 = vunpack.c.l.b16 %v3356
        %v3421 = vunpack.c.l.b16 %v3357
        %v3422 = vunpack.c.l.b16 %v3358
        %v3423 = vunpack.c.l.b16 %v3359
        %v3424 = vunpack.c.l.b16 %v3360
        %v3425 = vunpack.c.l.b16 %v3361
        %v3426 = vunpack.c.l.b16 %v3362
        %v3427 = vunpack.c.l.b16 %v3363
        %v3428 = vunpack.c.l.b16 %v3364
        %v3429 = vunpack.c.l.b16 %v3365
        %v3430 = vunpack.c.l.b16 %v3366
        %v3431 = vunpack.c.l.b16 %v3367
        %v3432 = vunpack.c.l.b16 %v3368
        %v3433 = vunpack.c.l.b16 %v3369
        %v3434 = vunpack.c.l.b16 %v3370
        %v3435 = vunpack.c.l.b16 %v3371
        %v3436 = vunpack.c.l.b16 %v3372
        %v3437 = vunpack.c.l.b16 %v3373
        %v3438 = vpack.c.b16 %v3407, %v3406
        %v3439 = vpack.c.b16 %v3409, %v3408
        %v3440 = vpack.c.b16 %v3411, %v3410
        %v3441 = vpack.c.b16 %v3413, %v3412
        %v3442 = vpack.c.b16 %v3415, %v3414
        %v3443 = vpack.c.b16 %v3417, %v3416
        %v3444 = vpack.c.b16 %v3419, %v3418
        %v3445 = vpack.c.b16 %v3421, %v3420
        %v3446 = vpack.c.b16 %v3423, %v3422
        %v3447 = vpack.c.b16 %v3425, %v3424
        %v3448 = vpack.c.b16 %v3427, %v3426
        %v3449 = vpack.c.b16 %v3429, %v3428
        %v3450 = vpack.c.b16 %v3431, %v3430
        %v3451 = vpack.c.b16 %v3433, %v3432
        %v3452 = vpack.c.b16 %v3435, %v3434
        %v3453 = vpack.c.b16 %v3437, %v3436
        %3470 = vmatprep.subr.bf16.mxu0 0
        %3471 = vmatpush1.bf16.msra.mxu0 %v3438
        %3472 = vmatprep.subr.bf16.mxu0 0
        %3473 = vmatpush1.bf16.msra.mxu0 %v3439
        %3474 = vmatprep.subr.bf16.mxu0 0
        %3475 = vmatpush1.bf16.msra.mxu0 %v3440
        %3476 = vmatprep.subr.bf16.mxu0 0
        %3477 = vmatpush1.bf16.msra.mxu0 %v3441
        %3478 = vmatprep.subr.bf16.mxu0 0
        %3479 = vmatpush1.bf16.msra.mxu0 %v3442
        %3480 = vmatprep.subr.bf16.mxu0 0
        %3481 = vmatpush1.bf16.msra.mxu0 %v3443
        %3482 = vmatprep.subr.bf16.mxu0 0
        %3483 = vmatpush1.bf16.msra.mxu0 %v3444
        %3484 = vmatprep.subr.bf16.mxu0 0
        %3485 = vmatpush1.bf16.msra.mxu0 %v3445
        %3486 = vmatprep.subr.bf16.mxu0 0
        %3487 = vmatpush1.bf16.msra.mxu0 %v3446
        %3488 = vmatprep.subr.bf16.mxu0 0
        %3489 = vmatpush1.bf16.msra.mxu0 %v3447
        %3490 = vmatprep.subr.bf16.mxu0 0
        %3491 = vmatpush1.bf16.msra.mxu0 %v3448
        %3492 = vmatprep.subr.bf16.mxu0 0
        %3493 = vmatpush1.bf16.msra.mxu0 %v3449
        %3494 = vmatprep.subr.bf16.mxu0 0
        %3495 = vmatpush1.bf16.msra.mxu0 %v3450
        %3496 = vmatprep.subr.bf16.mxu0 0
        %3497 = vmatpush1.bf16.msra.mxu0 %v3451
        %3498 = vmatprep.subr.bf16.mxu0 0
        %3499 = vmatpush1.bf16.msra.mxu0 %v3452
        %3500 = vmatprep.subr.bf16.mxu0 0
        %3501 = vmatpush1.bf16.msra.mxu0 %v3453
        %3502 = vmatprep.mubr.bf16.mxu0 %v3340
        %3503 = vmatmul.mubr.bf16.gmra.mrb[0].mxu0 %v3339
        %v3504 = vpop.f32.mrb[0].mxu0
        %v3505 = vadd.f32 0.0, %v3504
        %v3506 = vpop.f32.mrb[0].mxu0
        %v3507 = vpop.f32.mrb[0].mxu0
        %v3508 = vadd.f32 0.0, %v3507
        %v3509 = vpop.f32.mrb[0].mxu0
        %3510 = vdwg.mxu0
        %v3511 = vadd.f32 %v3337, %v3505
        %v3512 = vadd.f32 %v3338, %v3508
        %v3513 = vld [vmem:[%s6] sm:$0x1]
        %v3515 = vlaneseq
        %v3516 = vshrl.u32 %v3515, 7
        %v3517 = vsub.s32 0, %v3516
        %v3518 = vrot.slane %v3513, %v3517
        %v3520 = vadd.f32 %v3511, %v3518
        %v3521 = vadd.f32 %v3512, %v3518
        %v3522 = vpack.c.bf16 %v3521, %v3520
        %v3523 = vld [vmem:[%s7] sm:$0xff]
        %v3524 = vld [vmem:[%s7 + $0x8] sm:$0xff]
        %v3525 = vld [vmem:[%s7 + $0x10] sm:$0xff]
        %v3526 = vld [vmem:[%s7 + $0x18] sm:$0xff]
        %v3527 = vld [vmem:[%s7 + $0x20] sm:$0xff]
        %v3528 = vld [vmem:[%s7 + $0x28] sm:$0xff]
        %v3529 = vld [vmem:[%s7 + $0x30] sm:$0xff]
        %v3530 = vld [vmem:[%s7 + $0x38] sm:$0xff]
        %v3531 = vld [vmem:[%s8] sm:$0x3]
        %v3533 = vlaneseq
        %v3534 = vshrl.u32 %v3533, 7
        %v3535 = vsub.s32 0, %v3534
        %v3536 = vrot.slane %v3531, %v3535
        %v3537 = vlaneseq
        %v3538 = vshrl.u32 %v3537, 7
        %v3539 = vsub.s32 1, %v3538
        %v3540 = vrot.slane %v3531, %v3539
        %v3551 = vunpack.c.l.b16 %v3523
        %v3552 = vunpack.c.h.b16 %v3523
        %v3553 = vunpack.c.l.b16 %v3524
        %v3554 = vunpack.c.h.b16 %v3524
        %v3555 = vunpack.c.l.b16 %v3525
        %v3556 = vunpack.c.h.b16 %v3525
        %v3557 = vunpack.c.l.b16 %v3526
        %v3558 = vunpack.c.h.b16 %v3526
        %v3559 = vunpack.c.l.b16 %v3527
        %v3560 = vunpack.c.h.b16 %v3527
        %v3561 = vunpack.c.l.b16 %v3528
        %v3562 = vunpack.c.h.b16 %v3528
        %v3563 = vunpack.c.l.b16 %v3529
        %v3564 = vunpack.c.h.b16 %v3529
        %v3565 = vunpack.c.l.b16 %v3530
        %v3566 = vunpack.c.h.b16 %v3530
        %v3567 = vpack.c.b16 %v3553, %v3551
        %v3568 = vpack.c.b16 %v3554, %v3552
        %v3569 = vpack.c.b16 %v3557, %v3555
        %v3570 = vpack.c.b16 %v3558, %v3556
        %v3571 = vpack.c.b16 %v3561, %v3559
        %v3572 = vpack.c.b16 %v3562, %v3560
        %v3573 = vpack.c.b16 %v3565, %v3563
        %v3574 = vpack.c.b16 %v3566, %v3564
        %vm3583 = vcmask 523264
        %v3585 = vsel %vm3583, %v3522, 0
        %3587 = vmatprep.subr.bf16.mxu0 %v3568
        %3588 = vmatpush1.bf16.msra.mxu0 %v3567
        %3589 = vmatprep.subr.bf16.mxu0 %v3570
        %3590 = vmatpush1.bf16.msra.mxu0 %v3569
        %3591 = vmatprep.subr.bf16.mxu0 %v3572
        %3592 = vmatpush1.bf16.msra.mxu0 %v3571
        %3593 = vmatprep.subr.bf16.mxu0 %v3574
        %3594 = vmatpush1.bf16.msra.mxu0 %v3573
        %3595 = vmatprep.subr.bf16.mxu0 0
        %3596 = vmatpush1.bf16.msra.mxu0 0
        %3597 = vmatprep.subr.bf16.mxu0 0
        %3598 = vmatpush1.bf16.msra.mxu0 0
        %3599 = vmatprep.subr.bf16.mxu0 0
        %3600 = vmatpush1.bf16.msra.mxu0 0
        %3601 = vmatprep.subr.bf16.mxu0 0
        %3602 = vmatpush1.bf16.msra.mxu0 0
        %3603 = vmatprep.subr.bf16.mxu0 0
        %3604 = vmatpush1.bf16.msra.mxu0 0
        %3605 = vmatprep.subr.bf16.mxu0 0
        %3606 = vmatpush1.bf16.msra.mxu0 0
        %3607 = vmatprep.subr.bf16.mxu0 0
        %3608 = vmatpush1.bf16.msra.mxu0 0
        %3609 = vmatprep.subr.bf16.mxu0 0
        %3610 = vmatpush1.bf16.msra.mxu0 0
        %3611 = vmatprep.subr.bf16.mxu0 0
        %3612 = vmatpush1.bf16.msra.mxu0 0
        %3613 = vmatprep.subr.bf16.mxu0 0
        %3614 = vmatpush1.bf16.msra.mxu0 0
        %3615 = vmatprep.subr.bf16.mxu0 0
        %3616 = vmatpush1.bf16.msra.mxu0 0
        %3617 = vmatprep.subr.bf16.mxu0 0
        %3618 = vmatpush1.bf16.msra.mxu0 0
        %3619 = vmatprep.mubr.bf16.mxu0 0
        %3620 = vmatmul.mubr.bf16.gmra.mrb[0].mxu0 %v3585
        %v3621 = vpop.f32.mrb[0].mxu0
        %v3622 = vadd.f32 %v3536, %v3621
        %v3623 = vpop.f32.mrb[0].mxu0
        %v3624 = vadd.f32 %v3540, %v3623
        %v3625 = vpop.f32.mrb[0].mxu0
        %v3626 = vadd.f32 %v3536, %v3625
        %v3627 = vpop.f32.mrb[0].mxu0
        %v3628 = vadd.f32 %v3540, %v3627
        %3629 = vdwg.mxu0
        %v3630 = vmax.f32 %v3622, 0.0
        %v3631 = vmax.f32 %v3624, 0.0
        %v3632 = vmax.f32 %v3626, 0.0
        %v3633 = vmax.f32 %v3628, 0.0
        %v3634 = vpack.c.bf16 %v3632, %v3630
        %v3635 = vpack.c.bf16 %v3633, %v3631
        %3636 = vst [vmem:[#allocation5] sm:$0xff] %v3634
        %3637 = vst [vmem:[#allocation5 + $0x8] sm:$0xff] %v3635
        %s3638 = scalar_lea.vmem %s7, 64
        %v3639 = vld [vmem:[%s3638] sm:$0xff]
        %v3640 = vld [vmem:[%s3638 + $0x8] sm:$0xff]
        %v3641 = vld [vmem:[%s3638 + $0x10] sm:$0xff]
        %v3642 = vld [vmem:[%s3638 + $0x18] sm:$0xff]
        %v3643 = vld [vmem:[%s3638 + $0x20] sm:$0xff]
        %v3644 = vld [vmem:[%s3638 + $0x28] sm:$0xff]
        %v3645 = vld [vmem:[%s3638 + $0x30] sm:$0xff]
        %v3646 = vld [vmem:[%s3638 + $0x38] sm:$0xff]
        %v3647 = vld [vmem:[%s8] sm:$0x3]
        %v3649 = vlaneseq
        %v3650 = vshrl.u32 %v3649, 7
        %v3651 = vsub.s32 0, %v3650
        %v3652 = vrot.slane %v3647, %v3651
        %v3653 = vlaneseq
        %v3654 = vshrl.u32 %v3653, 7
        %v3655 = vsub.s32 1, %v3654
        %v3656 = vrot.slane %v3647, %v3655
        %v3667 = vunpack.c.l.b16 %v3639
        %v3668 = vunpack.c.h.b16 %v3639
        %v3669 = vunpack.c.l.b16 %v3640
        %v3670 = vunpack.c.h.b16 %v3640
        %v3671 = vunpack.c.l.b16 %v3641
        %v3672 = vunpack.c.h.b16 %v3641
        %v3673 = vunpack.c.l.b16 %v3642
        %v3674 = vunpack.c.h.b16 %v3642
        %v3675 = vunpack.c.l.b16 %v3643
        %v3676 = vunpack.c.h.b16 %v3643
        %v3677 = vunpack.c.l.b16 %v3644
        %v3678 = vunpack.c.h.b16 %v3644
        %v3679 = vunpack.c.l.b16 %v3645
        %v3680 = vunpack.c.h.b16 %v3645
        %v3681 = vunpack.c.l.b16 %v3646
        %v3682 = vunpack.c.h.b16 %v3646
        %v3683 = vpack.c.b16 %v3669, %v3667
        %v3684 = vpack.c.b16 %v3670, %v3668
        %v3685 = vpack.c.b16 %v3673, %v3671
        %v3686 = vpack.c.b16 %v3674, %v3672
        %v3687 = vpack.c.b16 %v3677, %v3675
        %v3688 = vpack.c.b16 %v3678, %v3676
        %v3689 = vpack.c.b16 %v3681, %v3679
        %v3690 = vpack.c.b16 %v3682, %v3680
        %3699 = vmatprep.subr.bf16.mxu0 %v3684
        %3700 = vmatpush1.bf16.msra.mxu0 %v3683
        %3701 = vmatprep.subr.bf16.mxu0 %v3686
        %3702 = vmatpush1.bf16.msra.mxu0 %v3685
        %3703 = vmatprep.subr.bf16.mxu0 %v3688
        %3704 = vmatpush1.bf16.msra.mxu0 %v3687
        %3705 = vmatprep.subr.bf16.mxu0 %v3690
        %3706 = vmatpush1.bf16.msra.mxu0 %v3689
        %3707 = vmatprep.subr.bf16.mxu0 0
        %3708 = vmatpush1.bf16.msra.mxu0 0
        %3709 = vmatprep.subr.bf16.mxu0 0
        %3710 = vmatpush1.bf16.msra.mxu0 0
        %3711 = vmatprep.subr.bf16.mxu0 0
        %3712 = vmatpush1.bf16.msra.mxu0 0
        %3713 = vmatprep.subr.bf16.mxu0 0
        %3714 = vmatpush1.bf16.msra.mxu0 0
        %3715 = vmatprep.subr.bf16.mxu0 0
        %3716 = vmatpush1.bf16.msra.mxu0 0
        %3717 = vmatprep.subr.bf16.mxu0 0
        %3718 = vmatpush1.bf16.msra.mxu0 0
        %3719 = vmatprep.subr.bf16.mxu0 0
        %3720 = vmatpush1.bf16.msra.mxu0 0
        %3721 = vmatprep.subr.bf16.mxu0 0
        %3722 = vmatpush1.bf16.msra.mxu0 0
        %3723 = vmatprep.subr.bf16.mxu0 0
        %3724 = vmatpush1.bf16.msra.mxu0 0
        %3725 = vmatprep.subr.bf16.mxu0 0
        %3726 = vmatpush1.bf16.msra.mxu0 0
        %3727 = vmatprep.subr.bf16.mxu0 0
        %3728 = vmatpush1.bf16.msra.mxu0 0
        %3729 = vmatprep.subr.bf16.mxu0 0
        %3730 = vmatpush1.bf16.msra.mxu0 0
        %3731 = vmatprep.mubr.bf16.mxu0 0
        %3732 = vmatmul.mubr.bf16.gmra.mrb[0].mxu0 %v3585
        %v3733 = vpop.f32.mrb[0].mxu0
        %v3734 = vadd.f32 %v3652, %v3733
        %v3735 = vpop.f32.mrb[0].mxu0
        %v3736 = vadd.f32 %v3656, %v3735
        %v3737 = vpop.f32.mrb[0].mxu0
        %v3738 = vadd.f32 %v3652, %v3737
        %v3739 = vpop.f32.mrb[0].mxu0
        %v3740 = vadd.f32 %v3656, %v3739
        %3741 = vdwg.mxu0
        %v3742 = vmax.f32 %v3734, 0.0
        %v3743 = vmax.f32 %v3736, 0.0
        %v3744 = vmax.f32 %v3738, 0.0
        %v3745 = vmax.f32 %v3740, 0.0
        %v3746 = vpack.c.bf16 %v3744, %v3742
        %v3747 = vpack.c.bf16 %v3745, %v3743
        %3748 = vst [vmem:[#allocation5 + $0x10] sm:$0xff] %v3746
        %3749 = vst [vmem:[#allocation5 + $0x18] sm:$0xff] %v3747
        %s3750 = scalar_lea.vmem %s7, 128
        %v3751 = vld [vmem:[%s3750] sm:$0xff]
        %v3752 = vld [vmem:[%s3750 + $0x8] sm:$0xff]
        %v3753 = vld [vmem:[%s3750 + $0x10] sm:$0xff]
        %v3754 = vld [vmem:[%s3750 + $0x18] sm:$0xff]
        %v3755 = vld [vmem:[%s3750 + $0x20] sm:$0xff]
        %v3756 = vld [vmem:[%s3750 + $0x28] sm:$0xff]
        %v3757 = vld [vmem:[%s3750 + $0x30] sm:$0xff]
        %v3758 = vld [vmem:[%s3750 + $0x38] sm:$0xff]
        %v3759 = vld [vmem:[%s8] sm:$0x3]
        %v3761 = vlaneseq
        %v3762 = vshrl.u32 %v3761, 7
        %v3763 = vsub.s32 0, %v3762
        %v3764 = vrot.slane %v3759, %v3763
        %v3765 = vlaneseq
        %v3766 = vshrl.u32 %v3765, 7
        %v3767 = vsub.s32 1, %v3766
        %v3768 = vrot.slane %v3759, %v3767
        %v3779 = vunpack.c.l.b16 %v3751
        %v3780 = vunpack.c.h.b16 %v3751
        %v3781 = vunpack.c.l.b16 %v3752
        %v3782 = vunpack.c.h.b16 %v3752
        %v3783 = vunpack.c.l.b16 %v3753
        %v3784 = vunpack.c.h.b16 %v3753
        %v3785 = vunpack.c.l.b16 %v3754
        %v3786 = vunpack.c.h.b16 %v3754
        %v3787 = vunpack.c.l.b16 %v3755
        %v3788 = vunpack.c.h.b16 %v3755
        %v3789 = vunpack.c.l.b16 %v3756
        %v3790 = vunpack.c.h.b16 %v3756
        %v3791 = vunpack.c.l.b16 %v3757
        %v3792 = vunpack.c.h.b16 %v3757
        %v3793 = vunpack.c.l.b16 %v3758
        %v3794 = vunpack.c.h.b16 %v3758
        %v3795 = vpack.c.b16 %v3781, %v3779
        %v3796 = vpack.c.b16 %v3782, %v3780
        %v3797 = vpack.c.b16 %v3785, %v3783
        %v3798 = vpack.c.b16 %v3786, %v3784
        %v3799 = vpack.c.b16 %v3789, %v3787
        %v3800 = vpack.c.b16 %v3790, %v3788
        %v3801 = vpack.c.b16 %v3793, %v3791
        %v3802 = vpack.c.b16 %v3794, %v3792
        %3811 = vmatprep.subr.bf16.mxu0 %v3796
        %3812 = vmatpush1.bf16.msra.mxu0 %v3795
        %3813 = vmatprep.subr.bf16.mxu0 %v3798
        %3814 = vmatpush1.bf16.msra.mxu0 %v3797
        %3815 = vmatprep.subr.bf16.mxu0 %v3800
        %3816 = vmatpush1.bf16.msra.mxu0 %v3799
        %3817 = vmatprep.subr.bf16.mxu0 %v3802
        %3818 = vmatpush1.bf16.msra.mxu0 %v3801
        %3819 = vmatprep.subr.bf16.mxu0 0
        %3820 = vmatpush1.bf16.msra.mxu0 0
        %3821 = vmatprep.subr.bf16.mxu0 0
        %3822 = vmatpush1.bf16.msra.mxu0 0
        %3823 = vmatprep.subr.bf16.mxu0 0
        %3824 = vmatpush1.bf16.msra.mxu0 0
        %3825 = vmatprep.subr.bf16.mxu0 0
        %3826 = vmatpush1.bf16.msra.mxu0 0
        %3827 = vmatprep.subr.bf16.mxu0 0
        %3828 = vmatpush1.bf16.msra.mxu0 0
        %3829 = vmatprep.subr.bf16.mxu0 0
        %3830 = vmatpush1.bf16.msra.mxu0 0
        %3831 = vmatprep.subr.bf16.mxu0 0
        %3832 = vmatpush1.bf16.msra.mxu0 0
        %3833 = vmatprep.subr.bf16.mxu0 0
        %3834 = vmatpush1.bf16.msra.mxu0 0
        %3835 = vmatprep.subr.bf16.mxu0 0
        %3836 = vmatpush1.bf16.msra.mxu0 0
        %3837 = vmatprep.subr.bf16.mxu0 0
        %3838 = vmatpush1.bf16.msra.mxu0 0
        %3839 = vmatprep.subr.bf16.mxu0 0
        %3840 = vmatpush1.bf16.msra.mxu0 0
        %3841 = vmatprep.subr.bf16.mxu0 0
        %3842 = vmatpush1.bf16.msra.mxu0 0
        %3843 = vmatprep.mubr.bf16.mxu0 0
        %3844 = vmatmul.mubr.bf16.gmra.mrb[0].mxu0 %v3585
        %v3845 = vpop.f32.mrb[0].mxu0
        %v3846 = vadd.f32 %v3764, %v3845
        %v3847 = vpop.f32.mrb[0].mxu0
        %v3848 = vadd.f32 %v3768, %v3847
        %v3849 = vpop.f32.mrb[0].mxu0
        %v3850 = vadd.f32 %v3764, %v3849
        %v3851 = vpop.f32.mrb[0].mxu0
        %v3852 = vadd.f32 %v3768, %v3851
        %3853 = vdwg.mxu0
        %v3854 = vmax.f32 %v3846, 0.0
        %v3855 = vmax.f32 %v3848, 0.0
        %v3856 = vmax.f32 %v3850, 0.0
        %v3857 = vmax.f32 %v3852, 0.0
        %v3858 = vpack.c.bf16 %v3856, %v3854
        %v3859 = vpack.c.bf16 %v3857, %v3855
        %3860 = vst [vmem:[#allocation5 + $0x20] sm:$0xff] %v3858
        %3861 = vst [vmem:[#allocation5 + $0x28] sm:$0xff] %v3859
        %s3862 = scalar_lea.vmem %s7, 192
        %v3863 = vld [vmem:[%s3862] sm:$0xff]
        %v3864 = vld [vmem:[%s3862 + $0x8] sm:$0xff]
        %v3865 = vld [vmem:[%s3862 + $0x10] sm:$0xff]
        %v3866 = vld [vmem:[%s3862 + $0x18] sm:$0xff]
        %v3867 = vld [vmem:[%s3862 + $0x20] sm:$0xff]
        %v3868 = vld [vmem:[%s3862 + $0x28] sm:$0xff]
        %v3869 = vld [vmem:[%s3862 + $0x30] sm:$0xff]
        %v3870 = vld [vmem:[%s3862 + $0x38] sm:$0xff]
        %v3871 = vld [vmem:[%s8] sm:$0x3]
        %v3873 = vlaneseq
        %v3874 = vshrl.u32 %v3873, 7
        %v3875 = vsub.s32 0, %v3874
        %v3876 = vrot.slane %v3871, %v3875
        %v3877 = vlaneseq
        %v3878 = vshrl.u32 %v3877, 7
        %v3879 = vsub.s32 1, %v3878
        %v3880 = vrot.slane %v3871, %v3879
        %v3891 = vunpack.c.l.b16 %v3863
        %v3892 = vunpack.c.h.b16 %v3863
        %v3893 = vunpack.c.l.b16 %v3864
        %v3894 = vunpack.c.h.b16 %v3864
        %v3895 = vunpack.c.l.b16 %v3865
        %v3896 = vunpack.c.h.b16 %v3865
        %v3897 = vunpack.c.l.b16 %v3866
        %v3898 = vunpack.c.h.b16 %v3866
        %v3899 = vunpack.c.l.b16 %v3867
        %v3900 = vunpack.c.h.b16 %v3867
        %v3901 = vunpack.c.l.b16 %v3868
        %v3902 = vunpack.c.h.b16 %v3868
        %v3903 = vunpack.c.l.b16 %v3869
        %v3904 = vunpack.c.h.b16 %v3869
        %v3905 = vunpack.c.l.b16 %v3870
        %v3906 = vunpack.c.h.b16 %v3870
        %v3907 = vpack.c.b16 %v3893, %v3891
        %v3908 = vpack.c.b16 %v3894, %v3892
        %v3909 = vpack.c.b16 %v3897, %v3895
        %v3910 = vpack.c.b16 %v3898, %v3896
        %v3911 = vpack.c.b16 %v3901, %v3899
        %v3912 = vpack.c.b16 %v3902, %v3900
        %v3913 = vpack.c.b16 %v3905, %v3903
        %v3914 = vpack.c.b16 %v3906, %v3904
        %3923 = vmatprep.subr.bf16.mxu0 %v3908
        %3924 = vmatpush1.bf16.msra.mxu0 %v3907
        %3925 = vmatprep.subr.bf16.mxu0 %v3910
        %3926 = vmatpush1.bf16.msra.mxu0 %v3909
        %3927 = vmatprep.subr.bf16.mxu0 %v3912
        %3928 = vmatpush1.bf16.msra.mxu0 %v3911
        %3929 = vmatprep.subr.bf16.mxu0 %v3914
        %3930 = vmatpush1.bf16.msra.mxu0 %v3913
        %3931 = vmatprep.subr.bf16.mxu0 0
        %3932 = vmatpush1.bf16.msra.mxu0 0
        %3933 = vmatprep.subr.bf16.mxu0 0
        %3934 = vmatpush1.bf16.msra.mxu0 0
        %3935 = vmatprep.subr.bf16.mxu0 0
        %3936 = vmatpush1.bf16.msra.mxu0 0
        %3937 = vmatprep.subr.bf16.mxu0 0
        %3938 = vmatpush1.bf16.msra.mxu0 0
        %3939 = vmatprep.subr.bf16.mxu0 0
        %3940 = vmatpush1.bf16.msra.mxu0 0
        %3941 = vmatprep.subr.bf16.mxu0 0
        %3942 = vmatpush1.bf16.msra.mxu0 0
        %3943 = vmatprep.subr.bf16.mxu0 0
        %3944 = vmatpush1.bf16.msra.mxu0 0
        %3945 = vmatprep.subr.bf16.mxu0 0
        %3946 = vmatpush1.bf16.msra.mxu0 0
        %3947 = vmatprep.subr.bf16.mxu0 0
        %3948 = vmatpush1.bf16.msra.mxu0 0
        %3949 = vmatprep.subr.bf16.mxu0 0
        %3950 = vmatpush1.bf16.msra.mxu0 0
        %3951 = vmatprep.subr.bf16.mxu0 0
        %3952 = vmatpush1.bf16.msra.mxu0 0
        %3953 = vmatprep.subr.bf16.mxu0 0
        %3954 = vmatpush1.bf16.msra.mxu0 0
        %3955 = vmatprep.mubr.bf16.mxu0 0
        %3956 = vmatmul.mubr.bf16.gmra.mrb[0].mxu0 %v3585
        %v3957 = vpop.f32.mrb[0].mxu0
        %v3958 = vadd.f32 %v3876, %v3957
        %v3959 = vpop.f32.mrb[0].mxu0
        %v3960 = vadd.f32 %v3880, %v3959
        %v3961 = vpop.f32.mrb[0].mxu0
        %v3962 = vadd.f32 %v3876, %v3961
        %v3963 = vpop.f32.mrb[0].mxu0
        %v3964 = vadd.f32 %v3880, %v3963
        %3965 = vdwg.mxu0
        %v3966 = vmax.f32 %v3958, 0.0
        %v3967 = vmax.f32 %v3960, 0.0
        %v3968 = vmax.f32 %v3962, 0.0
        %v3969 = vmax.f32 %v3964, 0.0
        %v3970 = vpack.c.bf16 %v3968, %v3966
        %v3971 = vpack.c.bf16 %v3969, %v3967
        %3972 = vst [vmem:[#allocation5 + $0x30] sm:$0xff] %v3970
        %3973 = vst [vmem:[#allocation5 + $0x38] sm:$0xff] %v3971
        %s3974 = scalar_lea.vmem %s7, 256
        %v3975 = vld [vmem:[%s3974] sm:$0xff]
        %v3976 = vld [vmem:[%s3974 + $0x8] sm:$0xff]
        %v3977 = vld [vmem:[%s3974 + $0x10] sm:$0xff]
        %v3978 = vld [vmem:[%s3974 + $0x18] sm:$0xff]
        %v3979 = vld [vmem:[%s3974 + $0x20] sm:$0xff]
        %v3980 = vld [vmem:[%s3974 + $0x28] sm:$0xff]
        %v3981 = vld [vmem:[%s3974 + $0x30] sm:$0xff]
        %v3982 = vld [vmem:[%s3974 + $0x38] sm:$0xff]
        %v3983 = vld [vmem:[%s8] sm:$0x3]
        %v3985 = vlaneseq
        %v3986 = vshrl.u32 %v3985, 7
        %v3987 = vsub.s32 0, %v3986
        %v3988 = vrot.slane %v3983, %v3987
        %v3989 = vlaneseq
        %v3990 = vshrl.u32 %v3989, 7
        %v3991 = vsub.s32 1, %v3990
        %v3992 = vrot.slane %v3983, %v3991
        %v4003 = vunpack.c.l.b16 %v3975
        %v4004 = vunpack.c.h.b16 %v3975
        %v4005 = vunpack.c.l.b16 %v3976
        %v4006 = vunpack.c.h.b16 %v3976
        %v4007 = vunpack.c.l.b16 %v3977
        %v4008 = vunpack.c.h.b16 %v3977
        %v4009 = vunpack.c.l.b16 %v3978
        %v4010 = vunpack.c.h.b16 %v3978
        %v4011 = vunpack.c.l.b16 %v3979
        %v4012 = vunpack.c.h.b16 %v3979
        %v4013 = vunpack.c.l.b16 %v3980
        %v4014 = vunpack.c.h.b16 %v3980
        %v4015 = vunpack.c.l.b16 %v3981
        %v4016 = vunpack.c.h.b16 %v3981
        %v4017 = vunpack.c.l.b16 %v3982
        %v4018 = vunpack.c.h.b16 %v3982
        %v4019 = vpack.c.b16 %v4005, %v4003
        %v4020 = vpack.c.b16 %v4006, %v4004
        %v4021 = vpack.c.b16 %v4009, %v4007
        %v4022 = vpack.c.b16 %v4010, %v4008
        %v4023 = vpack.c.b16 %v4013, %v4011
        %v4024 = vpack.c.b16 %v4014, %v4012
        %v4025 = vpack.c.b16 %v4017, %v4015
        %v4026 = vpack.c.b16 %v4018, %v4016
        %4035 = vmatprep.subr.bf16.mxu0 %v4020
        %4036 = vmatpush1.bf16.msra.mxu0 %v4019
        %4037 = vmatprep.subr.bf16.mxu0 %v4022
        %4038 = vmatpush1.bf16.msra.mxu0 %v4021
        %4039 = vmatprep.subr.bf16.mxu0 %v4024
        %4040 = vmatpush1.bf16.msra.mxu0 %v4023
        %4041 = vmatprep.subr.bf16.mxu0 %v4026
        %4042 = vmatpush1.bf16.msra.mxu0 %v4025
        %4043 = vmatprep.subr.bf16.mxu0 0
        %4044 = vmatpush1.bf16.msra.mxu0 0
        %4045 = vmatprep.subr.bf16.mxu0 0
        %4046 = vmatpush1.bf16.msra.mxu0 0
        %4047 = vmatprep.subr.bf16.mxu0 0
        %4048 = vmatpush1.bf16.msra.mxu0 0
        %4049 = vmatprep.subr.bf16.mxu0 0
        %4050 = vmatpush1.bf16.msra.mxu0 0
        %4051 = vmatprep.subr.bf16.mxu0 0
        %4052 = vmatpush1.bf16.msra.mxu0 0
        %4053 = vmatprep.subr.bf16.mxu0 0
        %4054 = vmatpush1.bf16.msra.mxu0 0
        %4055 = vmatprep.subr.bf16.mxu0 0
        %4056 = vmatpush1.bf16.msra.mxu0 0
        %4057 = vmatprep.subr.bf16.mxu0 0
        %4058 = vmatpush1.bf16.msra.mxu0 0
        %4059 = vmatprep.subr.bf16.mxu0 0
        %4060 = vmatpush1.bf16.msra.mxu0 0
        %4061 = vmatprep.subr.bf16.mxu0 0
        %4062 = vmatpush1.bf16.msra.mxu0 0
        %4063 = vmatprep.subr.bf16.mxu0 0
        %4064 = vmatpush1.bf16.msra.mxu0 0
        %4065 = vmatprep.subr.bf16.mxu0 0
        %4066 = vmatpush1.bf16.msra.mxu0 0
        %4067 = vmatprep.mubr.bf16.mxu0 0
        %4068 = vmatmul.mubr.bf16.gmra.mrb[0].mxu0 %v3585
        %v4069 = vpop.f32.mrb[0].mxu0
        %v4070 = vadd.f32 %v3988, %v4069
        %v4071 = vpop.f32.mrb[0].mxu0
        %v4072 = vadd.f32 %v3992, %v4071
        %v4073 = vpop.f32.mrb[0].mxu0
        %v4074 = vadd.f32 %v3988, %v4073
        %v4075 = vpop.f32.mrb[0].mxu0
        %v4076 = vadd.f32 %v3992, %v4075
        %4077 = vdwg.mxu0
        %v4078 = vmax.f32 %v4070, 0.0
        %v4079 = vmax.f32 %v4072, 0.0
        %v4080 = vmax.f32 %v4074, 0.0
        %v4081 = vmax.f32 %v4076, 0.0
        %v4082 = vpack.c.bf16 %v4080, %v4078
        %v4083 = vpack.c.bf16 %v4081, %v4079
        %4084 = vst [vmem:[#allocation5 + $0x40] sm:$0xff] %v4082
        %4085 = vst [vmem:[#allocation5 + $0x48] sm:$0xff] %v4083
        %s4086 = scalar_lea.vmem %s7, 320
        %v4087 = vld [vmem:[%s4086] sm:$0xff]
        %v4088 = vld [vmem:[%s4086 + $0x8] sm:$0xff]
        %v4089 = vld [vmem:[%s4086 + $0x10] sm:$0xff]
        %v4090 = vld [vmem:[%s4086 + $0x18] sm:$0xff]
        %v4091 = vld [vmem:[%s4086 + $0x20] sm:$0xff]
        %v4092 = vld [vmem:[%s4086 + $0x28] sm:$0xff]
        %v4093 = vld [vmem:[%s4086 + $0x30] sm:$0xff]
        %v4094 = vld [vmem:[%s4086 + $0x38] sm:$0xff]
        %v4095 = vld [vmem:[%s8] sm:$0x3]
        %v4097 = vlaneseq
        %v4098 = vshrl.u32 %v4097, 7
        %v4099 = vsub.s32 0, %v4098
        %v4100 = vrot.slane %v4095, %v4099
        %v4101 = vlaneseq
        %v4102 = vshrl.u32 %v4101, 7
        %v4103 = vsub.s32 1, %v4102
        %v4104 = vrot.slane %v4095, %v4103
        %v4115 = vunpack.c.l.b16 %v4087
        %v4116 = vunpack.c.h.b16 %v4087
        %v4117 = vunpack.c.l.b16 %v4088
        %v4118 = vunpack.c.h.b16 %v4088
        %v4119 = vunpack.c.l.b16 %v4089
        %v4120 = vunpack.c.h.b16 %v4089
        %v4121 = vunpack.c.l.b16 %v4090
        %v4122 = vunpack.c.h.b16 %v4090
        %v4123 = vunpack.c.l.b16 %v4091
        %v4124 = vunpack.c.h.b16 %v4091
        %v4125 = vunpack.c.l.b16 %v4092
        %v4126 = vunpack.c.h.b16 %v4092
        %v4127 = vunpack.c.l.b16 %v4093
        %v4128 = vunpack.c.h.b16 %v4093
        %v4129 = vunpack.c.l.b16 %v4094
        %v4130 = vunpack.c.h.b16 %v4094
        %v4131 = vpack.c.b16 %v4117, %v4115
        %v4132 = vpack.c.b16 %v4118, %v4116
        %v4133 = vpack.c.b16 %v4121, %v4119
        %v4134 = vpack.c.b16 %v4122, %v4120
        %v4135 = vpack.c.b16 %v4125, %v4123
        %v4136 = vpack.c.b16 %v4126, %v4124
        %v4137 = vpack.c.b16 %v4129, %v4127
        %v4138 = vpack.c.b16 %v4130, %v4128
        %4147 = vmatprep.subr.bf16.mxu0 %v4132
        %4148 = vmatpush1.bf16.msra.mxu0 %v4131
        %4149 = vmatprep.subr.bf16.mxu0 %v4134
        %4150 = vmatpush1.bf16.msra.mxu0 %v4133
        %4151 = vmatprep.subr.bf16.mxu0 %v4136
        %4152 = vmatpush1.bf16.msra.mxu0 %v4135
        %4153 = vmatprep.subr.bf16.mxu0 %v4138
        %4154 = vmatpush1.bf16.msra.mxu0 %v4137
        %4155 = vmatprep.subr.bf16.mxu0 0
        %4156 = vmatpush1.bf16.msra.mxu0 0
        %4157 = vmatprep.subr.bf16.mxu0 0
        %4158 = vmatpush1.bf16.msra.mxu0 0
        %4159 = vmatprep.subr.bf16.mxu0 0
        %4160 = vmatpush1.bf16.msra.mxu0 0
        %4161 = vmatprep.subr.bf16.mxu0 0
        %4162 = vmatpush1.bf16.msra.mxu0 0
        %4163 = vmatprep.subr.bf16.mxu0 0
        %4164 = vmatpush1.bf16.msra.mxu0 0
        %4165 = vmatprep.subr.bf16.mxu0 0
        %4166 = vmatpush1.bf16.msra.mxu0 0
        %4167 = vmatprep.subr.bf16.mxu0 0
        %4168 = vmatpush1.bf16.msra.mxu0 0
        %4169 = vmatprep.subr.bf16.mxu0 0
        %4170 = vmatpush1.bf16.msra.mxu0 0
        %4171 = vmatprep.subr.bf16.mxu0 0
        %4172 = vmatpush1.bf16.msra.mxu0 0
        %4173 = vmatprep.subr.bf16.mxu0 0
        %4174 = vmatpush1.bf16.msra.mxu0 0
        %4175 = vmatprep.subr.bf16.mxu0 0
        %4176 = vmatpush1.bf16.msra.mxu0 0
        %4177 = vmatprep.subr.bf16.mxu0 0
        %4178 = vmatpush1.bf16.msra.mxu0 0
        %4179 = vmatprep.mubr.bf16.mxu0 0
        %4180 = vmatmul.mubr.bf16.gmra.mrb[0].mxu0 %v3585
        %v4181 = vpop.f32.mrb[0].mxu0
        %v4182 = vadd.f32 %v4100, %v4181
        %v4183 = vpop.f32.mrb[0].mxu0
        %v4184 = vadd.f32 %v4104, %v4183
        %v4185 = vpop.f32.mrb[0].mxu0
        %v4186 = vadd.f32 %v4100, %v4185
        %v4187 = vpop.f32.mrb[0].mxu0
        %v4188 = vadd.f32 %v4104, %v4187
        %4189 = vdwg.mxu0
        %v4190 = vmax.f32 %v4182, 0.0
        %v4191 = vmax.f32 %v4184, 0.0
        %v4192 = vmax.f32 %v4186, 0.0
        %v4193 = vmax.f32 %v4188, 0.0
        %v4194 = vpack.c.bf16 %v4192, %v4190
        %v4195 = vpack.c.bf16 %v4193, %v4191
        %4196 = vst [vmem:[#allocation5 + $0x50] sm:$0xff] %v4194
        %4197 = vst [vmem:[#allocation5 + $0x58] sm:$0xff] %v4195
        %s4198 = scalar_lea.vmem %s7, 384
        %v4199 = vld [vmem:[%s4198] sm:$0xff]
        %v4200 = vld [vmem:[%s4198 + $0x8] sm:$0xff]
        %v4201 = vld [vmem:[%s4198 + $0x10] sm:$0xff]
        %v4202 = vld [vmem:[%s4198 + $0x18] sm:$0xff]
        %v4203 = vld [vmem:[%s4198 + $0x20] sm:$0xff]
        %v4204 = vld [vmem:[%s4198 + $0x28] sm:$0xff]
        %v4205 = vld [vmem:[%s4198 + $0x30] sm:$0xff]
        %v4206 = vld [vmem:[%s4198 + $0x38] sm:$0xff]
        %v4207 = vld [vmem:[%s8] sm:$0x3]
        %v4209 = vlaneseq
        %v4210 = vshrl.u32 %v4209, 7
        %v4211 = vsub.s32 0, %v4210
        %v4212 = vrot.slane %v4207, %v4211
        %v4213 = vlaneseq
        %v4214 = vshrl.u32 %v4213, 7
        %v4215 = vsub.s32 1, %v4214
        %v4216 = vrot.slane %v4207, %v4215
        %v4227 = vunpack.c.l.b16 %v4199
        %v4228 = vunpack.c.h.b16 %v4199
        %v4229 = vunpack.c.l.b16 %v4200
        %v4230 = vunpack.c.h.b16 %v4200
        %v4231 = vunpack.c.l.b16 %v4201
        %v4232 = vunpack.c.h.b16 %v4201
        %v4233 = vunpack.c.l.b16 %v4202
        %v4234 = vunpack.c.h.b16 %v4202
        %v4235 = vunpack.c.l.b16 %v4203
        %v4236 = vunpack.c.h.b16 %v4203
        %v4237 = vunpack.c.l.b16 %v4204
        %v4238 = vunpack.c.h.b16 %v4204
        %v4239 = vunpack.c.l.b16 %v4205
        %v4240 = vunpack.c.h.b16 %v4205
        %v4241 = vunpack.c.l.b16 %v4206
        %v4242 = vunpack.c.h.b16 %v4206
        %v4243 = vpack.c.b16 %v4229, %v4227
        %v4244 = vpack.c.b16 %v4230, %v4228
        %v4245 = vpack.c.b16 %v4233, %v4231
        %v4246 = vpack.c.b16 %v4234, %v4232
        %v4247 = vpack.c.b16 %v4237, %v4235
        %v4248 = vpack.c.b16 %v4238, %v4236
        %v4249 = vpack.c.b16 %v4241, %v4239
        %v4250 = vpack.c.b16 %v4242, %v4240
        %4259 = vmatprep.subr.bf16.mxu0 %v4244
        %4260 = vmatpush1.bf16.msra.mxu0 %v4243
        %4261 = vmatprep.subr.bf16.mxu0 %v4246
        %4262 = vmatpush1.bf16.msra.mxu0 %v4245
        %4263 = vmatprep.subr.bf16.mxu0 %v4248
        %4264 = vmatpush1.bf16.msra.mxu0 %v4247
        %4265 = vmatprep.subr.bf16.mxu0 %v4250
        %4266 = vmatpush1.bf16.msra.mxu0 %v4249
        %4267 = vmatprep.subr.bf16.mxu0 0
        %4268 = vmatpush1.bf16.msra.mxu0 0
        %4269 = vmatprep.subr.bf16.mxu0 0
        %4270 = vmatpush1.bf16.msra.mxu0 0
        %4271 = vmatprep.subr.bf16.mxu0 0
        %4272 = vmatpush1.bf16.msra.mxu0 0
        %4273 = vmatprep.subr.bf16.mxu0 0
        %4274 = vmatpush1.bf16.msra.mxu0 0
        %4275 = vmatprep.subr.bf16.mxu0 0
        %4276 = vmatpush1.bf16.msra.mxu0 0
        %4277 = vmatprep.subr.bf16.mxu0 0
        %4278 = vmatpush1.bf16.msra.mxu0 0
        %4279 = vmatprep.subr.bf16.mxu0 0
        %4280 = vmatpush1.bf16.msra.mxu0 0
        %4281 = vmatprep.subr.bf16.mxu0 0
        %4282 = vmatpush1.bf16.msra.mxu0 0
        %4283 = vmatprep.subr.bf16.mxu0 0
        %4284 = vmatpush1.bf16.msra.mxu0 0
        %4285 = vmatprep.subr.bf16.mxu0 0
        %4286 = vmatpush1.bf16.msra.mxu0 0
        %4287 = vmatprep.subr.bf16.mxu0 0
        %4288 = vmatpush1.bf16.msra.mxu0 0
        %4289 = vmatprep.subr.bf16.mxu0 0
        %4290 = vmatpush1.bf16.msra.mxu0 0
        %4291 = vmatprep.mubr.bf16.mxu0 0
        %4292 = vmatmul.mubr.bf16.gmra.mrb[0].mxu0 %v3585
        %v4293 = vpop.f32.mrb[0].mxu0
        %v4294 = vadd.f32 %v4212, %v4293
        %v4295 = vpop.f32.mrb[0].mxu0
        %v4296 = vadd.f32 %v4216, %v4295
        %v4297 = vpop.f32.mrb[0].mxu0
        %v4298 = vadd.f32 %v4212, %v4297
        %v4299 = vpop.f32.mrb[0].mxu0
        %v4300 = vadd.f32 %v4216, %v4299
        %4301 = vdwg.mxu0
        %v4302 = vmax.f32 %v4294, 0.0
        %v4303 = vmax.f32 %v4296, 0.0
        %v4304 = vmax.f32 %v4298, 0.0
        %v4305 = vmax.f32 %v4300, 0.0
        %v4306 = vpack.c.bf16 %v4304, %v4302
        %v4307 = vpack.c.bf16 %v4305, %v4303
        %4308 = vst [vmem:[#allocation5 + $0x60] sm:$0xff] %v4306
        %4309 = vst [vmem:[#allocation5 + $0x68] sm:$0xff] %v4307
        %v4310 = vld [vmem:[#allocation5] sm:$0xff]
        %v4311 = vld [vmem:[#allocation5 + $0x8] sm:$0xff]
        %v4312 = vld [vmem:[#allocation5 + $0x10] sm:$0xff]
        %v4313 = vld [vmem:[#allocation5 + $0x18] sm:$0xff]
        %v4314 = vld [vmem:[#allocation5 + $0x20] sm:$0xff]
        %v4315 = vld [vmem:[#allocation5 + $0x28] sm:$0xff]
        %v4316 = vld [vmem:[#allocation5 + $0x30] sm:$0xff]
        %v4317 = vld [vmem:[#allocation5 + $0x38] sm:$0xff]
        %v4318 = vld [vmem:[#allocation5 + $0x40] sm:$0xff]
        %v4319 = vld [vmem:[#allocation5 + $0x48] sm:$0xff]
        %v4320 = vld [vmem:[#allocation5 + $0x50] sm:$0xff]
        %v4321 = vld [vmem:[#allocation5 + $0x58] sm:$0xff]
        %v4322 = vld [vmem:[#allocation5 + $0x60] sm:$0xff]
        %v4323 = vld [vmem:[#allocation5 + $0x68] sm:$0xff]
        %s4324 = scalar_lea.vmem %s9, 256
        %v4325 = vld [vmem:[%s4324] sm:$0xff]
        %v4326 = vld [vmem:[%s4324 + $0x8] sm:$0xff]
        %v4327 = vld [vmem:[%s4324 + $0x10] sm:$0xff]
        %v4328 = vld [vmem:[%s4324 + $0x18] sm:$0xff]
        %v4329 = vld [vmem:[%s4324 + $0x20] sm:$0xff]
        %v4330 = vld [vmem:[%s4324 + $0x28] sm:$0xff]
        %v4331 = vld [vmem:[%s4324 + $0x30] sm:$0xff]
        %v4332 = vld [vmem:[%s4324 + $0x38] sm:$0xff]
        %v4333 = vld [vmem:[%s4324 + $0x40] sm:$0xff]
        %v4334 = vld [vmem:[%s4324 + $0x48] sm:$0xff]
        %v4335 = vld [vmem:[%s4324 + $0x50] sm:$0xff]
        %v4336 = vld [vmem:[%s4324 + $0x58] sm:$0xff]
        %v4337 = vld [vmem:[%s4324 + $0x60] sm:$0xff]
        %v4338 = vld [vmem:[%s4324 + $0x68] sm:$0xff]
        %v4339 = vld [vmem:[%s4324 + $0x70] sm:$0xff]
        %v4340 = vld [vmem:[%s4324 + $0x78] sm:$0xff]
        %v4341 = vld [vmem:[%s4324 + $0x80] sm:$0xff]
        %v4342 = vld [vmem:[%s4324 + $0x88] sm:$0xff]
        %v4343 = vld [vmem:[%s4324 + $0x90] sm:$0xff]
        %v4344 = vld [vmem:[%s4324 + $0x98] sm:$0xff]
        %v4345 = vld [vmem:[%s4324 + $0xa0] sm:$0xff]
        %v4346 = vld [vmem:[%s4324 + $0xa8] sm:$0xff]
        %v4347 = vld [vmem:[%s4324 + $0xb0] sm:$0xff]
        %v4348 = vld [vmem:[%s4324 + $0xb8] sm:$0xff]
        %v4349 = vld [vmem:[%s4324 + $0xc0] sm:$0xff]
        %v4350 = vld [vmem:[%s4324 + $0xc8] sm:$0xff]
        %v4351 = vld [vmem:[%s4324 + $0xd0] sm:$0xff]
        %v4352 = vld [vmem:[%s4324 + $0xd8] sm:$0xff]
        %v4353 = vld [vmem:[%s4324 + $0xe0] sm:$0xff]
        %v4354 = vld [vmem:[%s4324 + $0xe8] sm:$0xff]
        %v4355 = vld [vmem:[%s4324 + $0xf0] sm:$0xff]
        %v4356 = vld [vmem:[%s4324 + $0xf8] sm:$0xff]
        %v4357 = vld [vmem:[%s10] sm:$0x3]
        %v4359 = vlaneseq
        %v4360 = vshrl.u32 %v4359, 7
        %v4361 = vsub.s32 0, %v4360
        %v4362 = vrot.slane %v4357, %v4361
        %v4363 = vlaneseq
        %v4364 = vshrl.u32 %v4363, 7
        %v4365 = vsub.s32 1, %v4364
        %v4366 = vrot.slane %v4357, %v4365
        %v4401 = vunpack.c.l.b16 %v4325
        %v4402 = vunpack.c.h.b16 %v4325
        %v4403 = vunpack.c.l.b16 %v4326
        %v4404 = vunpack.c.h.b16 %v4326
        %v4405 = vunpack.c.l.b16 %v4327
        %v4406 = vunpack.c.h.b16 %v4327
        %v4407 = vunpack.c.l.b16 %v4328
        %v4408 = vunpack.c.h.b16 %v4328
        %v4409 = vunpack.c.l.b16 %v4329
        %v4410 = vunpack.c.h.b16 %v4329
        %v4411 = vunpack.c.l.b16 %v4330
        %v4412 = vunpack.c.h.b16 %v4330
        %v4413 = vunpack.c.l.b16 %v4331
        %v4414 = vunpack.c.h.b16 %v4331
        %v4415 = vunpack.c.l.b16 %v4332
        %v4416 = vunpack.c.h.b16 %v4332
        %v4417 = vunpack.c.l.b16 %v4333
        %v4418 = vunpack.c.h.b16 %v4333
        %v4419 = vunpack.c.l.b16 %v4334
        %v4420 = vunpack.c.h.b16 %v4334
        %v4421 = vunpack.c.l.b16 %v4335
        %v4422 = vunpack.c.h.b16 %v4335
        %v4423 = vunpack.c.l.b16 %v4336
        %v4424 = vunpack.c.h.b16 %v4336
        %v4425 = vunpack.c.l.b16 %v4337
        %v4426 = vunpack.c.h.b16 %v4337
        %v4427 = vunpack.c.l.b16 %v4338
        %v4428 = vunpack.c.h.b16 %v4338
        %v4429 = vunpack.c.l.b16 %v4339
        %v4430 = vunpack.c.h.b16 %v4339
        %v4431 = vunpack.c.l.b16 %v4340
        %v4432 = vunpack.c.h.b16 %v4340
        %v4433 = vunpack.c.l.b16 %v4341
        %v4434 = vunpack.c.h.b16 %v4341
        %v4435 = vunpack.c.l.b16 %v4342
        %v4436 = vunpack.c.h.b16 %v4342
        %v4437 = vunpack.c.l.b16 %v4343
        %v4438 = vunpack.c.h.b16 %v4343
        %v4439 = vunpack.c.l.b16 %v4344
        %v4440 = vunpack.c.h.b16 %v4344
        %v4441 = vunpack.c.l.b16 %v4345
        %v4442 = vunpack.c.h.b16 %v4345
        %v4443 = vunpack.c.l.b16 %v4346
        %v4444 = vunpack.c.h.b16 %v4346
        %v4445 = vunpack.c.l.b16 %v4347
        %v4446 = vunpack.c.h.b16 %v4347
        %v4447 = vunpack.c.l.b16 %v4348
        %v4448 = vunpack.c.h.b16 %v4348
        %v4449 = vunpack.c.l.b16 %v4349
        %v4450 = vunpack.c.h.b16 %v4349
        %v4451 = vunpack.c.l.b16 %v4350
        %v4452 = vunpack.c.h.b16 %v4350
        %v4453 = vunpack.c.l.b16 %v4351
        %v4454 = vunpack.c.h.b16 %v4351
        %v4455 = vunpack.c.l.b16 %v4352
        %v4456 = vunpack.c.h.b16 %v4352
        %v4457 = vunpack.c.l.b16 %v4353
        %v4458 = vunpack.c.h.b16 %v4353
        %v4459 = vunpack.c.l.b16 %v4354
        %v4460 = vunpack.c.h.b16 %v4354
        %v4461 = vunpack.c.l.b16 %v4355
        %v4462 = vunpack.c.h.b16 %v4355
        %v4463 = vunpack.c.l.b16 %v4356
        %v4464 = vunpack.c.h.b16 %v4356
        %v4465 = vpack.c.b16 %v4403, %v4401
        %v4466 = vpack.c.b16 %v4404, %v4402
        %v4467 = vpack.c.b16 %v4407, %v4405
        %v4468 = vpack.c.b16 %v4408, %v4406
        %v4469 = vpack.c.b16 %v4411, %v4409
        %v4470 = vpack.c.b16 %v4412, %v4410
        %v4471 = vpack.c.b16 %v4415, %v4413
        %v4472 = vpack.c.b16 %v4416, %v4414
        %v4473 = vpack.c.b16 %v4419, %v4417
        %v4474 = vpack.c.b16 %v4420, %v4418
        %v4475 = vpack.c.b16 %v4423, %v4421
        %v4476 = vpack.c.b16 %v4424, %v4422
        %v4477 = vpack.c.b16 %v4427, %v4425
        %v4478 = vpack.c.b16 %v4428, %v4426
        %v4479 = vpack.c.b16 %v4431, %v4429
        %v4480 = vpack.c.b16 %v4432, %v4430
        %v4481 = vpack.c.b16 %v4435, %v4433
        %v4482 = vpack.c.b16 %v4436, %v4434
        %v4483 = vpack.c.b16 %v4439, %v4437
        %v4484 = vpack.c.b16 %v4440, %v4438
        %v4485 = vpack.c.b16 %v4443, %v4441
        %v4486 = vpack.c.b16 %v4444, %v4442
        %v4487 = vpack.c.b16 %v4447, %v4445
        %v4488 = vpack.c.b16 %v4448, %v4446
        %v4489 = vpack.c.b16 %v4451, %v4449
        %v4490 = vpack.c.b16 %v4452, %v4450
        %v4491 = vpack.c.b16 %v4455, %v4453
        %v4492 = vpack.c.b16 %v4456, %v4454
        %v4493 = vpack.c.b16 %v4459, %v4457
        %v4494 = vpack.c.b16 %v4460, %v4458
        %v4495 = vpack.c.b16 %v4463, %v4461
        %v4496 = vpack.c.b16 %v4464, %v4462
        %4529 = vmatprep.subr.bf16.mxu0 %v4466
        %4530 = vmatpush1.bf16.msra.mxu0 %v4465
        %4531 = vmatprep.subr.bf16.mxu0 %v4468
        %4532 = vmatpush1.bf16.msra.mxu0 %v4467
        %4533 = vmatprep.subr.bf16.mxu0 %v4470
        %4534 = vmatpush1.bf16.msra.mxu0 %v4469
        %4535 = vmatprep.subr.bf16.mxu0 %v4472
        %4536 = vmatpush1.bf16.msra.mxu0 %v4471
        %4537 = vmatprep.subr.bf16.mxu0 %v4474
        %4538 = vmatpush1.bf16.msra.mxu0 %v4473
        %4539 = vmatprep.subr.bf16.mxu0 %v4476
        %4540 = vmatpush1.bf16.msra.mxu0 %v4475
        %4541 = vmatprep.subr.bf16.mxu0 %v4478
        %4542 = vmatpush1.bf16.msra.mxu0 %v4477
        %4543 = vmatprep.subr.bf16.mxu0 %v4480
        %4544 = vmatpush1.bf16.msra.mxu0 %v4479
        %4545 = vmatprep.subr.bf16.mxu0 %v4482
        %4546 = vmatpush1.bf16.msra.mxu0 %v4481
        %4547 = vmatprep.subr.bf16.mxu0 %v4484
        %4548 = vmatpush1.bf16.msra.mxu0 %v4483
        %4549 = vmatprep.subr.bf16.mxu0 %v4486
        %4550 = vmatpush1.bf16.msra.mxu0 %v4485
        %4551 = vmatprep.subr.bf16.mxu0 %v4488
        %4552 = vmatpush1.bf16.msra.mxu0 %v4487
        %4553 = vmatprep.subr.bf16.mxu0 %v4490
        %4554 = vmatpush1.bf16.msra.mxu0 %v4489
        %4555 = vmatprep.subr.bf16.mxu0 %v4492
        %4556 = vmatpush1.bf16.msra.mxu0 %v4491
        %4557 = vmatprep.subr.bf16.mxu0 %v4494
        %4558 = vmatpush1.bf16.msra.mxu0 %v4493
        %4559 = vmatprep.subr.bf16.mxu0 %v4496
        %4560 = vmatpush1.bf16.msra.mxu0 %v4495
        %4561 = vmatprep.mubr.bf16.mxu0 %v4311
        %4562 = vmatmul.mubr.bf16.gmra.mrb[0].mxu0 %v4310
        %v4563 = vpop.f32.mrb[0].mxu0
        %v4564 = vadd.f32 %v4362, %v4563
        %v4565 = vpop.f32.mrb[0].mxu0
        %v4566 = vadd.f32 %v4366, %v4565
        %v4567 = vpop.f32.mrb[0].mxu0
        %v4568 = vadd.f32 %v4362, %v4567
        %v4569 = vpop.f32.mrb[0].mxu0
        %v4570 = vadd.f32 %v4366, %v4569
        %4571 = vmatprep.mubr.bf16.mxu0 %v4313
        %4572 = vmatmul.mubr.bf16.gmra.mrb[0].mxu0 %v4312
        %v4573 = vpop.f32.mrb[0].mxu0
        %v4574 = vadd.f32 %v4362, %v4573
        %v4575 = vpop.f32.mrb[0].mxu0
        %v4576 = vadd.f32 %v4366, %v4575
        %v4577 = vpop.f32.mrb[0].mxu0
        %v4578 = vadd.f32 %v4362, %v4577
        %v4579 = vpop.f32.mrb[0].mxu0
        %v4580 = vadd.f32 %v4366, %v4579
        %4581 = vmatprep.mubr.bf16.mxu0 %v4315
        %4582 = vmatmul.mubr.bf16.gmra.mrb[0].mxu0 %v4314
        %v4583 = vpop.f32.mrb[0].mxu0
        %v4584 = vadd.f32 %v4362, %v4583
        %v4585 = vpop.f32.mrb[0].mxu0
        %v4586 = vadd.f32 %v4366, %v4585
        %v4587 = vpop.f32.mrb[0].mxu0
        %v4588 = vadd.f32 %v4362, %v4587
        %v4589 = vpop.f32.mrb[0].mxu0
        %v4590 = vadd.f32 %v4366, %v4589
        %4591 = vmatprep.mubr.bf16.mxu0 %v4317
        %4592 = vmatmul.mubr.bf16.gmra.mrb[0].mxu0 %v4316
        %v4593 = vpop.f32.mrb[0].mxu0
        %v4594 = vadd.f32 %v4362, %v4593
        %v4595 = vpop.f32.mrb[0].mxu0
        %v4596 = vadd.f32 %v4366, %v4595
        %v4597 = vpop.f32.mrb[0].mxu0
        %v4598 = vadd.f32 %v4362, %v4597
        %v4599 = vpop.f32.mrb[0].mxu0
        %v4600 = vadd.f32 %v4366, %v4599
        %4601 = vmatprep.mubr.bf16.mxu0 %v4319
        %4602 = vmatmul.mubr.bf16.gmra.mrb[0].mxu0 %v4318
        %v4603 = vpop.f32.mrb[0].mxu0
        %v4604 = vadd.f32 %v4362, %v4603
        %v4605 = vpop.f32.mrb[0].mxu0
        %v4606 = vadd.f32 %v4366, %v4605
        %v4607 = vpop.f32.mrb[0].mxu0
        %v4608 = vadd.f32 %v4362, %v4607
        %v4609 = vpop.f32.mrb[0].mxu0
        %v4610 = vadd.f32 %v4366, %v4609
        %4611 = vmatprep.mubr.bf16.mxu0 %v4321
        %4612 = vmatmul.mubr.bf16.gmra.mrb[0].mxu0 %v4320
        %v4613 = vpop.f32.mrb[0].mxu0
        %v4614 = vadd.f32 %v4362, %v4613
        %v4615 = vpop.f32.mrb[0].mxu0
        %v4616 = vadd.f32 %v4366, %v4615
        %v4617 = vpop.f32.mrb[0].mxu0
        %v4618 = vadd.f32 %v4362, %v4617
        %v4619 = vpop.f32.mrb[0].mxu0
        %v4620 = vadd.f32 %v4366, %v4619
        %4621 = vmatprep.mubr.bf16.mxu0 %v4323
        %4622 = vmatmul.mubr.bf16.gmra.mrb[0].mxu0 %v4322
        %v4623 = vpop.f32.mrb[0].mxu0
        %v4624 = vadd.f32 %v4362, %v4623
        %v4625 = vpop.f32.mrb[0].mxu0
        %v4626 = vadd.f32 %v4366, %v4625
        %v4627 = vpop.f32.mrb[0].mxu0
        %v4628 = vadd.f32 %v4362, %v4627
        %v4629 = vpop.f32.mrb[0].mxu0
        %v4630 = vadd.f32 %v4366, %v4629
        %4631 = vdwg.mxu0
        %v4632 = vmax.f32 %v4564, 0.0
        %v4633 = vmax.f32 %v4566, 0.0
        %v4634 = vmax.f32 %v4568, 0.0
        %v4635 = vmax.f32 %v4570, 0.0
        %v4636 = vmax.f32 %v4574, 0.0
        %v4637 = vmax.f32 %v4576, 0.0
        %v4638 = vmax.f32 %v4578, 0.0
        %v4639 = vmax.f32 %v4580, 0.0
        %v4640 = vmax.f32 %v4584, 0.0
        %v4641 = vmax.f32 %v4586, 0.0
        %v4642 = vmax.f32 %v4588, 0.0
        %v4643 = vmax.f32 %v4590, 0.0
        %v4644 = vmax.f32 %v4594, 0.0
        %v4645 = vmax.f32 %v4596, 0.0
        %v4646 = vmax.f32 %v4598, 0.0
        %v4647 = vmax.f32 %v4600, 0.0
        %v4648 = vmax.f32 %v4604, 0.0
        %v4649 = vmax.f32 %v4606, 0.0
        %v4650 = vmax.f32 %v4608, 0.0
        %v4651 = vmax.f32 %v4610, 0.0
        %v4652 = vmax.f32 %v4614, 0.0
        %v4653 = vmax.f32 %v4616, 0.0
        %v4654 = vmax.f32 %v4618, 0.0
        %v4655 = vmax.f32 %v4620, 0.0
        %v4656 = vmax.f32 %v4624, 0.0
        %v4657 = vmax.f32 %v4626, 0.0
        %v4658 = vmax.f32 %v4628, 0.0
        %v4659 = vmax.f32 %v4630, 0.0
        %v4660 = vpack.c.bf16 %v4634, %v4632
        %v4661 = vpack.c.bf16 %v4635, %v4633
        %v4662 = vpack.c.bf16 %v4638, %v4636
        %v4663 = vpack.c.bf16 %v4639, %v4637
        %v4664 = vpack.c.bf16 %v4642, %v4640
        %v4665 = vpack.c.bf16 %v4643, %v4641
        %v4666 = vpack.c.bf16 %v4646, %v4644
        %v4667 = vpack.c.bf16 %v4647, %v4645
        %v4668 = vpack.c.bf16 %v4650, %v4648
        %v4669 = vpack.c.bf16 %v4651, %v4649
        %v4670 = vpack.c.bf16 %v4654, %v4652
        %v4671 = vpack.c.bf16 %v4655, %v4653
        %v4672 = vpack.c.bf16 %v4658, %v4656
        %v4673 = vpack.c.bf16 %v4659, %v4657
        %4674 = vst [vmem:[#allocation6] sm:$0xff] %v4660
        %4675 = vst [vmem:[#allocation6 + $0x8] sm:$0xff] %v4661
        %4676 = vst [vmem:[#allocation6 + $0x10] sm:$0xff] %v4662
        %4677 = vst [vmem:[#allocation6 + $0x18] sm:$0xff] %v4663
        %4678 = vst [vmem:[#allocation6 + $0x20] sm:$0xff] %v4664
        %4679 = vst [vmem:[#allocation6 + $0x28] sm:$0xff] %v4665
        %4680 = vst [vmem:[#allocation6 + $0x30] sm:$0xff] %v4666
        %4681 = vst [vmem:[#allocation6 + $0x38] sm:$0xff] %v4667
        %4682 = vst [vmem:[#allocation6 + $0x40] sm:$0xff] %v4668
        %4683 = vst [vmem:[#allocation6 + $0x48] sm:$0xff] %v4669
        %4684 = vst [vmem:[#allocation6 + $0x50] sm:$0xff] %v4670
        %4685 = vst [vmem:[#allocation6 + $0x58] sm:$0xff] %v4671
        %4686 = vst [vmem:[#allocation6 + $0x60] sm:$0xff] %v4672
        %4687 = vst [vmem:[#allocation6 + $0x68] sm:$0xff] %v4673
        %v4688 = vld [vmem:[#allocation5] sm:$0xff]
        %v4689 = vld [vmem:[#allocation5 + $0x8] sm:$0xff]
        %v4690 = vld [vmem:[#allocation5 + $0x10] sm:$0xff]
        %v4691 = vld [vmem:[#allocation5 + $0x18] sm:$0xff]
        %v4692 = vld [vmem:[#allocation5 + $0x20] sm:$0xff]
        %v4693 = vld [vmem:[#allocation5 + $0x28] sm:$0xff]
        %v4694 = vld [vmem:[#allocation5 + $0x30] sm:$0xff]
        %v4695 = vld [vmem:[#allocation5 + $0x38] sm:$0xff]
        %v4696 = vld [vmem:[#allocation5 + $0x40] sm:$0xff]
        %v4697 = vld [vmem:[#allocation5 + $0x48] sm:$0xff]
        %v4698 = vld [vmem:[#allocation5 + $0x50] sm:$0xff]
        %v4699 = vld [vmem:[#allocation5 + $0x58] sm:$0xff]
        %v4700 = vld [vmem:[#allocation5 + $0x60] sm:$0xff]
        %v4701 = vld [vmem:[#allocation5 + $0x68] sm:$0xff]
        %s4702 = scalar_lea.vmem %s9, 512
        %v4703 = vld [vmem:[%s4702] sm:$0xff]
        %v4704 = vld [vmem:[%s4702 + $0x8] sm:$0xff]
        %v4705 = vld [vmem:[%s4702 + $0x10] sm:$0xff]
        %v4706 = vld [vmem:[%s4702 + $0x18] sm:$0xff]
        %v4707 = vld [vmem:[%s4702 + $0x20] sm:$0xff]
        %v4708 = vld [vmem:[%s4702 + $0x28] sm:$0xff]
        %v4709 = vld [vmem:[%s4702 + $0x30] sm:$0xff]
        %v4710 = vld [vmem:[%s4702 + $0x38] sm:$0xff]
        %v4711 = vld [vmem:[%s4702 + $0x40] sm:$0xff]
        %v4712 = vld [vmem:[%s4702 + $0x48] sm:$0xff]
        %v4713 = vld [vmem:[%s4702 + $0x50] sm:$0xff]
        %v4714 = vld [vmem:[%s4702 + $0x58] sm:$0xff]
        %v4715 = vld [vmem:[%s4702 + $0x60] sm:$0xff]
        %v4716 = vld [vmem:[%s4702 + $0x68] sm:$0xff]
        %v4717 = vld [vmem:[%s4702 + $0x70] sm:$0xff]
        %v4718 = vld [vmem:[%s4702 + $0x78] sm:$0xff]
        %v4719 = vld [vmem:[%s4702 + $0x80] sm:$0xff]
        %v4720 = vld [vmem:[%s4702 + $0x88] sm:$0xff]
        %v4721 = vld [vmem:[%s4702 + $0x90] sm:$0xff]
        %v4722 = vld [vmem:[%s4702 + $0x98] sm:$0xff]
        %v4723 = vld [vmem:[%s4702 + $0xa0] sm:$0xff]
        %v4724 = vld [vmem:[%s4702 + $0xa8] sm:$0xff]
        %v4725 = vld [vmem:[%s4702 + $0xb0] sm:$0xff]
        %v4726 = vld [vmem:[%s4702 + $0xb8] sm:$0xff]
        %v4727 = vld [vmem:[%s4702 + $0xc0] sm:$0xff]
        %v4728 = vld [vmem:[%s4702 + $0xc8] sm:$0xff]
        %v4729 = vld [vmem:[%s4702 + $0xd0] sm:$0xff]
        %v4730 = vld [vmem:[%s4702 + $0xd8] sm:$0xff]
        %v4731 = vld [vmem:[%s4702 + $0xe0] sm:$0xff]
        %v4732 = vld [vmem:[%s4702 + $0xe8] sm:$0xff]
        %v4733 = vld [vmem:[%s4702 + $0xf0] sm:$0xff]
        %v4734 = vld [vmem:[%s4702 + $0xf8] sm:$0xff]
        %v4735 = vld [vmem:[#allocation5 + $0x10] sm:$0xff]
        %v4736 = vld [vmem:[#allocation5 + $0x18] sm:$0xff]
        %v4737 = vld [vmem:[#allocation5 + $0x20] sm:$0xff]
        %v4738 = vld [vmem:[#allocation5 + $0x28] sm:$0xff]
        %v4739 = vld [vmem:[#allocation5 + $0x30] sm:$0xff]
        %v4740 = vld [vmem:[#allocation5 + $0x38] sm:$0xff]
        %v4741 = vld [vmem:[#allocation5 + $0x40] sm:$0xff]
        %v4742 = vld [vmem:[#allocation5 + $0x48] sm:$0xff]
        %v4743 = vld [vmem:[#allocation5 + $0x50] sm:$0xff]
        %v4744 = vld [vmem:[#allocation5 + $0x58] sm:$0xff]
        %v4745 = vld [vmem:[#allocation5 + $0x60] sm:$0xff]
        %v4746 = vld [vmem:[#allocation5 + $0x68] sm:$0xff]
        %v4747 = vld [vmem:[#allocation5 + $0x70] sm:$0xff]
        %v4748 = vld [vmem:[#allocation5 + $0x78] sm:$0xff]
        %v4749 = vld [vmem:[%s9] sm:$0xff]
        %v4750 = vld [vmem:[%s9 + $0x8] sm:$0xff]
        %v4751 = vld [vmem:[%s9 + $0x10] sm:$0xff]
        %v4752 = vld [vmem:[%s9 + $0x18] sm:$0xff]
        %v4753 = vld [vmem:[%s9 + $0x20] sm:$0xff]
        %v4754 = vld [vmem:[%s9 + $0x28] sm:$0xff]
        %v4755 = vld [vmem:[%s9 + $0x30] sm:$0xff]
        %v4756 = vld [vmem:[%s9 + $0x38] sm:$0xff]
        %v4757 = vld [vmem:[%s9 + $0x40] sm:$0xff]
        %v4758 = vld [vmem:[%s9 + $0x48] sm:$0xff]
        %v4759 = vld [vmem:[%s9 + $0x50] sm:$0xff]
        %v4760 = vld [vmem:[%s9 + $0x58] sm:$0xff]
        %v4761 = vld [vmem:[%s9 + $0x60] sm:$0xff]
        %v4762 = vld [vmem:[%s9 + $0x68] sm:$0xff]
        %v4763 = vld [vmem:[%s9 + $0x70] sm:$0xff]
        %v4764 = vld [vmem:[%s9 + $0x78] sm:$0xff]
        %v4765 = vld [vmem:[%s9 + $0x80] sm:$0xff]
        %v4766 = vld [vmem:[%s9 + $0x88] sm:$0xff]
        %v4767 = vld [vmem:[%s9 + $0x90] sm:$0xff]
        %v4768 = vld [vmem:[%s9 + $0x98] sm:$0xff]
        %v4769 = vld [vmem:[%s9 + $0xa0] sm:$0xff]
        %v4770 = vld [vmem:[%s9 + $0xa8] sm:$0xff]
        %v4771 = vld [vmem:[%s9 + $0xb0] sm:$0xff]
        %v4772 = vld [vmem:[%s9 + $0xb8] sm:$0xff]
        %v4773 = vld [vmem:[%s9 + $0xc0] sm:$0xff]
        %v4774 = vld [vmem:[%s9 + $0xc8] sm:$0xff]
        %v4775 = vld [vmem:[%s9 + $0xd0] sm:$0xff]
        %v4776 = vld [vmem:[%s9 + $0xd8] sm:$0xff]
        %v4777 = vld [vmem:[%s9 + $0xe0] sm:$0xff]
        %v4778 = vld [vmem:[%s9 + $0xe8] sm:$0xff]
        %v4779 = vld [vmem:[%s9 + $0xf0] sm:$0xff]
        %v4780 = vld [vmem:[%s9 + $0xf8] sm:$0xff]
        %v4813 = vunpack.c.l.b16 %v4749
        %v4814 = vunpack.c.h.b16 %v4749
        %v4815 = vunpack.c.l.b16 %v4750
        %v4816 = vunpack.c.h.b16 %v4750
        %v4817 = vunpack.c.l.b16 %v4751
        %v4818 = vunpack.c.h.b16 %v4751
        %v4819 = vunpack.c.l.b16 %v4752
        %v4820 = vunpack.c.h.b16 %v4752
        %v4821 = vunpack.c.l.b16 %v4753
        %v4822 = vunpack.c.h.b16 %v4753
        %v4823 = vunpack.c.l.b16 %v4754
        %v4824 = vunpack.c.h.b16 %v4754
        %v4825 = vunpack.c.l.b16 %v4755
        %v4826 = vunpack.c.h.b16 %v4755
        %v4827 = vunpack.c.l.b16 %v4756
        %v4828 = vunpack.c.h.b16 %v4756
        %v4829 = vunpack.c.l.b16 %v4757
        %v4830 = vunpack.c.h.b16 %v4757
        %v4831 = vunpack.c.l.b16 %v4758
        %v4832 = vunpack.c.h.b16 %v4758
        %v4833 = vunpack.c.l.b16 %v4759
        %v4834 = vunpack.c.h.b16 %v4759
        %v4835 = vunpack.c.l.b16 %v4760
        %v4836 = vunpack.c.h.b16 %v4760
        %v4837 = vunpack.c.l.b16 %v4761
        %v4838 = vunpack.c.h.b16 %v4761
        %v4839 = vunpack.c.l.b16 %v4762
        %v4840 = vunpack.c.h.b16 %v4762
        %v4841 = vunpack.c.l.b16 %v4763
        %v4842 = vunpack.c.h.b16 %v4763
        %v4843 = vunpack.c.l.b16 %v4764
        %v4844 = vunpack.c.h.b16 %v4764
        %v4845 = vunpack.c.l.b16 %v4765
        %v4846 = vunpack.c.h.b16 %v4765
        %v4847 = vunpack.c.l.b16 %v4766
        %v4848 = vunpack.c.h.b16 %v4766
        %v4849 = vunpack.c.l.b16 %v4767
        %v4850 = vunpack.c.h.b16 %v4767
        %v4851 = vunpack.c.l.b16 %v4768
        %v4852 = vunpack.c.h.b16 %v4768
        %v4853 = vunpack.c.l.b16 %v4769
        %v4854 = vunpack.c.h.b16 %v4769
        %v4855 = vunpack.c.l.b16 %v4770
        %v4856 = vunpack.c.h.b16 %v4770
        %v4857 = vunpack.c.l.b16 %v4771
        %v4858 = vunpack.c.h.b16 %v4771
        %v4859 = vunpack.c.l.b16 %v4772
        %v4860 = vunpack.c.h.b16 %v4772
        %v4861 = vunpack.c.l.b16 %v4773
        %v4862 = vunpack.c.h.b16 %v4773
        %v4863 = vunpack.c.l.b16 %v4774
        %v4864 = vunpack.c.h.b16 %v4774
        %v4865 = vunpack.c.l.b16 %v4775
        %v4866 = vunpack.c.h.b16 %v4775
        %v4867 = vunpack.c.l.b16 %v4776
        %v4868 = vunpack.c.h.b16 %v4776
        %v4869 = vunpack.c.l.b16 %v4777
        %v4870 = vunpack.c.h.b16 %v4777
        %v4871 = vunpack.c.l.b16 %v4778
        %v4872 = vunpack.c.h.b16 %v4778
        %v4873 = vunpack.c.l.b16 %v4779
        %v4874 = vunpack.c.h.b16 %v4779
        %v4875 = vunpack.c.l.b16 %v4780
        %v4876 = vunpack.c.h.b16 %v4780
        %v4877 = vpack.c.b16 %v4815, %v4813
        %v4878 = vpack.c.b16 %v4816, %v4814
        %v4879 = vpack.c.b16 %v4819, %v4817
        %v4880 = vpack.c.b16 %v4820, %v4818
        %v4881 = vpack.c.b16 %v4823, %v4821
        %v4882 = vpack.c.b16 %v4824, %v4822
        %v4883 = vpack.c.b16 %v4827, %v4825
        %v4884 = vpack.c.b16 %v4828, %v4826
        %v4885 = vpack.c.b16 %v4831, %v4829
        %v4886 = vpack.c.b16 %v4832, %v4830
        %v4887 = vpack.c.b16 %v4835, %v4833
        %v4888 = vpack.c.b16 %v4836, %v4834
        %v4889 = vpack.c.b16 %v4839, %v4837
        %v4890 = vpack.c.b16 %v4840, %v4838
        %v4891 = vpack.c.b16 %v4843, %v4841
        %v4892 = vpack.c.b16 %v4844, %v4842
        %v4893 = vpack.c.b16 %v4847, %v4845
        %v4894 = vpack.c.b16 %v4848, %v4846
        %v4895 = vpack.c.b16 %v4851, %v4849
        %v4896 = vpack.c.b16 %v4852, %v4850
        %v4897 = vpack.c.b16 %v4855, %v4853
        %v4898 = vpack.c.b16 %v4856, %v4854
        %v4899 = vpack.c.b16 %v4859, %v4857
        %v4900 = vpack.c.b16 %v4860, %v4858
        %v4901 = vpack.c.b16 %v4863, %v4861
        %v4902 = vpack.c.b16 %v4864, %v4862
        %v4903 = vpack.c.b16 %v4867, %v4865
        %v4904 = vpack.c.b16 %v4868, %v4866
        %v4905 = vpack.c.b16 %v4871, %v4869
        %v4906 = vpack.c.b16 %v4872, %v4870
        %v4907 = vpack.c.b16 %v4875, %v4873
        %v4908 = vpack.c.b16 %v4876, %v4874
        %4941 = vmatprep.subr.bf16.mxu0 %v4878
        %4942 = vmatpush1.bf16.msra.mxu0 %v4877
        %4943 = vmatprep.subr.bf16.mxu0 %v4880
        %4944 = vmatpush1.bf16.msra.mxu0 %v4879
        %4945 = vmatprep.subr.bf16.mxu0 %v4882
        %4946 = vmatpush1.bf16.msra.mxu0 %v4881
        %4947 = vmatprep.subr.bf16.mxu0 %v4884
        %4948 = vmatpush1.bf16.msra.mxu0 %v4883
        %4949 = vmatprep.subr.bf16.mxu0 %v4886
        %4950 = vmatpush1.bf16.msra.mxu0 %v4885
        %4951 = vmatprep.subr.bf16.mxu0 %v4888
        %4952 = vmatpush1.bf16.msra.mxu0 %v4887
        %4953 = vmatprep.subr.bf16.mxu0 %v4890
        %4954 = vmatpush1.bf16.msra.mxu0 %v4889
        %4955 = vmatprep.subr.bf16.mxu0 %v4892
        %4956 = vmatpush1.bf16.msra.mxu0 %v4891
        %4957 = vmatprep.subr.bf16.mxu0 %v4894
        %4958 = vmatpush1.bf16.msra.mxu0 %v4893
        %4959 = vmatprep.subr.bf16.mxu0 %v4896
        %4960 = vmatpush1.bf16.msra.mxu0 %v4895
        %4961 = vmatprep.subr.bf16.mxu0 %v4898
        %4962 = vmatpush1.bf16.msra.mxu0 %v4897
        %4963 = vmatprep.subr.bf16.mxu0 %v4900
        %4964 = vmatpush1.bf16.msra.mxu0 %v4899
        %4965 = vmatprep.subr.bf16.mxu0 %v4902
        %4966 = vmatpush1.bf16.msra.mxu0 %v4901
        %4967 = vmatprep.subr.bf16.mxu0 %v4904
        %4968 = vmatpush1.bf16.msra.mxu0 %v4903
        %4969 = vmatprep.subr.bf16.mxu0 %v4906
        %4970 = vmatpush1.bf16.msra.mxu0 %v4905
        %4971 = vmatprep.subr.bf16.mxu0 %v4908
        %4972 = vmatpush1.bf16.msra.mxu0 %v4907
        %4973 = vmatprep.mubr.bf16.mxu0 %v4736
        %4974 = vmatmul.mubr.bf16.gmra.mrb[0].mxu0 %v4735
        %v4975 = vpop.f32.mrb[0].mxu0
        %v4976 = vadd.f32 0.0, %v4975
        %v4977 = vpop.f32.mrb[0].mxu0
        %v4978 = vadd.f32 0.0, %v4977
        %v4979 = vpop.f32.mrb[0].mxu0
        %v4980 = vadd.f32 0.0, %v4979
        %v4981 = vpop.f32.mrb[0].mxu0
        %v4982 = vadd.f32 0.0, %v4981
        %4983 = vmatprep.mubr.bf16.mxu0 %v4738
        %4984 = vmatmul.mubr.bf16.gmra.mrb[0].mxu0 %v4737
        %v4985 = vpop.f32.mrb[0].mxu0
        %v4986 = vadd.f32 0.0, %v4985
        %v4987 = vpop.f32.mrb[0].mxu0
        %v4988 = vadd.f32 0.0, %v4987
        %v4989 = vpop.f32.mrb[0].mxu0
        %v4990 = vadd.f32 0.0, %v4989
        %v4991 = vpop.f32.mrb[0].mxu0
        %v4992 = vadd.f32 0.0, %v4991
        %4993 = vmatprep.mubr.bf16.mxu0 %v4740
        %4994 = vmatmul.mubr.bf16.gmra.mrb[0].mxu0 %v4739
        %v4995 = vpop.f32.mrb[0].mxu0
        %v4996 = vadd.f32 0.0, %v4995
        %v4997 = vpop.f32.mrb[0].mxu0
        %v4998 = vadd.f32 0.0, %v4997
        %v4999 = vpop.f32.mrb[0].mxu0
        %v5000 = vadd.f32 0.0, %v4999
        %v5001 = vpop.f32.mrb[0].mxu0
        %v5002 = vadd.f32 0.0, %v5001
        %5003 = vmatprep.mubr.bf16.mxu0 %v4742
        %5004 = vmatmul.mubr.bf16.gmra.mrb[0].mxu0 %v4741
        %v5005 = vpop.f32.mrb[0].mxu0
        %v5006 = vadd.f32 0.0, %v5005
        %v5007 = vpop.f32.mrb[0].mxu0
        %v5008 = vadd.f32 0.0, %v5007
        %v5009 = vpop.f32.mrb[0].mxu0
        %v5010 = vadd.f32 0.0, %v5009
        %v5011 = vpop.f32.mrb[0].mxu0
        %v5012 = vadd.f32 0.0, %v5011
        %5013 = vmatprep.mubr.bf16.mxu0 %v4744
        %5014 = vmatmul.mubr.bf16.gmra.mrb[0].mxu0 %v4743
        %v5015 = vpop.f32.mrb[0].mxu0
        %v5016 = vadd.f32 0.0, %v5015
        %v5017 = vpop.f32.mrb[0].mxu0
        %v5018 = vadd.f32 0.0, %v5017
        %v5019 = vpop.f32.mrb[0].mxu0
        %v5020 = vadd.f32 0.0, %v5019
        %v5021 = vpop.f32.mrb[0].mxu0
        %v5022 = vadd.f32 0.0, %v5021
        %5023 = vmatprep.mubr.bf16.mxu0 %v4746
        %5024 = vmatmul.mubr.bf16.gmra.mrb[0].mxu0 %v4745
        %v5025 = vpop.f32.mrb[0].mxu0
        %v5026 = vadd.f32 0.0, %v5025
        %v5027 = vpop.f32.mrb[0].mxu0
        %v5028 = vadd.f32 0.0, %v5027
        %v5029 = vpop.f32.mrb[0].mxu0
        %v5030 = vadd.f32 0.0, %v5029
        %v5031 = vpop.f32.mrb[0].mxu0
        %v5032 = vadd.f32 0.0, %v5031
        %5033 = vmatprep.mubr.bf16.mxu0 %v4748
        %5034 = vmatmul.mubr.bf16.gmra.mrb[0].mxu0 %v4747
        %v5035 = vpop.f32.mrb[0].mxu0
        %v5036 = vadd.f32 0.0, %v5035
        %v5037 = vpop.f32.mrb[0].mxu0
        %v5038 = vadd.f32 0.0, %v5037
        %v5039 = vpop.f32.mrb[0].mxu0
        %v5040 = vadd.f32 0.0, %v5039
        %v5041 = vpop.f32.mrb[0].mxu0
        %v5042 = vadd.f32 0.0, %v5041
        %5043 = vdwg.mxu0
        %v5076 = vunpack.c.l.b16 %v4703
        %v5077 = vunpack.c.h.b16 %v4703
        %v5078 = vunpack.c.l.b16 %v4704
        %v5079 = vunpack.c.h.b16 %v4704
        %v5080 = vunpack.c.l.b16 %v4705
        %v5081 = vunpack.c.h.b16 %v4705
        %v5082 = vunpack.c.l.b16 %v4706
        %v5083 = vunpack.c.h.b16 %v4706
        %v5084 = vunpack.c.l.b16 %v4707
        %v5085 = vunpack.c.h.b16 %v4707
        %v5086 = vunpack.c.l.b16 %v4708
        %v5087 = vunpack.c.h.b16 %v4708
        %v5088 = vunpack.c.l.b16 %v4709
        %v5089 = vunpack.c.h.b16 %v4709
        %v5090 = vunpack.c.l.b16 %v4710
        %v5091 = vunpack.c.h.b16 %v4710
        %v5092 = vunpack.c.l.b16 %v4711
        %v5093 = vunpack.c.h.b16 %v4711
        %v5094 = vunpack.c.l.b16 %v4712
        %v5095 = vunpack.c.h.b16 %v4712
        %v5096 = vunpack.c.l.b16 %v4713
        %v5097 = vunpack.c.h.b16 %v4713
        %v5098 = vunpack.c.l.b16 %v4714
        %v5099 = vunpack.c.h.b16 %v4714
        %v5100 = vunpack.c.l.b16 %v4715
        %v5101 = vunpack.c.h.b16 %v4715
        %v5102 = vunpack.c.l.b16 %v4716
        %v5103 = vunpack.c.h.b16 %v4716
        %v5104 = vunpack.c.l.b16 %v4717
        %v5105 = vunpack.c.h.b16 %v4717
        %v5106 = vunpack.c.l.b16 %v4718
        %v5107 = vunpack.c.h.b16 %v4718
        %v5108 = vunpack.c.l.b16 %v4719
        %v5109 = vunpack.c.h.b16 %v4719
        %v5110 = vunpack.c.l.b16 %v4720
        %v5111 = vunpack.c.h.b16 %v4720
        %v5112 = vunpack.c.l.b16 %v4721
        %v5113 = vunpack.c.h.b16 %v4721
        %v5114 = vunpack.c.l.b16 %v4722
        %v5115 = vunpack.c.h.b16 %v4722
        %v5116 = vunpack.c.l.b16 %v4723
        %v5117 = vunpack.c.h.b16 %v4723
        %v5118 = vunpack.c.l.b16 %v4724
        %v5119 = vunpack.c.h.b16 %v4724
        %v5120 = vunpack.c.l.b16 %v4725
        %v5121 = vunpack.c.h.b16 %v4725
        %v5122 = vunpack.c.l.b16 %v4726
        %v5123 = vunpack.c.h.b16 %v4726
        %v5124 = vunpack.c.l.b16 %v4727
        %v5125 = vunpack.c.h.b16 %v4727
        %v5126 = vunpack.c.l.b16 %v4728
        %v5127 = vunpack.c.h.b16 %v4728
        %v5128 = vunpack.c.l.b16 %v4729
        %v5129 = vunpack.c.h.b16 %v4729
        %v5130 = vunpack.c.l.b16 %v4730
        %v5131 = vunpack.c.h.b16 %v4730
        %v5132 = vunpack.c.l.b16 %v4731
        %v5133 = vunpack.c.h.b16 %v4731
        %v5134 = vunpack.c.l.b16 %v4732
        %v5135 = vunpack.c.h.b16 %v4732
        %v5136 = vunpack.c.l.b16 %v4733
        %v5137 = vunpack.c.h.b16 %v4733
        %v5138 = vunpack.c.l.b16 %v4734
        %v5139 = vunpack.c.h.b16 %v4734
        %v5140 = vpack.c.b16 %v5078, %v5076
        %v5141 = vpack.c.b16 %v5079, %v5077
        %v5142 = vpack.c.b16 %v5082, %v5080
        %v5143 = vpack.c.b16 %v5083, %v5081
        %v5144 = vpack.c.b16 %v5086, %v5084
        %v5145 = vpack.c.b16 %v5087, %v5085
        %v5146 = vpack.c.b16 %v5090, %v5088
        %v5147 = vpack.c.b16 %v5091, %v5089
        %v5148 = vpack.c.b16 %v5094, %v5092
        %v5149 = vpack.c.b16 %v5095, %v5093
        %v5150 = vpack.c.b16 %v5098, %v5096
        %v5151 = vpack.c.b16 %v5099, %v5097
        %v5152 = vpack.c.b16 %v5102, %v5100
        %v5153 = vpack.c.b16 %v5103, %v5101
        %v5154 = vpack.c.b16 %v5106, %v5104
        %v5155 = vpack.c.b16 %v5107, %v5105
        %v5156 = vpack.c.b16 %v5110, %v5108
        %v5157 = vpack.c.b16 %v5111, %v5109
        %v5158 = vpack.c.b16 %v5114, %v5112
        %v5159 = vpack.c.b16 %v5115, %v5113
        %v5160 = vpack.c.b16 %v5118, %v5116
        %v5161 = vpack.c.b16 %v5119, %v5117
        %v5162 = vpack.c.b16 %v5122, %v5120
        %v5163 = vpack.c.b16 %v5123, %v5121
        %v5164 = vpack.c.b16 %v5126, %v5124
        %v5165 = vpack.c.b16 %v5127, %v5125
        %v5166 = vpack.c.b16 %v5130, %v5128
        %v5167 = vpack.c.b16 %v5131, %v5129
        %v5168 = vpack.c.b16 %v5134, %v5132
        %v5169 = vpack.c.b16 %v5135, %v5133
        %v5170 = vpack.c.b16 %v5138, %v5136
        %v5171 = vpack.c.b16 %v5139, %v5137
        %5204 = vmatprep.subr.bf16.mxu0 %v5141
        %5205 = vmatpush1.bf16.msra.mxu0 %v5140
        %5206 = vmatprep.subr.bf16.mxu0 %v5143
        %5207 = vmatpush1.bf16.msra.mxu0 %v5142
        %5208 = vmatprep.subr.bf16.mxu0 %v5145
        %5209 = vmatpush1.bf16.msra.mxu0 %v5144
        %5210 = vmatprep.subr.bf16.mxu0 %v5147
        %5211 = vmatpush1.bf16.msra.mxu0 %v5146
        %5212 = vmatprep.subr.bf16.mxu0 %v5149
        %5213 = vmatpush1.bf16.msra.mxu0 %v5148
        %5214 = vmatprep.subr.bf16.mxu0 %v5151
        %5215 = vmatpush1.bf16.msra.mxu0 %v5150
        %5216 = vmatprep.subr.bf16.mxu0 %v5153
        %5217 = vmatpush1.bf16.msra.mxu0 %v5152
        %5218 = vmatprep.subr.bf16.mxu0 %v5155
        %5219 = vmatpush1.bf16.msra.mxu0 %v5154
        %5220 = vmatprep.subr.bf16.mxu0 %v5157
        %5221 = vmatpush1.bf16.msra.mxu0 %v5156
        %5222 = vmatprep.subr.bf16.mxu0 %v5159
        %5223 = vmatpush1.bf16.msra.mxu0 %v5158
        %5224 = vmatprep.subr.bf16.mxu0 %v5161
        %5225 = vmatpush1.bf16.msra.mxu0 %v5160
        %5226 = vmatprep.subr.bf16.mxu0 %v5163
        %5227 = vmatpush1.bf16.msra.mxu0 %v5162
        %5228 = vmatprep.subr.bf16.mxu0 %v5165
        %5229 = vmatpush1.bf16.msra.mxu0 %v5164
        %5230 = vmatprep.subr.bf16.mxu0 %v5167
        %5231 = vmatpush1.bf16.msra.mxu0 %v5166
        %5232 = vmatprep.subr.bf16.mxu0 %v5169
        %5233 = vmatpush1.bf16.msra.mxu0 %v5168
        %5234 = vmatprep.subr.bf16.mxu0 %v5171
        %5235 = vmatpush1.bf16.msra.mxu0 %v5170
        %5236 = vmatprep.mubr.bf16.mxu0 %v4689
        %5237 = vmatmul.mubr.bf16.gmra.mrb[0].mxu0 %v4688
        %v5238 = vpop.f32.mrb[0].mxu0
        %v5239 = vadd.f32 %v4976, %v5238
        %v5240 = vpop.f32.mrb[0].mxu0
        %v5241 = vadd.f32 %v4978, %v5240
        %v5242 = vpop.f32.mrb[0].mxu0
        %v5243 = vadd.f32 %v4980, %v5242
        %v5244 = vpop.f32.mrb[0].mxu0
        %v5245 = vadd.f32 %v4982, %v5244
        %5246 = vmatprep.mubr.bf16.mxu0 %v4691
        %5247 = vmatmul.mubr.bf16.gmra.mrb[0].mxu0 %v4690
        %v5248 = vpop.f32.mrb[0].mxu0
        %v5249 = vadd.f32 %v4986, %v5248
        %v5250 = vpop.f32.mrb[0].mxu0
        %v5251 = vadd.f32 %v4988, %v5250
        %v5252 = vpop.f32.mrb[0].mxu0
        %v5253 = vadd.f32 %v4990, %v5252
        %v5254 = vpop.f32.mrb[0].mxu0
        %v5255 = vadd.f32 %v4992, %v5254
        %5256 = vmatprep.mubr.bf16.mxu0 %v4693
        %5257 = vmatmul.mubr.bf16.gmra.mrb[0].mxu0 %v4692
        %v5258 = vpop.f32.mrb[0].mxu0
        %v5259 = vadd.f32 %v4996, %v5258
        %v5260 = vpop.f32.mrb[0].mxu0
        %v5261 = vadd.f32 %v4998, %v5260
        %v5262 = vpop.f32.mrb[0].mxu0
        %v5263 = vadd.f32 %v5000, %v5262
        %v5264 = vpop.f32.mrb[0].mxu0
        %v5265 = vadd.f32 %v5002, %v5264
        %5266 = vmatprep.mubr.bf16.mxu0 %v4695
        %5267 = vmatmul.mubr.bf16.gmra.mrb[0].mxu0 %v4694
        %v5268 = vpop.f32.mrb[0].mxu0
        %v5269 = vadd.f32 %v5006, %v5268
        %v5270 = vpop.f32.mrb[0].mxu0
        %v5271 = vadd.f32 %v5008, %v5270
        %v5272 = vpop.f32.mrb[0].mxu0
        %v5273 = vadd.f32 %v5010, %v5272
        %v5274 = vpop.f32.mrb[0].mxu0
        %v5275 = vadd.f32 %v5012, %v5274
        %5276 = vmatprep.mubr.bf16.mxu0 %v4697
        %5277 = vmatmul.mubr.bf16.gmra.mrb[0].mxu0 %v4696
        %v5278 = vpop.f32.mrb[0].mxu0
        %v5279 = vadd.f32 %v5016, %v5278
        %v5280 = vpop.f32.mrb[0].mxu0
        %v5281 = vadd.f32 %v5018, %v5280
        %v5282 = vpop.f32.mrb[0].mxu0
        %v5283 = vadd.f32 %v5020, %v5282
        %v5284 = vpop.f32.mrb[0].mxu0
        %v5285 = vadd.f32 %v5022, %v5284
        %5286 = vmatprep.mubr.bf16.mxu0 %v4699
        %5287 = vmatmul.mubr.bf16.gmra.mrb[0].mxu0 %v4698
        %v5288 = vpop.f32.mrb[0].mxu0
        %v5289 = vadd.f32 %v5026, %v5288
        %v5290 = vpop.f32.mrb[0].mxu0
        %v5291 = vadd.f32 %v5028, %v5290
        %v5292 = vpop.f32.mrb[0].mxu0
        %v5293 = vadd.f32 %v5030, %v5292
        %v5294 = vpop.f32.mrb[0].mxu0
        %v5295 = vadd.f32 %v5032, %v5294
        %5296 = vmatprep.mubr.bf16.mxu0 %v4701
        %5297 = vmatmul.mubr.bf16.gmra.mrb[0].mxu0 %v4700
        %v5298 = vpop.f32.mrb[0].mxu0
        %v5299 = vadd.f32 %v5036, %v5298
        %v5300 = vpop.f32.mrb[0].mxu0
        %v5301 = vadd.f32 %v5038, %v5300
        %v5302 = vpop.f32.mrb[0].mxu0
        %v5303 = vadd.f32 %v5040, %v5302
        %v5304 = vpop.f32.mrb[0].mxu0
        %v5305 = vadd.f32 %v5042, %v5304
        %5306 = vdwg.mxu0
        %v5307 = vld [vmem:[%s10] sm:$0x3]
        %v5309 = vlaneseq
        %v5310 = vshrl.u32 %v5309, 7
        %v5311 = vsub.s32 0, %v5310
        %v5312 = vrot.slane %v5307, %v5311
        %v5313 = vlaneseq
        %v5314 = vshrl.u32 %v5313, 7
        %v5315 = vsub.s32 1, %v5314
        %v5316 = vrot.slane %v5307, %v5315
        %v5319 = vadd.f32 %v5239, %v5312
        %v5320 = vadd.f32 %v5241, %v5316
        %v5321 = vadd.f32 %v5243, %v5312
        %v5322 = vadd.f32 %v5245, %v5316
        %v5323 = vadd.f32 %v5249, %v5312
        %v5324 = vadd.f32 %v5251, %v5316
        %v5325 = vadd.f32 %v5253, %v5312
        %v5326 = vadd.f32 %v5255, %v5316
        %v5327 = vadd.f32 %v5259, %v5312
        %v5328 = vadd.f32 %v5261, %v5316
        %v5329 = vadd.f32 %v5263, %v5312
        %v5330 = vadd.f32 %v5265, %v5316
        %v5331 = vadd.f32 %v5269, %v5312
        %v5332 = vadd.f32 %v5271, %v5316
        %v5333 = vadd.f32 %v5273, %v5312
        %v5334 = vadd.f32 %v5275, %v5316
        %v5335 = vadd.f32 %v5279, %v5312
        %v5336 = vadd.f32 %v5281, %v5316
        %v5337 = vadd.f32 %v5283, %v5312
        %v5338 = vadd.f32 %v5285, %v5316
        %v5339 = vadd.f32 %v5289, %v5312
        %v5340 = vadd.f32 %v5291, %v5316
        %v5341 = vadd.f32 %v5293, %v5312
        %v5342 = vadd.f32 %v5295, %v5316
        %v5343 = vadd.f32 %v5299, %v5312
        %v5344 = vadd.f32 %v5301, %v5316
        %v5345 = vadd.f32 %v5303, %v5312
        %v5346 = vadd.f32 %v5305, %v5316
        %v5347 = vmax.f32 %v5319, 0.0
        %v5348 = vmax.f32 %v5320, 0.0
        %v5349 = vmax.f32 %v5321, 0.0
        %v5350 = vmax.f32 %v5322, 0.0
        %v5351 = vmax.f32 %v5323, 0.0
        %v5352 = vmax.f32 %v5324, 0.0
        %v5353 = vmax.f32 %v5325, 0.0
        %v5354 = vmax.f32 %v5326, 0.0
        %v5355 = vmax.f32 %v5327, 0.0
        %v5356 = vmax.f32 %v5328, 0.0
        %v5357 = vmax.f32 %v5329, 0.0
        %v5358 = vmax.f32 %v5330, 0.0
        %v5359 = vmax.f32 %v5331, 0.0
        %v5360 = vmax.f32 %v5332, 0.0
        %v5361 = vmax.f32 %v5333, 0.0
        %v5362 = vmax.f32 %v5334, 0.0
        %v5363 = vmax.f32 %v5335, 0.0
        %v5364 = vmax.f32 %v5336, 0.0
        %v5365 = vmax.f32 %v5337, 0.0
        %v5366 = vmax.f32 %v5338, 0.0
        %v5367 = vmax.f32 %v5339, 0.0
        %v5368 = vmax.f32 %v5340, 0.0
        %v5369 = vmax.f32 %v5341, 0.0
        %v5370 = vmax.f32 %v5342, 0.0
        %v5371 = vmax.f32 %v5343, 0.0
        %v5372 = vmax.f32 %v5344, 0.0
        %v5373 = vmax.f32 %v5345, 0.0
        %v5374 = vmax.f32 %v5346, 0.0
        %v5375 = vpack.c.bf16 %v5349, %v5347
        %v5376 = vpack.c.bf16 %v5350, %v5348
        %v5377 = vpack.c.bf16 %v5353, %v5351
        %v5378 = vpack.c.bf16 %v5354, %v5352
        %v5379 = vpack.c.bf16 %v5357, %v5355
        %v5380 = vpack.c.bf16 %v5358, %v5356
        %v5381 = vpack.c.bf16 %v5361, %v5359
        %v5382 = vpack.c.bf16 %v5362, %v5360
        %v5383 = vpack.c.bf16 %v5365, %v5363
        %v5384 = vpack.c.bf16 %v5366, %v5364
        %v5385 = vpack.c.bf16 %v5369, %v5367
        %v5386 = vpack.c.bf16 %v5370, %v5368
        %v5387 = vpack.c.bf16 %v5373, %v5371
        %v5388 = vpack.c.bf16 %v5374, %v5372
        %5389 = vst [vmem:[#allocation7] sm:$0xff] %v5375
        %5390 = vst [vmem:[#allocation7 + $0x8] sm:$0xff] %v5376
        %5391 = vst [vmem:[#allocation7 + $0x10] sm:$0xff] %v5377
        %5392 = vst [vmem:[#allocation7 + $0x18] sm:$0xff] %v5378
        %5393 = vst [vmem:[#allocation7 + $0x20] sm:$0xff] %v5379
        %5394 = vst [vmem:[#allocation7 + $0x28] sm:$0xff] %v5380
        %5395 = vst [vmem:[#allocation7 + $0x30] sm:$0xff] %v5381
        %5396 = vst [vmem:[#allocation7 + $0x38] sm:$0xff] %v5382
        %5397 = vst [vmem:[#allocation7 + $0x40] sm:$0xff] %v5383
        %5398 = vst [vmem:[#allocation7 + $0x48] sm:$0xff] %v5384
        %5399 = vst [vmem:[#allocation7 + $0x50] sm:$0xff] %v5385
        %5400 = vst [vmem:[#allocation7 + $0x58] sm:$0xff] %v5386
        %5401 = vst [vmem:[#allocation7 + $0x60] sm:$0xff] %v5387
        %5402 = vst [vmem:[#allocation7 + $0x68] sm:$0xff] %v5388
        %v5403 = vld [vmem:[#allocation6] sm:$0xff]
        %v5404 = vld [vmem:[#allocation6 + $0x8] sm:$0xff]
        %v5405 = vld [vmem:[#allocation6 + $0x10] sm:$0xff]
        %v5406 = vld [vmem:[#allocation6 + $0x18] sm:$0xff]
        %v5407 = vld [vmem:[#allocation6 + $0x20] sm:$0xff]
        %v5408 = vld [vmem:[#allocation6 + $0x28] sm:$0xff]
        %v5409 = vld [vmem:[#allocation6 + $0x30] sm:$0xff]
        %v5410 = vld [vmem:[#allocation6 + $0x38] sm:$0xff]
        %v5411 = vld [vmem:[#allocation6 + $0x40] sm:$0xff]
        %v5412 = vld [vmem:[#allocation6 + $0x48] sm:$0xff]
        %v5413 = vld [vmem:[#allocation6 + $0x50] sm:$0xff]
        %v5414 = vld [vmem:[#allocation6 + $0x58] sm:$0xff]
        %v5415 = vld [vmem:[#allocation6 + $0x60] sm:$0xff]
        %v5416 = vld [vmem:[#allocation6 + $0x68] sm:$0xff]
        %v5417 = vld [vmem:[%s11] sm:$0xf]
        %v5418 = vld [vmem:[%s11 + $0x4] sm:$0xf]
        %v5419 = vld [vmem:[%s11 + $0x8] sm:$0xf]
        %v5420 = vld [vmem:[%s11 + $0xc] sm:$0xf]
        %v5421 = vld [vmem:[%s11 + $0x10] sm:$0xf]
        %v5422 = vld [vmem:[%s11 + $0x14] sm:$0xf]
        %v5423 = vld [vmem:[%s11 + $0x18] sm:$0xf]
        %v5424 = vld [vmem:[%s11 + $0x1c] sm:$0xf]
        %v5425 = vld [vmem:[%s11 + $0x20] sm:$0xf]
        %v5426 = vld [vmem:[%s11 + $0x24] sm:$0xf]
        %v5427 = vld [vmem:[%s11 + $0x28] sm:$0xf]
        %v5428 = vld [vmem:[%s11 + $0x2c] sm:$0xf]
        %v5429 = vld [vmem:[%s11 + $0x30] sm:$0xf]
        %v5430 = vld [vmem:[%s11 + $0x34] sm:$0xf]
        %v5431 = vld [vmem:[%s11 + $0x38] sm:$0xf]
        %v5432 = vld [vmem:[%s11 + $0x3c] sm:$0xf]
        %v5433 = vld [vmem:[%s11 + $0x40] sm:$0xf]
        %v5434 = vld [vmem:[%s11 + $0x44] sm:$0xf]
        %v5435 = vld [vmem:[%s11 + $0x48] sm:$0xf]
        %v5436 = vld [vmem:[%s11 + $0x4c] sm:$0xf]
        %v5437 = vld [vmem:[%s11 + $0x50] sm:$0xf]
        %v5438 = vld [vmem:[%s11 + $0x54] sm:$0xf]
        %v5439 = vld [vmem:[%s11 + $0x58] sm:$0xf]
        %v5440 = vld [vmem:[%s11 + $0x5c] sm:$0xf]
        %v5441 = vld [vmem:[%s11 + $0x60] sm:$0xf]
        %v5442 = vld [vmem:[%s11 + $0x64] sm:$0xf]
        %v5443 = vld [vmem:[%s11 + $0x68] sm:$0xf]
        %v5444 = vld [vmem:[%s11 + $0x6c] sm:$0xf]
        %v5445 = vld [vmem:[%s11 + $0x70] sm:$0xf]
        %v5446 = vld [vmem:[%s11 + $0x74] sm:$0xf]
        %v5447 = vld [vmem:[%s11 + $0x78] sm:$0xf]
        %v5448 = vld [vmem:[%s11 + $0x7c] sm:$0xf]
        %v5449 = vld [vmem:[#allocation7] sm:$0xff]
        %v5450 = vld [vmem:[#allocation7 + $0x8] sm:$0xff]
        %v5451 = vld [vmem:[#allocation7 + $0x10] sm:$0xff]
        %v5452 = vld [vmem:[#allocation7 + $0x18] sm:$0xff]
        %v5453 = vld [vmem:[#allocation7 + $0x20] sm:$0xff]
        %v5454 = vld [vmem:[#allocation7 + $0x28] sm:$0xff]
        %v5455 = vld [vmem:[#allocation7 + $0x30] sm:$0xff]
        %v5456 = vld [vmem:[#allocation7 + $0x38] sm:$0xff]
        %v5457 = vld [vmem:[#allocation7 + $0x40] sm:$0xff]
        %v5458 = vld [vmem:[#allocation7 + $0x48] sm:$0xff]
        %v5459 = vld [vmem:[#allocation7 + $0x50] sm:$0xff]
        %v5460 = vld [vmem:[#allocation7 + $0x58] sm:$0xff]
        %v5461 = vld [vmem:[#allocation7 + $0x60] sm:$0xff]
        %v5462 = vld [vmem:[#allocation7 + $0x68] sm:$0xff]
        %s5463 = scalar_lea.vmem %s11, 128
        %v5464 = vld [vmem:[%s5463] sm:$0xf]
        %v5465 = vld [vmem:[%s5463 + $0x4] sm:$0xf]
        %v5466 = vld [vmem:[%s5463 + $0x8] sm:$0xf]
        %v5467 = vld [vmem:[%s5463 + $0xc] sm:$0xf]
        %v5468 = vld [vmem:[%s5463 + $0x10] sm:$0xf]
        %v5469 = vld [vmem:[%s5463 + $0x14] sm:$0xf]
        %v5470 = vld [vmem:[%s5463 + $0x18] sm:$0xf]
        %v5471 = vld [vmem:[%s5463 + $0x1c] sm:$0xf]
        %v5472 = vld [vmem:[%s5463 + $0x20] sm:$0xf]
        %v5473 = vld [vmem:[%s5463 + $0x24] sm:$0xf]
        %v5474 = vld [vmem:[%s5463 + $0x28] sm:$0xf]
        %v5475 = vld [vmem:[%s5463 + $0x2c] sm:$0xf]
        %v5476 = vld [vmem:[%s5463 + $0x30] sm:$0xf]
        %v5477 = vld [vmem:[%s5463 + $0x34] sm:$0xf]
        %v5478 = vld [vmem:[%s5463 + $0x38] sm:$0xf]
        %v5479 = vld [vmem:[%s5463 + $0x3c] sm:$0xf]
        %v5480 = vld [vmem:[%s5463 + $0x40] sm:$0xf]
        %v5481 = vld [vmem:[%s5463 + $0x44] sm:$0xf]
        %v5482 = vld [vmem:[%s5463 + $0x48] sm:$0xf]
        %v5483 = vld [vmem:[%s5463 + $0x4c] sm:$0xf]
        %v5484 = vld [vmem:[%s5463 + $0x50] sm:$0xf]
        %v5485 = vld [vmem:[%s5463 + $0x54] sm:$0xf]
        %v5486 = vld [vmem:[%s5463 + $0x58] sm:$0xf]
        %v5487 = vld [vmem:[%s5463 + $0x5c] sm:$0xf]
        %v5488 = vld [vmem:[%s5463 + $0x60] sm:$0xf]
        %v5489 = vld [vmem:[%s5463 + $0x64] sm:$0xf]
        %v5490 = vld [vmem:[%s5463 + $0x68] sm:$0xf]
        %v5491 = vld [vmem:[%s5463 + $0x6c] sm:$0xf]
        %v5492 = vld [vmem:[%s5463 + $0x70] sm:$0xf]
        %v5493 = vld [vmem:[%s5463 + $0x74] sm:$0xf]
        %v5494 = vld [vmem:[%s5463 + $0x78] sm:$0xf]
        %v5495 = vld [vmem:[%s5463 + $0x7c] sm:$0xf]
        %v5528 = vunpack.c.l.b16 %v5464
        %v5529 = vunpack.c.l.b16 %v5465
        %v5530 = vunpack.c.l.b16 %v5466
        %v5531 = vunpack.c.l.b16 %v5467
        %v5532 = vunpack.c.l.b16 %v5468
        %v5533 = vunpack.c.l.b16 %v5469
        %v5534 = vunpack.c.l.b16 %v5470
        %v5535 = vunpack.c.l.b16 %v5471
        %v5536 = vunpack.c.l.b16 %v5472
        %v5537 = vunpack.c.l.b16 %v5473
        %v5538 = vunpack.c.l.b16 %v5474
        %v5539 = vunpack.c.l.b16 %v5475
        %v5540 = vunpack.c.l.b16 %v5476
        %v5541 = vunpack.c.l.b16 %v5477
        %v5542 = vunpack.c.l.b16 %v5478
        %v5543 = vunpack.c.l.b16 %v5479
        %v5544 = vunpack.c.l.b16 %v5480
        %v5545 = vunpack.c.l.b16 %v5481
        %v5546 = vunpack.c.l.b16 %v5482
        %v5547 = vunpack.c.l.b16 %v5483
        %v5548 = vunpack.c.l.b16 %v5484
        %v5549 = vunpack.c.l.b16 %v5485
        %v5550 = vunpack.c.l.b16 %v5486
        %v5551 = vunpack.c.l.b16 %v5487
        %v5552 = vunpack.c.l.b16 %v5488
        %v5553 = vunpack.c.l.b16 %v5489
        %v5554 = vunpack.c.l.b16 %v5490
        %v5555 = vunpack.c.l.b16 %v5491
        %v5556 = vunpack.c.l.b16 %v5492
        %v5557 = vunpack.c.l.b16 %v5493
        %v5558 = vunpack.c.l.b16 %v5494
        %v5559 = vunpack.c.l.b16 %v5495
        %v5560 = vpack.c.b16 %v5529, %v5528
        %v5561 = vpack.c.b16 %v5531, %v5530
        %v5562 = vpack.c.b16 %v5533, %v5532
        %v5563 = vpack.c.b16 %v5535, %v5534
        %v5564 = vpack.c.b16 %v5537, %v5536
        %v5565 = vpack.c.b16 %v5539, %v5538
        %v5566 = vpack.c.b16 %v5541, %v5540
        %v5567 = vpack.c.b16 %v5543, %v5542
        %v5568 = vpack.c.b16 %v5545, %v5544
        %v5569 = vpack.c.b16 %v5547, %v5546
        %v5570 = vpack.c.b16 %v5549, %v5548
        %v5571 = vpack.c.b16 %v5551, %v5550
        %v5572 = vpack.c.b16 %v5553, %v5552
        %v5573 = vpack.c.b16 %v5555, %v5554
        %v5574 = vpack.c.b16 %v5557, %v5556
        %v5575 = vpack.c.b16 %v5559, %v5558
        %5592 = vmatprep.subr.bf16.mxu0 0
        %5593 = vmatpush1.bf16.msra.mxu0 %v5560
        %5594 = vmatprep.subr.bf16.mxu0 0
        %5595 = vmatpush1.bf16.msra.mxu0 %v5561
        %5596 = vmatprep.subr.bf16.mxu0 0
        %5597 = vmatpush1.bf16.msra.mxu0 %v5562
        %5598 = vmatprep.subr.bf16.mxu0 0
        %5599 = vmatpush1.bf16.msra.mxu0 %v5563
        %5600 = vmatprep.subr.bf16.mxu0 0
        %5601 = vmatpush1.bf16.msra.mxu0 %v5564
        %5602 = vmatprep.subr.bf16.mxu0 0
        %5603 = vmatpush1.bf16.msra.mxu0 %v5565
        %5604 = vmatprep.subr.bf16.mxu0 0
        %5605 = vmatpush1.bf16.msra.mxu0 %v5566
        %5606 = vmatprep.subr.bf16.mxu0 0
        %5607 = vmatpush1.bf16.msra.mxu0 %v5567
        %5608 = vmatprep.subr.bf16.mxu0 0
        %5609 = vmatpush1.bf16.msra.mxu0 %v5568
        %5610 = vmatprep.subr.bf16.mxu0 0
        %5611 = vmatpush1.bf16.msra.mxu0 %v5569
        %5612 = vmatprep.subr.bf16.mxu0 0
        %5613 = vmatpush1.bf16.msra.mxu0 %v5570
        %5614 = vmatprep.subr.bf16.mxu0 0
        %5615 = vmatpush1.bf16.msra.mxu0 %v5571
        %5616 = vmatprep.subr.bf16.mxu0 0
        %5617 = vmatpush1.bf16.msra.mxu0 %v5572
        %5618 = vmatprep.subr.bf16.mxu0 0
        %5619 = vmatpush1.bf16.msra.mxu0 %v5573
        %5620 = vmatprep.subr.bf16.mxu0 0
        %5621 = vmatpush1.bf16.msra.mxu0 %v5574
        %5622 = vmatprep.subr.bf16.mxu0 0
        %5623 = vmatpush1.bf16.msra.mxu0 %v5575
        %5624 = vmatprep.mubr.bf16.mxu0 %v5450
        %5625 = vmatmul.mubr.bf16.gmra.mrb[0].mxu0 %v5449
        %v5626 = vpop.f32.mrb[0].mxu0
        %v5627 = vadd.f32 0.0, %v5626
        %v5628 = vpop.f32.mrb[0].mxu0
        %v5629 = vpop.f32.mrb[0].mxu0
        %v5630 = vadd.f32 0.0, %v5629
        %v5631 = vpop.f32.mrb[0].mxu0
        %5632 = vmatprep.mubr.bf16.mxu0 %v5452
        %5633 = vmatmul.mubr.bf16.gmra.mrb[0].mxu0 %v5451
        %v5634 = vpop.f32.mrb[0].mxu0
        %v5635 = vadd.f32 0.0, %v5634
        %v5636 = vpop.f32.mrb[0].mxu0
        %v5637 = vpop.f32.mrb[0].mxu0
        %v5638 = vadd.f32 0.0, %v5637
        %v5639 = vpop.f32.mrb[0].mxu0
        %5640 = vmatprep.mubr.bf16.mxu0 %v5454
        %5641 = vmatmul.mubr.bf16.gmra.mrb[0].mxu0 %v5453
        %v5642 = vpop.f32.mrb[0].mxu0
        %v5643 = vadd.f32 0.0, %v5642
        %v5644 = vpop.f32.mrb[0].mxu0
        %v5645 = vpop.f32.mrb[0].mxu0
        %v5646 = vadd.f32 0.0, %v5645
        %v5647 = vpop.f32.mrb[0].mxu0
        %5648 = vmatprep.mubr.bf16.mxu0 %v5456
        %5649 = vmatmul.mubr.bf16.gmra.mrb[0].mxu0 %v5455
        %v5650 = vpop.f32.mrb[0].mxu0
        %v5651 = vadd.f32 0.0, %v5650
        %v5652 = vpop.f32.mrb[0].mxu0
        %v5653 = vpop.f32.mrb[0].mxu0
        %v5654 = vadd.f32 0.0, %v5653
        %v5655 = vpop.f32.mrb[0].mxu0
        %5656 = vmatprep.mubr.bf16.mxu0 %v5458
        %5657 = vmatmul.mubr.bf16.gmra.mrb[0].mxu0 %v5457
        %v5658 = vpop.f32.mrb[0].mxu0
        %v5659 = vadd.f32 0.0, %v5658
        %v5660 = vpop.f32.mrb[0].mxu0
        %v5661 = vpop.f32.mrb[0].mxu0
        %v5662 = vadd.f32 0.0, %v5661
        %v5663 = vpop.f32.mrb[0].mxu0
        %5664 = vmatprep.mubr.bf16.mxu0 %v5460
        %5665 = vmatmul.mubr.bf16.gmra.mrb[0].mxu0 %v5459
        %v5666 = vpop.f32.mrb[0].mxu0
        %v5667 = vadd.f32 0.0, %v5666
        %v5668 = vpop.f32.mrb[0].mxu0
        %v5669 = vpop.f32.mrb[0].mxu0
        %v5670 = vadd.f32 0.0, %v5669
        %v5671 = vpop.f32.mrb[0].mxu0
        %5672 = vmatprep.mubr.bf16.mxu0 %v5462
        %5673 = vmatmul.mubr.bf16.gmra.mrb[0].mxu0 %v5461
        %v5674 = vpop.f32.mrb[0].mxu0
        %v5675 = vadd.f32 0.0, %v5674
        %v5676 = vpop.f32.mrb[0].mxu0
        %v5677 = vpop.f32.mrb[0].mxu0
        %v5678 = vadd.f32 0.0, %v5677
        %v5679 = vpop.f32.mrb[0].mxu0
        %5680 = vdwg.mxu0
        %v5713 = vunpack.c.l.b16 %v5417
        %v5714 = vunpack.c.l.b16 %v5418
        %v5715 = vunpack.c.l.b16 %v5419
        %v5716 = vunpack.c.l.b16 %v5420
        %v5717 = vunpack.c.l.b16 %v5421
        %v5718 = vunpack.c.l.b16 %v5422
        %v5719 = vunpack.c.l.b16 %v5423
        %v5720 = vunpack.c.l.b16 %v5424
        %v5721 = vunpack.c.l.b16 %v5425
        %v5722 = vunpack.c.l.b16 %v5426
        %v5723 = vunpack.c.l.b16 %v5427
        %v5724 = vunpack.c.l.b16 %v5428
        %v5725 = vunpack.c.l.b16 %v5429
        %v5726 = vunpack.c.l.b16 %v5430
        %v5727 = vunpack.c.l.b16 %v5431
        %v5728 = vunpack.c.l.b16 %v5432
        %v5729 = vunpack.c.l.b16 %v5433
        %v5730 = vunpack.c.l.b16 %v5434
        %v5731 = vunpack.c.l.b16 %v5435
        %v5732 = vunpack.c.l.b16 %v5436
        %v5733 = vunpack.c.l.b16 %v5437
        %v5734 = vunpack.c.l.b16 %v5438
        %v5735 = vunpack.c.l.b16 %v5439
        %v5736 = vunpack.c.l.b16 %v5440
        %v5737 = vunpack.c.l.b16 %v5441
        %v5738 = vunpack.c.l.b16 %v5442
        %v5739 = vunpack.c.l.b16 %v5443
        %v5740 = vunpack.c.l.b16 %v5444
        %v5741 = vunpack.c.l.b16 %v5445
        %v5742 = vunpack.c.l.b16 %v5446
        %v5743 = vunpack.c.l.b16 %v5447
        %v5744 = vunpack.c.l.b16 %v5448
        %v5745 = vpack.c.b16 %v5714, %v5713
        %v5746 = vpack.c.b16 %v5716, %v5715
        %v5747 = vpack.c.b16 %v5718, %v5717
        %v5748 = vpack.c.b16 %v5720, %v5719
        %v5749 = vpack.c.b16 %v5722, %v5721
        %v5750 = vpack.c.b16 %v5724, %v5723
        %v5751 = vpack.c.b16 %v5726, %v5725
        %v5752 = vpack.c.b16 %v5728, %v5727
        %v5753 = vpack.c.b16 %v5730, %v5729
        %v5754 = vpack.c.b16 %v5732, %v5731
        %v5755 = vpack.c.b16 %v5734, %v5733
        %v5756 = vpack.c.b16 %v5736, %v5735
        %v5757 = vpack.c.b16 %v5738, %v5737
        %v5758 = vpack.c.b16 %v5740, %v5739
        %v5759 = vpack.c.b16 %v5742, %v5741
        %v5760 = vpack.c.b16 %v5744, %v5743
        %5777 = vmatprep.subr.bf16.mxu0 0
        %5778 = vmatpush1.bf16.msra.mxu0 %v5745
        %5779 = vmatprep.subr.bf16.mxu0 0
        %5780 = vmatpush1.bf16.msra.mxu0 %v5746
        %5781 = vmatprep.subr.bf16.mxu0 0
        %5782 = vmatpush1.bf16.msra.mxu0 %v5747
        %5783 = vmatprep.subr.bf16.mxu0 0
        %5784 = vmatpush1.bf16.msra.mxu0 %v5748
        %5785 = vmatprep.subr.bf16.mxu0 0
        %5786 = vmatpush1.bf16.msra.mxu0 %v5749
        %5787 = vmatprep.subr.bf16.mxu0 0
        %5788 = vmatpush1.bf16.msra.mxu0 %v5750
        %5789 = vmatprep.subr.bf16.mxu0 0
        %5790 = vmatpush1.bf16.msra.mxu0 %v5751
        %5791 = vmatprep.subr.bf16.mxu0 0
        %5792 = vmatpush1.bf16.msra.mxu0 %v5752
        %5793 = vmatprep.subr.bf16.mxu0 0
        %5794 = vmatpush1.bf16.msra.mxu0 %v5753
        %5795 = vmatprep.subr.bf16.mxu0 0
        %5796 = vmatpush1.bf16.msra.mxu0 %v5754
        %5797 = vmatprep.subr.bf16.mxu0 0
        %5798 = vmatpush1.bf16.msra.mxu0 %v5755
        %5799 = vmatprep.subr.bf16.mxu0 0
        %5800 = vmatpush1.bf16.msra.mxu0 %v5756
        %5801 = vmatprep.subr.bf16.mxu0 0
        %5802 = vmatpush1.bf16.msra.mxu0 %v5757
        %5803 = vmatprep.subr.bf16.mxu0 0
        %5804 = vmatpush1.bf16.msra.mxu0 %v5758
        %5805 = vmatprep.subr.bf16.mxu0 0
        %5806 = vmatpush1.bf16.msra.mxu0 %v5759
        %5807 = vmatprep.subr.bf16.mxu0 0
        %5808 = vmatpush1.bf16.msra.mxu0 %v5760
        %5809 = vmatprep.mubr.bf16.mxu0 %v5404
        %5810 = vmatmul.mubr.bf16.gmra.mrb[0].mxu0 %v5403
        %v5811 = vpop.f32.mrb[0].mxu0
        %v5812 = vadd.f32 %v5627, %v5811
        %v5813 = vpop.f32.mrb[0].mxu0
        %v5814 = vpop.f32.mrb[0].mxu0
        %v5815 = vadd.f32 %v5630, %v5814
        %v5816 = vpop.f32.mrb[0].mxu0
        %5817 = vmatprep.mubr.bf16.mxu0 %v5406
        %5818 = vmatmul.mubr.bf16.gmra.mrb[0].mxu0 %v5405
        %v5819 = vpop.f32.mrb[0].mxu0
        %v5820 = vadd.f32 %v5635, %v5819
        %v5821 = vpop.f32.mrb[0].mxu0
        %v5822 = vpop.f32.mrb[0].mxu0
        %v5823 = vadd.f32 %v5638, %v5822
        %v5824 = vpop.f32.mrb[0].mxu0
        %5825 = vmatprep.mubr.bf16.mxu0 %v5408
        %5826 = vmatmul.mubr.bf16.gmra.mrb[0].mxu0 %v5407
        %v5827 = vpop.f32.mrb[0].mxu0
        %v5828 = vadd.f32 %v5643, %v5827
        %v5829 = vpop.f32.mrb[0].mxu0
        %v5830 = vpop.f32.mrb[0].mxu0
        %v5831 = vadd.f32 %v5646, %v5830
        %v5832 = vpop.f32.mrb[0].mxu0
        %5833 = vmatprep.mubr.bf16.mxu0 %v5410
        %5834 = vmatmul.mubr.bf16.gmra.mrb[0].mxu0 %v5409
        %v5835 = vpop.f32.mrb[0].mxu0
        %v5836 = vadd.f32 %v5651, %v5835
        %v5837 = vpop.f32.mrb[0].mxu0
        %v5838 = vpop.f32.mrb[0].mxu0
        %v5839 = vadd.f32 %v5654, %v5838
        %v5840 = vpop.f32.mrb[0].mxu0
        %5841 = vmatprep.mubr.bf16.mxu0 %v5412
        %5842 = vmatmul.mubr.bf16.gmra.mrb[0].mxu0 %v5411
        %v5843 = vpop.f32.mrb[0].mxu0
        %v5844 = vadd.f32 %v5659, %v5843
        %v5845 = vpop.f32.mrb[0].mxu0
        %v5846 = vpop.f32.mrb[0].mxu0
        %v5847 = vadd.f32 %v5662, %v5846
        %v5848 = vpop.f32.mrb[0].mxu0
        %5849 = vmatprep.mubr.bf16.mxu0 %v5414
        %5850 = vmatmul.mubr.bf16.gmra.mrb[0].mxu0 %v5413
        %v5851 = vpop.f32.mrb[0].mxu0
        %v5852 = vadd.f32 %v5667, %v5851
        %v5853 = vpop.f32.mrb[0].mxu0
        %v5854 = vpop.f32.mrb[0].mxu0
        %v5855 = vadd.f32 %v5670, %v5854
        %v5856 = vpop.f32.mrb[0].mxu0
        %5857 = vmatprep.mubr.bf16.mxu0 %v5416
        %5858 = vmatmul.mubr.bf16.gmra.mrb[0].mxu0 %v5415
        %v5859 = vpop.f32.mrb[0].mxu0
        %v5860 = vadd.f32 %v5675, %v5859
        %v5861 = vpop.f32.mrb[0].mxu0
        %v5862 = vpop.f32.mrb[0].mxu0
        %v5863 = vadd.f32 %v5678, %v5862
        %v5864 = vpop.f32.mrb[0].mxu0
        %5865 = vdwg.mxu0
        %v5866 = vld [vmem:[#allocation6 + $0x10] sm:$0xff]
        %v5867 = vld [vmem:[#allocation6 + $0x18] sm:$0xff]
        %v5868 = vld [vmem:[#allocation6 + $0x20] sm:$0xff]
        %v5869 = vld [vmem:[#allocation6 + $0x28] sm:$0xff]
        %v5870 = vld [vmem:[#allocation6 + $0x30] sm:$0xff]
        %v5871 = vld [vmem:[#allocation6 + $0x38] sm:$0xff]
        %v5872 = vld [vmem:[#allocation6 + $0x40] sm:$0xff]
        %v5873 = vld [vmem:[#allocation6 + $0x48] sm:$0xff]
        %v5874 = vld [vmem:[#allocation6 + $0x50] sm:$0xff]
        %v5875 = vld [vmem:[#allocation6 + $0x58] sm:$0xff]
        %v5876 = vld [vmem:[#allocation6 + $0x60] sm:$0xff]
        %v5877 = vld [vmem:[#allocation6 + $0x68] sm:$0xff]
        %v5878 = vld [vmem:[#allocation6 + $0x70] sm:$0xff]
        %v5879 = vld [vmem:[#allocation6 + $0x78] sm:$0xff]
        %s5880 = scalar_lea.vmem %s11, 256
        %v5881 = vld [vmem:[%s5880] sm:$0xf]
        %v5882 = vld [vmem:[%s5880 + $0x4] sm:$0xf]
        %v5883 = vld [vmem:[%s5880 + $0x8] sm:$0xf]
        %v5884 = vld [vmem:[%s5880 + $0xc] sm:$0xf]
        %v5885 = vld [vmem:[%s5880 + $0x10] sm:$0xf]
        %v5886 = vld [vmem:[%s5880 + $0x14] sm:$0xf]
        %v5887 = vld [vmem:[%s5880 + $0x18] sm:$0xf]
        %v5888 = vld [vmem:[%s5880 + $0x1c] sm:$0xf]
        %v5889 = vld [vmem:[%s5880 + $0x20] sm:$0xf]
        %v5890 = vld [vmem:[%s5880 + $0x24] sm:$0xf]
        %v5891 = vld [vmem:[%s5880 + $0x28] sm:$0xf]
        %v5892 = vld [vmem:[%s5880 + $0x2c] sm:$0xf]
        %v5893 = vld [vmem:[%s5880 + $0x30] sm:$0xf]
        %v5894 = vld [vmem:[%s5880 + $0x34] sm:$0xf]
        %v5895 = vld [vmem:[%s5880 + $0x38] sm:$0xf]
        %v5896 = vld [vmem:[%s5880 + $0x3c] sm:$0xf]
        %v5897 = vld [vmem:[%s5880 + $0x40] sm:$0xf]
        %v5898 = vld [vmem:[%s5880 + $0x44] sm:$0xf]
        %v5899 = vld [vmem:[%s5880 + $0x48] sm:$0xf]
        %v5900 = vld [vmem:[%s5880 + $0x4c] sm:$0xf]
        %v5901 = vld [vmem:[%s5880 + $0x50] sm:$0xf]
        %v5902 = vld [vmem:[%s5880 + $0x54] sm:$0xf]
        %v5903 = vld [vmem:[%s5880 + $0x58] sm:$0xf]
        %v5904 = vld [vmem:[%s5880 + $0x5c] sm:$0xf]
        %v5905 = vld [vmem:[%s5880 + $0x60] sm:$0xf]
        %v5906 = vld [vmem:[%s5880 + $0x64] sm:$0xf]
        %v5907 = vld [vmem:[%s5880 + $0x68] sm:$0xf]
        %v5908 = vld [vmem:[%s5880 + $0x6c] sm:$0xf]
        %v5909 = vld [vmem:[%s5880 + $0x70] sm:$0xf]
        %v5910 = vld [vmem:[%s5880 + $0x74] sm:$0xf]
        %v5911 = vld [vmem:[%s5880 + $0x78] sm:$0xf]
        %v5912 = vld [vmem:[%s5880 + $0x7c] sm:$0xf]
        %v5945 = vunpack.c.l.b16 %v5881
        %v5946 = vunpack.c.l.b16 %v5882
        %v5947 = vunpack.c.l.b16 %v5883
        %v5948 = vunpack.c.l.b16 %v5884
        %v5949 = vunpack.c.l.b16 %v5885
        %v5950 = vunpack.c.l.b16 %v5886
        %v5951 = vunpack.c.l.b16 %v5887
        %v5952 = vunpack.c.l.b16 %v5888
        %v5953 = vunpack.c.l.b16 %v5889
        %v5954 = vunpack.c.l.b16 %v5890
        %v5955 = vunpack.c.l.b16 %v5891
        %v5956 = vunpack.c.l.b16 %v5892
        %v5957 = vunpack.c.l.b16 %v5893
        %v5958 = vunpack.c.l.b16 %v5894
        %v5959 = vunpack.c.l.b16 %v5895
        %v5960 = vunpack.c.l.b16 %v5896
        %v5961 = vunpack.c.l.b16 %v5897
        %v5962 = vunpack.c.l.b16 %v5898
        %v5963 = vunpack.c.l.b16 %v5899
        %v5964 = vunpack.c.l.b16 %v5900
        %v5965 = vunpack.c.l.b16 %v5901
        %v5966 = vunpack.c.l.b16 %v5902
        %v5967 = vunpack.c.l.b16 %v5903
        %v5968 = vunpack.c.l.b16 %v5904
        %v5969 = vunpack.c.l.b16 %v5905
        %v5970 = vunpack.c.l.b16 %v5906
        %v5971 = vunpack.c.l.b16 %v5907
        %v5972 = vunpack.c.l.b16 %v5908
        %v5973 = vunpack.c.l.b16 %v5909
        %v5974 = vunpack.c.l.b16 %v5910
        %v5975 = vunpack.c.l.b16 %v5911
        %v5976 = vunpack.c.l.b16 %v5912
        %v5977 = vpack.c.b16 %v5946, %v5945
        %v5978 = vpack.c.b16 %v5948, %v5947
        %v5979 = vpack.c.b16 %v5950, %v5949
        %v5980 = vpack.c.b16 %v5952, %v5951
        %v5981 = vpack.c.b16 %v5954, %v5953
        %v5982 = vpack.c.b16 %v5956, %v5955
        %v5983 = vpack.c.b16 %v5958, %v5957
        %v5984 = vpack.c.b16 %v5960, %v5959
        %v5985 = vpack.c.b16 %v5962, %v5961
        %v5986 = vpack.c.b16 %v5964, %v5963
        %v5987 = vpack.c.b16 %v5966, %v5965
        %v5988 = vpack.c.b16 %v5968, %v5967
        %v5989 = vpack.c.b16 %v5970, %v5969
        %v5990 = vpack.c.b16 %v5972, %v5971
        %v5991 = vpack.c.b16 %v5974, %v5973
        %v5992 = vpack.c.b16 %v5976, %v5975
        %6009 = vmatprep.subr.bf16.mxu0 0
        %6010 = vmatpush1.bf16.msra.mxu0 %v5977
        %6011 = vmatprep.subr.bf16.mxu0 0
        %6012 = vmatpush1.bf16.msra.mxu0 %v5978
        %6013 = vmatprep.subr.bf16.mxu0 0
        %6014 = vmatpush1.bf16.msra.mxu0 %v5979
        %6015 = vmatprep.subr.bf16.mxu0 0
        %6016 = vmatpush1.bf16.msra.mxu0 %v5980
        %6017 = vmatprep.subr.bf16.mxu0 0
        %6018 = vmatpush1.bf16.msra.mxu0 %v5981
        %6019 = vmatprep.subr.bf16.mxu0 0
        %6020 = vmatpush1.bf16.msra.mxu0 %v5982
        %6021 = vmatprep.subr.bf16.mxu0 0
        %6022 = vmatpush1.bf16.msra.mxu0 %v5983
        %6023 = vmatprep.subr.bf16.mxu0 0
        %6024 = vmatpush1.bf16.msra.mxu0 %v5984
        %6025 = vmatprep.subr.bf16.mxu0 0
        %6026 = vmatpush1.bf16.msra.mxu0 %v5985
        %6027 = vmatprep.subr.bf16.mxu0 0
        %6028 = vmatpush1.bf16.msra.mxu0 %v5986
        %6029 = vmatprep.subr.bf16.mxu0 0
        %6030 = vmatpush1.bf16.msra.mxu0 %v5987
        %6031 = vmatprep.subr.bf16.mxu0 0
        %6032 = vmatpush1.bf16.msra.mxu0 %v5988
        %6033 = vmatprep.subr.bf16.mxu0 0
        %6034 = vmatpush1.bf16.msra.mxu0 %v5989
        %6035 = vmatprep.subr.bf16.mxu0 0
        %6036 = vmatpush1.bf16.msra.mxu0 %v5990
        %6037 = vmatprep.subr.bf16.mxu0 0
        %6038 = vmatpush1.bf16.msra.mxu0 %v5991
        %6039 = vmatprep.subr.bf16.mxu0 0
        %6040 = vmatpush1.bf16.msra.mxu0 %v5992
        %6041 = vmatprep.mubr.bf16.mxu0 %v5867
        %6042 = vmatmul.mubr.bf16.gmra.mrb[0].mxu0 %v5866
        %v6043 = vpop.f32.mrb[0].mxu0
        %v6044 = vadd.f32 0.0, %v6043
        %v6045 = vpop.f32.mrb[0].mxu0
        %v6046 = vpop.f32.mrb[0].mxu0
        %v6047 = vadd.f32 0.0, %v6046
        %v6048 = vpop.f32.mrb[0].mxu0
        %6049 = vmatprep.mubr.bf16.mxu0 %v5869
        %6050 = vmatmul.mubr.bf16.gmra.mrb[0].mxu0 %v5868
        %v6051 = vpop.f32.mrb[0].mxu0
        %v6052 = vadd.f32 0.0, %v6051
        %v6053 = vpop.f32.mrb[0].mxu0
        %v6054 = vpop.f32.mrb[0].mxu0
        %v6055 = vadd.f32 0.0, %v6054
        %v6056 = vpop.f32.mrb[0].mxu0
        %6057 = vmatprep.mubr.bf16.mxu0 %v5871
        %6058 = vmatmul.mubr.bf16.gmra.mrb[0].mxu0 %v5870
        %v6059 = vpop.f32.mrb[0].mxu0
        %v6060 = vadd.f32 0.0, %v6059
        %v6061 = vpop.f32.mrb[0].mxu0
        %v6062 = vpop.f32.mrb[0].mxu0
        %v6063 = vadd.f32 0.0, %v6062
        %v6064 = vpop.f32.mrb[0].mxu0
        %6065 = vmatprep.mubr.bf16.mxu0 %v5873
        %6066 = vmatmul.mubr.bf16.gmra.mrb[0].mxu0 %v5872
        %v6067 = vpop.f32.mrb[0].mxu0
        %v6068 = vadd.f32 0.0, %v6067
        %v6069 = vpop.f32.mrb[0].mxu0
        %v6070 = vpop.f32.mrb[0].mxu0
        %v6071 = vadd.f32 0.0, %v6070
        %v6072 = vpop.f32.mrb[0].mxu0
        %6073 = vmatprep.mubr.bf16.mxu0 %v5875
        %6074 = vmatmul.mubr.bf16.gmra.mrb[0].mxu0 %v5874
        %v6075 = vpop.f32.mrb[0].mxu0
        %v6076 = vadd.f32 0.0, %v6075
        %v6077 = vpop.f32.mrb[0].mxu0
        %v6078 = vpop.f32.mrb[0].mxu0
        %v6079 = vadd.f32 0.0, %v6078
        %v6080 = vpop.f32.mrb[0].mxu0
        %6081 = vmatprep.mubr.bf16.mxu0 %v5877
        %6082 = vmatmul.mubr.bf16.gmra.mrb[0].mxu0 %v5876
        %v6083 = vpop.f32.mrb[0].mxu0
        %v6084 = vadd.f32 0.0, %v6083
        %v6085 = vpop.f32.mrb[0].mxu0
        %v6086 = vpop.f32.mrb[0].mxu0
        %v6087 = vadd.f32 0.0, %v6086
        %v6088 = vpop.f32.mrb[0].mxu0
        %6089 = vmatprep.mubr.bf16.mxu0 %v5879
        %6090 = vmatmul.mubr.bf16.gmra.mrb[0].mxu0 %v5878
        %v6091 = vpop.f32.mrb[0].mxu0
        %v6092 = vadd.f32 0.0, %v6091
        %v6093 = vpop.f32.mrb[0].mxu0
        %v6094 = vpop.f32.mrb[0].mxu0
        %v6095 = vadd.f32 0.0, %v6094
        %v6096 = vpop.f32.mrb[0].mxu0
        %6097 = vdwg.mxu0
        %v6098 = vadd.f32 %v5812, %v6044
        %v6099 = vadd.f32 %v5815, %v6047
        %v6100 = vadd.f32 %v5820, %v6052
        %v6101 = vadd.f32 %v5823, %v6055
        %v6102 = vadd.f32 %v5828, %v6060
        %v6103 = vadd.f32 %v5831, %v6063
        %v6104 = vadd.f32 %v5836, %v6068
        %v6105 = vadd.f32 %v5839, %v6071
        %v6106 = vadd.f32 %v5844, %v6076
        %v6107 = vadd.f32 %v5847, %v6079
        %v6108 = vadd.f32 %v5852, %v6084
        %v6109 = vadd.f32 %v5855, %v6087
        %v6110 = vadd.f32 %v5860, %v6092
        %v6111 = vadd.f32 %v5863, %v6095
        %v6112 = vld [vmem:[%s12] sm:$0x1]
        %v6114 = vlaneseq
        %v6115 = vshrl.u32 %v6114, 7
        %v6116 = vsub.s32 0, %v6115
        %v6117 = vrot.slane %v6112, %v6116
        %v6119 = vadd.f32 %v6098, %v6117
        %v6120 = vadd.f32 %v6099, %v6117
        %v6121 = vadd.f32 %v6100, %v6117
        %v6122 = vadd.f32 %v6101, %v6117
        %v6123 = vadd.f32 %v6102, %v6117
        %v6124 = vadd.f32 %v6103, %v6117
        %v6125 = vadd.f32 %v6104, %v6117
        %v6126 = vadd.f32 %v6105, %v6117
        %v6127 = vadd.f32 %v6106, %v6117
        %v6128 = vadd.f32 %v6107, %v6117
        %v6129 = vadd.f32 %v6108, %v6117
        %v6130 = vadd.f32 %v6109, %v6117
        %v6131 = vadd.f32 %v6110, %v6117
        %v6132 = vadd.f32 %v6111, %v6117
        %v6133 = vxor.u32 %v6119, 2147483648
        %v6134 = vxor.u32 %v6120, 2147483648
        %v6135 = vxor.u32 %v6121, 2147483648
        %v6136 = vxor.u32 %v6122, 2147483648
        %v6137 = vxor.u32 %v6123, 2147483648
        %v6138 = vxor.u32 %v6124, 2147483648
        %v6139 = vxor.u32 %v6125, 2147483648
        %v6140 = vxor.u32 %v6126, 2147483648
        %v6141 = vxor.u32 %v6127, 2147483648
        %v6142 = vxor.u32 %v6128, 2147483648
        %v6143 = vxor.u32 %v6129, 2147483648
        %v6144 = vxor.u32 %v6130, 2147483648
        %v6145 = vxor.u32 %v6131, 2147483648
        %v6146 = vxor.u32 %v6132, 2147483648
        %v6147 = vmul.f32 %v6133, 1.442695
        %v6148 = vpow.pop %v6147
        %v6149 = vmul.f32 %v6134, 1.442695
        %v6150 = vpow.pop %v6149
        %v6151 = vmul.f32 %v6135, 1.442695
        %v6152 = vpow.pop %v6151
        %v6153 = vmul.f32 %v6136, 1.442695
        %v6154 = vpow.pop %v6153
        %v6155 = vmul.f32 %v6137, 1.442695
        %v6156 = vpow.pop %v6155
        %v6157 = vmul.f32 %v6138, 1.442695
        %v6158 = vpow.pop %v6157
        %v6159 = vmul.f32 %v6139, 1.442695
        %v6160 = vpow.pop %v6159
        %v6161 = vmul.f32 %v6140, 1.442695
        %v6162 = vpow.pop %v6161
        %v6163 = vmul.f32 %v6141, 1.442695
        %v6164 = vpow.pop %v6163
        %v6165 = vmul.f32 %v6142, 1.442695
        %v6166 = vpow.pop %v6165
        %v6167 = vmul.f32 %v6143, 1.442695
        %v6168 = vpow.pop %v6167
        %v6169 = vmul.f32 %v6144, 1.442695
        %v6170 = vpow.pop %v6169
        %v6171 = vmul.f32 %v6145, 1.442695
        %v6172 = vpow.pop %v6171
        %v6173 = vmul.f32 %v6146, 1.442695
        %v6174 = vpow.pop %v6173
        %v6175 = vadd.f32 %v6148, 1.0
        %v6176 = vadd.f32 %v6150, 1.0
        %v6177 = vadd.f32 %v6152, 1.0
        %v6178 = vadd.f32 %v6154, 1.0
        %v6179 = vadd.f32 %v6156, 1.0
        %v6180 = vadd.f32 %v6158, 1.0
        %v6181 = vadd.f32 %v6160, 1.0
        %v6182 = vadd.f32 %v6162, 1.0
        %v6183 = vadd.f32 %v6164, 1.0
        %v6184 = vadd.f32 %v6166, 1.0
        %v6185 = vadd.f32 %v6168, 1.0
        %v6186 = vadd.f32 %v6170, 1.0
        %v6187 = vadd.f32 %v6172, 1.0
        %v6188 = vadd.f32 %v6174, 1.0
        %v6189 = vrcp.pop %v6175
        %v6190 = vmul.f32 1.0, %v6189
        %v6191 = vrcp.pop %v6176
        %v6192 = vmul.f32 1.0, %v6191
        %v6193 = vrcp.pop %v6177
        %v6194 = vmul.f32 1.0, %v6193
        %v6195 = vrcp.pop %v6178
        %v6196 = vmul.f32 1.0, %v6195
        %v6197 = vrcp.pop %v6179
        %v6198 = vmul.f32 1.0, %v6197
        %v6199 = vrcp.pop %v6180
        %v6200 = vmul.f32 1.0, %v6199
        %v6201 = vrcp.pop %v6181
        %v6202 = vmul.f32 1.0, %v6201
        %v6203 = vrcp.pop %v6182
        %v6204 = vmul.f32 1.0, %v6203
        %v6205 = vrcp.pop %v6183
        %v6206 = vmul.f32 1.0, %v6205
        %v6207 = vrcp.pop %v6184
        %v6208 = vmul.f32 1.0, %v6207
        %v6209 = vrcp.pop %v6185
        %v6210 = vmul.f32 1.0, %v6209
        %v6211 = vrcp.pop %v6186
        %v6212 = vmul.f32 1.0, %v6211
        %v6213 = vrcp.pop %v6187
        %v6214 = vmul.f32 1.0, %v6213
        %v6215 = vrcp.pop %v6188
        %v6216 = vmul.f32 1.0, %v6215
        %6217 = vst [vmem:[%s591] sm:$0xff] %v6190
        %6218 = vst [vmem:[%s591 + $0x8] sm:$0xff] %v6192
        %6219 = vst [vmem:[%s591 + $0x10] sm:$0xff] %v6194
        %6220 = vst [vmem:[%s591 + $0x18] sm:$0xff] %v6196
        %6221 = vst [vmem:[%s591 + $0x20] sm:$0xff] %v6198
        %6222 = vst [vmem:[%s591 + $0x28] sm:$0xff] %v6200
        %6223 = vst [vmem:[%s591 + $0x30] sm:$0xff] %v6202
        %6224 = vst [vmem:[%s591 + $0x38] sm:$0xff] %v6204
        %6225 = vst [vmem:[%s591 + $0x40] sm:$0xff] %v6206
        %6226 = vst [vmem:[%s591 + $0x48] sm:$0xff] %v6208
        %6227 = vst [vmem:[%s591 + $0x50] sm:$0xff] %v6210
        %6228 = vst [vmem:[%s591 + $0x58] sm:$0xff] %v6212
        %6229 = vst [vmem:[%s591 + $0x60] sm:$0xff] %v6214
        %6230 = vst [vmem:[%s591 + $0x68] sm:$0xff] %v6216
        %s6231 = smul.u32 14, %s24
        %p6232 = scmp.lt.s32.totalorder %s6231, 27
        %s6233 = scalar_select %p6232, %s6231, 27
        %s6234 = smul.addr %s6233, 8
        %s6235 = scalar_lea.vmem %s13, %s6234
        // Predicated region
        $region114: #{autoencoder_forward.1} parent=108 // pred_check
          %p6236 = pneg %p320
        $region115: #{autoencoder_forward.1} parent=108 // pred_check_branch
          %6238 = sbr.rel (%p6236) target = $region117
        $region116: #{autoencoder_forward.1} parent=108 // pred_region
          %s6239 = smul.u32 14, %s24
        $region117: #{autoencoder_forward.1} parent=108 // pred_fallthru
          _
      $region109: #{autoencoder_forward.1} parent=5 // pred_fallthru
        _
      %p6240 = scmp.le.s32.totalorder 2, %s19
      // Predicated region
      $region118: #{autoencoder_forward.1} parent=5 // pred_check
        %p6241 = pneg %p6240
      $region119: #{autoencoder_forward.1} parent=5 // pred_check_branch
        %6243 = sbr.rel (%p6241) target = $region121
      $region120: #{autoencoder_forward.1} parent=5 // pred_region
        %s6244 = ssub.s32 %s19, 2
        // Predicated region
        $region122: #{autoencoder_forward.1} parent=120 // pred_check
          %p6245 = pneg %p326
        $region123: #{autoencoder_forward.1} parent=120 // pred_check_branch
          %6247 = sbr.rel (%p6245) target = $region125
        $region124: #{autoencoder_forward.1} parent=120 // pred_region
          %s6248 = smul.u32 14, %s25
          %p6249 = scmp.lt.s32.totalorder %s6248, 27
          %s6250 = scalar_select %p6249, %s6248, 27
          %s6251 = smul.addr %s6250, 8
          %s6252 = scalar_lea.vmem %s13, %s6251
        $region125: #{autoencoder_forward.1} parent=120 // pred_fallthru
          _
      $region121: #{autoencoder_forward.1} parent=5 // pred_fallthru
        _
    $region6: #{autoencoder_forward.1} parent=1 // loop_footer
      %s23 = sadd.s32 1, %s19
    $region7: #{autoencoder_forward.1} parent=1 // loop_footer_branch
      %18 = sbr.rel target = $region3
    $region8: #{autoencoder_forward.1} parent=1 // loop_exit
      _

</llo_original>
